<compile_context>
chip_gen: v6e
topology: v6e:2x2x1
jax: 0.10.0
libtpu: 0.0.40
codegen_flags: <defaults>
</compile_context>

<pallas_src>
import functools

import jax
import jax.numpy as jnp
from jax.experimental import pallas as pl
from jax.experimental.pallas import tpu as pltpu

TN = 128          # matmul output-column tile (== lane width)
NEG_INF = -1e30


def _round_up(x, m):
    return ((x + m - 1) // m) * m


def _num_tensorcores_per_chip():
    """2 on megacore-style chips (v7x, v4/v5p), else 1 (v5e/v6e); safe fallback."""
    try:
        d = jax.devices()[0]
        n = getattr(d, "num_cores", None)
        if isinstance(n, int) and n > 0:
            return n
        kind = str(getattr(d, "device_kind", "")).lower()
        if any(t in kind for t in ("v7", "7x", "v4", "v5p")):
            return 2
    except Exception:
        pass
    return 1


_NUM_TC = _num_tensorcores_per_chip()


def _pick_bm(M):
    """M tile: multiple of 16 (bf16 sublanes).  Single block on 1-TC chips,
    >=2 'parallel' blocks on 2-TC chips so both TensorCores are used."""
    if _NUM_TC >= 2 and M >= 32:
        bm = _round_up((M + _NUM_TC - 1) // _NUM_TC, 16)
    else:
        bm = _round_up(M, 16)
    return max(16, min(bm, 512))


# ----------------------------------------------------------------------------
# Pallas kernels
# ----------------------------------------------------------------------------
def _matmul_bn_act_kernel(a_ref, w_ref, p_ref, o_ref):
    """out = PReLU((A @ W) * scale + bias); full-K single pass, f32 epilogue.
    p_ref rows: 0=scale, 1=bias, 2=alpha."""
    acc = jnp.dot(a_ref[...], w_ref[...], preferred_element_type=jnp.float32)
    y = acc * p_ref[0:1, :] + p_ref[1:2, :]
    o_ref[...] = jnp.where(y >= 0, y, p_ref[2:3, :] * y).astype(o_ref.dtype)


def _matmul_bn_act_res_kernel(a_ref, w_ref, p_ref, r_ref, o_ref):
    """Same, plus fused residual add + output PReLU (bottleneck tail).
    p_ref rows: 0=scale, 1=bias, 2=alpha(ext), 3=alpha_out."""
    acc = jnp.dot(a_ref[...], w_ref[...], preferred_element_type=jnp.float32)
    y = acc * p_ref[0:1, :] + p_ref[1:2, :]
    y = jnp.where(y >= 0, y, p_ref[2:3, :] * y)        # ext-branch PReLU
    y = y + r_ref[...].astype(jnp.float32)             # residual (main branch)
    o_ref[...] = jnp.where(y >= 0, y, p_ref[3:4, :] * y).astype(o_ref.dtype)


def _maxpool9_kernel(t0, t1, t2, t3, t4, t5, t6, t7, t8, p_ref, o_ref, *,
                     c_in, c_out):
    """9-tap max + fused per-channel affine/PReLU epilogue.
    If c_out > c_in the extra output lanes are zero-filled (downsampling main
    branch channel pad), fused here instead of a separate jnp.pad slab."""
    m = jnp.maximum(t0[...], t1[...])
    m = jnp.maximum(m, t2[...])
    m = jnp.maximum(m, t3[...])
    m = jnp.maximum(m, t4[...])
    m = jnp.maximum(m, t5[...])
    m = jnp.maximum(m, t6[...])
    m = jnp.maximum(m, t7[...])
    m = jnp.maximum(m, t8[...])
    y = m.astype(jnp.float32)
    y = y * p_ref[0:1, :] + p_ref[1:2, :]
    y = jnp.where(y >= 0, y, p_ref[2:3, :] * y)
    y = y.astype(o_ref.dtype)
    if c_out == c_in:
        o_ref[...] = y
    else:
        o_ref[...] = jnp.zeros_like(o_ref)
        o_ref[:, 0:c_in] = y


# ----------------------------------------------------------------------------
# Pallas wrappers
# ----------------------------------------------------------------------------
def matmul_bn_act(a, w, scale, bias, alpha, residual=None, alpha_out=None):
    """(M,K) @ (K,N) with fused per-column BN affine + PReLU (+ optional fused
    residual add + output PReLU).  K is a single block padded to 128-multiples
    only; operands bf16, accumulate f32, outputs bf16."""
    M, K = a.shape
    _, N = w.shape

    bm = _pick_bm(M)
    Mp = _round_up(M, bm)
    Kp = _round_up(K, 128)
    Np = _round_up(N, TN)

    a_p = jnp.pad(a.astype(jnp.bfloat16), ((0, Mp - M), (0, Kp - K)))
    w_p = jnp.pad(w.astype(jnp.bfloat16), ((0, Kp - K), (0, Np - N)))

    # Packed epilogue params: one DMA instead of 3-4 per grid step.
    prm = jnp.zeros((8, Np), jnp.float32)
    prm = prm.at[0, :N].set(scale)
    prm = prm.at[1, :N].set(bias)
    prm = prm.at[2, :N].set(alpha)
    if alpha_out is not None:
        prm = prm.at[3, :N].set(alpha_out)

    grid = (Mp // bm, Np // TN)
    in_specs = [
        pl.BlockSpec((bm, Kp), lambda i, j: (i, 0)),
        pl.BlockSpec((Kp, TN), lambda i, j: (0, j)),
        pl.BlockSpec((8, TN), lambda i, j: (0, j)),
    ]
    out_spec = pl.BlockSpec((bm, TN), lambda i, j: (i, j))
    cparams = pltpu.CompilerParams(
        dimension_semantics=("parallel", "parallel"))

    if residual is None:
        out = pl.pallas_call(
            _matmul_bn_act_kernel,
            out_shape=jax.ShapeDtypeStruct((Mp, Np), jnp.bfloat16),
            grid_spec=pltpu.PrefetchScalarGridSpec(
                num_scalar_prefetch=0, grid=grid,
                in_specs=in_specs, out_specs=out_spec),
            compiler_params=cparams,
        )(a_p, w_p, prm)
    else:
        r_p = jnp.pad(residual.astype(jnp.bfloat16),
                      ((0, Mp - M), (0, Np - residual.shape[1])))
        out = pl.pallas_call(
            _matmul_bn_act_res_kernel,
            out_shape=jax.ShapeDtypeStruct((Mp, Np), jnp.bfloat16),
            grid_spec=pltpu.PrefetchScalarGridSpec(
                num_scalar_prefetch=0, grid=grid,
                in_specs=in_specs + [pl.BlockSpec((bm, TN), lambda i, j: (i, j))],
                out_specs=out_spec),
            compiler_params=cparams,
        )(a_p, w_p, prm, r_p)
    return out[:M, :N]


def maxpool2d(x, k=3, stride=2, padding=1, out_channels=None, affine=None):
    """3x3/s2 max-pool (NHWC, bf16).  Optional fused per-channel affine+PReLU
    (initial block) and fused zero channel-padding to out_channels (down block).
    TODO(synk): taps are still 9 small HBM slices (bf16); tensors are tiny and
    this runs only 3x per forward, so in-kernel strided tap reads were skipped."""
    assert k == 3, "ENet only uses 3x3 max-pool"
    N, H, W, C = x.shape
    cout = C if out_channels is None else out_channels
    xp = jnp.pad(x, ((0, 0), (padding, padding), (padding, padding), (0, 0)),
                 constant_values=NEG_INF)
    oh = (H + 2 * padding - k) // stride + 1
    ow = (W + 2 * padding - k) // stride + 1
    M = N * oh * ow
    bm = _pick_bm(M)
    Mp = _round_up(M, bm)

    taps = []
    for i in range(k):
        for j in range(k):
            sl = xp[:, i:i + stride * (oh - 1) + 1:stride,
                       j:j + stride * (ow - 1) + 1:stride, :]
            taps.append(jnp.pad(sl.reshape(M, C), ((0, Mp - M), (0, 0))))

    prm = jnp.zeros((8, C), jnp.float32)
    if affine is None:
        prm = prm.at[0].set(1.0).at[2].set(1.0)        # identity affine/PReLU
    else:
        s, b, a = affine
        prm = prm.at[0].set(s).at[1].set(b).at[2].set(a)

    tap_spec = pl.BlockSpec((bm, C), lambda i: (i, 0))
    out = pl.pallas_call(
        functools.partial(_maxpool9_kernel, c_in=C, c_out=cout),
        out_shape=jax.ShapeDtypeStruct((Mp, cout), jnp.bfloat16),
        grid_spec=pltpu.PrefetchScalarGridSpec(
            num_scalar_prefetch=0, grid=(Mp // bm,),
            in_specs=[tap_spec] * (k * k)
                     + [pl.BlockSpec((8, C), lambda i: (0, 0))],
            out_specs=pl.BlockSpec((bm, cout), lambda i: (i, 0))),
        compiler_params=pltpu.CompilerParams(
            dimension_semantics=("parallel",)),
    )(*taps, prm)
    return out[:M].reshape(N, oh, ow, cout)


def im2col(x, kh, kw, stride, padding, dilation):
    # TODO(synk): for kh*kw > 1 this still HBM-materializes the (bf16) patch
    # slab; streaming taps from a pl.ANY HBM ref inside the matmul kernel is
    # the next step (needs dilation-aware halo indexing).
    N, H, W, C = x.shape
    ph, pw = padding
    dh, dw = dilation
    if kh == 1 and kw == 1 and stride == 1 and ph == 0 and pw == 0:
        return x.reshape(N * H * W, C), (N, H, W)
    xp = jnp.pad(x, ((0, 0), (ph, ph), (pw, pw), (0, 0)))
    oh = (H + 2 * ph - (dh * (kh - 1) + 1)) // stride + 1
    ow = (W + 2 * pw - (dw * (kw - 1) + 1)) // stride + 1
    cols = []
    for i in range(kh):
        for j in range(kw):
            sl = xp[:, i * dh:i * dh + stride * (oh - 1) + 1:stride,
                       j * dw:j * dw + stride * (ow - 1) + 1:stride, :]
            cols.append(sl)
    patches = jnp.concatenate(cols, axis=-1)
    return patches.reshape(N * oh * ow, kh * kw * C), (N, oh, ow)


def conv_bn_act(x, w, scale, bias, alpha, stride=1, padding=(0, 0),
                dilation=(1, 1), residual=None, alpha_out=None):
    """Conv2d + BN (inference affine) + PReLU, NHWC; optional fused residual."""
    kh, kw, cin, cout = w.shape
    patches, (n, oh, ow) = im2col(x, kh, kw, stride, padding, dilation)
    out = matmul_bn_act(patches, w.reshape(kh * kw * cin, cout),
                        scale, bias, alpha,
                        residual=residual, alpha_out=alpha_out)
    return out.reshape(n, oh, ow, cout)


# ----------------------------------------------------------------------------
# Deterministic parameter construction
# ----------------------------------------------------------------------------
class PGen:
    def __init__(self, seed):
        self.key = jax.random.PRNGKey(seed)

    def take(self, shape, scale=0.1):
        self.key, sub = jax.random.split(self.key)
        return scale * jax.random.normal(sub, shape, jnp.float32)


def make_bn(pg, c):
    gamma = 1.0 + pg.take((c,))
    beta = pg.take((c,))
    mean = pg.take((c,))
    var = 1.0 + jnp.abs(pg.take((c,)))
    scale = gamma * jax.lax.rsqrt(var + 1e-5)
    return scale, beta - mean * scale


def make_prelu(pg, c):
    # nn.PReLU() uses a single learnable scalar (init 0.25); broadcast to (c,).
    a = 0.25 + pg.take((), 0.01)
    return jnp.full((c,), 1.0, jnp.float32) * a


def init_initial(pg, cin=3, cout=16):
    p = {"w": pg.take((3, 3, cin, cout - cin))}
    p["s"], p["b"] = make_bn(pg, cout)
    p["a"] = make_prelu(pg, cout)
    return p


def init_down(pg, cin, cout):
    internal = cin // 4
    p = {"w1": pg.take((2, 2, cin, internal))}
    p["s1"], p["b1"] = make_bn(pg, internal)
    p["a1"] = make_prelu(pg, internal)
    p["w2"] = pg.take((3, 3, internal, internal))
    p["s2"], p["b2"] = make_bn(pg, internal)
    p["a2"] = make_prelu(pg, internal)
    p["w3"] = pg.take((1, 1, internal, cout))
    p["s3"], p["b3"] = make_bn(pg, cout)
    p["a3"] = make_prelu(pg, cout)
    p["aout"] = make_prelu(pg, cout)
    return p


def init_regular(pg, ch, kernel_size=3, asymmetric=False):
    internal = ch // 4
    p = {"w1": pg.take((1, 1, ch, internal))}
    p["s1"], p["b1"] = make_bn(pg, internal)
    p["a1"] = make_prelu(pg, internal)
    if asymmetric:
        p["w2a"] = pg.take((kernel_size, 1, internal, internal))
        p["s2a"], p["b2a"] = make_bn(pg, internal)
        p["a2a"] = make_prelu(pg, internal)
        p["w2b"] = pg.take((1, kernel_size, internal, internal))
        p["s2b"], p["b2b"] = make_bn(pg, internal)
        p["a2b"] = make_prelu(pg, internal)
    else:
        p["w2"] = pg.take((kernel_size, kernel_size, internal, internal))
        p["s2"], p["b2"] = make_bn(pg, internal)
        p["a2"] = make_prelu(pg, internal)
    p["w3"] = pg.take((1, 1, internal, ch))
    p["s3"], p["b3"] = make_bn(pg, ch)
    p["a3"] = make_prelu(pg, ch)
    p["aout"] = make_prelu(pg, ch)
    return p


# ----------------------------------------------------------------------------
# Block forward passes (NHWC, bf16 activations)
# ----------------------------------------------------------------------------
def initial_fwd(p, x, cout=16):
    N, H, W, C = x.shape
    nconv = cout - C
    main = conv_bn_act(x, p["w"], p["s"][:nconv], p["b"][:nconv],
                       p["a"][:nconv], stride=2, padding=(1, 1))
    # max-pool branch with BN+PReLU fused into its epilogue.
    ext = maxpool2d(x, 3, 2, 1,
                    affine=(p["s"][nconv:], p["b"][nconv:], p["a"][nconv:]))
    return jnp.concatenate([main, ext], axis=-1)


def down_fwd(p, x, cout):
    N, H, W, C = x.shape
    # main branch: max-pool with zero channel-pad to cout fused in-kernel.
    # TODO(synk): max-pool indices (return_indices=True) only feed the decoder's
    # max-unpool and are not materialized here.
    main = maxpool2d(x, 3, 2, 1, out_channels=cout)
    _, oh, ow, _ = main.shape
    ext = conv_bn_act(x, p["w1"], p["s1"], p["b1"], p["a1"], stride=2)
    ext = conv_bn_act(ext, p["w2"], p["s2"], p["b2"], p["a2"], padding=(1, 1))
    # TODO(synk): Dropout2d is identity in eval mode; not modeled.
    # residual add + output PReLU fused into the final 1x1 conv epilogue.
    out = conv_bn_act(ext, p["w3"], p["s3"], p["b3"], p["a3"],
                      residual=main.reshape(N * oh * ow, cout),
                      alpha_out=p["aout"])
    return out


def regular_fwd(p, x, kernel_size=3, padding=1, dilation=1, asymmetric=False):
    N, H, W, C = x.shape
    ext = conv_bn_act(x, p["w1"], p["s1"], p["b1"], p["a1"])
    if asymmetric:
        ext = conv_bn_act(ext, p["w2a"], p["s2a"], p["b2a"], p["a2a"],
                          padding=(padding, 0))
        ext = conv_bn_act(ext, p["w2b"], p["s2b"], p["b2b"], p["a2b"],
                          padding=(0, padding))
    else:
        ext = conv_bn_act(ext, p["w2"], p["s2"], p["b2"], p["a2"],
                          padding=(padding, padding),
                          dilation=(dilation, dilation))
    # TODO(synk): Dropout2d is identity in eval mode; not modeled.
    # residual add + output PReLU fused into the final 1x1 conv epilogue.
    out = conv_bn_act(ext, p["w3"], p["s3"], p["b3"], p["a3"],
                      residual=x.reshape(N * H * W, C), alpha_out=p["aout"])
    return out


# ----------------------------------------------------------------------------
# Full encoder
# ----------------------------------------------------------------------------
STAGE23 = [
    ("regular2_1", dict()),
    ("dilated2_2", dict(dilation=2, padding=2)),
    ("asymmetric2_3", dict(kernel_size=5, padding=2, asymmetric=True)),
    ("dilated2_4", dict(dilation=4, padding=4)),
    ("regular2_5", dict()),
    ("dilated2_6", dict(dilation=8, padding=8)),
    ("asymmetric2_7", dict(kernel_size=5, padding=2, asymmetric=True)),
    ("dilated2_8", dict(dilation=16, padding=16)),
    ("regular3_0", dict()),
    ("dilated3_1", dict(dilation=2, padding=2)),
    ("asymmetric3_2", dict(kernel_size=5, padding=2, asymmetric=True)),
    ("dilated3_3", dict(dilation=4, padding=4)),
    ("regular3_4", dict()),
    ("dilated3_5", dict(dilation=8, padding=8)),
    ("asymmetric3_6", dict(kernel_size=5, padding=2, asymmetric=True)),
    ("dilated3_7", dict(dilation=16, padding=16)),
]


def init_encoder(seed=42):
    pg = PGen(seed)
    params = {"initial": init_initial(pg), "down1": init_down(pg, 16, 64)}
    for name in ["regular1_1", "regular1_2", "regular1_3", "regular1_4"]:
        params[name] = init_regular(pg, 64)
    params["down2"] = init_down(pg, 64, 128)
    for name, kw in STAGE23:
        params[name] = init_regular(pg, 128,
                                    kernel_size=kw.get("kernel_size", 3),
                                    asymmetric=kw.get("asymmetric", False))
    return params


def enet_encoder_forward(params, x_nchw):
    # NCHW -> NHWC; all internal activations are bf16 (f32 accumulate in MXU).
    x = jnp.transpose(x_nchw, (0, 2, 3, 1)).astype(jnp.bfloat16)
    x = initial_fwd(params["initial"], x)              # (N, H/2,  W/2,  16)
    x = down_fwd(params["down1"], x, 64)               # (N, H/4,  W/4,  64)
    for name in ["regular1_1", "regular1_2", "regular1_3", "regular1_4"]:
        x = regular_fwd(params[name], x)
    x = down_fwd(params["down2"], x, 128)              # (N, H/8,  W/8, 128)
    for name, kw in STAGE23:
        x = regular_fwd(params[name], x, **kw)
    return jnp.transpose(x, (0, 3, 1, 2)).astype(jnp.float32)   # back to NCHW


if __name__ == "__main__":
    key = jax.random.PRNGKey(0)
    x = jax.random.normal(key, (2, 3, 32, 32), jnp.float32)

    params = init_encoder(seed=42)
    fwd = jax.jit(functools.partial(enet_encoder_forward, params))

    out = jax.block_until_ready(fwd(x))

    # 3 downsamplings: 32 -> 16 -> 8 -> 4, final channels 128.
    assert out.shape == (2, 128, 4, 4), out.shape
    assert bool(jnp.all(jnp.isfinite(out)))
    print("KERNEL_OK")
</pallas_src>

<mosaic_0001>
module attributes {stable_mosaic.version = 11 : i64} {
  func.func @_maxpool9_kernel(%arg0: i32, %arg1: memref<512x3xbf16, #tpu.memory_space<vmem>>, %arg2: memref<512x3xbf16, #tpu.memory_space<vmem>>, %arg3: memref<512x3xbf16, #tpu.memory_space<vmem>>, %arg4: memref<512x3xbf16, #tpu.memory_space<vmem>>, %arg5: memref<512x3xbf16, #tpu.memory_space<vmem>>, %arg6: memref<512x3xbf16, #tpu.memory_space<vmem>>, %arg7: memref<512x3xbf16, #tpu.memory_space<vmem>>, %arg8: memref<512x3xbf16, #tpu.memory_space<vmem>>, %arg9: memref<512x3xbf16, #tpu.memory_space<vmem>>, %arg10: memref<8x3xf32, #tpu.memory_space<vmem>>, %arg11: memref<512x3xbf16, #tpu.memory_space<vmem>>) attributes {dimension_semantics = [#tpu.dimension_semantics<parallel>], iteration_bounds = array<i64: 1>, scalar_prefetch = 0 : i64, scratch_operands = 0 : i64, tpu.core_type = #tpu.core_type<tc>, window_params = [{transform_indices = @transform_0, window_bounds = array<i64: 512, 3>}, {transform_indices = @transform_1, window_bounds = array<i64: 512, 3>}, {transform_indices = @transform_2, window_bounds = array<i64: 512, 3>}, {transform_indices = @transform_3, window_bounds = array<i64: 512, 3>}, {transform_indices = @transform_4, window_bounds = array<i64: 512, 3>}, {transform_indices = @transform_5, window_bounds = array<i64: 512, 3>}, {transform_indices = @transform_6, window_bounds = array<i64: 512, 3>}, {transform_indices = @transform_7, window_bounds = array<i64: 512, 3>}, {transform_indices = @transform_8, window_bounds = array<i64: 512, 3>}, {pipeline_mode = #tpu.pipeline_mode<synchronous>, transform_indices = @transform_9, window_bounds = array<i64: 8, 3>}, {transform_indices = @transform_10, window_bounds = array<i64: 512, 3>}]} {
    %c0 = arith.constant 0 : index
    %c0_0 = arith.constant 0 : index
    %0 = vector.load %arg1[%c0, %c0_0] : memref<512x3xbf16, #tpu.memory_space<vmem>>, vector<512x3xbf16>
    %c0_1 = arith.constant 0 : index
    %c0_2 = arith.constant 0 : index
    %1 = vector.load %arg2[%c0_1, %c0_2] : memref<512x3xbf16, #tpu.memory_space<vmem>>, vector<512x3xbf16>
    %2 = arith.maximumf %0, %1 : vector<512x3xbf16>
    %c0_3 = arith.constant 0 : index
    %c0_4 = arith.constant 0 : index
    %3 = vector.load %arg3[%c0_3, %c0_4] : memref<512x3xbf16, #tpu.memory_space<vmem>>, vector<512x3xbf16>
    %4 = arith.maximumf %2, %3 : vector<512x3xbf16>
    %c0_5 = arith.constant 0 : index
    %c0_6 = arith.constant 0 : index
    %5 = vector.load %arg4[%c0_5, %c0_6] : memref<512x3xbf16, #tpu.memory_space<vmem>>, vector<512x3xbf16>
    %6 = arith.maximumf %4, %5 : vector<512x3xbf16>
    %c0_7 = arith.constant 0 : index
    %c0_8 = arith.constant 0 : index
    %7 = vector.load %arg5[%c0_7, %c0_8] : memref<512x3xbf16, #tpu.memory_space<vmem>>, vector<512x3xbf16>
    %8 = arith.maximumf %6, %7 : vector<512x3xbf16>
    %c0_9 = arith.constant 0 : index
    %c0_10 = arith.constant 0 : index
    %9 = vector.load %arg6[%c0_9, %c0_10] : memref<512x3xbf16, #tpu.memory_space<vmem>>, vector<512x3xbf16>
    %10 = arith.maximumf %8, %9 : vector<512x3xbf16>
    %c0_11 = arith.constant 0 : index
    %c0_12 = arith.constant 0 : index
    %11 = vector.load %arg7[%c0_11, %c0_12] : memref<512x3xbf16, #tpu.memory_space<vmem>>, vector<512x3xbf16>
    %12 = arith.maximumf %10, %11 : vector<512x3xbf16>
    %c0_13 = arith.constant 0 : index
    %c0_14 = arith.constant 0 : index
    %13 = vector.load %arg8[%c0_13, %c0_14] : memref<512x3xbf16, #tpu.memory_space<vmem>>, vector<512x3xbf16>
    %14 = arith.maximumf %12, %13 : vector<512x3xbf16>
    %c0_15 = arith.constant 0 : index
    %c0_16 = arith.constant 0 : index
    %15 = vector.load %arg9[%c0_15, %c0_16] : memref<512x3xbf16, #tpu.memory_space<vmem>>, vector<512x3xbf16>
    %16 = arith.maximumf %14, %15 : vector<512x3xbf16>
    %17 = arith.extf %16 : vector<512x3xbf16> to vector<512x3xf32>
    %c0_17 = arith.constant 0 : index
    %c0_18 = arith.constant 0 : index
    %18 = vector.load %arg10[%c0_17, %c0_18] : memref<8x3xf32, #tpu.memory_space<vmem>>, vector<1x3xf32>
    %19 = vector.broadcast %18 : vector<1x3xf32> to vector<512x3xf32>
    %20 = arith.mulf %17, %19 : vector<512x3xf32>
    %c1 = arith.constant 1 : index
    %c0_19 = arith.constant 0 : index
    %21 = vector.load %arg10[%c1, %c0_19] : memref<8x3xf32, #tpu.memory_space<vmem>>, vector<1x3xf32>
    %22 = vector.broadcast %21 : vector<1x3xf32> to vector<512x3xf32>
    %23 = arith.addf %20, %22 : vector<512x3xf32>
    %cst = arith.constant 0.000000e+00 : f32
    %24 = vector.broadcast %cst : f32 to vector<512x3xf32>
    %25 = arith.cmpf oge, %23, %24 : vector<512x3xf32>
    %c2 = arith.constant 2 : index
    %c0_20 = arith.constant 0 : index
    %26 = vector.load %arg10[%c2, %c0_20] : memref<8x3xf32, #tpu.memory_space<vmem>>, vector<1x3xf32>
    %27 = vector.broadcast %26 : vector<1x3xf32> to vector<512x3xf32>
    %28 = arith.mulf %27, %23 : vector<512x3xf32>
    %29 = arith.select %25, %23, %28 : vector<512x3xi1>, vector<512x3xf32>
    %30 = arith.truncf %29 : vector<512x3xf32> to vector<512x3xbf16>
    %c0_21 = arith.constant 0 : index
    %c0_22 = arith.constant 0 : index
    %31 = vector.load %arg11[%c0_21, %c0_22] : memref<512x3xbf16, #tpu.memory_space<vmem>>, vector<512x3xbf16>
    tpu.vector_store %arg11[%c0_21, %c0_22], %30 {strides = array<i32>} : memref<512x3xbf16, #tpu.memory_space<vmem>>, vector<512x3xbf16>,
    return
  }
  func.func @transform_0(%arg0: i32) -> (i32, i32) {
    %c0_i32 = arith.constant 0 : i32
    %c0_i32_0 = arith.constant 0 : i32
    return %arg0, %c0_i32 : i32, i32
  }
  func.func @transform_1(%arg0: i32) -> (i32, i32) {
    %c0_i32 = arith.constant 0 : i32
    %c0_i32_0 = arith.constant 0 : i32
    return %arg0, %c0_i32 : i32, i32
  }
  func.func @transform_2(%arg0: i32) -> (i32, i32) {
    %c0_i32 = arith.constant 0 : i32
    %c0_i32_0 = arith.constant 0 : i32
    return %arg0, %c0_i32 : i32, i32
  }
  func.func @transform_3(%arg0: i32) -> (i32, i32) {
    %c0_i32 = arith.constant 0 : i32
    %c0_i32_0 = arith.constant 0 : i32
    return %arg0, %c0_i32 : i32, i32
  }
  func.func @transform_4(%arg0: i32) -> (i32, i32) {
    %c0_i32 = arith.constant 0 : i32
    %c0_i32_0 = arith.constant 0 : i32
    return %arg0, %c0_i32 : i32, i32
  }
  func.func @transform_5(%arg0: i32) -> (i32, i32) {
    %c0_i32 = arith.constant 0 : i32
    %c0_i32_0 = arith.constant 0 : i32
    return %arg0, %c0_i32 : i32, i32
  }
  func.func @transform_6(%arg0: i32) -> (i32, i32) {
    %c0_i32 = arith.constant 0 : i32
    %c0_i32_0 = arith.constant 0 : i32
    return %arg0, %c0_i32 : i32, i32
  }
  func.func @transform_7(%arg0: i32) -> (i32, i32) {
    %c0_i32 = arith.constant 0 : i32
    %c0_i32_0 = arith.constant 0 : i32
    return %arg0, %c0_i32 : i32, i32
  }
  func.func @transform_8(%arg0: i32) -> (i32, i32) {
    %c0_i32 = arith.constant 0 : i32
    %c0_i32_0 = arith.constant 0 : i32
    return %arg0, %c0_i32 : i32, i32
  }
  func.func @transform_9(%arg0: i32) -> (i32, i32) {
    %c0_i32 = arith.constant 0 : i32
    %c0_i32_0 = arith.constant 0 : i32
    %c0_i32_1 = arith.constant 0 : i32
    return %c0_i32, %c0_i32_0 : i32, i32
  }
  func.func @transform_10(%arg0: i32) -> (i32, i32) {
    %c0_i32 = arith.constant 0 : i32
    %c0_i32_0 = arith.constant 0 : i32
    return %arg0, %c0_i32 : i32, i32
  }
}

module attributes {stable_mosaic.version = 11 : i64} {
  func.func @_matmul_bn_act_kernel(%arg0: i32, %arg1: i32, %arg2: memref<512x128xbf16, #tpu.memory_space<vmem>>, %arg3: memref<128x128xbf16, #tpu.memory_space<vmem>>, %arg4: memref<8x128xf32, #tpu.memory_space<vmem>>, %arg5: memref<512x128xbf16, #tpu.memory_space<vmem>>) attributes {dimension_semantics = [#tpu.dimension_semantics<parallel>, #tpu.dimension_semantics<parallel>], iteration_bounds = array<i64: 1, 1>, scalar_prefetch = 0 : i64, scratch_operands = 0 : i64, tpu.core_type = #tpu.core_type<tc>, window_params = [{transform_indices = @transform_0, window_bounds = array<i64: 512, 128>}, {transform_indices = @transform_1, window_bounds = array<i64: 128, 128>}, {transform_indices = @transform_2, window_bounds = array<i64: 8, 128>}, {transform_indices = @transform_3, window_bounds = array<i64: 512, 128>}]} {
    %c0 = arith.constant 0 : index
    %c0_0 = arith.constant 0 : index
    %0 = vector.load %arg2[%c0, %c0_0] : memref<512x128xbf16, #tpu.memory_space<vmem>>, vector<512x128xbf16>
    %c0_1 = arith.constant 0 : index
    %c0_2 = arith.constant 0 : index
    %1 = vector.load %arg3[%c0_1, %c0_2] : memref<128x128xbf16, #tpu.memory_space<vmem>>, vector<128x128xbf16>
    %cst = arith.constant dense<0.000000e+00> : vector<512x128xf32>
    %2 = tpu.matmul %0, %1, %cst {dimension_numbers = #tpu.dot_dimension_numbers<[1], [0], [0], [1], [0, 0, 1, 1], [], []>} : vector<512x128xbf16>, vector<128x128xbf16>, vector<512x128xf32> -> vector<512x128xf32>
    %c0_3 = arith.constant 0 : index
    %c0_4 = arith.constant 0 : index
    %3 = vector.load %arg4[%c0_3, %c0_4] : memref<8x128xf32, #tpu.memory_space<vmem>>, vector<1x128xf32>
    %4 = vector.broadcast %3 : vector<1x128xf32> to vector<512x128xf32>
    %5 = arith.mulf %2, %4 : vector<512x128xf32>
    %c1 = arith.constant 1 : index
    %c0_5 = arith.constant 0 : index
    %6 = vector.load %arg4[%c1, %c0_5] : memref<8x128xf32, #tpu.memory_space<vmem>>, vector<1x128xf32>
    %7 = vector.broadcast %6 : vector<1x128xf32> to vector<512x128xf32>
    %8 = arith.addf %5, %7 : vector<512x128xf32>
    %cst_6 = arith.constant 0.000000e+00 : f32
    %9 = vector.broadcast %cst_6 : f32 to vector<512x128xf32>
    %10 = arith.cmpf oge, %8, %9 : vector<512x128xf32>
    %c2 = arith.constant 2 : index
    %c0_7 = arith.constant 0 : index
    %11 = vector.load %arg4[%c2, %c0_7] : memref<8x128xf32, #tpu.memory_space<vmem>>, vector<1x128xf32>
    %12 = vector.broadcast %11 : vector<1x128xf32> to vector<512x128xf32>
    %13 = arith.mulf %12, %8 : vector<512x128xf32>
    %14 = arith.select %10, %8, %13 : vector<512x128xi1>, vector<512x128xf32>
    %15 = arith.truncf %14 : vector<512x128xf32> to vector<512x128xbf16>
    %c0_8 = arith.constant 0 : index
    %c0_9 = arith.constant 0 : index
    %16 = vector.load %arg5[%c0_8, %c0_9] : memref<512x128xbf16, #tpu.memory_space<vmem>>, vector<512x128xbf16>
    tpu.vector_store %arg5[%c0_8, %c0_9], %15 {strides = array<i32>} : memref<512x128xbf16, #tpu.memory_space<vmem>>, vector<512x128xbf16>,
    return
  }
  func.func @transform_0(%arg0: i32, %arg1: i32) -> (i32, i32) {
    %c0_i32 = arith.constant 0 : i32
    %c0_i32_0 = arith.constant 0 : i32
    return %arg0, %c0_i32 : i32, i32
  }
  func.func @transform_1(%arg0: i32, %arg1: i32) -> (i32, i32) {
    %c0_i32 = arith.constant 0 : i32
    %c0_i32_0 = arith.constant 0 : i32
    return %c0_i32, %arg1 : i32, i32
  }
  func.func @transform_2(%arg0: i32, %arg1: i32) -> (i32, i32) {
    %c0_i32 = arith.constant 0 : i32
    %c0_i32_0 = arith.constant 0 : i32
    return %c0_i32, %arg1 : i32, i32
  }
  func.func @transform_3(%arg0: i32, %arg1: i32) -> (i32, i32) {
    %c0_i32 = arith.constant 0 : i32
    return %arg0, %arg1 : i32, i32
  }
}

module attributes {stable_mosaic.version = 11 : i64} {
  func.func @_matmul_bn_act_kernel(%arg0: i32, %arg1: i32, %arg2: memref<128x128xbf16, #tpu.memory_space<vmem>>, %arg3: memref<128x128xbf16, #tpu.memory_space<vmem>>, %arg4: memref<8x128xf32, #tpu.memory_space<vmem>>, %arg5: memref<128x128xbf16, #tpu.memory_space<vmem>>) attributes {dimension_semantics = [#tpu.dimension_semantics<parallel>, #tpu.dimension_semantics<parallel>], iteration_bounds = array<i64: 1, 1>, scalar_prefetch = 0 : i64, scratch_operands = 0 : i64, tpu.core_type = #tpu.core_type<tc>, window_params = [{transform_indices = @transform_0, window_bounds = array<i64: 128, 128>}, {transform_indices = @transform_1, window_bounds = array<i64: 128, 128>}, {transform_indices = @transform_2, window_bounds = array<i64: 8, 128>}, {transform_indices = @transform_3, window_bounds = array<i64: 128, 128>}]} {
    %c0 = arith.constant 0 : index
    %c0_0 = arith.constant 0 : index
    %0 = vector.load %arg2[%c0, %c0_0] : memref<128x128xbf16, #tpu.memory_space<vmem>>, vector<128x128xbf16>
    %c0_1 = arith.constant 0 : index
    %c0_2 = arith.constant 0 : index
    %1 = vector.load %arg3[%c0_1, %c0_2] : memref<128x128xbf16, #tpu.memory_space<vmem>>, vector<128x128xbf16>
    %cst = arith.constant dense<0.000000e+00> : vector<128x128xf32>
    %2 = tpu.matmul %0, %1, %cst {dimension_numbers = #tpu.dot_dimension_numbers<[1], [0], [0], [1], [0, 0, 1, 1], [], []>} : vector<128x128xbf16>, vector<128x128xbf16>, vector<128x128xf32> -> vector<128x128xf32>
    %c0_3 = arith.constant 0 : index
    %c0_4 = arith.constant 0 : index
    %3 = vector.load %arg4[%c0_3, %c0_4] : memref<8x128xf32, #tpu.memory_space<vmem>>, vector<1x128xf32>
    %4 = vector.broadcast %3 : vector<1x128xf32> to vector<128x128xf32>
    %5 = arith.mulf %2, %4 : vector<128x128xf32>
    %c1 = arith.constant 1 : index
    %c0_5 = arith.constant 0 : index
    %6 = vector.load %arg4[%c1, %c0_5] : memref<8x128xf32, #tpu.memory_space<vmem>>, vector<1x128xf32>
    %7 = vector.broadcast %6 : vector<1x128xf32> to vector<128x128xf32>
    %8 = arith.addf %5, %7 : vector<128x128xf32>
    %cst_6 = arith.constant 0.000000e+00 : f32
    %9 = vector.broadcast %cst_6 : f32 to vector<128x128xf32>
    %10 = arith.cmpf oge, %8, %9 : vector<128x128xf32>
    %c2 = arith.constant 2 : index
    %c0_7 = arith.constant 0 : index
    %11 = vector.load %arg4[%c2, %c0_7] : memref<8x128xf32, #tpu.memory_space<vmem>>, vector<1x128xf32>
    %12 = vector.broadcast %11 : vector<1x128xf32> to vector<128x128xf32>
    %13 = arith.mulf %12, %8 : vector<128x128xf32>
    %14 = arith.select %10, %8, %13 : vector<128x128xi1>, vector<128x128xf32>
    %15 = arith.truncf %14 : vector<128x128xf32> to vector<128x128xbf16>
    %c0_8 = arith.constant 0 : index
    %c0_9 = arith.constant 0 : index
    %16 = vector.load %arg5[%c0_8, %c0_9] : memref<128x128xbf16, #tpu.memory_space<vmem>>, vector<128x128xbf16>
    tpu.vector_store %arg5[%c0_8, %c0_9], %15 {strides = array<i32>} : memref<128x128xbf16, #tpu.memory_space<vmem>>, vector<128x128xbf16>,
    return
  }
  func.func @transform_0(%arg0: i32, %arg1: i32) -> (i32, i32) {
    %c0_i32 = arith.constant 0 : i32
    %c0_i32_0 = arith.constant 0 : i32
    return %arg0, %c0_i32 : i32, i32
  }
  func.func @transform_1(%arg0: i32, %arg1: i32) -> (i32, i32) {
    %c0_i32 = arith.constant 0 : i32
    %c0_i32_0 = arith.constant 0 : i32
    return %c0_i32, %arg1 : i32, i32
  }
  func.func @transform_2(%arg0: i32, %arg1: i32) -> (i32, i32) {
    %c0_i32 = arith.constant 0 : i32
    %c0_i32_0 = arith.constant 0 : i32
    return %c0_i32, %arg1 : i32, i32
  }
  func.func @transform_3(%arg0: i32, %arg1: i32) -> (i32, i32) {
    %c0_i32 = arith.constant 0 : i32
    return %arg0, %arg1 : i32, i32
  }
}

module attributes {stable_mosaic.version = 11 : i64} {
  func.func @_matmul_bn_act_res_kernel(%arg0: i32, %arg1: i32, %arg2: memref<128x128xbf16, #tpu.memory_space<vmem>>, %arg3: memref<128x128xbf16, #tpu.memory_space<vmem>>, %arg4: memref<8x128xf32, #tpu.memory_space<vmem>>, %arg5: memref<128x128xbf16, #tpu.memory_space<vmem>>, %arg6: memref<128x128xbf16, #tpu.memory_space<vmem>>) attributes {dimension_semantics = [#tpu.dimension_semantics<parallel>, #tpu.dimension_semantics<parallel>], iteration_bounds = array<i64: 1, 1>, scalar_prefetch = 0 : i64, scratch_operands = 0 : i64, tpu.core_type = #tpu.core_type<tc>, window_params = [{transform_indices = @transform_0, window_bounds = array<i64: 128, 128>}, {transform_indices = @transform_1, window_bounds = array<i64: 128, 128>}, {transform_indices = @transform_2, window_bounds = array<i64: 8, 128>}, {transform_indices = @transform_3, window_bounds = array<i64: 128, 128>}, {transform_indices = @transform_4, window_bounds = array<i64: 128, 128>}]} {
    %c0 = arith.constant 0 : index
    %c0_0 = arith.constant 0 : index
    %0 = vector.load %arg2[%c0, %c0_0] : memref<128x128xbf16, #tpu.memory_space<vmem>>, vector<128x128xbf16>
    %c0_1 = arith.constant 0 : index
    %c0_2 = arith.constant 0 : index
    %1 = vector.load %arg3[%c0_1, %c0_2] : memref<128x128xbf16, #tpu.memory_space<vmem>>, vector<128x128xbf16>
    %cst = arith.constant dense<0.000000e+00> : vector<128x128xf32>
    %2 = tpu.matmul %0, %1, %cst {dimension_numbers = #tpu.dot_dimension_numbers<[1], [0], [0], [1], [0, 0, 1, 1], [], []>} : vector<128x128xbf16>, vector<128x128xbf16>, vector<128x128xf32> -> vector<128x128xf32>
    %c0_3 = arith.constant 0 : index
    %c0_4 = arith.constant 0 : index
    %3 = vector.load %arg4[%c0_3, %c0_4] : memref<8x128xf32, #tpu.memory_space<vmem>>, vector<1x128xf32>
    %4 = vector.broadcast %3 : vector<1x128xf32> to vector<128x128xf32>
    %5 = arith.mulf %2, %4 : vector<128x128xf32>
    %c1 = arith.constant 1 : index
    %c0_5 = arith.constant 0 : index
    %6 = vector.load %arg4[%c1, %c0_5] : memref<8x128xf32, #tpu.memory_space<vmem>>, vector<1x128xf32>
    %7 = vector.broadcast %6 : vector<1x128xf32> to vector<128x128xf32>
    %8 = arith.addf %5, %7 : vector<128x128xf32>
    %cst_6 = arith.constant 0.000000e+00 : f32
    %9 = vector.broadcast %cst_6 : f32 to vector<128x128xf32>
    %10 = arith.cmpf oge, %8, %9 : vector<128x128xf32>
    %c2 = arith.constant 2 : index
    %c0_7 = arith.constant 0 : index
    %11 = vector.load %arg4[%c2, %c0_7] : memref<8x128xf32, #tpu.memory_space<vmem>>, vector<1x128xf32>
    %12 = vector.broadcast %11 : vector<1x128xf32> to vector<128x128xf32>
    %13 = arith.mulf %12, %8 : vector<128x128xf32>
    %14 = arith.select %10, %8, %13 : vector<128x128xi1>, vector<128x128xf32>
    %c0_8 = arith.constant 0 : index
    %c0_9 = arith.constant 0 : index
    %15 = vector.load %arg5[%c0_8, %c0_9] : memref<128x128xbf16, #tpu.memory_space<vmem>>, vector<128x128xbf16>
    %16 = arith.extf %15 : vector<128x128xbf16> to vector<128x128xf32>
    %17 = arith.addf %14, %16 : vector<128x128xf32>
    %cst_10 = arith.constant 0.000000e+00 : f32
    %18 = vector.broadcast %cst_10 : f32 to vector<128x128xf32>
    %19 = arith.cmpf oge, %17, %18 : vector<128x128xf32>
    %c3 = arith.constant 3 : index
    %c0_11 = arith.constant 0 : index
    %20 = vector.load %arg4[%c3, %c0_11] : memref<8x128xf32, #tpu.memory_space<vmem>>, vector<1x128xf32>
    %21 = vector.broadcast %20 : vector<1x128xf32> to vector<128x128xf32>
    %22 = arith.mulf %21, %17 : vector<128x128xf32>
    %23 = arith.select %19, %17, %22 : vector<128x128xi1>, vector<128x128xf32>
    %24 = arith.truncf %23 : vector<128x128xf32> to vector<128x128xbf16>
    %c0_12 = arith.constant 0 : index
    %c0_13 = arith.constant 0 : index
    %25 = vector.load %arg6[%c0_12, %c0_13] : memref<128x128xbf16, #tpu.memory_space<vmem>>, vector<128x128xbf16>
    tpu.vector_store %arg6[%c0_12, %c0_13], %24 {strides = array<i32>} : memref<128x128xbf16, #tpu.memory_space<vmem>>, vector<128x128xbf16>,
    return
  }
  func.func @transform_0(%arg0: i32, %arg1: i32) -> (i32, i32) {
    %c0_i32 = arith.constant 0 : i32
    %c0_i32_0 = arith.constant 0 : i32
    return %arg0, %c0_i32 : i32, i32
  }
  func.func @transform_1(%arg0: i32, %arg1: i32) -> (i32, i32) {
    %c0_i32 = arith.constant 0 : i32
    %c0_i32_0 = arith.constant 0 : i32
    return %c0_i32, %arg1 : i32, i32
  }
  func.func @transform_2(%arg0: i32, %arg1: i32) -> (i32, i32) {
    %c0_i32 = arith.constant 0 : i32
    %c0_i32_0 = arith.constant 0 : i32
    return %c0_i32, %arg1 : i32, i32
  }
  func.func @transform_3(%arg0: i32, %arg1: i32) -> (i32, i32) {
    %c0_i32 = arith.constant 0 : i32
    return %arg0, %arg1 : i32, i32
  }
  func.func @transform_4(%arg0: i32, %arg1: i32) -> (i32, i32) {
    %c0_i32 = arith.constant 0 : i32
    return %arg0, %arg1 : i32, i32
  }
}

module attributes {stable_mosaic.version = 11 : i64} {
  func.func @_maxpool9_kernel(%arg0: i32, %arg1: memref<128x16xbf16, #tpu.memory_space<vmem>>, %arg2: memref<128x16xbf16, #tpu.memory_space<vmem>>, %arg3: memref<128x16xbf16, #tpu.memory_space<vmem>>, %arg4: memref<128x16xbf16, #tpu.memory_space<vmem>>, %arg5: memref<128x16xbf16, #tpu.memory_space<vmem>>, %arg6: memref<128x16xbf16, #tpu.memory_space<vmem>>, %arg7: memref<128x16xbf16, #tpu.memory_space<vmem>>, %arg8: memref<128x16xbf16, #tpu.memory_space<vmem>>, %arg9: memref<128x16xbf16, #tpu.memory_space<vmem>>, %arg10: memref<8x16xf32, #tpu.memory_space<vmem>>, %arg11: memref<128x64xbf16, #tpu.memory_space<vmem>>) attributes {dimension_semantics = [#tpu.dimension_semantics<parallel>], iteration_bounds = array<i64: 1>, scalar_prefetch = 0 : i64, scratch_operands = 0 : i64, tpu.core_type = #tpu.core_type<tc>, window_params = [{transform_indices = @transform_0, window_bounds = array<i64: 128, 16>}, {transform_indices = @transform_1, window_bounds = array<i64: 128, 16>}, {transform_indices = @transform_2, window_bounds = array<i64: 128, 16>}, {transform_indices = @transform_3, window_bounds = array<i64: 128, 16>}, {transform_indices = @transform_4, window_bounds = array<i64: 128, 16>}, {transform_indices = @transform_5, window_bounds = array<i64: 128, 16>}, {transform_indices = @transform_6, window_bounds = array<i64: 128, 16>}, {transform_indices = @transform_7, window_bounds = array<i64: 128, 16>}, {transform_indices = @transform_8, window_bounds = array<i64: 128, 16>}, {pipeline_mode = #tpu.pipeline_mode<synchronous>, transform_indices = @transform_9, window_bounds = array<i64: 8, 16>}, {transform_indices = @transform_10, window_bounds = array<i64: 128, 64>}]} {
    %c0 = arith.constant 0 : index
    %c0_0 = arith.constant 0 : index
    %0 = vector.load %arg1[%c0, %c0_0] : memref<128x16xbf16, #tpu.memory_space<vmem>>, vector<128x16xbf16>
    %c0_1 = arith.constant 0 : index
    %c0_2 = arith.constant 0 : index
    %1 = vector.load %arg2[%c0_1, %c0_2] : memref<128x16xbf16, #tpu.memory_space<vmem>>, vector<128x16xbf16>
    %2 = arith.maximumf %0, %1 : vector<128x16xbf16>
    %c0_3 = arith.constant 0 : index
    %c0_4 = arith.constant 0 : index
    %3 = vector.load %arg3[%c0_3, %c0_4] : memref<128x16xbf16, #tpu.memory_space<vmem>>, vector<128x16xbf16>
    %4 = arith.maximumf %2, %3 : vector<128x16xbf16>
    %c0_5 = arith.constant 0 : index
    %c0_6 = arith.constant 0 : index
    %5 = vector.load %arg4[%c0_5, %c0_6] : memref<128x16xbf16, #tpu.memory_space<vmem>>, vector<128x16xbf16>
    %6 = arith.maximumf %4, %5 : vector<128x16xbf16>
    %c0_7 = arith.constant 0 : index
    %c0_8 = arith.constant 0 : index
    %7 = vector.load %arg5[%c0_7, %c0_8] : memref<128x16xbf16, #tpu.memory_space<vmem>>, vector<128x16xbf16>
    %8 = arith.maximumf %6, %7 : vector<128x16xbf16>
    %c0_9 = arith.constant 0 : index
    %c0_10 = arith.constant 0 : index
    %9 = vector.load %arg6[%c0_9, %c0_10] : memref<128x16xbf16, #tpu.memory_space<vmem>>, vector<128x16xbf16>
    %10 = arith.maximumf %8, %9 : vector<128x16xbf16>
    %c0_11 = arith.constant 0 : index
    %c0_12 = arith.constant 0 : index
    %11 = vector.load %arg7[%c0_11, %c0_12] : memref<128x16xbf16, #tpu.memory_space<vmem>>, vector<128x16xbf16>
    %12 = arith.maximumf %10, %11 : vector<128x16xbf16>
    %c0_13 = arith.constant 0 : index
    %c0_14 = arith.constant 0 : index
    %13 = vector.load %arg8[%c0_13, %c0_14] : memref<128x16xbf16, #tpu.memory_space<vmem>>, vector<128x16xbf16>
    %14 = arith.maximumf %12, %13 : vector<128x16xbf16>
    %c0_15 = arith.constant 0 : index
    %c0_16 = arith.constant 0 : index
    %15 = vector.load %arg9[%c0_15, %c0_16] : memref<128x16xbf16, #tpu.memory_space<vmem>>, vector<128x16xbf16>
    %16 = arith.maximumf %14, %15 : vector<128x16xbf16>
    %17 = arith.extf %16 : vector<128x16xbf16> to vector<128x16xf32>
    %c0_17 = arith.constant 0 : index
    %c0_18 = arith.constant 0 : index
    %18 = vector.load %arg10[%c0_17, %c0_18] : memref<8x16xf32, #tpu.memory_space<vmem>>, vector<1x16xf32>
    %19 = vector.broadcast %18 : vector<1x16xf32> to vector<128x16xf32>
    %20 = arith.mulf %17, %19 : vector<128x16xf32>
    %c1 = arith.constant 1 : index
    %c0_19 = arith.constant 0 : index
    %21 = vector.load %arg10[%c1, %c0_19] : memref<8x16xf32, #tpu.memory_space<vmem>>, vector<1x16xf32>
    %22 = vector.broadcast %21 : vector<1x16xf32> to vector<128x16xf32>
    %23 = arith.addf %20, %22 : vector<128x16xf32>
    %cst = arith.constant 0.000000e+00 : f32
    %24 = vector.broadcast %cst : f32 to vector<128x16xf32>
    %25 = arith.cmpf oge, %23, %24 : vector<128x16xf32>
    %c2 = arith.constant 2 : index
    %c0_20 = arith.constant 0 : index
    %26 = vector.load %arg10[%c2, %c0_20] : memref<8x16xf32, #tpu.memory_space<vmem>>, vector<1x16xf32>
    %27 = vector.broadcast %26 : vector<1x16xf32> to vector<128x16xf32>
    %28 = arith.mulf %27, %23 : vector<128x16xf32>
    %29 = arith.select %25, %23, %28 : vector<128x16xi1>, vector<128x16xf32>
    %30 = arith.truncf %29 : vector<128x16xf32> to vector<128x16xbf16>
    %cst_21 = arith.constant 0.000000e+00 : bf16
    %31 = vector.broadcast %cst_21 : bf16 to vector<128x64xbf16>
    %c0_22 = arith.constant 0 : index
    %c0_23 = arith.constant 0 : index
    %32 = vector.load %arg11[%c0_22, %c0_23] : memref<128x64xbf16, #tpu.memory_space<vmem>>, vector<128x64xbf16>
    tpu.vector_store %arg11[%c0_22, %c0_23], %31 {strides = array<i32>} : memref<128x64xbf16, #tpu.memory_space<vmem>>, vector<128x64xbf16>,
    %c0_24 = arith.constant 0 : index
    %c0_25 = arith.constant 0 : index
    %33 = vector.load %arg11[%c0_24, %c0_25] : memref<128x64xbf16, #tpu.memory_space<vmem>>, vector<128x16xbf16>
    tpu.vector_store %arg11[%c0_24, %c0_25], %30 {strides = array<i32>} : memref<128x64xbf16, #tpu.memory_space<vmem>>, vector<128x16xbf16>,
    return
  }
  func.func @transform_0(%arg0: i32) -> (i32, i32) {
    %c0_i32 = arith.constant 0 : i32
    %c0_i32_0 = arith.constant 0 : i32
    return %arg0, %c0_i32 : i32, i32
  }
  func.func @transform_1(%arg0: i32) -> (i32, i32) {
    %c0_i32 = arith.constant 0 : i32
    %c0_i32_0 = arith.constant 0 : i32
    return %arg0, %c0_i32 : i32, i32
  }
  func.func @transform_2(%arg0: i32) -> (i32, i32) {
    %c0_i32 = arith.constant 0 : i32
    %c0_i32_0 = arith.constant 0 : i32
    return %arg0, %c0_i32 : i32, i32
  }
  func.func @transform_3(%arg0: i32) -> (i32, i32) {
    %c0_i32 = arith.constant 0 : i32
    %c0_i32_0 = arith.constant 0 : i32
    return %arg0, %c0_i32 : i32, i32
  }
  func.func @transform_4(%arg0: i32) -> (i32, i32) {
    %c0_i32 = arith.constant 0 : i32
    %c0_i32_0 = arith.constant 0 : i32
    return %arg0, %c0_i32 : i32, i32
  }
  func.func @transform_5(%arg0: i32) -> (i32, i32) {
    %c0_i32 = arith.constant 0 : i32
    %c0_i32_0 = arith.constant 0 : i32
    return %arg0, %c0_i32 : i32, i32
  }
  func.func @transform_6(%arg0: i32) -> (i32, i32) {
    %c0_i32 = arith.constant 0 : i32
    %c0_i32_0 = arith.constant 0 : i32
    return %arg0, %c0_i32 : i32, i32
  }
  func.func @transform_7(%arg0: i32) -> (i32, i32) {
    %c0_i32 = arith.constant 0 : i32
    %c0_i32_0 = arith.constant 0 : i32
    return %arg0, %c0_i32 : i32, i32
  }
  func.func @transform_8(%arg0: i32) -> (i32, i32) {
    %c0_i32 = arith.constant 0 : i32
    %c0_i32_0 = arith.constant 0 : i32
    return %arg0, %c0_i32 : i32, i32
  }
  func.func @transform_9(%arg0: i32) -> (i32, i32) {
    %c0_i32 = arith.constant 0 : i32
    %c0_i32_0 = arith.constant 0 : i32
    %c0_i32_1 = arith.constant 0 : i32
    return %c0_i32, %c0_i32_0 : i32, i32
  }
  func.func @transform_10(%arg0: i32) -> (i32, i32) {
    %c0_i32 = arith.constant 0 : i32
    %c0_i32_0 = arith.constant 0 : i32
    return %arg0, %c0_i32 : i32, i32
  }
}

module attributes {stable_mosaic.version = 11 : i64} {
  func.func @_matmul_bn_act_kernel(%arg0: i32, %arg1: i32, %arg2: memref<128x256xbf16, #tpu.memory_space<vmem>>, %arg3: memref<256x128xbf16, #tpu.memory_space<vmem>>, %arg4: memref<8x128xf32, #tpu.memory_space<vmem>>, %arg5: memref<128x128xbf16, #tpu.memory_space<vmem>>) attributes {dimension_semantics = [#tpu.dimension_semantics<parallel>, #tpu.dimension_semantics<parallel>], iteration_bounds = array<i64: 1, 1>, scalar_prefetch = 0 : i64, scratch_operands = 0 : i64, tpu.core_type = #tpu.core_type<tc>, window_params = [{transform_indices = @transform_0, window_bounds = array<i64: 128, 256>}, {transform_indices = @transform_1, window_bounds = array<i64: 256, 128>}, {transform_indices = @transform_2, window_bounds = array<i64: 8, 128>}, {transform_indices = @transform_3, window_bounds = array<i64: 128, 128>}]} {
    %c0 = arith.constant 0 : index
    %c0_0 = arith.constant 0 : index
    %0 = vector.load %arg2[%c0, %c0_0] : memref<128x256xbf16, #tpu.memory_space<vmem>>, vector<128x256xbf16>
    %c0_1 = arith.constant 0 : index
    %c0_2 = arith.constant 0 : index
    %1 = vector.load %arg3[%c0_1, %c0_2] : memref<256x128xbf16, #tpu.memory_space<vmem>>, vector<256x128xbf16>
    %cst = arith.constant dense<0.000000e+00> : vector<128x128xf32>
    %2 = tpu.matmul %0, %1, %cst {dimension_numbers = #tpu.dot_dimension_numbers<[1], [0], [0], [1], [0, 0, 1, 1], [], []>} : vector<128x256xbf16>, vector<256x128xbf16>, vector<128x128xf32> -> vector<128x128xf32>
    %c0_3 = arith.constant 0 : index
    %c0_4 = arith.constant 0 : index
    %3 = vector.load %arg4[%c0_3, %c0_4] : memref<8x128xf32, #tpu.memory_space<vmem>>, vector<1x128xf32>
    %4 = vector.broadcast %3 : vector<1x128xf32> to vector<128x128xf32>
    %5 = arith.mulf %2, %4 : vector<128x128xf32>
    %c1 = arith.constant 1 : index
    %c0_5 = arith.constant 0 : index
    %6 = vector.load %arg4[%c1, %c0_5] : memref<8x128xf32, #tpu.memory_space<vmem>>, vector<1x128xf32>
    %7 = vector.broadcast %6 : vector<1x128xf32> to vector<128x128xf32>
    %8 = arith.addf %5, %7 : vector<128x128xf32>
    %cst_6 = arith.constant 0.000000e+00 : f32
    %9 = vector.broadcast %cst_6 : f32 to vector<128x128xf32>
    %10 = arith.cmpf oge, %8, %9 : vector<128x128xf32>
    %c2 = arith.constant 2 : index
    %c0_7 = arith.constant 0 : index
    %11 = vector.load %arg4[%c2, %c0_7] : memref<8x128xf32, #tpu.memory_space<vmem>>, vector<1x128xf32>
    %12 = vector.broadcast %11 : vector<1x128xf32> to vector<128x128xf32>
    %13 = arith.mulf %12, %8 : vector<128x128xf32>
    %14 = arith.select %10, %8, %13 : vector<128x128xi1>, vector<128x128xf32>
    %15 = arith.truncf %14 : vector<128x128xf32> to vector<128x128xbf16>
    %c0_8 = arith.constant 0 : index
    %c0_9 = arith.constant 0 : index
    %16 = vector.load %arg5[%c0_8, %c0_9] : memref<128x128xbf16, #tpu.memory_space<vmem>>, vector<128x128xbf16>
    tpu.vector_store %arg5[%c0_8, %c0_9], %15 {strides = array<i32>} : memref<128x128xbf16, #tpu.memory_space<vmem>>, vector<128x128xbf16>,
    return
  }
  func.func @transform_0(%arg0: i32, %arg1: i32) -> (i32, i32) {
    %c0_i32 = arith.constant 0 : i32
    %c0_i32_0 = arith.constant 0 : i32
    return %arg0, %c0_i32 : i32, i32
  }
  func.func @transform_1(%arg0: i32, %arg1: i32) -> (i32, i32) {
    %c0_i32 = arith.constant 0 : i32
    %c0_i32_0 = arith.constant 0 : i32
    return %c0_i32, %arg1 : i32, i32
  }
  func.func @transform_2(%arg0: i32, %arg1: i32) -> (i32, i32) {
    %c0_i32 = arith.constant 0 : i32
    %c0_i32_0 = arith.constant 0 : i32
    return %c0_i32, %arg1 : i32, i32
  }
  func.func @transform_3(%arg0: i32, %arg1: i32) -> (i32, i32) {
    %c0_i32 = arith.constant 0 : i32
    return %arg0, %arg1 : i32, i32
  }
}

module attributes {stable_mosaic.version = 11 : i64} {
  func.func @_matmul_bn_act_kernel(%arg0: i32, %arg1: i32, %arg2: memref<32x256xbf16, #tpu.memory_space<vmem>>, %arg3: memref<256x128xbf16, #tpu.memory_space<vmem>>, %arg4: memref<8x128xf32, #tpu.memory_space<vmem>>, %arg5: memref<32x128xbf16, #tpu.memory_space<vmem>>) attributes {dimension_semantics = [#tpu.dimension_semantics<parallel>, #tpu.dimension_semantics<parallel>], iteration_bounds = array<i64: 1, 1>, scalar_prefetch = 0 : i64, scratch_operands = 0 : i64, tpu.core_type = #tpu.core_type<tc>, window_params = [{transform_indices = @transform_0, window_bounds = array<i64: 32, 256>}, {transform_indices = @transform_1, window_bounds = array<i64: 256, 128>}, {transform_indices = @transform_2, window_bounds = array<i64: 8, 128>}, {transform_indices = @transform_3, window_bounds = array<i64: 32, 128>}]} {
    %c0 = arith.constant 0 : index
    %c0_0 = arith.constant 0 : index
    %0 = vector.load %arg2[%c0, %c0_0] : memref<32x256xbf16, #tpu.memory_space<vmem>>, vector<32x256xbf16>
    %c0_1 = arith.constant 0 : index
    %c0_2 = arith.constant 0 : index
    %1 = vector.load %arg3[%c0_1, %c0_2] : memref<256x128xbf16, #tpu.memory_space<vmem>>, vector<256x128xbf16>
    %cst = arith.constant dense<0.000000e+00> : vector<32x128xf32>
    %2 = tpu.matmul %0, %1, %cst {dimension_numbers = #tpu.dot_dimension_numbers<[1], [0], [0], [1], [0, 0, 1, 1], [], []>} : vector<32x256xbf16>, vector<256x128xbf16>, vector<32x128xf32> -> vector<32x128xf32>
    %c0_3 = arith.constant 0 : index
    %c0_4 = arith.constant 0 : index
    %3 = vector.load %arg4[%c0_3, %c0_4] : memref<8x128xf32, #tpu.memory_space<vmem>>, vector<1x128xf32>
    %4 = vector.broadcast %3 : vector<1x128xf32> to vector<32x128xf32>
    %5 = arith.mulf %2, %4 : vector<32x128xf32>
    %c1 = arith.constant 1 : index
    %c0_5 = arith.constant 0 : index
    %6 = vector.load %arg4[%c1, %c0_5] : memref<8x128xf32, #tpu.memory_space<vmem>>, vector<1x128xf32>
    %7 = vector.broadcast %6 : vector<1x128xf32> to vector<32x128xf32>
    %8 = arith.addf %5, %7 : vector<32x128xf32>
    %cst_6 = arith.constant 0.000000e+00 : f32
    %9 = vector.broadcast %cst_6 : f32 to vector<32x128xf32>
    %10 = arith.cmpf oge, %8, %9 : vector<32x128xf32>
    %c2 = arith.constant 2 : index
    %c0_7 = arith.constant 0 : index
    %11 = vector.load %arg4[%c2, %c0_7] : memref<8x128xf32, #tpu.memory_space<vmem>>, vector<1x128xf32>
    %12 = vector.broadcast %11 : vector<1x128xf32> to vector<32x128xf32>
    %13 = arith.mulf %12, %8 : vector<32x128xf32>
    %14 = arith.select %10, %8, %13 : vector<32x128xi1>, vector<32x128xf32>
    %15 = arith.truncf %14 : vector<32x128xf32> to vector<32x128xbf16>
    %c0_8 = arith.constant 0 : index
    %c0_9 = arith.constant 0 : index
    %16 = vector.load %arg5[%c0_8, %c0_9] : memref<32x128xbf16, #tpu.memory_space<vmem>>, vector<32x128xbf16>
    tpu.vector_store %arg5[%c0_8, %c0_9], %15 {strides = array<i32>} : memref<32x128xbf16, #tpu.memory_space<vmem>>, vector<32x128xbf16>,
    return
  }
  func.func @transform_0(%arg0: i32, %arg1: i32) -> (i32, i32) {
    %c0_i32 = arith.constant 0 : i32
    %c0_i32_0 = arith.constant 0 : i32
    return %arg0, %c0_i32 : i32, i32
  }
  func.func @transform_1(%arg0: i32, %arg1: i32) -> (i32, i32) {
    %c0_i32 = arith.constant 0 : i32
    %c0_i32_0 = arith.constant 0 : i32
    return %c0_i32, %arg1 : i32, i32
  }
  func.func @transform_2(%arg0: i32, %arg1: i32) -> (i32, i32) {
    %c0_i32 = arith.constant 0 : i32
    %c0_i32_0 = arith.constant 0 : i32
    return %c0_i32, %arg1 : i32, i32
  }
  func.func @transform_3(%arg0: i32, %arg1: i32) -> (i32, i32) {
    %c0_i32 = arith.constant 0 : i32
    return %arg0, %arg1 : i32, i32
  }
}

module attributes {stable_mosaic.version = 11 : i64} {
  func.func @_maxpool9_kernel(%arg0: i32, %arg1: memref<32x64xbf16, #tpu.memory_space<vmem>>, %arg2: memref<32x64xbf16, #tpu.memory_space<vmem>>, %arg3: memref<32x64xbf16, #tpu.memory_space<vmem>>, %arg4: memref<32x64xbf16, #tpu.memory_space<vmem>>, %arg5: memref<32x64xbf16, #tpu.memory_space<vmem>>, %arg6: memref<32x64xbf16, #tpu.memory_space<vmem>>, %arg7: memref<32x64xbf16, #tpu.memory_space<vmem>>, %arg8: memref<32x64xbf16, #tpu.memory_space<vmem>>, %arg9: memref<32x64xbf16, #tpu.memory_space<vmem>>, %arg10: memref<8x64xf32, #tpu.memory_space<vmem>>, %arg11: memref<32x128xbf16, #tpu.memory_space<vmem>>) attributes {dimension_semantics = [#tpu.dimension_semantics<parallel>], iteration_bounds = array<i64: 1>, scalar_prefetch = 0 : i64, scratch_operands = 0 : i64, tpu.core_type = #tpu.core_type<tc>, window_params = [{transform_indices = @transform_0, window_bounds = array<i64: 32, 64>}, {transform_indices = @transform_1, window_bounds = array<i64: 32, 64>}, {transform_indices = @transform_2, window_bounds = array<i64: 32, 64>}, {transform_indices = @transform_3, window_bounds = array<i64: 32, 64>}, {transform_indices = @transform_4, window_bounds = array<i64: 32, 64>}, {transform_indices = @transform_5, window_bounds = array<i64: 32, 64>}, {transform_indices = @transform_6, window_bounds = array<i64: 32, 64>}, {transform_indices = @transform_7, window_bounds = array<i64: 32, 64>}, {transform_indices = @transform_8, window_bounds = array<i64: 32, 64>}, {pipeline_mode = #tpu.pipeline_mode<synchronous>, transform_indices = @transform_9, window_bounds = array<i64: 8, 64>}, {transform_indices = @transform_10, window_bounds = array<i64: 32, 128>}]} {
    %c0 = arith.constant 0 : index
    %c0_0 = arith.constant 0 : index
    %0 = vector.load %arg1[%c0, %c0_0] : memref<32x64xbf16, #tpu.memory_space<vmem>>, vector<32x64xbf16>
    %c0_1 = arith.constant 0 : index
    %c0_2 = arith.constant 0 : index
    %1 = vector.load %arg2[%c0_1, %c0_2] : memref<32x64xbf16, #tpu.memory_space<vmem>>, vector<32x64xbf16>
    %2 = arith.maximumf %0, %1 : vector<32x64xbf16>
    %c0_3 = arith.constant 0 : index
    %c0_4 = arith.constant 0 : index
    %3 = vector.load %arg3[%c0_3, %c0_4] : memref<32x64xbf16, #tpu.memory_space<vmem>>, vector<32x64xbf16>
    %4 = arith.maximumf %2, %3 : vector<32x64xbf16>
    %c0_5 = arith.constant 0 : index
    %c0_6 = arith.constant 0 : index
    %5 = vector.load %arg4[%c0_5, %c0_6] : memref<32x64xbf16, #tpu.memory_space<vmem>>, vector<32x64xbf16>
    %6 = arith.maximumf %4, %5 : vector<32x64xbf16>
    %c0_7 = arith.constant 0 : index
    %c0_8 = arith.constant 0 : index
    %7 = vector.load %arg5[%c0_7, %c0_8] : memref<32x64xbf16, #tpu.memory_space<vmem>>, vector<32x64xbf16>
    %8 = arith.maximumf %6, %7 : vector<32x64xbf16>
    %c0_9 = arith.constant 0 : index
    %c0_10 = arith.constant 0 : index
    %9 = vector.load %arg6[%c0_9, %c0_10] : memref<32x64xbf16, #tpu.memory_space<vmem>>, vector<32x64xbf16>
    %10 = arith.maximumf %8, %9 : vector<32x64xbf16>
    %c0_11 = arith.constant 0 : index
    %c0_12 = arith.constant 0 : index
    %11 = vector.load %arg7[%c0_11, %c0_12] : memref<32x64xbf16, #tpu.memory_space<vmem>>, vector<32x64xbf16>
    %12 = arith.maximumf %10, %11 : vector<32x64xbf16>
    %c0_13 = arith.constant 0 : index
    %c0_14 = arith.constant 0 : index
    %13 = vector.load %arg8[%c0_13, %c0_14] : memref<32x64xbf16, #tpu.memory_space<vmem>>, vector<32x64xbf16>
    %14 = arith.maximumf %12, %13 : vector<32x64xbf16>
    %c0_15 = arith.constant 0 : index
    %c0_16 = arith.constant 0 : index
    %15 = vector.load %arg9[%c0_15, %c0_16] : memref<32x64xbf16, #tpu.memory_space<vmem>>, vector<32x64xbf16>
    %16 = arith.maximumf %14, %15 : vector<32x64xbf16>
    %17 = arith.extf %16 : vector<32x64xbf16> to vector<32x64xf32>
    %c0_17 = arith.constant 0 : index
    %c0_18 = arith.constant 0 : index
    %18 = vector.load %arg10[%c0_17, %c0_18] : memref<8x64xf32, #tpu.memory_space<vmem>>, vector<1x64xf32>
    %19 = vector.broadcast %18 : vector<1x64xf32> to vector<32x64xf32>
    %20 = arith.mulf %17, %19 : vector<32x64xf32>
    %c1 = arith.constant 1 : index
    %c0_19 = arith.constant 0 : index
    %21 = vector.load %arg10[%c1, %c0_19] : memref<8x64xf32, #tpu.memory_space<vmem>>, vector<1x64xf32>
    %22 = vector.broadcast %21 : vector<1x64xf32> to vector<32x64xf32>
    %23 = arith.addf %20, %22 : vector<32x64xf32>
    %cst = arith.constant 0.000000e+00 : f32
    %24 = vector.broadcast %cst : f32 to vector<32x64xf32>
    %25 = arith.cmpf oge, %23, %24 : vector<32x64xf32>
    %c2 = arith.constant 2 : index
    %c0_20 = arith.constant 0 : index
    %26 = vector.load %arg10[%c2, %c0_20] : memref<8x64xf32, #tpu.memory_space<vmem>>, vector<1x64xf32>
    %27 = vector.broadcast %26 : vector<1x64xf32> to vector<32x64xf32>
    %28 = arith.mulf %27, %23 : vector<32x64xf32>
    %29 = arith.select %25, %23, %28 : vector<32x64xi1>, vector<32x64xf32>
    %30 = arith.truncf %29 : vector<32x64xf32> to vector<32x64xbf16>
    %cst_21 = arith.constant 0.000000e+00 : bf16
    %31 = vector.broadcast %cst_21 : bf16 to vector<32x128xbf16>
    %c0_22 = arith.constant 0 : index
    %c0_23 = arith.constant 0 : index
    %32 = vector.load %arg11[%c0_22, %c0_23] : memref<32x128xbf16, #tpu.memory_space<vmem>>, vector<32x128xbf16>
    tpu.vector_store %arg11[%c0_22, %c0_23], %31 {strides = array<i32>} : memref<32x128xbf16, #tpu.memory_space<vmem>>, vector<32x128xbf16>,
    %c0_24 = arith.constant 0 : index
    %c0_25 = arith.constant 0 : index
    %33 = vector.load %arg11[%c0_24, %c0_25] : memref<32x128xbf16, #tpu.memory_space<vmem>>, vector<32x64xbf16>
    tpu.vector_store %arg11[%c0_24, %c0_25], %30 {strides = array<i32>} : memref<32x128xbf16, #tpu.memory_space<vmem>>, vector<32x64xbf16>,
    return
  }
  func.func @transform_0(%arg0: i32) -> (i32, i32) {
    %c0_i32 = arith.constant 0 : i32
    %c0_i32_0 = arith.constant 0 : i32
    return %arg0, %c0_i32 : i32, i32
  }
  func.func @transform_1(%arg0: i32) -> (i32, i32) {
    %c0_i32 = arith.constant 0 : i32
    %c0_i32_0 = arith.constant 0 : i32
    return %arg0, %c0_i32 : i32, i32
  }
  func.func @transform_2(%arg0: i32) -> (i32, i32) {
    %c0_i32 = arith.constant 0 : i32
    %c0_i32_0 = arith.constant 0 : i32
    return %arg0, %c0_i32 : i32, i32
  }
  func.func @transform_3(%arg0: i32) -> (i32, i32) {
    %c0_i32 = arith.constant 0 : i32
    %c0_i32_0 = arith.constant 0 : i32
    return %arg0, %c0_i32 : i32, i32
  }
  func.func @transform_4(%arg0: i32) -> (i32, i32) {
    %c0_i32 = arith.constant 0 : i32
    %c0_i32_0 = arith.constant 0 : i32
    return %arg0, %c0_i32 : i32, i32
  }
  func.func @transform_5(%arg0: i32) -> (i32, i32) {
    %c0_i32 = arith.constant 0 : i32
    %c0_i32_0 = arith.constant 0 : i32
    return %arg0, %c0_i32 : i32, i32
  }
  func.func @transform_6(%arg0: i32) -> (i32, i32) {
    %c0_i32 = arith.constant 0 : i32
    %c0_i32_0 = arith.constant 0 : i32
    return %arg0, %c0_i32 : i32, i32
  }
  func.func @transform_7(%arg0: i32) -> (i32, i32) {
    %c0_i32 = arith.constant 0 : i32
    %c0_i32_0 = arith.constant 0 : i32
    return %arg0, %c0_i32 : i32, i32
  }
  func.func @transform_8(%arg0: i32) -> (i32, i32) {
    %c0_i32 = arith.constant 0 : i32
    %c0_i32_0 = arith.constant 0 : i32
    return %arg0, %c0_i32 : i32, i32
  }
  func.func @transform_9(%arg0: i32) -> (i32, i32) {
    %c0_i32 = arith.constant 0 : i32
    %c0_i32_0 = arith.constant 0 : i32
    %c0_i32_1 = arith.constant 0 : i32
    return %c0_i32, %c0_i32_0 : i32, i32
  }
  func.func @transform_10(%arg0: i32) -> (i32, i32) {
    %c0_i32 = arith.constant 0 : i32
    %c0_i32_0 = arith.constant 0 : i32
    return %arg0, %c0_i32 : i32, i32
  }
}

module attributes {stable_mosaic.version = 11 : i64} {
  func.func @_matmul_bn_act_kernel(%arg0: i32, %arg1: i32, %arg2: memref<32x128xbf16, #tpu.memory_space<vmem>>, %arg3: memref<128x128xbf16, #tpu.memory_space<vmem>>, %arg4: memref<8x128xf32, #tpu.memory_space<vmem>>, %arg5: memref<32x128xbf16, #tpu.memory_space<vmem>>) attributes {dimension_semantics = [#tpu.dimension_semantics<parallel>, #tpu.dimension_semantics<parallel>], iteration_bounds = array<i64: 1, 1>, scalar_prefetch = 0 : i64, scratch_operands = 0 : i64, tpu.core_type = #tpu.core_type<tc>, window_params = [{transform_indices = @transform_0, window_bounds = array<i64: 32, 128>}, {transform_indices = @transform_1, window_bounds = array<i64: 128, 128>}, {transform_indices = @transform_2, window_bounds = array<i64: 8, 128>}, {transform_indices = @transform_3, window_bounds = array<i64: 32, 128>}]} {
    %c0 = arith.constant 0 : index
    %c0_0 = arith.constant 0 : index
    %0 = vector.load %arg2[%c0, %c0_0] : memref<32x128xbf16, #tpu.memory_space<vmem>>, vector<32x128xbf16>
    %c0_1 = arith.constant 0 : index
    %c0_2 = arith.constant 0 : index
    %1 = vector.load %arg3[%c0_1, %c0_2] : memref<128x128xbf16, #tpu.memory_space<vmem>>, vector<128x128xbf16>
    %cst = arith.constant dense<0.000000e+00> : vector<32x128xf32>
    %2 = tpu.matmul %0, %1, %cst {dimension_numbers = #tpu.dot_dimension_numbers<[1], [0], [0], [1], [0, 0, 1, 1], [], []>} : vector<32x128xbf16>, vector<128x128xbf16>, vector<32x128xf32> -> vector<32x128xf32>
    %c0_3 = arith.constant 0 : index
    %c0_4 = arith.constant 0 : index
    %3 = vector.load %arg4[%c0_3, %c0_4] : memref<8x128xf32, #tpu.memory_space<vmem>>, vector<1x128xf32>
    %4 = vector.broadcast %3 : vector<1x128xf32> to vector<32x128xf32>
    %5 = arith.mulf %2, %4 : vector<32x128xf32>
    %c1 = arith.constant 1 : index
    %c0_5 = arith.constant 0 : index
    %6 = vector.load %arg4[%c1, %c0_5] : memref<8x128xf32, #tpu.memory_space<vmem>>, vector<1x128xf32>
    %7 = vector.broadcast %6 : vector<1x128xf32> to vector<32x128xf32>
    %8 = arith.addf %5, %7 : vector<32x128xf32>
    %cst_6 = arith.constant 0.000000e+00 : f32
    %9 = vector.broadcast %cst_6 : f32 to vector<32x128xf32>
    %10 = arith.cmpf oge, %8, %9 : vector<32x128xf32>
    %c2 = arith.constant 2 : index
    %c0_7 = arith.constant 0 : index
    %11 = vector.load %arg4[%c2, %c0_7] : memref<8x128xf32, #tpu.memory_space<vmem>>, vector<1x128xf32>
    %12 = vector.broadcast %11 : vector<1x128xf32> to vector<32x128xf32>
    %13 = arith.mulf %12, %8 : vector<32x128xf32>
    %14 = arith.select %10, %8, %13 : vector<32x128xi1>, vector<32x128xf32>
    %15 = arith.truncf %14 : vector<32x128xf32> to vector<32x128xbf16>
    %c0_8 = arith.constant 0 : index
    %c0_9 = arith.constant 0 : index
    %16 = vector.load %arg5[%c0_8, %c0_9] : memref<32x128xbf16, #tpu.memory_space<vmem>>, vector<32x128xbf16>
    tpu.vector_store %arg5[%c0_8, %c0_9], %15 {strides = array<i32>} : memref<32x128xbf16, #tpu.memory_space<vmem>>, vector<32x128xbf16>,
    return
  }
  func.func @transform_0(%arg0: i32, %arg1: i32) -> (i32, i32) {
    %c0_i32 = arith.constant 0 : i32
    %c0_i32_0 = arith.constant 0 : i32
    return %arg0, %c0_i32 : i32, i32
  }
  func.func @transform_1(%arg0: i32, %arg1: i32) -> (i32, i32) {
    %c0_i32 = arith.constant 0 : i32
    %c0_i32_0 = arith.constant 0 : i32
    return %c0_i32, %arg1 : i32, i32
  }
  func.func @transform_2(%arg0: i32, %arg1: i32) -> (i32, i32) {
    %c0_i32 = arith.constant 0 : i32
    %c0_i32_0 = arith.constant 0 : i32
    return %c0_i32, %arg1 : i32, i32
  }
  func.func @transform_3(%arg0: i32, %arg1: i32) -> (i32, i32) {
    %c0_i32 = arith.constant 0 : i32
    return %arg0, %arg1 : i32, i32
  }
}

module attributes {stable_mosaic.version = 11 : i64} {
  func.func @_matmul_bn_act_res_kernel(%arg0: i32, %arg1: i32, %arg2: memref<32x128xbf16, #tpu.memory_space<vmem>>, %arg3: memref<128x128xbf16, #tpu.memory_space<vmem>>, %arg4: memref<8x128xf32, #tpu.memory_space<vmem>>, %arg5: memref<32x128xbf16, #tpu.memory_space<vmem>>, %arg6: memref<32x128xbf16, #tpu.memory_space<vmem>>) attributes {dimension_semantics = [#tpu.dimension_semantics<parallel>, #tpu.dimension_semantics<parallel>], iteration_bounds = array<i64: 1, 1>, scalar_prefetch = 0 : i64, scratch_operands = 0 : i64, tpu.core_type = #tpu.core_type<tc>, window_params = [{transform_indices = @transform_0, window_bounds = array<i64: 32, 128>}, {transform_indices = @transform_1, window_bounds = array<i64: 128, 128>}, {transform_indices = @transform_2, window_bounds = array<i64: 8, 128>}, {transform_indices = @transform_3, window_bounds = array<i64: 32, 128>}, {transform_indices = @transform_4, window_bounds = array<i64: 32, 128>}]} {
    %c0 = arith.constant 0 : index
    %c0_0 = arith.constant 0 : index
    %0 = vector.load %arg2[%c0, %c0_0] : memref<32x128xbf16, #tpu.memory_space<vmem>>, vector<32x128xbf16>
    %c0_1 = arith.constant 0 : index
    %c0_2 = arith.constant 0 : index
    %1 = vector.load %arg3[%c0_1, %c0_2] : memref<128x128xbf16, #tpu.memory_space<vmem>>, vector<128x128xbf16>
    %cst = arith.constant dense<0.000000e+00> : vector<32x128xf32>
    %2 = tpu.matmul %0, %1, %cst {dimension_numbers = #tpu.dot_dimension_numbers<[1], [0], [0], [1], [0, 0, 1, 1], [], []>} : vector<32x128xbf16>, vector<128x128xbf16>, vector<32x128xf32> -> vector<32x128xf32>
    %c0_3 = arith.constant 0 : index
    %c0_4 = arith.constant 0 : index
    %3 = vector.load %arg4[%c0_3, %c0_4] : memref<8x128xf32, #tpu.memory_space<vmem>>, vector<1x128xf32>
    %4 = vector.broadcast %3 : vector<1x128xf32> to vector<32x128xf32>
    %5 = arith.mulf %2, %4 : vector<32x128xf32>
    %c1 = arith.constant 1 : index
    %c0_5 = arith.constant 0 : index
    %6 = vector.load %arg4[%c1, %c0_5] : memref<8x128xf32, #tpu.memory_space<vmem>>, vector<1x128xf32>
    %7 = vector.broadcast %6 : vector<1x128xf32> to vector<32x128xf32>
    %8 = arith.addf %5, %7 : vector<32x128xf32>
    %cst_6 = arith.constant 0.000000e+00 : f32
    %9 = vector.broadcast %cst_6 : f32 to vector<32x128xf32>
    %10 = arith.cmpf oge, %8, %9 : vector<32x128xf32>
    %c2 = arith.constant 2 : index
    %c0_7 = arith.constant 0 : index
    %11 = vector.load %arg4[%c2, %c0_7] : memref<8x128xf32, #tpu.memory_space<vmem>>, vector<1x128xf32>
    %12 = vector.broadcast %11 : vector<1x128xf32> to vector<32x128xf32>
    %13 = arith.mulf %12, %8 : vector<32x128xf32>
    %14 = arith.select %10, %8, %13 : vector<32x128xi1>, vector<32x128xf32>
    %c0_8 = arith.constant 0 : index
    %c0_9 = arith.constant 0 : index
    %15 = vector.load %arg5[%c0_8, %c0_9] : memref<32x128xbf16, #tpu.memory_space<vmem>>, vector<32x128xbf16>
    %16 = arith.extf %15 : vector<32x128xbf16> to vector<32x128xf32>
    %17 = arith.addf %14, %16 : vector<32x128xf32>
    %cst_10 = arith.constant 0.000000e+00 : f32
    %18 = vector.broadcast %cst_10 : f32 to vector<32x128xf32>
    %19 = arith.cmpf oge, %17, %18 : vector<32x128xf32>
    %c3 = arith.constant 3 : index
    %c0_11 = arith.constant 0 : index
    %20 = vector.load %arg4[%c3, %c0_11] : memref<8x128xf32, #tpu.memory_space<vmem>>, vector<1x128xf32>
    %21 = vector.broadcast %20 : vector<1x128xf32> to vector<32x128xf32>
    %22 = arith.mulf %21, %17 : vector<32x128xf32>
    %23 = arith.select %19, %17, %22 : vector<32x128xi1>, vector<32x128xf32>
    %24 = arith.truncf %23 : vector<32x128xf32> to vector<32x128xbf16>
    %c0_12 = arith.constant 0 : index
    %c0_13 = arith.constant 0 : index
    %25 = vector.load %arg6[%c0_12, %c0_13] : memref<32x128xbf16, #tpu.memory_space<vmem>>, vector<32x128xbf16>
    tpu.vector_store %arg6[%c0_12, %c0_13], %24 {strides = array<i32>} : memref<32x128xbf16, #tpu.memory_space<vmem>>, vector<32x128xbf16>,
    return
  }
  func.func @transform_0(%arg0: i32, %arg1: i32) -> (i32, i32) {
    %c0_i32 = arith.constant 0 : i32
    %c0_i32_0 = arith.constant 0 : i32
    return %arg0, %c0_i32 : i32, i32
  }
  func.func @transform_1(%arg0: i32, %arg1: i32) -> (i32, i32) {
    %c0_i32 = arith.constant 0 : i32
    %c0_i32_0 = arith.constant 0 : i32
    return %c0_i32, %arg1 : i32, i32
  }
  func.func @transform_2(%arg0: i32, %arg1: i32) -> (i32, i32) {
    %c0_i32 = arith.constant 0 : i32
    %c0_i32_0 = arith.constant 0 : i32
    return %c0_i32, %arg1 : i32, i32
  }
  func.func @transform_3(%arg0: i32, %arg1: i32) -> (i32, i32) {
    %c0_i32 = arith.constant 0 : i32
    return %arg0, %arg1 : i32, i32
  }
  func.func @transform_4(%arg0: i32, %arg1: i32) -> (i32, i32) {
    %c0_i32 = arith.constant 0 : i32
    return %arg0, %arg1 : i32, i32
  }
}

module attributes {stable_mosaic.version = 11 : i64} {
  func.func @_matmul_bn_act_kernel(%arg0: i32, %arg1: i32, %arg2: memref<32x384xbf16, #tpu.memory_space<vmem>>, %arg3: memref<384x128xbf16, #tpu.memory_space<vmem>>, %arg4: memref<8x128xf32, #tpu.memory_space<vmem>>, %arg5: memref<32x128xbf16, #tpu.memory_space<vmem>>) attributes {dimension_semantics = [#tpu.dimension_semantics<parallel>, #tpu.dimension_semantics<parallel>], iteration_bounds = array<i64: 1, 1>, scalar_prefetch = 0 : i64, scratch_operands = 0 : i64, tpu.core_type = #tpu.core_type<tc>, window_params = [{transform_indices = @transform_0, window_bounds = array<i64: 32, 384>}, {transform_indices = @transform_1, window_bounds = array<i64: 384, 128>}, {transform_indices = @transform_2, window_bounds = array<i64: 8, 128>}, {transform_indices = @transform_3, window_bounds = array<i64: 32, 128>}]} {
    %c0 = arith.constant 0 : index
    %c0_0 = arith.constant 0 : index
    %0 = vector.load %arg2[%c0, %c0_0] : memref<32x384xbf16, #tpu.memory_space<vmem>>, vector<32x384xbf16>
    %c0_1 = arith.constant 0 : index
    %c0_2 = arith.constant 0 : index
    %1 = vector.load %arg3[%c0_1, %c0_2] : memref<384x128xbf16, #tpu.memory_space<vmem>>, vector<384x128xbf16>
    %cst = arith.constant dense<0.000000e+00> : vector<32x128xf32>
    %2 = tpu.matmul %0, %1, %cst {dimension_numbers = #tpu.dot_dimension_numbers<[1], [0], [0], [1], [0, 0, 1, 1], [], []>} : vector<32x384xbf16>, vector<384x128xbf16>, vector<32x128xf32> -> vector<32x128xf32>
    %c0_3 = arith.constant 0 : index
    %c0_4 = arith.constant 0 : index
    %3 = vector.load %arg4[%c0_3, %c0_4] : memref<8x128xf32, #tpu.memory_space<vmem>>, vector<1x128xf32>
    %4 = vector.broadcast %3 : vector<1x128xf32> to vector<32x128xf32>
    %5 = arith.mulf %2, %4 : vector<32x128xf32>
    %c1 = arith.constant 1 : index
    %c0_5 = arith.constant 0 : index
    %6 = vector.load %arg4[%c1, %c0_5] : memref<8x128xf32, #tpu.memory_space<vmem>>, vector<1x128xf32>
    %7 = vector.broadcast %6 : vector<1x128xf32> to vector<32x128xf32>
    %8 = arith.addf %5, %7 : vector<32x128xf32>
    %cst_6 = arith.constant 0.000000e+00 : f32
    %9 = vector.broadcast %cst_6 : f32 to vector<32x128xf32>
    %10 = arith.cmpf oge, %8, %9 : vector<32x128xf32>
    %c2 = arith.constant 2 : index
    %c0_7 = arith.constant 0 : index
    %11 = vector.load %arg4[%c2, %c0_7] : memref<8x128xf32, #tpu.memory_space<vmem>>, vector<1x128xf32>
    %12 = vector.broadcast %11 : vector<1x128xf32> to vector<32x128xf32>
    %13 = arith.mulf %12, %8 : vector<32x128xf32>
    %14 = arith.select %10, %8, %13 : vector<32x128xi1>, vector<32x128xf32>
    %15 = arith.truncf %14 : vector<32x128xf32> to vector<32x128xbf16>
    %c0_8 = arith.constant 0 : index
    %c0_9 = arith.constant 0 : index
    %16 = vector.load %arg5[%c0_8, %c0_9] : memref<32x128xbf16, #tpu.memory_space<vmem>>, vector<32x128xbf16>
    tpu.vector_store %arg5[%c0_8, %c0_9], %15 {strides = array<i32>} : memref<32x128xbf16, #tpu.memory_space<vmem>>, vector<32x128xbf16>,
    return
  }
  func.func @transform_0(%arg0: i32, %arg1: i32) -> (i32, i32) {
    %c0_i32 = arith.constant 0 : i32
    %c0_i32_0 = arith.constant 0 : i32
    return %arg0, %c0_i32 : i32, i32
  }
  func.func @transform_1(%arg0: i32, %arg1: i32) -> (i32, i32) {
    %c0_i32 = arith.constant 0 : i32
    %c0_i32_0 = arith.constant 0 : i32
    return %c0_i32, %arg1 : i32, i32
  }
  func.func @transform_2(%arg0: i32, %arg1: i32) -> (i32, i32) {
    %c0_i32 = arith.constant 0 : i32
    %c0_i32_0 = arith.constant 0 : i32
    return %c0_i32, %arg1 : i32, i32
  }
  func.func @transform_3(%arg0: i32, %arg1: i32) -> (i32, i32) {
    %c0_i32 = arith.constant 0 : i32
    return %arg0, %arg1 : i32, i32
  }
}

</mosaic_0001>

<llo_original>
// kernel: enet_encoder_forward.74
$region0: #{enet_encoder_forward.74}
  #allocation0 [shape = 'u32[]', space=smem, size = 0x4, offset = 0x4, fixed_abs, tag = 'smem constant byte address 0x4 - core index']
  #allocation1 [shape = 'u32[144,128]{1,0:T(1,128)}', space=vmem, size = 0x12000, scoped, tag = 'internal scratch']
  %s0 = inlined_call_operand.vmem [shape: bf16[512,128], index: 0, kind: input, shape index: {}]
  %s1 = inlined_call_operand.vmem [shape: bf16[128,128], index: 1, kind: input, shape index: {}]
  %s2 = inlined_call_operand.vmem [shape: f32[8,128], index: 2, kind: input, shape index: {}]
  %s3 = inlined_call_operand.vmem [shape: bf16[512,128], index: 3, kind: output, shape index: {}]
  %s4 = sld [smem:[#allocation0]]
  $region22: #{enet_encoder_forward.74} parent=0
    _
  %s6 = ssub.s32 1, %s4
  %s7 = scalar_select 0, %s6, %s4
  // Predicated region
  $region2: #{enet_encoder_forward.74} parent=0 // pred_check
    _
  $region3: #{enet_encoder_forward.74} parent=0 // pred_check_branch
    %9 = sbr.rel (0) target = $region5
  $region4: #{enet_encoder_forward.74} parent=0 // pred_region
    _
  $region5: #{enet_encoder_forward.74} parent=0 // pred_fallthru
    _
  // Predicated region
  $region6: #{enet_encoder_forward.74} parent=0 // pred_check
    _
  $region7: #{enet_encoder_forward.74} parent=0 // pred_check_branch
    %11 = sbr.rel (0) target = $region9
  $region8: #{enet_encoder_forward.74} parent=0 // pred_region
    _
  $region9: #{enet_encoder_forward.74} parent=0 // pred_fallthru
    _
  // Predicated region
  $region10: #{enet_encoder_forward.74} parent=0 // pred_check
    _
  $region11: #{enet_encoder_forward.74} parent=0 // pred_check_branch
    %13 = sbr.rel (0) target = $region13
  $region12: #{enet_encoder_forward.74} parent=0 // pred_region
    _
  $region13: #{enet_encoder_forward.74} parent=0 // pred_fallthru
    _
  %v15 = vld [vmem:[%s0] sm:$0xf]
  %v16 = vld [vmem:[%s0 + $0x4] sm:$0xf]
  %v17 = vld [vmem:[%s0 + $0x8] sm:$0xf]
  %v18 = vld [vmem:[%s0 + $0xc] sm:$0xf]
  %v19 = vld [vmem:[%s0 + $0x10] sm:$0xf]
  %v20 = vld [vmem:[%s0 + $0x14] sm:$0xf]
  %v21 = vld [vmem:[%s0 + $0x18] sm:$0xf]
  %v22 = vld [vmem:[%s0 + $0x1c] sm:$0xf]
  %v23 = vld [vmem:[%s0 + $0x20] sm:$0xf]
  %v24 = vld [vmem:[%s0 + $0x24] sm:$0xf]
  %v25 = vld [vmem:[%s0 + $0x28] sm:$0xf]
  %v26 = vld [vmem:[%s0 + $0x2c] sm:$0xf]
  %v27 = vld [vmem:[%s0 + $0x30] sm:$0xf]
  %v28 = vld [vmem:[%s0 + $0x34] sm:$0xf]
  %v29 = vld [vmem:[%s0 + $0x38] sm:$0xf]
  %v30 = vld [vmem:[%s0 + $0x3c] sm:$0xf]
  %v31 = vld [vmem:[%s0 + $0x40] sm:$0xf]
  %v32 = vld [vmem:[%s0 + $0x44] sm:$0xf]
  %v33 = vld [vmem:[%s0 + $0x48] sm:$0xf]
  %v34 = vld [vmem:[%s0 + $0x4c] sm:$0xf]
  %v35 = vld [vmem:[%s0 + $0x50] sm:$0xf]
  %v36 = vld [vmem:[%s0 + $0x54] sm:$0xf]
  %v37 = vld [vmem:[%s0 + $0x58] sm:$0xf]
  %v38 = vld [vmem:[%s0 + $0x5c] sm:$0xf]
  %v39 = vld [vmem:[%s0 + $0x60] sm:$0xf]
  %v40 = vld [vmem:[%s0 + $0x64] sm:$0xf]
  %v41 = vld [vmem:[%s0 + $0x68] sm:$0xf]
  %v42 = vld [vmem:[%s0 + $0x6c] sm:$0xf]
  %v43 = vld [vmem:[%s0 + $0x70] sm:$0xf]
  %v44 = vld [vmem:[%s0 + $0x74] sm:$0xf]
  %v45 = vld [vmem:[%s0 + $0x78] sm:$0xf]
  %v46 = vld [vmem:[%s0 + $0x7c] sm:$0xf]
  %v47 = vld [vmem:[%s0 + $0x80] sm:$0xf]
  %v48 = vld [vmem:[%s0 + $0x84] sm:$0xf]
  %v49 = vld [vmem:[%s0 + $0x88] sm:$0xf]
  %v50 = vld [vmem:[%s0 + $0x8c] sm:$0xf]
  %v51 = vld [vmem:[%s0 + $0x90] sm:$0xf]
  %v52 = vld [vmem:[%s0 + $0x94] sm:$0xf]
  %v53 = vld [vmem:[%s0 + $0x98] sm:$0xf]
  %v54 = vld [vmem:[%s0 + $0x9c] sm:$0xf]
  %v55 = vld [vmem:[%s0 + $0xa0] sm:$0xf]
  %v56 = vld [vmem:[%s0 + $0xa4] sm:$0xf]
  %v57 = vld [vmem:[%s0 + $0xa8] sm:$0xf]
  %v58 = vld [vmem:[%s0 + $0xac] sm:$0xf]
  %v59 = vld [vmem:[%s0 + $0xb0] sm:$0xf]
  %v60 = vld [vmem:[%s0 + $0xb4] sm:$0xf]
  %v61 = vld [vmem:[%s0 + $0xb8] sm:$0xf]
  %v62 = vld [vmem:[%s0 + $0xbc] sm:$0xf]
  %v63 = vld [vmem:[%s0 + $0xc0] sm:$0xf]
  %v64 = vld [vmem:[%s0 + $0xc4] sm:$0xf]
  %v65 = vld [vmem:[%s0 + $0xc8] sm:$0xf]
  %v66 = vld [vmem:[%s0 + $0xcc] sm:$0xf]
  %v67 = vld [vmem:[%s0 + $0xd0] sm:$0xf]
  %v68 = vld [vmem:[%s0 + $0xd4] sm:$0xf]
  %v69 = vld [vmem:[%s0 + $0xd8] sm:$0xf]
  %v70 = vld [vmem:[%s0 + $0xdc] sm:$0xf]
  %v71 = vld [vmem:[%s0 + $0xe0] sm:$0xf]
  %v72 = vld [vmem:[%s0 + $0xe4] sm:$0xf]
  %v73 = vld [vmem:[%s0 + $0xe8] sm:$0xf]
  %v74 = vld [vmem:[%s0 + $0xec] sm:$0xf]
  %v75 = vld [vmem:[%s0 + $0xf0] sm:$0xf]
  %v76 = vld [vmem:[%s0 + $0xf4] sm:$0xf]
  %v77 = vld [vmem:[%s0 + $0xf8] sm:$0xf]
  %v78 = vld [vmem:[%s0 + $0xfc] sm:$0xf]
  %v79 = vld [vmem:[%s1] sm:$0xf]
  %v80 = vld [vmem:[%s1 + $0x4] sm:$0xf]
  %v81 = vld [vmem:[%s1 + $0x8] sm:$0xf]
  %v82 = vld [vmem:[%s1 + $0xc] sm:$0xf]
  %v83 = vld [vmem:[%s1 + $0x10] sm:$0xf]
  %v84 = vld [vmem:[%s1 + $0x14] sm:$0xf]
  %v85 = vld [vmem:[%s1 + $0x18] sm:$0xf]
  %v86 = vld [vmem:[%s1 + $0x1c] sm:$0xf]
  %v87 = vld [vmem:[%s1 + $0x20] sm:$0xf]
  %v88 = vld [vmem:[%s1 + $0x24] sm:$0xf]
  %v89 = vld [vmem:[%s1 + $0x28] sm:$0xf]
  %v90 = vld [vmem:[%s1 + $0x2c] sm:$0xf]
  %v91 = vld [vmem:[%s1 + $0x30] sm:$0xf]
  %v92 = vld [vmem:[%s1 + $0x34] sm:$0xf]
  %v93 = vld [vmem:[%s1 + $0x38] sm:$0xf]
  %v94 = vld [vmem:[%s1 + $0x3c] sm:$0xf]
  %v159 = vunpack.c.l.b16 %v15
  %v160 = vunpack.c.l.b16 %v16
  %v161 = vunpack.c.l.b16 %v17
  %v162 = vunpack.c.l.b16 %v18
  %v163 = vunpack.c.l.b16 %v19
  %v164 = vunpack.c.l.b16 %v20
  %v165 = vunpack.c.l.b16 %v21
  %v166 = vunpack.c.l.b16 %v22
  %v167 = vunpack.c.l.b16 %v23
  %v168 = vunpack.c.l.b16 %v24
  %v169 = vunpack.c.l.b16 %v25
  %v170 = vunpack.c.l.b16 %v26
  %v171 = vunpack.c.l.b16 %v27
  %v172 = vunpack.c.l.b16 %v28
  %v173 = vunpack.c.l.b16 %v29
  %v174 = vunpack.c.l.b16 %v30
  %v175 = vunpack.c.l.b16 %v31
  %v176 = vunpack.c.l.b16 %v32
  %v177 = vunpack.c.l.b16 %v33
  %v178 = vunpack.c.l.b16 %v34
  %v179 = vunpack.c.l.b16 %v35
  %v180 = vunpack.c.l.b16 %v36
  %v181 = vunpack.c.l.b16 %v37
  %v182 = vunpack.c.l.b16 %v38
  %v183 = vunpack.c.l.b16 %v39
  %v184 = vunpack.c.l.b16 %v40
  %v185 = vunpack.c.l.b16 %v41
  %v186 = vunpack.c.l.b16 %v42
  %v187 = vunpack.c.l.b16 %v43
  %v188 = vunpack.c.l.b16 %v44
  %v189 = vunpack.c.l.b16 %v45
  %v190 = vunpack.c.l.b16 %v46
  %v191 = vunpack.c.l.b16 %v47
  %v192 = vunpack.c.l.b16 %v48
  %v193 = vunpack.c.l.b16 %v49
  %v194 = vunpack.c.l.b16 %v50
  %v195 = vunpack.c.l.b16 %v51
  %v196 = vunpack.c.l.b16 %v52
  %v197 = vunpack.c.l.b16 %v53
  %v198 = vunpack.c.l.b16 %v54
  %v199 = vunpack.c.l.b16 %v55
  %v200 = vunpack.c.l.b16 %v56
  %v201 = vunpack.c.l.b16 %v57
  %v202 = vunpack.c.l.b16 %v58
  %v203 = vunpack.c.l.b16 %v59
  %v204 = vunpack.c.l.b16 %v60
  %v205 = vunpack.c.l.b16 %v61
  %v206 = vunpack.c.l.b16 %v62
  %v207 = vunpack.c.l.b16 %v63
  %v208 = vunpack.c.l.b16 %v64
  %v209 = vunpack.c.l.b16 %v65
  %v210 = vunpack.c.l.b16 %v66
  %v211 = vunpack.c.l.b16 %v67
  %v212 = vunpack.c.l.b16 %v68
  %v213 = vunpack.c.l.b16 %v69
  %v214 = vunpack.c.l.b16 %v70
  %v215 = vunpack.c.l.b16 %v71
  %v216 = vunpack.c.l.b16 %v72
  %v217 = vunpack.c.l.b16 %v73
  %v218 = vunpack.c.l.b16 %v74
  %v219 = vunpack.c.l.b16 %v75
  %v220 = vunpack.c.l.b16 %v76
  %v221 = vunpack.c.l.b16 %v77
  %v222 = vunpack.c.l.b16 %v78
  %v223 = vpack.c.b16 %v160, %v159
  %v224 = vpack.c.b16 %v162, %v161
  %v225 = vpack.c.b16 %v164, %v163
  %v226 = vpack.c.b16 %v166, %v165
  %v227 = vpack.c.b16 %v168, %v167
  %v228 = vpack.c.b16 %v170, %v169
  %v229 = vpack.c.b16 %v172, %v171
  %v230 = vpack.c.b16 %v174, %v173
  %v231 = vpack.c.b16 %v176, %v175
  %v232 = vpack.c.b16 %v178, %v177
  %v233 = vpack.c.b16 %v180, %v179
  %v234 = vpack.c.b16 %v182, %v181
  %v235 = vpack.c.b16 %v184, %v183
  %v236 = vpack.c.b16 %v186, %v185
  %v237 = vpack.c.b16 %v188, %v187
  %v238 = vpack.c.b16 %v190, %v189
  %v239 = vpack.c.b16 %v192, %v191
  %v240 = vpack.c.b16 %v194, %v193
  %v241 = vpack.c.b16 %v196, %v195
  %v242 = vpack.c.b16 %v198, %v197
  %v243 = vpack.c.b16 %v200, %v199
  %v244 = vpack.c.b16 %v202, %v201
  %v245 = vpack.c.b16 %v204, %v203
  %v246 = vpack.c.b16 %v206, %v205
  %v247 = vpack.c.b16 %v208, %v207
  %v248 = vpack.c.b16 %v210, %v209
  %v249 = vpack.c.b16 %v212, %v211
  %v250 = vpack.c.b16 %v214, %v213
  %v251 = vpack.c.b16 %v216, %v215
  %v252 = vpack.c.b16 %v218, %v217
  %v253 = vpack.c.b16 %v220, %v219
  %v254 = vpack.c.b16 %v222, %v221
  %v303 = vunpack.c.l.b16 %v79
  %v304 = vunpack.c.l.b16 %v80
  %v305 = vunpack.c.l.b16 %v81
  %v306 = vunpack.c.l.b16 %v82
  %v307 = vunpack.c.l.b16 %v83
  %v308 = vunpack.c.l.b16 %v84
  %v309 = vunpack.c.l.b16 %v85
  %v310 = vunpack.c.l.b16 %v86
  %v311 = vunpack.c.l.b16 %v87
  %v312 = vunpack.c.l.b16 %v88
  %v313 = vunpack.c.l.b16 %v89
  %v314 = vunpack.c.l.b16 %v90
  %v315 = vunpack.c.l.b16 %v91
  %v316 = vunpack.c.l.b16 %v92
  %v317 = vunpack.c.l.b16 %v93
  %v318 = vunpack.c.l.b16 %v94
  %v319 = vpack.c.b16 %v304, %v303
  %v320 = vpack.c.b16 %v306, %v305
  %v321 = vpack.c.b16 %v308, %v307
  %v322 = vpack.c.b16 %v310, %v309
  %v323 = vpack.c.b16 %v312, %v311
  %v324 = vpack.c.b16 %v314, %v313
  %v325 = vpack.c.b16 %v316, %v315
  %v326 = vpack.c.b16 %v318, %v317
  %335 = vmatprep.subr.bf16.mxu0 0
  %336 = vmatpush1.bf16.msra.mxu0 %v326
  %337 = vmatprep.subr.bf16.mxu0 0
  %338 = vmatpush1.bf16.msra.mxu0 %v325
  %339 = vmatprep.subr.bf16.mxu0 0
  %340 = vmatpush1.bf16.msra.mxu0 %v324
  %341 = vmatprep.subr.bf16.mxu0 0
  %342 = vmatpush1.bf16.msra.mxu0 %v323
  %343 = vmatprep.subr.bf16.mxu0 0
  %344 = vmatpush1.bf16.msra.mxu0 %v322
  %345 = vmatprep.subr.bf16.mxu0 0
  %346 = vmatpush1.bf16.msra.mxu0 %v321
  %347 = vmatprep.subr.bf16.mxu0 0
  %348 = vmatpush1.bf16.msra.mxu0 %v320
  %349 = vmatprep.subr.bf16.mxu0 0
  %350 = vmatpush1.bf16.msra.mxu0 %v319
  %351 = vmatprep.subr.bf16.mxu0 0
  %352 = vmatpush2.bf16.msra.mxu0 0
  %353 = vmatprep.subr.bf16.mxu0 0
  %354 = vmatpush2.bf16.msra.mxu0 0
  %355 = vmatprep.subr.bf16.mxu0 0
  %356 = vmatpush2.bf16.msra.mxu0 0
  %357 = vmatprep.subr.bf16.mxu0 0
  %358 = vmatpush2.bf16.msra.mxu0 0
  %359 = vmatprep.subr.bf16.mxu0 0
  %360 = vmatpush2.bf16.msra.mxu0 0
  %361 = vmatprep.subr.bf16.mxu0 0
  %362 = vmatpush2.bf16.msra.mxu0 0
  %363 = vmatprep.subr.bf16.mxu0 0
  %364 = vmatpush2.bf16.msra.mxu0 0
  %365 = vmatprep.subr.bf16.mxu0 0
  %366 = vmatpush2.bf16.msra.mxu0 0
  %367 = vmatprep.mubr.bf16.mxu0 0
  %368 = vmatmul.mubr.bf16.gmra.mxu0 %v223
  %v369 = vpop.f32.mrf.mxu0
  %v370 = vadd.f32 0.0, %v369
  %v371 = vpop.f32.mrf.mxu0
  %v372 = vpop.f32.mrf.mxu0
  %v373 = vadd.f32 0.0, %v372
  %v374 = vpop.f32.mrf.mxu0
  %375 = vmatprep.mubr.bf16.mxu0 0
  %376 = vmatmul.mubr.bf16.gmra.mxu0 %v224
  %v377 = vpop.f32.mrf.mxu0
  %v378 = vadd.f32 0.0, %v377
  %v379 = vpop.f32.mrf.mxu0
  %v380 = vpop.f32.mrf.mxu0
  %v381 = vadd.f32 0.0, %v380
  %v382 = vpop.f32.mrf.mxu0
  %383 = vmatprep.mubr.bf16.mxu0 0
  %384 = vmatmul.mubr.bf16.gmra.mxu0 %v225
  %v385 = vpop.f32.mrf.mxu0
  %v386 = vadd.f32 0.0, %v385
  %v387 = vpop.f32.mrf.mxu0
  %v388 = vpop.f32.mrf.mxu0
  %v389 = vadd.f32 0.0, %v388
  %v390 = vpop.f32.mrf.mxu0
  %391 = vmatprep.mubr.bf16.mxu0 0
  %392 = vmatmul.mubr.bf16.gmra.mxu0 %v226
  %v393 = vpop.f32.mrf.mxu0
  %v394 = vadd.f32 0.0, %v393
  %v395 = vpop.f32.mrf.mxu0
  %v396 = vpop.f32.mrf.mxu0
  %v397 = vadd.f32 0.0, %v396
  %v398 = vpop.f32.mrf.mxu0
  %399 = vmatprep.mubr.bf16.mxu0 0
  %400 = vmatmul.mubr.bf16.gmra.mxu0 %v227
  %v401 = vpop.f32.mrf.mxu0
  %v402 = vadd.f32 0.0, %v401
  %v403 = vpop.f32.mrf.mxu0
  %v404 = vpop.f32.mrf.mxu0
  %v405 = vadd.f32 0.0, %v404
  %v406 = vpop.f32.mrf.mxu0
  %407 = vmatprep.mubr.bf16.mxu0 0
  %408 = vmatmul.mubr.bf16.gmra.mxu0 %v228
  %v409 = vpop.f32.mrf.mxu0
  %v410 = vadd.f32 0.0, %v409
  %v411 = vpop.f32.mrf.mxu0
  %v412 = vpop.f32.mrf.mxu0
  %v413 = vadd.f32 0.0, %v412
  %v414 = vpop.f32.mrf.mxu0
  %415 = vmatprep.mubr.bf16.mxu0 0
  %416 = vmatmul.mubr.bf16.gmra.mxu0 %v229
  %v417 = vpop.f32.mrf.mxu0
  %v418 = vadd.f32 0.0, %v417
  %v419 = vpop.f32.mrf.mxu0
  %v420 = vpop.f32.mrf.mxu0
  %v421 = vadd.f32 0.0, %v420
  %v422 = vpop.f32.mrf.mxu0
  %423 = vmatprep.mubr.bf16.mxu0 0
  %424 = vmatmul.mubr.bf16.gmra.mxu0 %v230
  %v425 = vpop.f32.mrf.mxu0
  %v426 = vadd.f32 0.0, %v425
  %v427 = vpop.f32.mrf.mxu0
  %v428 = vpop.f32.mrf.mxu0
  %v429 = vadd.f32 0.0, %v428
  %v430 = vpop.f32.mrf.mxu0
  %431 = vmatprep.mubr.bf16.mxu0 0
  %432 = vmatmul.mubr.bf16.gmra.mxu0 %v231
  %v433 = vpop.f32.mrf.mxu0
  %v434 = vadd.f32 0.0, %v433
  %v435 = vpop.f32.mrf.mxu0
  %v436 = vpop.f32.mrf.mxu0
  %v437 = vadd.f32 0.0, %v436
  %v438 = vpop.f32.mrf.mxu0
  %439 = vmatprep.mubr.bf16.mxu0 0
  %440 = vmatmul.mubr.bf16.gmra.mxu0 %v232
  %v441 = vpop.f32.mrf.mxu0
  %v442 = vadd.f32 0.0, %v441
  %v443 = vpop.f32.mrf.mxu0
  %v444 = vpop.f32.mrf.mxu0
  %v445 = vadd.f32 0.0, %v444
  %v446 = vpop.f32.mrf.mxu0
  %447 = vmatprep.mubr.bf16.mxu0 0
  %448 = vmatmul.mubr.bf16.gmra.mxu0 %v233
  %v449 = vpop.f32.mrf.mxu0
  %v450 = vadd.f32 0.0, %v449
  %v451 = vpop.f32.mrf.mxu0
  %v452 = vpop.f32.mrf.mxu0
  %v453 = vadd.f32 0.0, %v452
  %v454 = vpop.f32.mrf.mxu0
  %455 = vmatprep.mubr.bf16.mxu0 0
  %456 = vmatmul.mubr.bf16.gmra.mxu0 %v234
  %v457 = vpop.f32.mrf.mxu0
  %v458 = vadd.f32 0.0, %v457
  %v459 = vpop.f32.mrf.mxu0
  %v460 = vpop.f32.mrf.mxu0
  %v461 = vadd.f32 0.0, %v460
  %v462 = vpop.f32.mrf.mxu0
  %463 = vmatprep.mubr.bf16.mxu0 0
  %464 = vmatmul.mubr.bf16.gmra.mxu0 %v235
  %v465 = vpop.f32.mrf.mxu0
  %v466 = vadd.f32 0.0, %v465
  %v467 = vpop.f32.mrf.mxu0
  %v468 = vpop.f32.mrf.mxu0
  %v469 = vadd.f32 0.0, %v468
  %v470 = vpop.f32.mrf.mxu0
  %471 = vmatprep.mubr.bf16.mxu0 0
  %472 = vmatmul.mubr.bf16.gmra.mxu0 %v236
  %v473 = vpop.f32.mrf.mxu0
  %v474 = vadd.f32 0.0, %v473
  %v475 = vpop.f32.mrf.mxu0
  %v476 = vpop.f32.mrf.mxu0
  %v477 = vadd.f32 0.0, %v476
  %v478 = vpop.f32.mrf.mxu0
  %479 = vmatprep.mubr.bf16.mxu0 0
  %480 = vmatmul.mubr.bf16.gmra.mxu0 %v237
  %v481 = vpop.f32.mrf.mxu0
  %v482 = vadd.f32 0.0, %v481
  %v483 = vpop.f32.mrf.mxu0
  %v484 = vpop.f32.mrf.mxu0
  %v485 = vadd.f32 0.0, %v484
  %v486 = vpop.f32.mrf.mxu0
  %487 = vmatprep.mubr.bf16.mxu0 0
  %488 = vmatmul.mubr.bf16.gmra.mxu0 %v238
  %v489 = vpop.f32.mrf.mxu0
  %v490 = vadd.f32 0.0, %v489
  %v491 = vpop.f32.mrf.mxu0
  %v492 = vpop.f32.mrf.mxu0
  %v493 = vadd.f32 0.0, %v492
  %v494 = vpop.f32.mrf.mxu0
  %495 = vmatprep.mubr.bf16.mxu0 0
  %496 = vmatmul.mubr.bf16.gmra.mxu0 %v239
  %v497 = vpop.f32.mrf.mxu0
  %v498 = vadd.f32 0.0, %v497
  %v499 = vpop.f32.mrf.mxu0
  %v500 = vpop.f32.mrf.mxu0
  %v501 = vadd.f32 0.0, %v500
  %v502 = vpop.f32.mrf.mxu0
  %503 = vmatprep.mubr.bf16.mxu0 0
  %504 = vmatmul.mubr.bf16.gmra.mxu0 %v240
  %v505 = vpop.f32.mrf.mxu0
  %v506 = vadd.f32 0.0, %v505
  %v507 = vpop.f32.mrf.mxu0
  %v508 = vpop.f32.mrf.mxu0
  %v509 = vadd.f32 0.0, %v508
  %v510 = vpop.f32.mrf.mxu0
  %511 = vmatprep.mubr.bf16.mxu0 0
  %512 = vmatmul.mubr.bf16.gmra.mxu0 %v241
  %v513 = vpop.f32.mrf.mxu0
  %v514 = vadd.f32 0.0, %v513
  %v515 = vpop.f32.mrf.mxu0
  %v516 = vpop.f32.mrf.mxu0
  %v517 = vadd.f32 0.0, %v516
  %v518 = vpop.f32.mrf.mxu0
  %519 = vmatprep.mubr.bf16.mxu0 0
  %520 = vmatmul.mubr.bf16.gmra.mxu0 %v242
  %v521 = vpop.f32.mrf.mxu0
  %v522 = vadd.f32 0.0, %v521
  %v523 = vpop.f32.mrf.mxu0
  %v524 = vpop.f32.mrf.mxu0
  %v525 = vadd.f32 0.0, %v524
  %v526 = vpop.f32.mrf.mxu0
  %527 = vmatprep.mubr.bf16.mxu0 0
  %528 = vmatmul.mubr.bf16.gmra.mxu0 %v243
  %v529 = vpop.f32.mrf.mxu0
  %v530 = vadd.f32 0.0, %v529
  %v531 = vpop.f32.mrf.mxu0
  %v532 = vpop.f32.mrf.mxu0
  %v533 = vadd.f32 0.0, %v532
  %v534 = vpop.f32.mrf.mxu0
  %535 = vmatprep.mubr.bf16.mxu0 0
  %536 = vmatmul.mubr.bf16.gmra.mxu0 %v244
  %v537 = vpop.f32.mrf.mxu0
  %v538 = vadd.f32 0.0, %v537
  %v539 = vpop.f32.mrf.mxu0
  %v540 = vpop.f32.mrf.mxu0
  %v541 = vadd.f32 0.0, %v540
  %v542 = vpop.f32.mrf.mxu0
  %543 = vmatprep.mubr.bf16.mxu0 0
  %544 = vmatmul.mubr.bf16.gmra.mxu0 %v245
  %v545 = vpop.f32.mrf.mxu0
  %v546 = vadd.f32 0.0, %v545
  %v547 = vpop.f32.mrf.mxu0
  %v548 = vpop.f32.mrf.mxu0
  %v549 = vadd.f32 0.0, %v548
  %v550 = vpop.f32.mrf.mxu0
  %551 = vmatprep.mubr.bf16.mxu0 0
  %552 = vmatmul.mubr.bf16.gmra.mxu0 %v246
  %v553 = vpop.f32.mrf.mxu0
  %v554 = vadd.f32 0.0, %v553
  %v555 = vpop.f32.mrf.mxu0
  %v556 = vpop.f32.mrf.mxu0
  %v557 = vadd.f32 0.0, %v556
  %v558 = vpop.f32.mrf.mxu0
  %559 = vmatprep.mubr.bf16.mxu0 0
  %560 = vmatmul.mubr.bf16.gmra.mxu0 %v247
  %v561 = vpop.f32.mrf.mxu0
  %v562 = vadd.f32 0.0, %v561
  %v563 = vpop.f32.mrf.mxu0
  %v564 = vpop.f32.mrf.mxu0
  %v565 = vadd.f32 0.0, %v564
  %v566 = vpop.f32.mrf.mxu0
  %567 = vmatprep.mubr.bf16.mxu0 0
  %568 = vmatmul.mubr.bf16.gmra.mxu0 %v248
  %v569 = vpop.f32.mrf.mxu0
  %v570 = vadd.f32 0.0, %v569
  %v571 = vpop.f32.mrf.mxu0
  %v572 = vpop.f32.mrf.mxu0
  %v573 = vadd.f32 0.0, %v572
  %v574 = vpop.f32.mrf.mxu0
  %575 = vmatprep.mubr.bf16.mxu0 0
  %576 = vmatmul.mubr.bf16.gmra.mxu0 %v249
  %v577 = vpop.f32.mrf.mxu0
  %v578 = vadd.f32 0.0, %v577
  %v579 = vpop.f32.mrf.mxu0
  %v580 = vpop.f32.mrf.mxu0
  %v581 = vadd.f32 0.0, %v580
  %v582 = vpop.f32.mrf.mxu0
  %583 = vmatprep.mubr.bf16.mxu0 0
  %584 = vmatmul.mubr.bf16.gmra.mxu0 %v250
  %v585 = vpop.f32.mrf.mxu0
  %v586 = vadd.f32 0.0, %v585
  %v587 = vpop.f32.mrf.mxu0
  %v588 = vpop.f32.mrf.mxu0
  %v589 = vadd.f32 0.0, %v588
  %v590 = vpop.f32.mrf.mxu0
  %591 = vmatprep.mubr.bf16.mxu0 0
  %592 = vmatmul.mubr.bf16.gmra.mxu0 %v251
  %v593 = vpop.f32.mrf.mxu0
  %v594 = vadd.f32 0.0, %v593
  %v595 = vpop.f32.mrf.mxu0
  %v596 = vpop.f32.mrf.mxu0
  %v597 = vadd.f32 0.0, %v596
  %v598 = vpop.f32.mrf.mxu0
  %599 = vmatprep.mubr.bf16.mxu0 0
  %600 = vmatmul.mubr.bf16.gmra.mxu0 %v252
  %v601 = vpop.f32.mrf.mxu0
  %v602 = vadd.f32 0.0, %v601
  %v603 = vpop.f32.mrf.mxu0
  %v604 = vpop.f32.mrf.mxu0
  %v605 = vadd.f32 0.0, %v604
  %v606 = vpop.f32.mrf.mxu0
  %607 = vmatprep.mubr.bf16.mxu0 0
  %608 = vmatmul.mubr.bf16.gmra.mxu0 %v253
  %v609 = vpop.f32.mrf.mxu0
  %v610 = vadd.f32 0.0, %v609
  %v611 = vpop.f32.mrf.mxu0
  %v612 = vpop.f32.mrf.mxu0
  %v613 = vadd.f32 0.0, %v612
  %v614 = vpop.f32.mrf.mxu0
  %615 = vmatprep.mubr.bf16.mxu0 0
  %616 = vmatmul.mubr.bf16.gmra.mxu0 %v254
  %v617 = vpop.f32.mrf.mxu0
  %v618 = vadd.f32 0.0, %v617
  %v619 = vpop.f32.mrf.mxu0
  %v620 = vpop.f32.mrf.mxu0
  %v621 = vadd.f32 0.0, %v620
  %v622 = vpop.f32.mrf.mxu0
  %623 = vdwg.mxu0
  %v624 = vld [vmem:[%s2] sm:$0x1]
  %v625 = vlaneseq
  %v626 = vshrl.u32 %v625, 7
  %v627 = vsub.s32 0, %v626
  %v628 = vrot.slane %v624, %v627
  %v629 = vmul.f32 %v370, %v628
  %v630 = vmul.f32 %v373, %v628
  %v631 = vmul.f32 %v378, %v628
  %v632 = vmul.f32 %v381, %v628
  %v633 = vmul.f32 %v386, %v628
  %v634 = vmul.f32 %v389, %v628
  %v635 = vmul.f32 %v394, %v628
  %v636 = vmul.f32 %v397, %v628
  %v637 = vmul.f32 %v402, %v628
  %v638 = vmul.f32 %v405, %v628
  %v639 = vmul.f32 %v410, %v628
  %v640 = vmul.f32 %v413, %v628
  %v641 = vmul.f32 %v418, %v628
  %v642 = vmul.f32 %v421, %v628
  %v643 = vmul.f32 %v426, %v628
  %v644 = vmul.f32 %v429, %v628
  %v645 = vmul.f32 %v434, %v628
  %v646 = vmul.f32 %v437, %v628
  %v647 = vmul.f32 %v442, %v628
  %v648 = vmul.f32 %v445, %v628
  %v649 = vmul.f32 %v450, %v628
  %v650 = vmul.f32 %v453, %v628
  %v651 = vmul.f32 %v458, %v628
  %v652 = vmul.f32 %v461, %v628
  %v653 = vmul.f32 %v466, %v628
  %v654 = vmul.f32 %v469, %v628
  %v655 = vmul.f32 %v474, %v628
  %v656 = vmul.f32 %v477, %v628
  %v657 = vmul.f32 %v482, %v628
  %v658 = vmul.f32 %v485, %v628
  %v659 = vmul.f32 %v490, %v628
  %v660 = vmul.f32 %v493, %v628
  %v661 = vmul.f32 %v498, %v628
  %v662 = vmul.f32 %v501, %v628
  %v663 = vmul.f32 %v506, %v628
  %v664 = vmul.f32 %v509, %v628
  %v665 = vmul.f32 %v514, %v628
  %v666 = vmul.f32 %v517, %v628
  %v667 = vmul.f32 %v522, %v628
  %v668 = vmul.f32 %v525, %v628
  %v669 = vmul.f32 %v530, %v628
  %v670 = vmul.f32 %v533, %v628
  %v671 = vmul.f32 %v538, %v628
  %v672 = vmul.f32 %v541, %v628
  %v673 = vmul.f32 %v546, %v628
  %v674 = vmul.f32 %v549, %v628
  %v675 = vmul.f32 %v554, %v628
  %v676 = vmul.f32 %v557, %v628
  %v677 = vmul.f32 %v562, %v628
  %v678 = vmul.f32 %v565, %v628
  %v679 = vmul.f32 %v570, %v628
  %v680 = vmul.f32 %v573, %v628
  %v681 = vmul.f32 %v578, %v628
  %v682 = vmul.f32 %v581, %v628
  %v683 = vmul.f32 %v586, %v628
  %v684 = vmul.f32 %v589, %v628
  %v685 = vmul.f32 %v594, %v628
  %v686 = vmul.f32 %v597, %v628
  %v687 = vmul.f32 %v602, %v628
  %v688 = vmul.f32 %v605, %v628
  %v689 = vmul.f32 %v610, %v628
  %v690 = vmul.f32 %v613, %v628
  %v691 = vmul.f32 %v618, %v628
  %v692 = vmul.f32 %v621, %v628
  %v693 = vld [vmem:[%s2 + $0x1] sm:$0x1]
  %v694 = vlaneseq
  %v695 = vshrl.u32 %v694, 7
  %v696 = vsub.s32 0, %v695
  %v697 = vrot.slane %v693, %v696
  %v698 = vadd.f32 %v629, %v697
  %v699 = vadd.f32 %v630, %v697
  %v700 = vadd.f32 %v631, %v697
  %v701 = vadd.f32 %v632, %v697
  %v702 = vadd.f32 %v633, %v697
  %v703 = vadd.f32 %v634, %v697
  %v704 = vadd.f32 %v635, %v697
  %v705 = vadd.f32 %v636, %v697
  %v706 = vadd.f32 %v637, %v697
  %v707 = vadd.f32 %v638, %v697
  %v708 = vadd.f32 %v639, %v697
  %v709 = vadd.f32 %v640, %v697
  %v710 = vadd.f32 %v641, %v697
  %v711 = vadd.f32 %v642, %v697
  %v712 = vadd.f32 %v643, %v697
  %v713 = vadd.f32 %v644, %v697
  %v714 = vadd.f32 %v645, %v697
  %v715 = vadd.f32 %v646, %v697
  %v716 = vadd.f32 %v647, %v697
  %v717 = vadd.f32 %v648, %v697
  %v718 = vadd.f32 %v649, %v697
  %v719 = vadd.f32 %v650, %v697
  %v720 = vadd.f32 %v651, %v697
  %v721 = vadd.f32 %v652, %v697
  %v722 = vadd.f32 %v653, %v697
  %v723 = vadd.f32 %v654, %v697
  %v724 = vadd.f32 %v655, %v697
  %v725 = vadd.f32 %v656, %v697
  %v726 = vadd.f32 %v657, %v697
  %v727 = vadd.f32 %v658, %v697
  %v728 = vadd.f32 %v659, %v697
  %v729 = vadd.f32 %v660, %v697
  %v730 = vadd.f32 %v661, %v697
  %v731 = vadd.f32 %v662, %v697
  %v732 = vadd.f32 %v663, %v697
  %v733 = vadd.f32 %v664, %v697
  %v734 = vadd.f32 %v665, %v697
  %v735 = vadd.f32 %v666, %v697
  %v736 = vadd.f32 %v667, %v697
  %v737 = vadd.f32 %v668, %v697
  %v738 = vadd.f32 %v669, %v697
  %v739 = vadd.f32 %v670, %v697
  %v740 = vadd.f32 %v671, %v697
  %v741 = vadd.f32 %v672, %v697
  %v742 = vadd.f32 %v673, %v697
  %v743 = vadd.f32 %v674, %v697
  %v744 = vadd.f32 %v675, %v697
  %v745 = vadd.f32 %v676, %v697
  %v746 = vadd.f32 %v677, %v697
  %v747 = vadd.f32 %v678, %v697
  %v748 = vadd.f32 %v679, %v697
  %v749 = vadd.f32 %v680, %v697
  %v750 = vadd.f32 %v681, %v697
  %v751 = vadd.f32 %v682, %v697
  %v752 = vadd.f32 %v683, %v697
  %v753 = vadd.f32 %v684, %v697
  %v754 = vadd.f32 %v685, %v697
  %v755 = vadd.f32 %v686, %v697
  %v756 = vadd.f32 %v687, %v697
  %v757 = vadd.f32 %v688, %v697
  %v758 = vadd.f32 %v689, %v697
  %v759 = vadd.f32 %v690, %v697
  %v760 = vadd.f32 %v691, %v697
  %v761 = vadd.f32 %v692, %v697
  %vm762 = vcmp.ge.f32.partialorder %v698, 0.0
  %vm763 = vcmp.ge.f32.partialorder %v699, 0.0
  %vm764 = vcmp.ge.f32.partialorder %v700, 0.0
  %vm765 = vcmp.ge.f32.partialorder %v701, 0.0
  %vm766 = vcmp.ge.f32.partialorder %v702, 0.0
  %vm767 = vcmp.ge.f32.partialorder %v703, 0.0
  %vm768 = vcmp.ge.f32.partialorder %v704, 0.0
  %vm769 = vcmp.ge.f32.partialorder %v705, 0.0
  %vm770 = vcmp.ge.f32.partialorder %v706, 0.0
  %vm771 = vcmp.ge.f32.partialorder %v707, 0.0
  %vm772 = vcmp.ge.f32.partialorder %v708, 0.0
  %vm773 = vcmp.ge.f32.partialorder %v709, 0.0
  %vm774 = vcmp.ge.f32.partialorder %v710, 0.0
  %vm775 = vcmp.ge.f32.partialorder %v711, 0.0
  %vm776 = vcmp.ge.f32.partialorder %v712, 0.0
  %vm777 = vcmp.ge.f32.partialorder %v713, 0.0
  %vm778 = vcmp.ge.f32.partialorder %v714, 0.0
  %vm779 = vcmp.ge.f32.partialorder %v715, 0.0
  %vm780 = vcmp.ge.f32.partialorder %v716, 0.0
  %vm781 = vcmp.ge.f32.partialorder %v717, 0.0
  %vm782 = vcmp.ge.f32.partialorder %v718, 0.0
  %vm783 = vcmp.ge.f32.partialorder %v719, 0.0
  %vm784 = vcmp.ge.f32.partialorder %v720, 0.0
  %vm785 = vcmp.ge.f32.partialorder %v721, 0.0
  %vm786 = vcmp.ge.f32.partialorder %v722, 0.0
  %vm787 = vcmp.ge.f32.partialorder %v723, 0.0
  %vm788 = vcmp.ge.f32.partialorder %v724, 0.0
  %vm789 = vcmp.ge.f32.partialorder %v725, 0.0
  %vm790 = vcmp.ge.f32.partialorder %v726, 0.0
  %vm791 = vcmp.ge.f32.partialorder %v727, 0.0
  %vm792 = vcmp.ge.f32.partialorder %v728, 0.0
  %vm793 = vcmp.ge.f32.partialorder %v729, 0.0
  %vm794 = vcmp.ge.f32.partialorder %v730, 0.0
  %vm795 = vcmp.ge.f32.partialorder %v731, 0.0
  %vm796 = vcmp.ge.f32.partialorder %v732, 0.0
  %vm797 = vcmp.ge.f32.partialorder %v733, 0.0
  %vm798 = vcmp.ge.f32.partialorder %v734, 0.0
  %vm799 = vcmp.ge.f32.partialorder %v735, 0.0
  %vm800 = vcmp.ge.f32.partialorder %v736, 0.0
  %vm801 = vcmp.ge.f32.partialorder %v737, 0.0
  %vm802 = vcmp.ge.f32.partialorder %v738, 0.0
  %vm803 = vcmp.ge.f32.partialorder %v739, 0.0
  %vm804 = vcmp.ge.f32.partialorder %v740, 0.0
  %vm805 = vcmp.ge.f32.partialorder %v741, 0.0
  %vm806 = vcmp.ge.f32.partialorder %v742, 0.0
  %vm807 = vcmp.ge.f32.partialorder %v743, 0.0
  %vm808 = vcmp.ge.f32.partialorder %v744, 0.0
  %vm809 = vcmp.ge.f32.partialorder %v745, 0.0
  %vm810 = vcmp.ge.f32.partialorder %v746, 0.0
  %vm811 = vcmp.ge.f32.partialorder %v747, 0.0
  %vm812 = vcmp.ge.f32.partialorder %v748, 0.0
  %vm813 = vcmp.ge.f32.partialorder %v749, 0.0
  %vm814 = vcmp.ge.f32.partialorder %v750, 0.0
  %vm815 = vcmp.ge.f32.partialorder %v751, 0.0
  %vm816 = vcmp.ge.f32.partialorder %v752, 0.0
  %vm817 = vcmp.ge.f32.partialorder %v753, 0.0
  %vm818 = vcmp.ge.f32.partialorder %v754, 0.0
  %vm819 = vcmp.ge.f32.partialorder %v755, 0.0
  %vm820 = vcmp.ge.f32.partialorder %v756, 0.0
  %vm821 = vcmp.ge.f32.partialorder %v757, 0.0
  %vm822 = vcmp.ge.f32.partialorder %v758, 0.0
  %vm823 = vcmp.ge.f32.partialorder %v759, 0.0
  %vm824 = vcmp.ge.f32.partialorder %v760, 0.0
  %vm825 = vcmp.ge.f32.partialorder %v761, 0.0
  %v826 = vld [vmem:[%s2 + $0x2] sm:$0x1]
  %v827 = vlaneseq
  %v828 = vshrl.u32 %v827, 7
  %v829 = vsub.s32 0, %v828
  %v830 = vrot.slane %v826, %v829
  %v831 = vmul.f32 %v830, %v698
  %v832 = vmul.f32 %v830, %v699
  %v833 = vmul.f32 %v830, %v700
  %v834 = vmul.f32 %v830, %v701
  %v835 = vmul.f32 %v830, %v702
  %v836 = vmul.f32 %v830, %v703
  %v837 = vmul.f32 %v830, %v704
  %v838 = vmul.f32 %v830, %v705
  %v839 = vmul.f32 %v830, %v706
  %v840 = vmul.f32 %v830, %v707
  %v841 = vmul.f32 %v830, %v708
  %v842 = vmul.f32 %v830, %v709
  %v843 = vmul.f32 %v830, %v710
  %v844 = vmul.f32 %v830, %v711
  %v845 = vmul.f32 %v830, %v712
  %v846 = vmul.f32 %v830, %v713
  %v847 = vmul.f32 %v830, %v714
  %v848 = vmul.f32 %v830, %v715
  %v849 = vmul.f32 %v830, %v716
  %v850 = vmul.f32 %v830, %v717
  %v851 = vmul.f32 %v830, %v718
  %v852 = vmul.f32 %v830, %v719
  %v853 = vmul.f32 %v830, %v720
  %v854 = vmul.f32 %v830, %v721
  %v855 = vmul.f32 %v830, %v722
  %v856 = vmul.f32 %v830, %v723
  %v857 = vmul.f32 %v830, %v724
  %v858 = vmul.f32 %v830, %v725
  %v859 = vmul.f32 %v830, %v726
  %v860 = vmul.f32 %v830, %v727
  %v861 = vmul.f32 %v830, %v728
  %v862 = vmul.f32 %v830, %v729
  %v863 = vmul.f32 %v830, %v730
  %v864 = vmul.f32 %v830, %v731
  %v865 = vmul.f32 %v830, %v732
  %v866 = vmul.f32 %v830, %v733
  %v867 = vmul.f32 %v830, %v734
  %v868 = vmul.f32 %v830, %v735
  %v869 = vmul.f32 %v830, %v736
  %v870 = vmul.f32 %v830, %v737
  %v871 = vmul.f32 %v830, %v738
  %v872 = vmul.f32 %v830, %v739
  %v873 = vmul.f32 %v830, %v740
  %v874 = vmul.f32 %v830, %v741
  %v875 = vmul.f32 %v830, %v742
  %v876 = vmul.f32 %v830, %v743
  %v877 = vmul.f32 %v830, %v744
  %v878 = vmul.f32 %v830, %v745
  %v879 = vmul.f32 %v830, %v746
  %v880 = vmul.f32 %v830, %v747
  %v881 = vmul.f32 %v830, %v748
  %v882 = vmul.f32 %v830, %v749
  %v883 = vmul.f32 %v830, %v750
  %v884 = vmul.f32 %v830, %v751
  %v885 = vmul.f32 %v830, %v752
  %v886 = vmul.f32 %v830, %v753
  %v887 = vmul.f32 %v830, %v754
  %v888 = vmul.f32 %v830, %v755
  %v889 = vmul.f32 %v830, %v756
  %v890 = vmul.f32 %v830, %v757
  %v891 = vmul.f32 %v830, %v758
  %v892 = vmul.f32 %v830, %v759
  %v893 = vmul.f32 %v830, %v760
  %v894 = vmul.f32 %v830, %v761
  %v895 = vsel %vm762, %v698, %v831
  %v896 = vsel %vm763, %v699, %v832
  %v897 = vsel %vm764, %v700, %v833
  %v898 = vsel %vm765, %v701, %v834
  %v899 = vsel %vm766, %v702, %v835
  %v900 = vsel %vm767, %v703, %v836
  %v901 = vsel %vm768, %v704, %v837
  %v902 = vsel %vm769, %v705, %v838
  %v903 = vsel %vm770, %v706, %v839
  %v904 = vsel %vm771, %v707, %v840
  %v905 = vsel %vm772, %v708, %v841
  %v906 = vsel %vm773, %v709, %v842
  %v907 = vsel %vm774, %v710, %v843
  %v908 = vsel %vm775, %v711, %v844
  %v909 = vsel %vm776, %v712, %v845
  %v910 = vsel %vm777, %v713, %v846
  %v911 = vsel %vm778, %v714, %v847
  %v912 = vsel %vm779, %v715, %v848
  %v913 = vsel %vm780, %v716, %v849
  %v914 = vsel %vm781, %v717, %v850
  %v915 = vsel %vm782, %v718, %v851
  %v916 = vsel %vm783, %v719, %v852
  %v917 = vsel %vm784, %v720, %v853
  %v918 = vsel %vm785, %v721, %v854
  %v919 = vsel %vm786, %v722, %v855
  %v920 = vsel %vm787, %v723, %v856
  %v921 = vsel %vm788, %v724, %v857
  %v922 = vsel %vm789, %v725, %v858
  %v923 = vsel %vm790, %v726, %v859
  %v924 = vsel %vm791, %v727, %v860
  %v925 = vsel %vm792, %v728, %v861
  %v926 = vsel %vm793, %v729, %v862
  %v927 = vsel %vm794, %v730, %v863
  %v928 = vsel %vm795, %v731, %v864
  %v929 = vsel %vm796, %v732, %v865
  %v930 = vsel %vm797, %v733, %v866
  %v931 = vsel %vm798, %v734, %v867
  %v932 = vsel %vm799, %v735, %v868
  %v933 = vsel %vm800, %v736, %v869
  %v934 = vsel %vm801, %v737, %v870
  %v935 = vsel %vm802, %v738, %v871
  %v936 = vsel %vm803, %v739, %v872
  %v937 = vsel %vm804, %v740, %v873
  %v938 = vsel %vm805, %v741, %v874
  %v939 = vsel %vm806, %v742, %v875
  %v940 = vsel %vm807, %v743, %v876
  %v941 = vsel %vm808, %v744, %v877
  %v942 = vsel %vm809, %v745, %v878
  %v943 = vsel %vm810, %v746, %v879
  %v944 = vsel %vm811, %v747, %v880
  %v945 = vsel %vm812, %v748, %v881
  %v946 = vsel %vm813, %v749, %v882
  %v947 = vsel %vm814, %v750, %v883
  %v948 = vsel %vm815, %v751, %v884
  %v949 = vsel %vm816, %v752, %v885
  %v950 = vsel %vm817, %v753, %v886
  %v951 = vsel %vm818, %v754, %v887
  %v952 = vsel %vm819, %v755, %v888
  %v953 = vsel %vm820, %v756, %v889
  %v954 = vsel %vm821, %v757, %v890
  %v955 = vsel %vm822, %v758, %v891
  %v956 = vsel %vm823, %v759, %v892
  %v957 = vsel %vm824, %v760, %v893
  %v958 = vsel %vm825, %v761, %v894
  %v959 = vpack.c.bf16 %v896, %v895
  %v960 = vpack.c.bf16 %v898, %v897
  %v961 = vpack.c.bf16 %v900, %v899
  %v962 = vpack.c.bf16 %v902, %v901
  %v963 = vpack.c.bf16 %v904, %v903
  %v964 = vpack.c.bf16 %v906, %v905
  %v965 = vpack.c.bf16 %v908, %v907
  %v966 = vpack.c.bf16 %v910, %v909
  %v967 = vpack.c.bf16 %v912, %v911
  %v968 = vpack.c.bf16 %v914, %v913
  %v969 = vpack.c.bf16 %v916, %v915
  %v970 = vpack.c.bf16 %v918, %v917
  %v971 = vpack.c.bf16 %v920, %v919
  %v972 = vpack.c.bf16 %v922, %v921
  %v973 = vpack.c.bf16 %v924, %v923
  %v974 = vpack.c.bf16 %v926, %v925
  %v975 = vpack.c.bf16 %v928, %v927
  %v976 = vpack.c.bf16 %v930, %v929
  %v977 = vpack.c.bf16 %v932, %v931
  %v978 = vpack.c.bf16 %v934, %v933
  %v979 = vpack.c.bf16 %v936, %v935
  %v980 = vpack.c.bf16 %v938, %v937
  %v981 = vpack.c.bf16 %v940, %v939
  %v982 = vpack.c.bf16 %v942, %v941
  %v983 = vpack.c.bf16 %v944, %v943
  %v984 = vpack.c.bf16 %v946, %v945
  %v985 = vpack.c.bf16 %v948, %v947
  %v986 = vpack.c.bf16 %v950, %v949
  %v987 = vpack.c.bf16 %v952, %v951
  %v988 = vpack.c.bf16 %v954, %v953
  %v989 = vpack.c.bf16 %v956, %v955
  %v990 = vpack.c.bf16 %v958, %v957
  %v1023 = vunpack.c.l.b16 %v959
  %v1024 = vunpack.c.h.b16 %v959
  %v1025 = vunpack.c.l.b16 %v960
  %v1026 = vunpack.c.h.b16 %v960
  %v1027 = vunpack.c.l.b16 %v961
  %v1028 = vunpack.c.h.b16 %v961
  %v1029 = vunpack.c.l.b16 %v962
  %v1030 = vunpack.c.h.b16 %v962
  %v1031 = vunpack.c.l.b16 %v963
  %v1032 = vunpack.c.h.b16 %v963
  %v1033 = vunpack.c.l.b16 %v964
  %v1034 = vunpack.c.h.b16 %v964
  %v1035 = vunpack.c.l.b16 %v965
  %v1036 = vunpack.c.h.b16 %v965
  %v1037 = vunpack.c.l.b16 %v966
  %v1038 = vunpack.c.h.b16 %v966
  %v1039 = vunpack.c.l.b16 %v967
  %v1040 = vunpack.c.h.b16 %v967
  %v1041 = vunpack.c.l.b16 %v968
  %v1042 = vunpack.c.h.b16 %v968
  %v1043 = vunpack.c.l.b16 %v969
  %v1044 = vunpack.c.h.b16 %v969
  %v1045 = vunpack.c.l.b16 %v970
  %v1046 = vunpack.c.h.b16 %v970
  %v1047 = vunpack.c.l.b16 %v971
  %v1048 = vunpack.c.h.b16 %v971
  %v1049 = vunpack.c.l.b16 %v972
  %v1050 = vunpack.c.h.b16 %v972
  %v1051 = vunpack.c.l.b16 %v973
  %v1052 = vunpack.c.h.b16 %v973
  %v1053 = vunpack.c.l.b16 %v974
  %v1054 = vunpack.c.h.b16 %v974
  %v1055 = vunpack.c.l.b16 %v975
  %v1056 = vunpack.c.h.b16 %v975
  %v1057 = vunpack.c.l.b16 %v976
  %v1058 = vunpack.c.h.b16 %v976
  %v1059 = vunpack.c.l.b16 %v977
  %v1060 = vunpack.c.h.b16 %v977
  %v1061 = vunpack.c.l.b16 %v978
  %v1062 = vunpack.c.h.b16 %v978
  %v1063 = vunpack.c.l.b16 %v979
  %v1064 = vunpack.c.h.b16 %v979
  %v1065 = vunpack.c.l.b16 %v980
  %v1066 = vunpack.c.h.b16 %v980
  %v1067 = vunpack.c.l.b16 %v981
  %v1068 = vunpack.c.h.b16 %v981
  %v1069 = vunpack.c.l.b16 %v982
  %v1070 = vunpack.c.h.b16 %v982
  %v1071 = vunpack.c.l.b16 %v983
  %v1072 = vunpack.c.h.b16 %v983
  %v1073 = vunpack.c.l.b16 %v984
  %v1074 = vunpack.c.h.b16 %v984
  %v1075 = vunpack.c.l.b16 %v985
  %v1076 = vunpack.c.h.b16 %v985
  %v1077 = vunpack.c.l.b16 %v986
  %v1078 = vunpack.c.h.b16 %v986
  %v1079 = vunpack.c.l.b16 %v987
  %v1080 = vunpack.c.h.b16 %v987
  %v1081 = vunpack.c.l.b16 %v988
  %v1082 = vunpack.c.h.b16 %v988
  %v1083 = vunpack.c.l.b16 %v989
  %v1084 = vunpack.c.h.b16 %v989
  %v1085 = vunpack.c.l.b16 %v990
  %v1086 = vunpack.c.h.b16 %v990
  %v1087 = vpack.c.b16 %v1023, %v1023
  %v1088 = vpack.c.b16 %v1024, %v1024
  %v1089 = vpack.c.b16 %v1025, %v1025
  %v1090 = vpack.c.b16 %v1026, %v1026
  %v1091 = vpack.c.b16 %v1027, %v1027
  %v1092 = vpack.c.b16 %v1028, %v1028
  %v1093 = vpack.c.b16 %v1029, %v1029
  %v1094 = vpack.c.b16 %v1030, %v1030
  %v1095 = vpack.c.b16 %v1031, %v1031
  %v1096 = vpack.c.b16 %v1032, %v1032
  %v1097 = vpack.c.b16 %v1033, %v1033
  %v1098 = vpack.c.b16 %v1034, %v1034
  %v1099 = vpack.c.b16 %v1035, %v1035
  %v1100 = vpack.c.b16 %v1036, %v1036
  %v1101 = vpack.c.b16 %v1037, %v1037
  %v1102 = vpack.c.b16 %v1038, %v1038
  %v1103 = vpack.c.b16 %v1039, %v1039
  %v1104 = vpack.c.b16 %v1040, %v1040
  %v1105 = vpack.c.b16 %v1041, %v1041
  %v1106 = vpack.c.b16 %v1042, %v1042
  %v1107 = vpack.c.b16 %v1043, %v1043
  %v1108 = vpack.c.b16 %v1044, %v1044
  %v1109 = vpack.c.b16 %v1045, %v1045
  %v1110 = vpack.c.b16 %v1046, %v1046
  %v1111 = vpack.c.b16 %v1047, %v1047
  %v1112 = vpack.c.b16 %v1048, %v1048
  %v1113 = vpack.c.b16 %v1049, %v1049
  %v1114 = vpack.c.b16 %v1050, %v1050
  %v1115 = vpack.c.b16 %v1051, %v1051
  %v1116 = vpack.c.b16 %v1052, %v1052
  %v1117 = vpack.c.b16 %v1053, %v1053
  %v1118 = vpack.c.b16 %v1054, %v1054
  %v1119 = vpack.c.b16 %v1055, %v1055
  %v1120 = vpack.c.b16 %v1056, %v1056
  %v1121 = vpack.c.b16 %v1057, %v1057
  %v1122 = vpack.c.b16 %v1058, %v1058
  %v1123 = vpack.c.b16 %v1059, %v1059
  %v1124 = vpack.c.b16 %v1060, %v1060
  %v1125 = vpack.c.b16 %v1061, %v1061
  %v1126 = vpack.c.b16 %v1062, %v1062
  %v1127 = vpack.c.b16 %v1063, %v1063
  %v1128 = vpack.c.b16 %v1064, %v1064
  %v1129 = vpack.c.b16 %v1065, %v1065
  %v1130 = vpack.c.b16 %v1066, %v1066
  %v1131 = vpack.c.b16 %v1067, %v1067
  %v1132 = vpack.c.b16 %v1068, %v1068
  %v1133 = vpack.c.b16 %v1069, %v1069
  %v1134 = vpack.c.b16 %v1070, %v1070
  %v1135 = vpack.c.b16 %v1071, %v1071
  %v1136 = vpack.c.b16 %v1072, %v1072
  %v1137 = vpack.c.b16 %v1073, %v1073
  %v1138 = vpack.c.b16 %v1074, %v1074
  %v1139 = vpack.c.b16 %v1075, %v1075
  %v1140 = vpack.c.b16 %v1076, %v1076
  %v1141 = vpack.c.b16 %v1077, %v1077
  %v1142 = vpack.c.b16 %v1078, %v1078
  %v1143 = vpack.c.b16 %v1079, %v1079
  %v1144 = vpack.c.b16 %v1080, %v1080
  %v1145 = vpack.c.b16 %v1081, %v1081
  %v1146 = vpack.c.b16 %v1082, %v1082
  %v1147 = vpack.c.b16 %v1083, %v1083
  %v1148 = vpack.c.b16 %v1084, %v1084
  %v1149 = vpack.c.b16 %v1085, %v1085
  %v1150 = vpack.c.b16 %v1086, %v1086
  %1215 = vst [vmem:[%s3] sm:$0xf] %v1087
  %1216 = vst [vmem:[%s3 + $0x4] sm:$0xf] %v1088
  %1217 = vst [vmem:[%s3 + $0x8] sm:$0xf] %v1089
  %1218 = vst [vmem:[%s3 + $0xc] sm:$0xf] %v1090
  %1219 = vst [vmem:[%s3 + $0x10] sm:$0xf] %v1091
  %1220 = vst [vmem:[%s3 + $0x14] sm:$0xf] %v1092
  %1221 = vst [vmem:[%s3 + $0x18] sm:$0xf] %v1093
  %1222 = vst [vmem:[%s3 + $0x1c] sm:$0xf] %v1094
  %1223 = vst [vmem:[%s3 + $0x20] sm:$0xf] %v1095
  %1224 = vst [vmem:[%s3 + $0x24] sm:$0xf] %v1096
  %1225 = vst [vmem:[%s3 + $0x28] sm:$0xf] %v1097
  %1226 = vst [vmem:[%s3 + $0x2c] sm:$0xf] %v1098
  %1227 = vst [vmem:[%s3 + $0x30] sm:$0xf] %v1099
  %1228 = vst [vmem:[%s3 + $0x34] sm:$0xf] %v1100
  %1229 = vst [vmem:[%s3 + $0x38] sm:$0xf] %v1101
  %1230 = vst [vmem:[%s3 + $0x3c] sm:$0xf] %v1102
  %1231 = vst [vmem:[%s3 + $0x40] sm:$0xf] %v1103
  %1232 = vst [vmem:[%s3 + $0x44] sm:$0xf] %v1104
  %1233 = vst [vmem:[%s3 + $0x48] sm:$0xf] %v1105
  %1234 = vst [vmem:[%s3 + $0x4c] sm:$0xf] %v1106
  %1235 = vst [vmem:[%s3 + $0x50] sm:$0xf] %v1107
  %1236 = vst [vmem:[%s3 + $0x54] sm:$0xf] %v1108
  %1237 = vst [vmem:[%s3 + $0x58] sm:$0xf] %v1109
  %1238 = vst [vmem:[%s3 + $0x5c] sm:$0xf] %v1110
  %1239 = vst [vmem:[%s3 + $0x60] sm:$0xf] %v1111
  %1240 = vst [vmem:[%s3 + $0x64] sm:$0xf] %v1112
  %1241 = vst [vmem:[%s3 + $0x68] sm:$0xf] %v1113
  %1242 = vst [vmem:[%s3 + $0x6c] sm:$0xf] %v1114
  %1243 = vst [vmem:[%s3 + $0x70] sm:$0xf] %v1115
  %1244 = vst [vmem:[%s3 + $0x74] sm:$0xf] %v1116
  %1245 = vst [vmem:[%s3 + $0x78] sm:$0xf] %v1117
  %1246 = vst [vmem:[%s3 + $0x7c] sm:$0xf] %v1118
  %1247 = vst [vmem:[%s3 + $0x80] sm:$0xf] %v1119
  %1248 = vst [vmem:[%s3 + $0x84] sm:$0xf] %v1120
  %1249 = vst [vmem:[%s3 + $0x88] sm:$0xf] %v1121
  %1250 = vst [vmem:[%s3 + $0x8c] sm:$0xf] %v1122
  %1251 = vst [vmem:[%s3 + $0x90] sm:$0xf] %v1123
  %1252 = vst [vmem:[%s3 + $0x94] sm:$0xf] %v1124
  %1253 = vst [vmem:[%s3 + $0x98] sm:$0xf] %v1125
  %1254 = vst [vmem:[%s3 + $0x9c] sm:$0xf] %v1126
  %1255 = vst [vmem:[%s3 + $0xa0] sm:$0xf] %v1127
  %1256 = vst [vmem:[%s3 + $0xa4] sm:$0xf] %v1128
  %1257 = vst [vmem:[%s3 + $0xa8] sm:$0xf] %v1129
  %1258 = vst [vmem:[%s3 + $0xac] sm:$0xf] %v1130
  %1259 = vst [vmem:[%s3 + $0xb0] sm:$0xf] %v1131
  %1260 = vst [vmem:[%s3 + $0xb4] sm:$0xf] %v1132
  %1261 = vst [vmem:[%s3 + $0xb8] sm:$0xf] %v1133
  %1262 = vst [vmem:[%s3 + $0xbc] sm:$0xf] %v1134
  %1263 = vst [vmem:[%s3 + $0xc0] sm:$0xf] %v1135
  %1264 = vst [vmem:[%s3 + $0xc4] sm:$0xf] %v1136
  %1265 = vst [vmem:[%s3 + $0xc8] sm:$0xf] %v1137
  %1266 = vst [vmem:[%s3 + $0xcc] sm:$0xf] %v1138
  %1267 = vst [vmem:[%s3 + $0xd0] sm:$0xf] %v1139
  %1268 = vst [vmem:[%s3 + $0xd4] sm:$0xf] %v1140
  %1269 = vst [vmem:[%s3 + $0xd8] sm:$0xf] %v1141
  %1270 = vst [vmem:[%s3 + $0xdc] sm:$0xf] %v1142
  %1271 = vst [vmem:[%s3 + $0xe0] sm:$0xf] %v1143
  %1272 = vst [vmem:[%s3 + $0xe4] sm:$0xf] %v1144
  %1273 = vst [vmem:[%s3 + $0xe8] sm:$0xf] %v1145
  %1274 = vst [vmem:[%s3 + $0xec] sm:$0xf] %v1146
  %1275 = vst [vmem:[%s3 + $0xf0] sm:$0xf] %v1147
  %1276 = vst [vmem:[%s3 + $0xf4] sm:$0xf] %v1148
  %1277 = vst [vmem:[%s3 + $0xf8] sm:$0xf] %v1149
  %1278 = vst [vmem:[%s3 + $0xfc] sm:$0xf] %v1150
  // Predicated region
  $region14: #{enet_encoder_forward.74} parent=0 // pred_check
    _
  $region15: #{enet_encoder_forward.74} parent=0 // pred_check_branch
    %1280 = sbr.rel (0) target = $region17
  $region16: #{enet_encoder_forward.74} parent=0 // pred_region
    _
  $region17: #{enet_encoder_forward.74} parent=0 // pred_fallthru
    _
  // Predicated region
  $region18: #{enet_encoder_forward.74} parent=0 // pred_check
    _
  $region19: #{enet_encoder_forward.74} parent=0 // pred_check_branch
    %1282 = sbr.rel (0) target = $region21
  $region20: #{enet_encoder_forward.74} parent=0 // pred_region
    _
  $region21: #{enet_encoder_forward.74} parent=0 // pred_fallthru
    _

// kernel: enet_encoder_forward.75
$region0: #{enet_encoder_forward.75}
  #allocation0 [shape = 'u32[]', space=smem, size = 0x4, offset = 0x4, fixed_abs, tag = 'smem constant byte address 0x4 - core index']
  #allocation1 [shape = 'u32[144,128]{1,0:T(1,128)}', space=vmem, size = 0x12000, scoped, tag = 'internal scratch']
  %s0 = inlined_call_operand.vmem [shape: bf16[512,3], index: 0, kind: input, shape index: {}]
  %s1 = inlined_call_operand.vmem [shape: bf16[512,3], index: 1, kind: input, shape index: {}]
  %s2 = inlined_call_operand.vmem [shape: bf16[512,3], index: 2, kind: input, shape index: {}]
  %s3 = inlined_call_operand.vmem [shape: bf16[512,3], index: 3, kind: input, shape index: {}]
  %s4 = inlined_call_operand.vmem [shape: bf16[512,3], index: 4, kind: input, shape index: {}]
  %s5 = inlined_call_operand.vmem [shape: bf16[512,3], index: 5, kind: input, shape index: {}]
  %s6 = inlined_call_operand.vmem [shape: bf16[512,3], index: 6, kind: input, shape index: {}]
  %s7 = inlined_call_operand.vmem [shape: bf16[512,3], index: 7, kind: input, shape index: {}]
  %s8 = inlined_call_operand.vmem [shape: bf16[512,3], index: 8, kind: input, shape index: {}]
  %s9 = inlined_call_operand.vmem [shape: f32[8,3], index: 9, kind: input, shape index: {}]
  %s10 = inlined_call_operand.vmem [shape: bf16[512,3], index: 10, kind: output, shape index: {}]
  %s11 = sld [smem:[#allocation0]]
  $region50: #{enet_encoder_forward.75} parent=0
    _
  %s13 = ssub.s32 1, %s11
  %s14 = scalar_select 0, %s13, %s11
  // Predicated region
  $region2: #{enet_encoder_forward.75} parent=0 // pred_check
    _
  $region3: #{enet_encoder_forward.75} parent=0 // pred_check_branch
    %16 = sbr.rel (0) target = $region5
  $region4: #{enet_encoder_forward.75} parent=0 // pred_region
    _
  $region5: #{enet_encoder_forward.75} parent=0 // pred_fallthru
    _
  // Predicated region
  $region6: #{enet_encoder_forward.75} parent=0 // pred_check
    _
  $region7: #{enet_encoder_forward.75} parent=0 // pred_check_branch
    %18 = sbr.rel (0) target = $region9
  $region8: #{enet_encoder_forward.75} parent=0 // pred_region
    _
  $region9: #{enet_encoder_forward.75} parent=0 // pred_fallthru
    _
  // Predicated region
  $region10: #{enet_encoder_forward.75} parent=0 // pred_check
    _
  $region11: #{enet_encoder_forward.75} parent=0 // pred_check_branch
    %20 = sbr.rel (0) target = $region13
  $region12: #{enet_encoder_forward.75} parent=0 // pred_region
    _
  $region13: #{enet_encoder_forward.75} parent=0 // pred_fallthru
    _
  // Predicated region
  $region14: #{enet_encoder_forward.75} parent=0 // pred_check
    _
  $region15: #{enet_encoder_forward.75} parent=0 // pred_check_branch
    %22 = sbr.rel (0) target = $region17
  $region16: #{enet_encoder_forward.75} parent=0 // pred_region
    _
  $region17: #{enet_encoder_forward.75} parent=0 // pred_fallthru
    _
  // Predicated region
  $region18: #{enet_encoder_forward.75} parent=0 // pred_check
    _
  $region19: #{enet_encoder_forward.75} parent=0 // pred_check_branch
    %24 = sbr.rel (0) target = $region21
  $region20: #{enet_encoder_forward.75} parent=0 // pred_region
    _
  $region21: #{enet_encoder_forward.75} parent=0 // pred_fallthru
    _
  // Predicated region
  $region22: #{enet_encoder_forward.75} parent=0 // pred_check
    _
  $region23: #{enet_encoder_forward.75} parent=0 // pred_check_branch
    %26 = sbr.rel (0) target = $region25
  $region24: #{enet_encoder_forward.75} parent=0 // pred_region
    _
  $region25: #{enet_encoder_forward.75} parent=0 // pred_fallthru
    _
  // Predicated region
  $region26: #{enet_encoder_forward.75} parent=0 // pred_check
    _
  $region27: #{enet_encoder_forward.75} parent=0 // pred_check_branch
    %28 = sbr.rel (0) target = $region29
  $region28: #{enet_encoder_forward.75} parent=0 // pred_region
    _
  $region29: #{enet_encoder_forward.75} parent=0 // pred_fallthru
    _
  // Predicated region
  $region30: #{enet_encoder_forward.75} parent=0 // pred_check
    _
  $region31: #{enet_encoder_forward.75} parent=0 // pred_check_branch
    %30 = sbr.rel (0) target = $region33
  $region32: #{enet_encoder_forward.75} parent=0 // pred_region
    _
  $region33: #{enet_encoder_forward.75} parent=0 // pred_fallthru
    _
  // Predicated region
  $region34: #{enet_encoder_forward.75} parent=0 // pred_check
    _
  $region35: #{enet_encoder_forward.75} parent=0 // pred_check_branch
    %32 = sbr.rel (0) target = $region37
  $region36: #{enet_encoder_forward.75} parent=0 // pred_region
    _
  $region37: #{enet_encoder_forward.75} parent=0 // pred_fallthru
    _
  // Predicated region
  $region38: #{enet_encoder_forward.75} parent=0 // pred_check
    _
  $region39: #{enet_encoder_forward.75} parent=0 // pred_check_branch
    %34 = sbr.rel (0) target = $region41
  $region40: #{enet_encoder_forward.75} parent=0 // pred_region
    _
  $region41: #{enet_encoder_forward.75} parent=0 // pred_fallthru
    _
  %v35 = vld [vmem:[%s0] sm:$0xf]
  %v36 = vld [vmem:[%s0 + $0x4] sm:$0xf]
  %v37 = vld [vmem:[%s0 + $0x8] sm:$0xf]
  %v38 = vld [vmem:[%s0 + $0xc] sm:$0xf]
  %v39 = vld [vmem:[%s0 + $0x10] sm:$0xf]
  %v40 = vld [vmem:[%s0 + $0x14] sm:$0xf]
  %v41 = vld [vmem:[%s0 + $0x18] sm:$0xf]
  %v42 = vld [vmem:[%s0 + $0x1c] sm:$0xf]
  %v43 = vld [vmem:[%s0 + $0x20] sm:$0xf]
  %v44 = vld [vmem:[%s0 + $0x24] sm:$0xf]
  %v45 = vld [vmem:[%s0 + $0x28] sm:$0xf]
  %v46 = vld [vmem:[%s0 + $0x2c] sm:$0xf]
  %v47 = vld [vmem:[%s0 + $0x30] sm:$0xf]
  %v48 = vld [vmem:[%s0 + $0x34] sm:$0xf]
  %v49 = vld [vmem:[%s0 + $0x38] sm:$0xf]
  %v50 = vld [vmem:[%s0 + $0x3c] sm:$0xf]
  %v51 = vld [vmem:[%s0 + $0x40] sm:$0xf]
  %v52 = vld [vmem:[%s0 + $0x44] sm:$0xf]
  %v53 = vld [vmem:[%s0 + $0x48] sm:$0xf]
  %v54 = vld [vmem:[%s0 + $0x4c] sm:$0xf]
  %v55 = vld [vmem:[%s0 + $0x50] sm:$0xf]
  %v56 = vld [vmem:[%s0 + $0x54] sm:$0xf]
  %v57 = vld [vmem:[%s0 + $0x58] sm:$0xf]
  %v58 = vld [vmem:[%s0 + $0x5c] sm:$0xf]
  %v59 = vld [vmem:[%s0 + $0x60] sm:$0xf]
  %v60 = vld [vmem:[%s0 + $0x64] sm:$0xf]
  %v61 = vld [vmem:[%s0 + $0x68] sm:$0xf]
  %v62 = vld [vmem:[%s0 + $0x6c] sm:$0xf]
  %v63 = vld [vmem:[%s0 + $0x70] sm:$0xf]
  %v64 = vld [vmem:[%s0 + $0x74] sm:$0xf]
  %v65 = vld [vmem:[%s0 + $0x78] sm:$0xf]
  %v66 = vld [vmem:[%s0 + $0x7c] sm:$0xf]
  %v67 = vld [vmem:[%s0 + $0x80] sm:$0xf]
  %v68 = vld [vmem:[%s0 + $0x84] sm:$0xf]
  %v69 = vld [vmem:[%s0 + $0x88] sm:$0xf]
  %v70 = vld [vmem:[%s0 + $0x8c] sm:$0xf]
  %v71 = vld [vmem:[%s0 + $0x90] sm:$0xf]
  %v72 = vld [vmem:[%s0 + $0x94] sm:$0xf]
  %v73 = vld [vmem:[%s0 + $0x98] sm:$0xf]
  %v74 = vld [vmem:[%s0 + $0x9c] sm:$0xf]
  %v75 = vld [vmem:[%s0 + $0xa0] sm:$0xf]
  %v76 = vld [vmem:[%s0 + $0xa4] sm:$0xf]
  %v77 = vld [vmem:[%s0 + $0xa8] sm:$0xf]
  %v78 = vld [vmem:[%s0 + $0xac] sm:$0xf]
  %v79 = vld [vmem:[%s0 + $0xb0] sm:$0xf]
  %v80 = vld [vmem:[%s0 + $0xb4] sm:$0xf]
  %v81 = vld [vmem:[%s0 + $0xb8] sm:$0xf]
  %v82 = vld [vmem:[%s0 + $0xbc] sm:$0xf]
  %v83 = vld [vmem:[%s0 + $0xc0] sm:$0xf]
  %v84 = vld [vmem:[%s0 + $0xc4] sm:$0xf]
  %v85 = vld [vmem:[%s0 + $0xc8] sm:$0xf]
  %v86 = vld [vmem:[%s0 + $0xcc] sm:$0xf]
  %v87 = vld [vmem:[%s0 + $0xd0] sm:$0xf]
  %v88 = vld [vmem:[%s0 + $0xd4] sm:$0xf]
  %v89 = vld [vmem:[%s0 + $0xd8] sm:$0xf]
  %v90 = vld [vmem:[%s0 + $0xdc] sm:$0xf]
  %v91 = vld [vmem:[%s0 + $0xe0] sm:$0xf]
  %v92 = vld [vmem:[%s0 + $0xe4] sm:$0xf]
  %v93 = vld [vmem:[%s0 + $0xe8] sm:$0xf]
  %v94 = vld [vmem:[%s0 + $0xec] sm:$0xf]
  %v95 = vld [vmem:[%s0 + $0xf0] sm:$0xf]
  %v96 = vld [vmem:[%s0 + $0xf4] sm:$0xf]
  %v97 = vld [vmem:[%s0 + $0xf8] sm:$0xf]
  %v98 = vld [vmem:[%s0 + $0xfc] sm:$0xf]
  %v99 = vld [vmem:[%s1] sm:$0xf]
  %v100 = vld [vmem:[%s1 + $0x4] sm:$0xf]
  %v101 = vld [vmem:[%s1 + $0x8] sm:$0xf]
  %v102 = vld [vmem:[%s1 + $0xc] sm:$0xf]
  %v103 = vld [vmem:[%s1 + $0x10] sm:$0xf]
  %v104 = vld [vmem:[%s1 + $0x14] sm:$0xf]
  %v105 = vld [vmem:[%s1 + $0x18] sm:$0xf]
  %v106 = vld [vmem:[%s1 + $0x1c] sm:$0xf]
  %v107 = vld [vmem:[%s1 + $0x20] sm:$0xf]
  %v108 = vld [vmem:[%s1 + $0x24] sm:$0xf]
  %v109 = vld [vmem:[%s1 + $0x28] sm:$0xf]
  %v110 = vld [vmem:[%s1 + $0x2c] sm:$0xf]
  %v111 = vld [vmem:[%s1 + $0x30] sm:$0xf]
  %v112 = vld [vmem:[%s1 + $0x34] sm:$0xf]
  %v113 = vld [vmem:[%s1 + $0x38] sm:$0xf]
  %v114 = vld [vmem:[%s1 + $0x3c] sm:$0xf]
  %v115 = vld [vmem:[%s1 + $0x40] sm:$0xf]
  %v116 = vld [vmem:[%s1 + $0x44] sm:$0xf]
  %v117 = vld [vmem:[%s1 + $0x48] sm:$0xf]
  %v118 = vld [vmem:[%s1 + $0x4c] sm:$0xf]
  %v119 = vld [vmem:[%s1 + $0x50] sm:$0xf]
  %v120 = vld [vmem:[%s1 + $0x54] sm:$0xf]
  %v121 = vld [vmem:[%s1 + $0x58] sm:$0xf]
  %v122 = vld [vmem:[%s1 + $0x5c] sm:$0xf]
  %v123 = vld [vmem:[%s1 + $0x60] sm:$0xf]
  %v124 = vld [vmem:[%s1 + $0x64] sm:$0xf]
  %v125 = vld [vmem:[%s1 + $0x68] sm:$0xf]
  %v126 = vld [vmem:[%s1 + $0x6c] sm:$0xf]
  %v127 = vld [vmem:[%s1 + $0x70] sm:$0xf]
  %v128 = vld [vmem:[%s1 + $0x74] sm:$0xf]
  %v129 = vld [vmem:[%s1 + $0x78] sm:$0xf]
  %v130 = vld [vmem:[%s1 + $0x7c] sm:$0xf]
  %v131 = vld [vmem:[%s1 + $0x80] sm:$0xf]
  %v132 = vld [vmem:[%s1 + $0x84] sm:$0xf]
  %v133 = vld [vmem:[%s1 + $0x88] sm:$0xf]
  %v134 = vld [vmem:[%s1 + $0x8c] sm:$0xf]
  %v135 = vld [vmem:[%s1 + $0x90] sm:$0xf]
  %v136 = vld [vmem:[%s1 + $0x94] sm:$0xf]
  %v137 = vld [vmem:[%s1 + $0x98] sm:$0xf]
  %v138 = vld [vmem:[%s1 + $0x9c] sm:$0xf]
  %v139 = vld [vmem:[%s1 + $0xa0] sm:$0xf]
  %v140 = vld [vmem:[%s1 + $0xa4] sm:$0xf]
  %v141 = vld [vmem:[%s1 + $0xa8] sm:$0xf]
  %v142 = vld [vmem:[%s1 + $0xac] sm:$0xf]
  %v143 = vld [vmem:[%s1 + $0xb0] sm:$0xf]
  %v144 = vld [vmem:[%s1 + $0xb4] sm:$0xf]
  %v145 = vld [vmem:[%s1 + $0xb8] sm:$0xf]
  %v146 = vld [vmem:[%s1 + $0xbc] sm:$0xf]
  %v147 = vld [vmem:[%s1 + $0xc0] sm:$0xf]
  %v148 = vld [vmem:[%s1 + $0xc4] sm:$0xf]
  %v149 = vld [vmem:[%s1 + $0xc8] sm:$0xf]
  %v150 = vld [vmem:[%s1 + $0xcc] sm:$0xf]
  %v151 = vld [vmem:[%s1 + $0xd0] sm:$0xf]
  %v152 = vld [vmem:[%s1 + $0xd4] sm:$0xf]
  %v153 = vld [vmem:[%s1 + $0xd8] sm:$0xf]
  %v154 = vld [vmem:[%s1 + $0xdc] sm:$0xf]
  %v155 = vld [vmem:[%s1 + $0xe0] sm:$0xf]
  %v156 = vld [vmem:[%s1 + $0xe4] sm:$0xf]
  %v157 = vld [vmem:[%s1 + $0xe8] sm:$0xf]
  %v158 = vld [vmem:[%s1 + $0xec] sm:$0xf]
  %v159 = vld [vmem:[%s1 + $0xf0] sm:$0xf]
  %v160 = vld [vmem:[%s1 + $0xf4] sm:$0xf]
  %v161 = vld [vmem:[%s1 + $0xf8] sm:$0xf]
  %v162 = vld [vmem:[%s1 + $0xfc] sm:$0xf]
  %v163 = vmax.bf16 %v35, %v99
  %v164 = vmax.bf16 %v36, %v100
  %v165 = vmax.bf16 %v37, %v101
  %v166 = vmax.bf16 %v38, %v102
  %v167 = vmax.bf16 %v39, %v103
  %v168 = vmax.bf16 %v40, %v104
  %v169 = vmax.bf16 %v41, %v105
  %v170 = vmax.bf16 %v42, %v106
  %v171 = vmax.bf16 %v43, %v107
  %v172 = vmax.bf16 %v44, %v108
  %v173 = vmax.bf16 %v45, %v109
  %v174 = vmax.bf16 %v46, %v110
  %v175 = vmax.bf16 %v47, %v111
  %v176 = vmax.bf16 %v48, %v112
  %v177 = vmax.bf16 %v49, %v113
  %v178 = vmax.bf16 %v50, %v114
  %v179 = vmax.bf16 %v51, %v115
  %v180 = vmax.bf16 %v52, %v116
  %v181 = vmax.bf16 %v53, %v117
  %v182 = vmax.bf16 %v54, %v118
  %v183 = vmax.bf16 %v55, %v119
  %v184 = vmax.bf16 %v56, %v120
  %v185 = vmax.bf16 %v57, %v121
  %v186 = vmax.bf16 %v58, %v122
  %v187 = vmax.bf16 %v59, %v123
  %v188 = vmax.bf16 %v60, %v124
  %v189 = vmax.bf16 %v61, %v125
  %v190 = vmax.bf16 %v62, %v126
  %v191 = vmax.bf16 %v63, %v127
  %v192 = vmax.bf16 %v64, %v128
  %v193 = vmax.bf16 %v65, %v129
  %v194 = vmax.bf16 %v66, %v130
  %v195 = vmax.bf16 %v67, %v131
  %v196 = vmax.bf16 %v68, %v132
  %v197 = vmax.bf16 %v69, %v133
  %v198 = vmax.bf16 %v70, %v134
  %v199 = vmax.bf16 %v71, %v135
  %v200 = vmax.bf16 %v72, %v136
  %v201 = vmax.bf16 %v73, %v137
  %v202 = vmax.bf16 %v74, %v138
  %v203 = vmax.bf16 %v75, %v139
  %v204 = vmax.bf16 %v76, %v140
  %v205 = vmax.bf16 %v77, %v141
  %v206 = vmax.bf16 %v78, %v142
  %v207 = vmax.bf16 %v79, %v143
  %v208 = vmax.bf16 %v80, %v144
  %v209 = vmax.bf16 %v81, %v145
  %v210 = vmax.bf16 %v82, %v146
  %v211 = vmax.bf16 %v83, %v147
  %v212 = vmax.bf16 %v84, %v148
  %v213 = vmax.bf16 %v85, %v149
  %v214 = vmax.bf16 %v86, %v150
  %v215 = vmax.bf16 %v87, %v151
  %v216 = vmax.bf16 %v88, %v152
  %v217 = vmax.bf16 %v89, %v153
  %v218 = vmax.bf16 %v90, %v154
  %v219 = vmax.bf16 %v91, %v155
  %v220 = vmax.bf16 %v92, %v156
  %v221 = vmax.bf16 %v93, %v157
  %v222 = vmax.bf16 %v94, %v158
  %v223 = vmax.bf16 %v95, %v159
  %v224 = vmax.bf16 %v96, %v160
  %v225 = vmax.bf16 %v97, %v161
  %v226 = vmax.bf16 %v98, %v162
  %v227 = vld [vmem:[%s2] sm:$0xf]
  %v228 = vld [vmem:[%s2 + $0x4] sm:$0xf]
  %v229 = vld [vmem:[%s2 + $0x8] sm:$0xf]
  %v230 = vld [vmem:[%s2 + $0xc] sm:$0xf]
  %v231 = vld [vmem:[%s2 + $0x10] sm:$0xf]
  %v232 = vld [vmem:[%s2 + $0x14] sm:$0xf]
  %v233 = vld [vmem:[%s2 + $0x18] sm:$0xf]
  %v234 = vld [vmem:[%s2 + $0x1c] sm:$0xf]
  %v235 = vld [vmem:[%s2 + $0x20] sm:$0xf]
  %v236 = vld [vmem:[%s2 + $0x24] sm:$0xf]
  %v237 = vld [vmem:[%s2 + $0x28] sm:$0xf]
  %v238 = vld [vmem:[%s2 + $0x2c] sm:$0xf]
  %v239 = vld [vmem:[%s2 + $0x30] sm:$0xf]
  %v240 = vld [vmem:[%s2 + $0x34] sm:$0xf]
  %v241 = vld [vmem:[%s2 + $0x38] sm:$0xf]
  %v242 = vld [vmem:[%s2 + $0x3c] sm:$0xf]
  %v243 = vld [vmem:[%s2 + $0x40] sm:$0xf]
  %v244 = vld [vmem:[%s2 + $0x44] sm:$0xf]
  %v245 = vld [vmem:[%s2 + $0x48] sm:$0xf]
  %v246 = vld [vmem:[%s2 + $0x4c] sm:$0xf]
  %v247 = vld [vmem:[%s2 + $0x50] sm:$0xf]
  %v248 = vld [vmem:[%s2 + $0x54] sm:$0xf]
  %v249 = vld [vmem:[%s2 + $0x58] sm:$0xf]
  %v250 = vld [vmem:[%s2 + $0x5c] sm:$0xf]
  %v251 = vld [vmem:[%s2 + $0x60] sm:$0xf]
  %v252 = vld [vmem:[%s2 + $0x64] sm:$0xf]
  %v253 = vld [vmem:[%s2 + $0x68] sm:$0xf]
  %v254 = vld [vmem:[%s2 + $0x6c] sm:$0xf]
  %v255 = vld [vmem:[%s2 + $0x70] sm:$0xf]
  %v256 = vld [vmem:[%s2 + $0x74] sm:$0xf]
  %v257 = vld [vmem:[%s2 + $0x78] sm:$0xf]
  %v258 = vld [vmem:[%s2 + $0x7c] sm:$0xf]
  %v259 = vld [vmem:[%s2 + $0x80] sm:$0xf]
  %v260 = vld [vmem:[%s2 + $0x84] sm:$0xf]
  %v261 = vld [vmem:[%s2 + $0x88] sm:$0xf]
  %v262 = vld [vmem:[%s2 + $0x8c] sm:$0xf]
  %v263 = vld [vmem:[%s2 + $0x90] sm:$0xf]
  %v264 = vld [vmem:[%s2 + $0x94] sm:$0xf]
  %v265 = vld [vmem:[%s2 + $0x98] sm:$0xf]
  %v266 = vld [vmem:[%s2 + $0x9c] sm:$0xf]
  %v267 = vld [vmem:[%s2 + $0xa0] sm:$0xf]
  %v268 = vld [vmem:[%s2 + $0xa4] sm:$0xf]
  %v269 = vld [vmem:[%s2 + $0xa8] sm:$0xf]
  %v270 = vld [vmem:[%s2 + $0xac] sm:$0xf]
  %v271 = vld [vmem:[%s2 + $0xb0] sm:$0xf]
  %v272 = vld [vmem:[%s2 + $0xb4] sm:$0xf]
  %v273 = vld [vmem:[%s2 + $0xb8] sm:$0xf]
  %v274 = vld [vmem:[%s2 + $0xbc] sm:$0xf]
  %v275 = vld [vmem:[%s2 + $0xc0] sm:$0xf]
  %v276 = vld [vmem:[%s2 + $0xc4] sm:$0xf]
  %v277 = vld [vmem:[%s2 + $0xc8] sm:$0xf]
  %v278 = vld [vmem:[%s2 + $0xcc] sm:$0xf]
  %v279 = vld [vmem:[%s2 + $0xd0] sm:$0xf]
  %v280 = vld [vmem:[%s2 + $0xd4] sm:$0xf]
  %v281 = vld [vmem:[%s2 + $0xd8] sm:$0xf]
  %v282 = vld [vmem:[%s2 + $0xdc] sm:$0xf]
  %v283 = vld [vmem:[%s2 + $0xe0] sm:$0xf]
  %v284 = vld [vmem:[%s2 + $0xe4] sm:$0xf]
  %v285 = vld [vmem:[%s2 + $0xe8] sm:$0xf]
  %v286 = vld [vmem:[%s2 + $0xec] sm:$0xf]
  %v287 = vld [vmem:[%s2 + $0xf0] sm:$0xf]
  %v288 = vld [vmem:[%s2 + $0xf4] sm:$0xf]
  %v289 = vld [vmem:[%s2 + $0xf8] sm:$0xf]
  %v290 = vld [vmem:[%s2 + $0xfc] sm:$0xf]
  %v291 = vmax.bf16 %v163, %v227
  %v292 = vmax.bf16 %v164, %v228
  %v293 = vmax.bf16 %v165, %v229
  %v294 = vmax.bf16 %v166, %v230
  %v295 = vmax.bf16 %v167, %v231
  %v296 = vmax.bf16 %v168, %v232
  %v297 = vmax.bf16 %v169, %v233
  %v298 = vmax.bf16 %v170, %v234
  %v299 = vmax.bf16 %v171, %v235
  %v300 = vmax.bf16 %v172, %v236
  %v301 = vmax.bf16 %v173, %v237
  %v302 = vmax.bf16 %v174, %v238
  %v303 = vmax.bf16 %v175, %v239
  %v304 = vmax.bf16 %v176, %v240
  %v305 = vmax.bf16 %v177, %v241
  %v306 = vmax.bf16 %v178, %v242
  %v307 = vmax.bf16 %v179, %v243
  %v308 = vmax.bf16 %v180, %v244
  %v309 = vmax.bf16 %v181, %v245
  %v310 = vmax.bf16 %v182, %v246
  %v311 = vmax.bf16 %v183, %v247
  %v312 = vmax.bf16 %v184, %v248
  %v313 = vmax.bf16 %v185, %v249
  %v314 = vmax.bf16 %v186, %v250
  %v315 = vmax.bf16 %v187, %v251
  %v316 = vmax.bf16 %v188, %v252
  %v317 = vmax.bf16 %v189, %v253
  %v318 = vmax.bf16 %v190, %v254
  %v319 = vmax.bf16 %v191, %v255
  %v320 = vmax.bf16 %v192, %v256
  %v321 = vmax.bf16 %v193, %v257
  %v322 = vmax.bf16 %v194, %v258
  %v323 = vmax.bf16 %v195, %v259
  %v324 = vmax.bf16 %v196, %v260
  %v325 = vmax.bf16 %v197, %v261
  %v326 = vmax.bf16 %v198, %v262
  %v327 = vmax.bf16 %v199, %v263
  %v328 = vmax.bf16 %v200, %v264
  %v329 = vmax.bf16 %v201, %v265
  %v330 = vmax.bf16 %v202, %v266
  %v331 = vmax.bf16 %v203, %v267
  %v332 = vmax.bf16 %v204, %v268
  %v333 = vmax.bf16 %v205, %v269
  %v334 = vmax.bf16 %v206, %v270
  %v335 = vmax.bf16 %v207, %v271
  %v336 = vmax.bf16 %v208, %v272
  %v337 = vmax.bf16 %v209, %v273
  %v338 = vmax.bf16 %v210, %v274
  %v339 = vmax.bf16 %v211, %v275
  %v340 = vmax.bf16 %v212, %v276
  %v341 = vmax.bf16 %v213, %v277
  %v342 = vmax.bf16 %v214, %v278
  %v343 = vmax.bf16 %v215, %v279
  %v344 = vmax.bf16 %v216, %v280
  %v345 = vmax.bf16 %v217, %v281
  %v346 = vmax.bf16 %v218, %v282
  %v347 = vmax.bf16 %v219, %v283
  %v348 = vmax.bf16 %v220, %v284
  %v349 = vmax.bf16 %v221, %v285
  %v350 = vmax.bf16 %v222, %v286
  %v351 = vmax.bf16 %v223, %v287
  %v352 = vmax.bf16 %v224, %v288
  %v353 = vmax.bf16 %v225, %v289
  %v354 = vmax.bf16 %v226, %v290
  %v355 = vld [vmem:[%s3] sm:$0xf]
  %v356 = vld [vmem:[%s3 + $0x4] sm:$0xf]
  %v357 = vld [vmem:[%s3 + $0x8] sm:$0xf]
  %v358 = vld [vmem:[%s3 + $0xc] sm:$0xf]
  %v359 = vld [vmem:[%s3 + $0x10] sm:$0xf]
  %v360 = vld [vmem:[%s3 + $0x14] sm:$0xf]
  %v361 = vld [vmem:[%s3 + $0x18] sm:$0xf]
  %v362 = vld [vmem:[%s3 + $0x1c] sm:$0xf]
  %v363 = vld [vmem:[%s3 + $0x20] sm:$0xf]
  %v364 = vld [vmem:[%s3 + $0x24] sm:$0xf]
  %v365 = vld [vmem:[%s3 + $0x28] sm:$0xf]
  %v366 = vld [vmem:[%s3 + $0x2c] sm:$0xf]
  %v367 = vld [vmem:[%s3 + $0x30] sm:$0xf]
  %v368 = vld [vmem:[%s3 + $0x34] sm:$0xf]
  %v369 = vld [vmem:[%s3 + $0x38] sm:$0xf]
  %v370 = vld [vmem:[%s3 + $0x3c] sm:$0xf]
  %v371 = vld [vmem:[%s3 + $0x40] sm:$0xf]
  %v372 = vld [vmem:[%s3 + $0x44] sm:$0xf]
  %v373 = vld [vmem:[%s3 + $0x48] sm:$0xf]
  %v374 = vld [vmem:[%s3 + $0x4c] sm:$0xf]
  %v375 = vld [vmem:[%s3 + $0x50] sm:$0xf]
  %v376 = vld [vmem:[%s3 + $0x54] sm:$0xf]
  %v377 = vld [vmem:[%s3 + $0x58] sm:$0xf]
  %v378 = vld [vmem:[%s3 + $0x5c] sm:$0xf]
  %v379 = vld [vmem:[%s3 + $0x60] sm:$0xf]
  %v380 = vld [vmem:[%s3 + $0x64] sm:$0xf]
  %v381 = vld [vmem:[%s3 + $0x68] sm:$0xf]
  %v382 = vld [vmem:[%s3 + $0x6c] sm:$0xf]
  %v383 = vld [vmem:[%s3 + $0x70] sm:$0xf]
  %v384 = vld [vmem:[%s3 + $0x74] sm:$0xf]
  %v385 = vld [vmem:[%s3 + $0x78] sm:$0xf]
  %v386 = vld [vmem:[%s3 + $0x7c] sm:$0xf]
  %v387 = vld [vmem:[%s3 + $0x80] sm:$0xf]
  %v388 = vld [vmem:[%s3 + $0x84] sm:$0xf]
  %v389 = vld [vmem:[%s3 + $0x88] sm:$0xf]
  %v390 = vld [vmem:[%s3 + $0x8c] sm:$0xf]
  %v391 = vld [vmem:[%s3 + $0x90] sm:$0xf]
  %v392 = vld [vmem:[%s3 + $0x94] sm:$0xf]
  %v393 = vld [vmem:[%s3 + $0x98] sm:$0xf]
  %v394 = vld [vmem:[%s3 + $0x9c] sm:$0xf]
  %v395 = vld [vmem:[%s3 + $0xa0] sm:$0xf]
  %v396 = vld [vmem:[%s3 + $0xa4] sm:$0xf]
  %v397 = vld [vmem:[%s3 + $0xa8] sm:$0xf]
  %v398 = vld [vmem:[%s3 + $0xac] sm:$0xf]
  %v399 = vld [vmem:[%s3 + $0xb0] sm:$0xf]
  %v400 = vld [vmem:[%s3 + $0xb4] sm:$0xf]
  %v401 = vld [vmem:[%s3 + $0xb8] sm:$0xf]
  %v402 = vld [vmem:[%s3 + $0xbc] sm:$0xf]
  %v403 = vld [vmem:[%s3 + $0xc0] sm:$0xf]
  %v404 = vld [vmem:[%s3 + $0xc4] sm:$0xf]
  %v405 = vld [vmem:[%s3 + $0xc8] sm:$0xf]
  %v406 = vld [vmem:[%s3 + $0xcc] sm:$0xf]
  %v407 = vld [vmem:[%s3 + $0xd0] sm:$0xf]
  %v408 = vld [vmem:[%s3 + $0xd4] sm:$0xf]
  %v409 = vld [vmem:[%s3 + $0xd8] sm:$0xf]
  %v410 = vld [vmem:[%s3 + $0xdc] sm:$0xf]
  %v411 = vld [vmem:[%s3 + $0xe0] sm:$0xf]
  %v412 = vld [vmem:[%s3 + $0xe4] sm:$0xf]
  %v413 = vld [vmem:[%s3 + $0xe8] sm:$0xf]
  %v414 = vld [vmem:[%s3 + $0xec] sm:$0xf]
  %v415 = vld [vmem:[%s3 + $0xf0] sm:$0xf]
  %v416 = vld [vmem:[%s3 + $0xf4] sm:$0xf]
  %v417 = vld [vmem:[%s3 + $0xf8] sm:$0xf]
  %v418 = vld [vmem:[%s3 + $0xfc] sm:$0xf]
  %v419 = vmax.bf16 %v291, %v355
  %v420 = vmax.bf16 %v292, %v356
  %v421 = vmax.bf16 %v293, %v357
  %v422 = vmax.bf16 %v294, %v358
  %v423 = vmax.bf16 %v295, %v359
  %v424 = vmax.bf16 %v296, %v360
  %v425 = vmax.bf16 %v297, %v361
  %v426 = vmax.bf16 %v298, %v362
  %v427 = vmax.bf16 %v299, %v363
  %v428 = vmax.bf16 %v300, %v364
  %v429 = vmax.bf16 %v301, %v365
  %v430 = vmax.bf16 %v302, %v366
  %v431 = vmax.bf16 %v303, %v367
  %v432 = vmax.bf16 %v304, %v368
  %v433 = vmax.bf16 %v305, %v369
  %v434 = vmax.bf16 %v306, %v370
  %v435 = vmax.bf16 %v307, %v371
  %v436 = vmax.bf16 %v308, %v372
  %v437 = vmax.bf16 %v309, %v373
  %v438 = vmax.bf16 %v310, %v374
  %v439 = vmax.bf16 %v311, %v375
  %v440 = vmax.bf16 %v312, %v376
  %v441 = vmax.bf16 %v313, %v377
  %v442 = vmax.bf16 %v314, %v378
  %v443 = vmax.bf16 %v315, %v379
  %v444 = vmax.bf16 %v316, %v380
  %v445 = vmax.bf16 %v317, %v381
  %v446 = vmax.bf16 %v318, %v382
  %v447 = vmax.bf16 %v319, %v383
  %v448 = vmax.bf16 %v320, %v384
  %v449 = vmax.bf16 %v321, %v385
  %v450 = vmax.bf16 %v322, %v386
  %v451 = vmax.bf16 %v323, %v387
  %v452 = vmax.bf16 %v324, %v388
  %v453 = vmax.bf16 %v325, %v389
  %v454 = vmax.bf16 %v326, %v390
  %v455 = vmax.bf16 %v327, %v391
  %v456 = vmax.bf16 %v328, %v392
  %v457 = vmax.bf16 %v329, %v393
  %v458 = vmax.bf16 %v330, %v394
  %v459 = vmax.bf16 %v331, %v395
  %v460 = vmax.bf16 %v332, %v396
  %v461 = vmax.bf16 %v333, %v397
  %v462 = vmax.bf16 %v334, %v398
  %v463 = vmax.bf16 %v335, %v399
  %v464 = vmax.bf16 %v336, %v400
  %v465 = vmax.bf16 %v337, %v401
  %v466 = vmax.bf16 %v338, %v402
  %v467 = vmax.bf16 %v339, %v403
  %v468 = vmax.bf16 %v340, %v404
  %v469 = vmax.bf16 %v341, %v405
  %v470 = vmax.bf16 %v342, %v406
  %v471 = vmax.bf16 %v343, %v407
  %v472 = vmax.bf16 %v344, %v408
  %v473 = vmax.bf16 %v345, %v409
  %v474 = vmax.bf16 %v346, %v410
  %v475 = vmax.bf16 %v347, %v411
  %v476 = vmax.bf16 %v348, %v412
  %v477 = vmax.bf16 %v349, %v413
  %v478 = vmax.bf16 %v350, %v414
  %v479 = vmax.bf16 %v351, %v415
  %v480 = vmax.bf16 %v352, %v416
  %v481 = vmax.bf16 %v353, %v417
  %v482 = vmax.bf16 %v354, %v418
  %v483 = vld [vmem:[%s4] sm:$0xf]
  %v484 = vld [vmem:[%s4 + $0x4] sm:$0xf]
  %v485 = vld [vmem:[%s4 + $0x8] sm:$0xf]
  %v486 = vld [vmem:[%s4 + $0xc] sm:$0xf]
  %v487 = vld [vmem:[%s4 + $0x10] sm:$0xf]
  %v488 = vld [vmem:[%s4 + $0x14] sm:$0xf]
  %v489 = vld [vmem:[%s4 + $0x18] sm:$0xf]
  %v490 = vld [vmem:[%s4 + $0x1c] sm:$0xf]
  %v491 = vld [vmem:[%s4 + $0x20] sm:$0xf]
  %v492 = vld [vmem:[%s4 + $0x24] sm:$0xf]
  %v493 = vld [vmem:[%s4 + $0x28] sm:$0xf]
  %v494 = vld [vmem:[%s4 + $0x2c] sm:$0xf]
  %v495 = vld [vmem:[%s4 + $0x30] sm:$0xf]
  %v496 = vld [vmem:[%s4 + $0x34] sm:$0xf]
  %v497 = vld [vmem:[%s4 + $0x38] sm:$0xf]
  %v498 = vld [vmem:[%s4 + $0x3c] sm:$0xf]
  %v499 = vld [vmem:[%s4 + $0x40] sm:$0xf]
  %v500 = vld [vmem:[%s4 + $0x44] sm:$0xf]
  %v501 = vld [vmem:[%s4 + $0x48] sm:$0xf]
  %v502 = vld [vmem:[%s4 + $0x4c] sm:$0xf]
  %v503 = vld [vmem:[%s4 + $0x50] sm:$0xf]
  %v504 = vld [vmem:[%s4 + $0x54] sm:$0xf]
  %v505 = vld [vmem:[%s4 + $0x58] sm:$0xf]
  %v506 = vld [vmem:[%s4 + $0x5c] sm:$0xf]
  %v507 = vld [vmem:[%s4 + $0x60] sm:$0xf]
  %v508 = vld [vmem:[%s4 + $0x64] sm:$0xf]
  %v509 = vld [vmem:[%s4 + $0x68] sm:$0xf]
  %v510 = vld [vmem:[%s4 + $0x6c] sm:$0xf]
  %v511 = vld [vmem:[%s4 + $0x70] sm:$0xf]
  %v512 = vld [vmem:[%s4 + $0x74] sm:$0xf]
  %v513 = vld [vmem:[%s4 + $0x78] sm:$0xf]
  %v514 = vld [vmem:[%s4 + $0x7c] sm:$0xf]
  %v515 = vld [vmem:[%s4 + $0x80] sm:$0xf]
  %v516 = vld [vmem:[%s4 + $0x84] sm:$0xf]
  %v517 = vld [vmem:[%s4 + $0x88] sm:$0xf]
  %v518 = vld [vmem:[%s4 + $0x8c] sm:$0xf]
  %v519 = vld [vmem:[%s4 + $0x90] sm:$0xf]
  %v520 = vld [vmem:[%s4 + $0x94] sm:$0xf]
  %v521 = vld [vmem:[%s4 + $0x98] sm:$0xf]
  %v522 = vld [vmem:[%s4 + $0x9c] sm:$0xf]
  %v523 = vld [vmem:[%s4 + $0xa0] sm:$0xf]
  %v524 = vld [vmem:[%s4 + $0xa4] sm:$0xf]
  %v525 = vld [vmem:[%s4 + $0xa8] sm:$0xf]
  %v526 = vld [vmem:[%s4 + $0xac] sm:$0xf]
  %v527 = vld [vmem:[%s4 + $0xb0] sm:$0xf]
  %v528 = vld [vmem:[%s4 + $0xb4] sm:$0xf]
  %v529 = vld [vmem:[%s4 + $0xb8] sm:$0xf]
  %v530 = vld [vmem:[%s4 + $0xbc] sm:$0xf]
  %v531 = vld [vmem:[%s4 + $0xc0] sm:$0xf]
  %v532 = vld [vmem:[%s4 + $0xc4] sm:$0xf]
  %v533 = vld [vmem:[%s4 + $0xc8] sm:$0xf]
  %v534 = vld [vmem:[%s4 + $0xcc] sm:$0xf]
  %v535 = vld [vmem:[%s4 + $0xd0] sm:$0xf]
  %v536 = vld [vmem:[%s4 + $0xd4] sm:$0xf]
  %v537 = vld [vmem:[%s4 + $0xd8] sm:$0xf]
  %v538 = vld [vmem:[%s4 + $0xdc] sm:$0xf]
  %v539 = vld [vmem:[%s4 + $0xe0] sm:$0xf]
  %v540 = vld [vmem:[%s4 + $0xe4] sm:$0xf]
  %v541 = vld [vmem:[%s4 + $0xe8] sm:$0xf]
  %v542 = vld [vmem:[%s4 + $0xec] sm:$0xf]
  %v543 = vld [vmem:[%s4 + $0xf0] sm:$0xf]
  %v544 = vld [vmem:[%s4 + $0xf4] sm:$0xf]
  %v545 = vld [vmem:[%s4 + $0xf8] sm:$0xf]
  %v546 = vld [vmem:[%s4 + $0xfc] sm:$0xf]
  %v547 = vmax.bf16 %v419, %v483
  %v548 = vmax.bf16 %v420, %v484
  %v549 = vmax.bf16 %v421, %v485
  %v550 = vmax.bf16 %v422, %v486
  %v551 = vmax.bf16 %v423, %v487
  %v552 = vmax.bf16 %v424, %v488
  %v553 = vmax.bf16 %v425, %v489
  %v554 = vmax.bf16 %v426, %v490
  %v555 = vmax.bf16 %v427, %v491
  %v556 = vmax.bf16 %v428, %v492
  %v557 = vmax.bf16 %v429, %v493
  %v558 = vmax.bf16 %v430, %v494
  %v559 = vmax.bf16 %v431, %v495
  %v560 = vmax.bf16 %v432, %v496
  %v561 = vmax.bf16 %v433, %v497
  %v562 = vmax.bf16 %v434, %v498
  %v563 = vmax.bf16 %v435, %v499
  %v564 = vmax.bf16 %v436, %v500
  %v565 = vmax.bf16 %v437, %v501
  %v566 = vmax.bf16 %v438, %v502
  %v567 = vmax.bf16 %v439, %v503
  %v568 = vmax.bf16 %v440, %v504
  %v569 = vmax.bf16 %v441, %v505
  %v570 = vmax.bf16 %v442, %v506
  %v571 = vmax.bf16 %v443, %v507
  %v572 = vmax.bf16 %v444, %v508
  %v573 = vmax.bf16 %v445, %v509
  %v574 = vmax.bf16 %v446, %v510
  %v575 = vmax.bf16 %v447, %v511
  %v576 = vmax.bf16 %v448, %v512
  %v577 = vmax.bf16 %v449, %v513
  %v578 = vmax.bf16 %v450, %v514
  %v579 = vmax.bf16 %v451, %v515
  %v580 = vmax.bf16 %v452, %v516
  %v581 = vmax.bf16 %v453, %v517
  %v582 = vmax.bf16 %v454, %v518
  %v583 = vmax.bf16 %v455, %v519
  %v584 = vmax.bf16 %v456, %v520
  %v585 = vmax.bf16 %v457, %v521
  %v586 = vmax.bf16 %v458, %v522
  %v587 = vmax.bf16 %v459, %v523
  %v588 = vmax.bf16 %v460, %v524
  %v589 = vmax.bf16 %v461, %v525
  %v590 = vmax.bf16 %v462, %v526
  %v591 = vmax.bf16 %v463, %v527
  %v592 = vmax.bf16 %v464, %v528
  %v593 = vmax.bf16 %v465, %v529
  %v594 = vmax.bf16 %v466, %v530
  %v595 = vmax.bf16 %v467, %v531
  %v596 = vmax.bf16 %v468, %v532
  %v597 = vmax.bf16 %v469, %v533
  %v598 = vmax.bf16 %v470, %v534
  %v599 = vmax.bf16 %v471, %v535
  %v600 = vmax.bf16 %v472, %v536
  %v601 = vmax.bf16 %v473, %v537
  %v602 = vmax.bf16 %v474, %v538
  %v603 = vmax.bf16 %v475, %v539
  %v604 = vmax.bf16 %v476, %v540
  %v605 = vmax.bf16 %v477, %v541
  %v606 = vmax.bf16 %v478, %v542
  %v607 = vmax.bf16 %v479, %v543
  %v608 = vmax.bf16 %v480, %v544
  %v609 = vmax.bf16 %v481, %v545
  %v610 = vmax.bf16 %v482, %v546
  %v611 = vld [vmem:[%s5] sm:$0xf]
  %v612 = vld [vmem:[%s5 + $0x4] sm:$0xf]
  %v613 = vld [vmem:[%s5 + $0x8] sm:$0xf]
  %v614 = vld [vmem:[%s5 + $0xc] sm:$0xf]
  %v615 = vld [vmem:[%s5 + $0x10] sm:$0xf]
  %v616 = vld [vmem:[%s5 + $0x14] sm:$0xf]
  %v617 = vld [vmem:[%s5 + $0x18] sm:$0xf]
  %v618 = vld [vmem:[%s5 + $0x1c] sm:$0xf]
  %v619 = vld [vmem:[%s5 + $0x20] sm:$0xf]
  %v620 = vld [vmem:[%s5 + $0x24] sm:$0xf]
  %v621 = vld [vmem:[%s5 + $0x28] sm:$0xf]
  %v622 = vld [vmem:[%s5 + $0x2c] sm:$0xf]
  %v623 = vld [vmem:[%s5 + $0x30] sm:$0xf]
  %v624 = vld [vmem:[%s5 + $0x34] sm:$0xf]
  %v625 = vld [vmem:[%s5 + $0x38] sm:$0xf]
  %v626 = vld [vmem:[%s5 + $0x3c] sm:$0xf]
  %v627 = vld [vmem:[%s5 + $0x40] sm:$0xf]
  %v628 = vld [vmem:[%s5 + $0x44] sm:$0xf]
  %v629 = vld [vmem:[%s5 + $0x48] sm:$0xf]
  %v630 = vld [vmem:[%s5 + $0x4c] sm:$0xf]
  %v631 = vld [vmem:[%s5 + $0x50] sm:$0xf]
  %v632 = vld [vmem:[%s5 + $0x54] sm:$0xf]
  %v633 = vld [vmem:[%s5 + $0x58] sm:$0xf]
  %v634 = vld [vmem:[%s5 + $0x5c] sm:$0xf]
  %v635 = vld [vmem:[%s5 + $0x60] sm:$0xf]
  %v636 = vld [vmem:[%s5 + $0x64] sm:$0xf]
  %v637 = vld [vmem:[%s5 + $0x68] sm:$0xf]
  %v638 = vld [vmem:[%s5 + $0x6c] sm:$0xf]
  %v639 = vld [vmem:[%s5 + $0x70] sm:$0xf]
  %v640 = vld [vmem:[%s5 + $0x74] sm:$0xf]
  %v641 = vld [vmem:[%s5 + $0x78] sm:$0xf]
  %v642 = vld [vmem:[%s5 + $0x7c] sm:$0xf]
  %v643 = vld [vmem:[%s5 + $0x80] sm:$0xf]
  %v644 = vld [vmem:[%s5 + $0x84] sm:$0xf]
  %v645 = vld [vmem:[%s5 + $0x88] sm:$0xf]
  %v646 = vld [vmem:[%s5 + $0x8c] sm:$0xf]
  %v647 = vld [vmem:[%s5 + $0x90] sm:$0xf]
  %v648 = vld [vmem:[%s5 + $0x94] sm:$0xf]
  %v649 = vld [vmem:[%s5 + $0x98] sm:$0xf]
  %v650 = vld [vmem:[%s5 + $0x9c] sm:$0xf]
  %v651 = vld [vmem:[%s5 + $0xa0] sm:$0xf]
  %v652 = vld [vmem:[%s5 + $0xa4] sm:$0xf]
  %v653 = vld [vmem:[%s5 + $0xa8] sm:$0xf]
  %v654 = vld [vmem:[%s5 + $0xac] sm:$0xf]
  %v655 = vld [vmem:[%s5 + $0xb0] sm:$0xf]
  %v656 = vld [vmem:[%s5 + $0xb4] sm:$0xf]
  %v657 = vld [vmem:[%s5 + $0xb8] sm:$0xf]
  %v658 = vld [vmem:[%s5 + $0xbc] sm:$0xf]
  %v659 = vld [vmem:[%s5 + $0xc0] sm:$0xf]
  %v660 = vld [vmem:[%s5 + $0xc4] sm:$0xf]
  %v661 = vld [vmem:[%s5 + $0xc8] sm:$0xf]
  %v662 = vld [vmem:[%s5 + $0xcc] sm:$0xf]
  %v663 = vld [vmem:[%s5 + $0xd0] sm:$0xf]
  %v664 = vld [vmem:[%s5 + $0xd4] sm:$0xf]
  %v665 = vld [vmem:[%s5 + $0xd8] sm:$0xf]
  %v666 = vld [vmem:[%s5 + $0xdc] sm:$0xf]
  %v667 = vld [vmem:[%s5 + $0xe0] sm:$0xf]
  %v668 = vld [vmem:[%s5 + $0xe4] sm:$0xf]
  %v669 = vld [vmem:[%s5 + $0xe8] sm:$0xf]
  %v670 = vld [vmem:[%s5 + $0xec] sm:$0xf]
  %v671 = vld [vmem:[%s5 + $0xf0] sm:$0xf]
  %v672 = vld [vmem:[%s5 + $0xf4] sm:$0xf]
  %v673 = vld [vmem:[%s5 + $0xf8] sm:$0xf]
  %v674 = vld [vmem:[%s5 + $0xfc] sm:$0xf]
  %v675 = vmax.bf16 %v547, %v611
  %v676 = vmax.bf16 %v548, %v612
  %v677 = vmax.bf16 %v549, %v613
  %v678 = vmax.bf16 %v550, %v614
  %v679 = vmax.bf16 %v551, %v615
  %v680 = vmax.bf16 %v552, %v616
  %v681 = vmax.bf16 %v553, %v617
  %v682 = vmax.bf16 %v554, %v618
  %v683 = vmax.bf16 %v555, %v619
  %v684 = vmax.bf16 %v556, %v620
  %v685 = vmax.bf16 %v557, %v621
  %v686 = vmax.bf16 %v558, %v622
  %v687 = vmax.bf16 %v559, %v623
  %v688 = vmax.bf16 %v560, %v624
  %v689 = vmax.bf16 %v561, %v625
  %v690 = vmax.bf16 %v562, %v626
  %v691 = vmax.bf16 %v563, %v627
  %v692 = vmax.bf16 %v564, %v628
  %v693 = vmax.bf16 %v565, %v629
  %v694 = vmax.bf16 %v566, %v630
  %v695 = vmax.bf16 %v567, %v631
  %v696 = vmax.bf16 %v568, %v632
  %v697 = vmax.bf16 %v569, %v633
  %v698 = vmax.bf16 %v570, %v634
  %v699 = vmax.bf16 %v571, %v635
  %v700 = vmax.bf16 %v572, %v636
  %v701 = vmax.bf16 %v573, %v637
  %v702 = vmax.bf16 %v574, %v638
  %v703 = vmax.bf16 %v575, %v639
  %v704 = vmax.bf16 %v576, %v640
  %v705 = vmax.bf16 %v577, %v641
  %v706 = vmax.bf16 %v578, %v642
  %v707 = vmax.bf16 %v579, %v643
  %v708 = vmax.bf16 %v580, %v644
  %v709 = vmax.bf16 %v581, %v645
  %v710 = vmax.bf16 %v582, %v646
  %v711 = vmax.bf16 %v583, %v647
  %v712 = vmax.bf16 %v584, %v648
  %v713 = vmax.bf16 %v585, %v649
  %v714 = vmax.bf16 %v586, %v650
  %v715 = vmax.bf16 %v587, %v651
  %v716 = vmax.bf16 %v588, %v652
  %v717 = vmax.bf16 %v589, %v653
  %v718 = vmax.bf16 %v590, %v654
  %v719 = vmax.bf16 %v591, %v655
  %v720 = vmax.bf16 %v592, %v656
  %v721 = vmax.bf16 %v593, %v657
  %v722 = vmax.bf16 %v594, %v658
  %v723 = vmax.bf16 %v595, %v659
  %v724 = vmax.bf16 %v596, %v660
  %v725 = vmax.bf16 %v597, %v661
  %v726 = vmax.bf16 %v598, %v662
  %v727 = vmax.bf16 %v599, %v663
  %v728 = vmax.bf16 %v600, %v664
  %v729 = vmax.bf16 %v601, %v665
  %v730 = vmax.bf16 %v602, %v666
  %v731 = vmax.bf16 %v603, %v667
  %v732 = vmax.bf16 %v604, %v668
  %v733 = vmax.bf16 %v605, %v669
  %v734 = vmax.bf16 %v606, %v670
  %v735 = vmax.bf16 %v607, %v671
  %v736 = vmax.bf16 %v608, %v672
  %v737 = vmax.bf16 %v609, %v673
  %v738 = vmax.bf16 %v610, %v674
  %v739 = vld [vmem:[%s6] sm:$0xf]
  %v740 = vld [vmem:[%s6 + $0x4] sm:$0xf]
  %v741 = vld [vmem:[%s6 + $0x8] sm:$0xf]
  %v742 = vld [vmem:[%s6 + $0xc] sm:$0xf]
  %v743 = vld [vmem:[%s6 + $0x10] sm:$0xf]
  %v744 = vld [vmem:[%s6 + $0x14] sm:$0xf]
  %v745 = vld [vmem:[%s6 + $0x18] sm:$0xf]
  %v746 = vld [vmem:[%s6 + $0x1c] sm:$0xf]
  %v747 = vld [vmem:[%s6 + $0x20] sm:$0xf]
  %v748 = vld [vmem:[%s6 + $0x24] sm:$0xf]
  %v749 = vld [vmem:[%s6 + $0x28] sm:$0xf]
  %v750 = vld [vmem:[%s6 + $0x2c] sm:$0xf]
  %v751 = vld [vmem:[%s6 + $0x30] sm:$0xf]
  %v752 = vld [vmem:[%s6 + $0x34] sm:$0xf]
  %v753 = vld [vmem:[%s6 + $0x38] sm:$0xf]
  %v754 = vld [vmem:[%s6 + $0x3c] sm:$0xf]
  %v755 = vld [vmem:[%s6 + $0x40] sm:$0xf]
  %v756 = vld [vmem:[%s6 + $0x44] sm:$0xf]
  %v757 = vld [vmem:[%s6 + $0x48] sm:$0xf]
  %v758 = vld [vmem:[%s6 + $0x4c] sm:$0xf]
  %v759 = vld [vmem:[%s6 + $0x50] sm:$0xf]
  %v760 = vld [vmem:[%s6 + $0x54] sm:$0xf]
  %v761 = vld [vmem:[%s6 + $0x58] sm:$0xf]
  %v762 = vld [vmem:[%s6 + $0x5c] sm:$0xf]
  %v763 = vld [vmem:[%s6 + $0x60] sm:$0xf]
  %v764 = vld [vmem:[%s6 + $0x64] sm:$0xf]
  %v765 = vld [vmem:[%s6 + $0x68] sm:$0xf]
  %v766 = vld [vmem:[%s6 + $0x6c] sm:$0xf]
  %v767 = vld [vmem:[%s6 + $0x70] sm:$0xf]
  %v768 = vld [vmem:[%s6 + $0x74] sm:$0xf]
  %v769 = vld [vmem:[%s6 + $0x78] sm:$0xf]
  %v770 = vld [vmem:[%s6 + $0x7c] sm:$0xf]
  %v771 = vld [vmem:[%s6 + $0x80] sm:$0xf]
  %v772 = vld [vmem:[%s6 + $0x84] sm:$0xf]
  %v773 = vld [vmem:[%s6 + $0x88] sm:$0xf]
  %v774 = vld [vmem:[%s6 + $0x8c] sm:$0xf]
  %v775 = vld [vmem:[%s6 + $0x90] sm:$0xf]
  %v776 = vld [vmem:[%s6 + $0x94] sm:$0xf]
  %v777 = vld [vmem:[%s6 + $0x98] sm:$0xf]
  %v778 = vld [vmem:[%s6 + $0x9c] sm:$0xf]
  %v779 = vld [vmem:[%s6 + $0xa0] sm:$0xf]
  %v780 = vld [vmem:[%s6 + $0xa4] sm:$0xf]
  %v781 = vld [vmem:[%s6 + $0xa8] sm:$0xf]
  %v782 = vld [vmem:[%s6 + $0xac] sm:$0xf]
  %v783 = vld [vmem:[%s6 + $0xb0] sm:$0xf]
  %v784 = vld [vmem:[%s6 + $0xb4] sm:$0xf]
  %v785 = vld [vmem:[%s6 + $0xb8] sm:$0xf]
  %v786 = vld [vmem:[%s6 + $0xbc] sm:$0xf]
  %v787 = vld [vmem:[%s6 + $0xc0] sm:$0xf]
  %v788 = vld [vmem:[%s6 + $0xc4] sm:$0xf]
  %v789 = vld [vmem:[%s6 + $0xc8] sm:$0xf]
  %v790 = vld [vmem:[%s6 + $0xcc] sm:$0xf]
  %v791 = vld [vmem:[%s6 + $0xd0] sm:$0xf]
  %v792 = vld [vmem:[%s6 + $0xd4] sm:$0xf]
  %v793 = vld [vmem:[%s6 + $0xd8] sm:$0xf]
  %v794 = vld [vmem:[%s6 + $0xdc] sm:$0xf]
  %v795 = vld [vmem:[%s6 + $0xe0] sm:$0xf]
  %v796 = vld [vmem:[%s6 + $0xe4] sm:$0xf]
  %v797 = vld [vmem:[%s6 + $0xe8] sm:$0xf]
  %v798 = vld [vmem:[%s6 + $0xec] sm:$0xf]
  %v799 = vld [vmem:[%s6 + $0xf0] sm:$0xf]
  %v800 = vld [vmem:[%s6 + $0xf4] sm:$0xf]
  %v801 = vld [vmem:[%s6 + $0xf8] sm:$0xf]
  %v802 = vld [vmem:[%s6 + $0xfc] sm:$0xf]
  %v803 = vmax.bf16 %v675, %v739
  %v804 = vmax.bf16 %v676, %v740
  %v805 = vmax.bf16 %v677, %v741
  %v806 = vmax.bf16 %v678, %v742
  %v807 = vmax.bf16 %v679, %v743
  %v808 = vmax.bf16 %v680, %v744
  %v809 = vmax.bf16 %v681, %v745
  %v810 = vmax.bf16 %v682, %v746
  %v811 = vmax.bf16 %v683, %v747
  %v812 = vmax.bf16 %v684, %v748
  %v813 = vmax.bf16 %v685, %v749
  %v814 = vmax.bf16 %v686, %v750
  %v815 = vmax.bf16 %v687, %v751
  %v816 = vmax.bf16 %v688, %v752
  %v817 = vmax.bf16 %v689, %v753
  %v818 = vmax.bf16 %v690, %v754
  %v819 = vmax.bf16 %v691, %v755
  %v820 = vmax.bf16 %v692, %v756
  %v821 = vmax.bf16 %v693, %v757
  %v822 = vmax.bf16 %v694, %v758
  %v823 = vmax.bf16 %v695, %v759
  %v824 = vmax.bf16 %v696, %v760
  %v825 = vmax.bf16 %v697, %v761
  %v826 = vmax.bf16 %v698, %v762
  %v827 = vmax.bf16 %v699, %v763
  %v828 = vmax.bf16 %v700, %v764
  %v829 = vmax.bf16 %v701, %v765
  %v830 = vmax.bf16 %v702, %v766
  %v831 = vmax.bf16 %v703, %v767
  %v832 = vmax.bf16 %v704, %v768
  %v833 = vmax.bf16 %v705, %v769
  %v834 = vmax.bf16 %v706, %v770
  %v835 = vmax.bf16 %v707, %v771
  %v836 = vmax.bf16 %v708, %v772
  %v837 = vmax.bf16 %v709, %v773
  %v838 = vmax.bf16 %v710, %v774
  %v839 = vmax.bf16 %v711, %v775
  %v840 = vmax.bf16 %v712, %v776
  %v841 = vmax.bf16 %v713, %v777
  %v842 = vmax.bf16 %v714, %v778
  %v843 = vmax.bf16 %v715, %v779
  %v844 = vmax.bf16 %v716, %v780
  %v845 = vmax.bf16 %v717, %v781
  %v846 = vmax.bf16 %v718, %v782
  %v847 = vmax.bf16 %v719, %v783
  %v848 = vmax.bf16 %v720, %v784
  %v849 = vmax.bf16 %v721, %v785
  %v850 = vmax.bf16 %v722, %v786
  %v851 = vmax.bf16 %v723, %v787
  %v852 = vmax.bf16 %v724, %v788
  %v853 = vmax.bf16 %v725, %v789
  %v854 = vmax.bf16 %v726, %v790
  %v855 = vmax.bf16 %v727, %v791
  %v856 = vmax.bf16 %v728, %v792
  %v857 = vmax.bf16 %v729, %v793
  %v858 = vmax.bf16 %v730, %v794
  %v859 = vmax.bf16 %v731, %v795
  %v860 = vmax.bf16 %v732, %v796
  %v861 = vmax.bf16 %v733, %v797
  %v862 = vmax.bf16 %v734, %v798
  %v863 = vmax.bf16 %v735, %v799
  %v864 = vmax.bf16 %v736, %v800
  %v865 = vmax.bf16 %v737, %v801
  %v866 = vmax.bf16 %v738, %v802
  %v867 = vld [vmem:[%s7] sm:$0xf]
  %v868 = vld [vmem:[%s7 + $0x4] sm:$0xf]
  %v869 = vld [vmem:[%s7 + $0x8] sm:$0xf]
  %v870 = vld [vmem:[%s7 + $0xc] sm:$0xf]
  %v871 = vld [vmem:[%s7 + $0x10] sm:$0xf]
  %v872 = vld [vmem:[%s7 + $0x14] sm:$0xf]
  %v873 = vld [vmem:[%s7 + $0x18] sm:$0xf]
  %v874 = vld [vmem:[%s7 + $0x1c] sm:$0xf]
  %v875 = vld [vmem:[%s7 + $0x20] sm:$0xf]
  %v876 = vld [vmem:[%s7 + $0x24] sm:$0xf]
  %v877 = vld [vmem:[%s7 + $0x28] sm:$0xf]
  %v878 = vld [vmem:[%s7 + $0x2c] sm:$0xf]
  %v879 = vld [vmem:[%s7 + $0x30] sm:$0xf]
  %v880 = vld [vmem:[%s7 + $0x34] sm:$0xf]
  %v881 = vld [vmem:[%s7 + $0x38] sm:$0xf]
  %v882 = vld [vmem:[%s7 + $0x3c] sm:$0xf]
  %v883 = vld [vmem:[%s7 + $0x40] sm:$0xf]
  %v884 = vld [vmem:[%s7 + $0x44] sm:$0xf]
  %v885 = vld [vmem:[%s7 + $0x48] sm:$0xf]
  %v886 = vld [vmem:[%s7 + $0x4c] sm:$0xf]
  %v887 = vld [vmem:[%s7 + $0x50] sm:$0xf]
  %v888 = vld [vmem:[%s7 + $0x54] sm:$0xf]
  %v889 = vld [vmem:[%s7 + $0x58] sm:$0xf]
  %v890 = vld [vmem:[%s7 + $0x5c] sm:$0xf]
  %v891 = vld [vmem:[%s7 + $0x60] sm:$0xf]
  %v892 = vld [vmem:[%s7 + $0x64] sm:$0xf]
  %v893 = vld [vmem:[%s7 + $0x68] sm:$0xf]
  %v894 = vld [vmem:[%s7 + $0x6c] sm:$0xf]
  %v895 = vld [vmem:[%s7 + $0x70] sm:$0xf]
  %v896 = vld [vmem:[%s7 + $0x74] sm:$0xf]
  %v897 = vld [vmem:[%s7 + $0x78] sm:$0xf]
  %v898 = vld [vmem:[%s7 + $0x7c] sm:$0xf]
  %v899 = vld [vmem:[%s7 + $0x80] sm:$0xf]
  %v900 = vld [vmem:[%s7 + $0x84] sm:$0xf]
  %v901 = vld [vmem:[%s7 + $0x88] sm:$0xf]
  %v902 = vld [vmem:[%s7 + $0x8c] sm:$0xf]
  %v903 = vld [vmem:[%s7 + $0x90] sm:$0xf]
  %v904 = vld [vmem:[%s7 + $0x94] sm:$0xf]
  %v905 = vld [vmem:[%s7 + $0x98] sm:$0xf]
  %v906 = vld [vmem:[%s7 + $0x9c] sm:$0xf]
  %v907 = vld [vmem:[%s7 + $0xa0] sm:$0xf]
  %v908 = vld [vmem:[%s7 + $0xa4] sm:$0xf]
  %v909 = vld [vmem:[%s7 + $0xa8] sm:$0xf]
  %v910 = vld [vmem:[%s7 + $0xac] sm:$0xf]
  %v911 = vld [vmem:[%s7 + $0xb0] sm:$0xf]
  %v912 = vld [vmem:[%s7 + $0xb4] sm:$0xf]
  %v913 = vld [vmem:[%s7 + $0xb8] sm:$0xf]
  %v914 = vld [vmem:[%s7 + $0xbc] sm:$0xf]
  %v915 = vld [vmem:[%s7 + $0xc0] sm:$0xf]
  %v916 = vld [vmem:[%s7 + $0xc4] sm:$0xf]
  %v917 = vld [vmem:[%s7 + $0xc8] sm:$0xf]
  %v918 = vld [vmem:[%s7 + $0xcc] sm:$0xf]
  %v919 = vld [vmem:[%s7 + $0xd0] sm:$0xf]
  %v920 = vld [vmem:[%s7 + $0xd4] sm:$0xf]
  %v921 = vld [vmem:[%s7 + $0xd8] sm:$0xf]
  %v922 = vld [vmem:[%s7 + $0xdc] sm:$0xf]
  %v923 = vld [vmem:[%s7 + $0xe0] sm:$0xf]
  %v924 = vld [vmem:[%s7 + $0xe4] sm:$0xf]
  %v925 = vld [vmem:[%s7 + $0xe8] sm:$0xf]
  %v926 = vld [vmem:[%s7 + $0xec] sm:$0xf]
  %v927 = vld [vmem:[%s7 + $0xf0] sm:$0xf]
  %v928 = vld [vmem:[%s7 + $0xf4] sm:$0xf]
  %v929 = vld [vmem:[%s7 + $0xf8] sm:$0xf]
  %v930 = vld [vmem:[%s7 + $0xfc] sm:$0xf]
  %v931 = vmax.bf16 %v803, %v867
  %v932 = vmax.bf16 %v804, %v868
  %v933 = vmax.bf16 %v805, %v869
  %v934 = vmax.bf16 %v806, %v870
  %v935 = vmax.bf16 %v807, %v871
  %v936 = vmax.bf16 %v808, %v872
  %v937 = vmax.bf16 %v809, %v873
  %v938 = vmax.bf16 %v810, %v874
  %v939 = vmax.bf16 %v811, %v875
  %v940 = vmax.bf16 %v812, %v876
  %v941 = vmax.bf16 %v813, %v877
  %v942 = vmax.bf16 %v814, %v878
  %v943 = vmax.bf16 %v815, %v879
  %v944 = vmax.bf16 %v816, %v880
  %v945 = vmax.bf16 %v817, %v881
  %v946 = vmax.bf16 %v818, %v882
  %v947 = vmax.bf16 %v819, %v883
  %v948 = vmax.bf16 %v820, %v884
  %v949 = vmax.bf16 %v821, %v885
  %v950 = vmax.bf16 %v822, %v886
  %v951 = vmax.bf16 %v823, %v887
  %v952 = vmax.bf16 %v824, %v888
  %v953 = vmax.bf16 %v825, %v889
  %v954 = vmax.bf16 %v826, %v890
  %v955 = vmax.bf16 %v827, %v891
  %v956 = vmax.bf16 %v828, %v892
  %v957 = vmax.bf16 %v829, %v893
  %v958 = vmax.bf16 %v830, %v894
  %v959 = vmax.bf16 %v831, %v895
  %v960 = vmax.bf16 %v832, %v896
  %v961 = vmax.bf16 %v833, %v897
  %v962 = vmax.bf16 %v834, %v898
  %v963 = vmax.bf16 %v835, %v899
  %v964 = vmax.bf16 %v836, %v900
  %v965 = vmax.bf16 %v837, %v901
  %v966 = vmax.bf16 %v838, %v902
  %v967 = vmax.bf16 %v839, %v903
  %v968 = vmax.bf16 %v840, %v904
  %v969 = vmax.bf16 %v841, %v905
  %v970 = vmax.bf16 %v842, %v906
  %v971 = vmax.bf16 %v843, %v907
  %v972 = vmax.bf16 %v844, %v908
  %v973 = vmax.bf16 %v845, %v909
  %v974 = vmax.bf16 %v846, %v910
  %v975 = vmax.bf16 %v847, %v911
  %v976 = vmax.bf16 %v848, %v912
  %v977 = vmax.bf16 %v849, %v913
  %v978 = vmax.bf16 %v850, %v914
  %v979 = vmax.bf16 %v851, %v915
  %v980 = vmax.bf16 %v852, %v916
  %v981 = vmax.bf16 %v853, %v917
  %v982 = vmax.bf16 %v854, %v918
  %v983 = vmax.bf16 %v855, %v919
  %v984 = vmax.bf16 %v856, %v920
  %v985 = vmax.bf16 %v857, %v921
  %v986 = vmax.bf16 %v858, %v922
  %v987 = vmax.bf16 %v859, %v923
  %v988 = vmax.bf16 %v860, %v924
  %v989 = vmax.bf16 %v861, %v925
  %v990 = vmax.bf16 %v862, %v926
  %v991 = vmax.bf16 %v863, %v927
  %v992 = vmax.bf16 %v864, %v928
  %v993 = vmax.bf16 %v865, %v929
  %v994 = vmax.bf16 %v866, %v930
  %v995 = vld [vmem:[%s8] sm:$0xf]
  %v996 = vld [vmem:[%s8 + $0x4] sm:$0xf]
  %v997 = vld [vmem:[%s8 + $0x8] sm:$0xf]
  %v998 = vld [vmem:[%s8 + $0xc] sm:$0xf]
  %v999 = vld [vmem:[%s8 + $0x10] sm:$0xf]
  %v1000 = vld [vmem:[%s8 + $0x14] sm:$0xf]
  %v1001 = vld [vmem:[%s8 + $0x18] sm:$0xf]
  %v1002 = vld [vmem:[%s8 + $0x1c] sm:$0xf]
  %v1003 = vld [vmem:[%s8 + $0x20] sm:$0xf]
  %v1004 = vld [vmem:[%s8 + $0x24] sm:$0xf]
  %v1005 = vld [vmem:[%s8 + $0x28] sm:$0xf]
  %v1006 = vld [vmem:[%s8 + $0x2c] sm:$0xf]
  %v1007 = vld [vmem:[%s8 + $0x30] sm:$0xf]
  %v1008 = vld [vmem:[%s8 + $0x34] sm:$0xf]
  %v1009 = vld [vmem:[%s8 + $0x38] sm:$0xf]
  %v1010 = vld [vmem:[%s8 + $0x3c] sm:$0xf]
  %v1011 = vld [vmem:[%s8 + $0x40] sm:$0xf]
  %v1012 = vld [vmem:[%s8 + $0x44] sm:$0xf]
  %v1013 = vld [vmem:[%s8 + $0x48] sm:$0xf]
  %v1014 = vld [vmem:[%s8 + $0x4c] sm:$0xf]
  %v1015 = vld [vmem:[%s8 + $0x50] sm:$0xf]
  %v1016 = vld [vmem:[%s8 + $0x54] sm:$0xf]
  %v1017 = vld [vmem:[%s8 + $0x58] sm:$0xf]
  %v1018 = vld [vmem:[%s8 + $0x5c] sm:$0xf]
  %v1019 = vld [vmem:[%s8 + $0x60] sm:$0xf]
  %v1020 = vld [vmem:[%s8 + $0x64] sm:$0xf]
  %v1021 = vld [vmem:[%s8 + $0x68] sm:$0xf]
  %v1022 = vld [vmem:[%s8 + $0x6c] sm:$0xf]
  %v1023 = vld [vmem:[%s8 + $0x70] sm:$0xf]
  %v1024 = vld [vmem:[%s8 + $0x74] sm:$0xf]
  %v1025 = vld [vmem:[%s8 + $0x78] sm:$0xf]
  %v1026 = vld [vmem:[%s8 + $0x7c] sm:$0xf]
  %v1027 = vld [vmem:[%s8 + $0x80] sm:$0xf]
  %v1028 = vld [vmem:[%s8 + $0x84] sm:$0xf]
  %v1029 = vld [vmem:[%s8 + $0x88] sm:$0xf]
  %v1030 = vld [vmem:[%s8 + $0x8c] sm:$0xf]
  %v1031 = vld [vmem:[%s8 + $0x90] sm:$0xf]
  %v1032 = vld [vmem:[%s8 + $0x94] sm:$0xf]
  %v1033 = vld [vmem:[%s8 + $0x98] sm:$0xf]
  %v1034 = vld [vmem:[%s8 + $0x9c] sm:$0xf]
  %v1035 = vld [vmem:[%s8 + $0xa0] sm:$0xf]
  %v1036 = vld [vmem:[%s8 + $0xa4] sm:$0xf]
  %v1037 = vld [vmem:[%s8 + $0xa8] sm:$0xf]
  %v1038 = vld [vmem:[%s8 + $0xac] sm:$0xf]
  %v1039 = vld [vmem:[%s8 + $0xb0] sm:$0xf]
  %v1040 = vld [vmem:[%s8 + $0xb4] sm:$0xf]
  %v1041 = vld [vmem:[%s8 + $0xb8] sm:$0xf]
  %v1042 = vld [vmem:[%s8 + $0xbc] sm:$0xf]
  %v1043 = vld [vmem:[%s8 + $0xc0] sm:$0xf]
  %v1044 = vld [vmem:[%s8 + $0xc4] sm:$0xf]
  %v1045 = vld [vmem:[%s8 + $0xc8] sm:$0xf]
  %v1046 = vld [vmem:[%s8 + $0xcc] sm:$0xf]
  %v1047 = vld [vmem:[%s8 + $0xd0] sm:$0xf]
  %v1048 = vld [vmem:[%s8 + $0xd4] sm:$0xf]
  %v1049 = vld [vmem:[%s8 + $0xd8] sm:$0xf]
  %v1050 = vld [vmem:[%s8 + $0xdc] sm:$0xf]
  %v1051 = vld [vmem:[%s8 + $0xe0] sm:$0xf]
  %v1052 = vld [vmem:[%s8 + $0xe4] sm:$0xf]
  %v1053 = vld [vmem:[%s8 + $0xe8] sm:$0xf]
  %v1054 = vld [vmem:[%s8 + $0xec] sm:$0xf]
  %v1055 = vld [vmem:[%s8 + $0xf0] sm:$0xf]
  %v1056 = vld [vmem:[%s8 + $0xf4] sm:$0xf]
  %v1057 = vld [vmem:[%s8 + $0xf8] sm:$0xf]
  %v1058 = vld [vmem:[%s8 + $0xfc] sm:$0xf]
  %v1059 = vmax.bf16 %v931, %v995
  %v1060 = vmax.bf16 %v932, %v996
  %v1061 = vmax.bf16 %v933, %v997
  %v1062 = vmax.bf16 %v934, %v998
  %v1063 = vmax.bf16 %v935, %v999
  %v1064 = vmax.bf16 %v936, %v1000
  %v1065 = vmax.bf16 %v937, %v1001
  %v1066 = vmax.bf16 %v938, %v1002
  %v1067 = vmax.bf16 %v939, %v1003
  %v1068 = vmax.bf16 %v940, %v1004
  %v1069 = vmax.bf16 %v941, %v1005
  %v1070 = vmax.bf16 %v942, %v1006
  %v1071 = vmax.bf16 %v943, %v1007
  %v1072 = vmax.bf16 %v944, %v1008
  %v1073 = vmax.bf16 %v945, %v1009
  %v1074 = vmax.bf16 %v946, %v1010
  %v1075 = vmax.bf16 %v947, %v1011
  %v1076 = vmax.bf16 %v948, %v1012
  %v1077 = vmax.bf16 %v949, %v1013
  %v1078 = vmax.bf16 %v950, %v1014
  %v1079 = vmax.bf16 %v951, %v1015
  %v1080 = vmax.bf16 %v952, %v1016
  %v1081 = vmax.bf16 %v953, %v1017
  %v1082 = vmax.bf16 %v954, %v1018
  %v1083 = vmax.bf16 %v955, %v1019
  %v1084 = vmax.bf16 %v956, %v1020
  %v1085 = vmax.bf16 %v957, %v1021
  %v1086 = vmax.bf16 %v958, %v1022
  %v1087 = vmax.bf16 %v959, %v1023
  %v1088 = vmax.bf16 %v960, %v1024
  %v1089 = vmax.bf16 %v961, %v1025
  %v1090 = vmax.bf16 %v962, %v1026
  %v1091 = vmax.bf16 %v963, %v1027
  %v1092 = vmax.bf16 %v964, %v1028
  %v1093 = vmax.bf16 %v965, %v1029
  %v1094 = vmax.bf16 %v966, %v1030
  %v1095 = vmax.bf16 %v967, %v1031
  %v1096 = vmax.bf16 %v968, %v1032
  %v1097 = vmax.bf16 %v969, %v1033
  %v1098 = vmax.bf16 %v970, %v1034
  %v1099 = vmax.bf16 %v971, %v1035
  %v1100 = vmax.bf16 %v972, %v1036
  %v1101 = vmax.bf16 %v973, %v1037
  %v1102 = vmax.bf16 %v974, %v1038
  %v1103 = vmax.bf16 %v975, %v1039
  %v1104 = vmax.bf16 %v976, %v1040
  %v1105 = vmax.bf16 %v977, %v1041
  %v1106 = vmax.bf16 %v978, %v1042
  %v1107 = vmax.bf16 %v979, %v1043
  %v1108 = vmax.bf16 %v980, %v1044
  %v1109 = vmax.bf16 %v981, %v1045
  %v1110 = vmax.bf16 %v982, %v1046
  %v1111 = vmax.bf16 %v983, %v1047
  %v1112 = vmax.bf16 %v984, %v1048
  %v1113 = vmax.bf16 %v985, %v1049
  %v1114 = vmax.bf16 %v986, %v1050
  %v1115 = vmax.bf16 %v987, %v1051
  %v1116 = vmax.bf16 %v988, %v1052
  %v1117 = vmax.bf16 %v989, %v1053
  %v1118 = vmax.bf16 %v990, %v1054
  %v1119 = vmax.bf16 %v991, %v1055
  %v1120 = vmax.bf16 %v992, %v1056
  %v1121 = vmax.bf16 %v993, %v1057
  %v1122 = vmax.bf16 %v994, %v1058
  %v1123 = vunpack.c.l.bf16 %v1059
  %v1124 = vunpack.c.l.bf16 %v1060
  %v1125 = vunpack.c.l.bf16 %v1061
  %v1126 = vunpack.c.l.bf16 %v1062
  %v1127 = vunpack.c.l.bf16 %v1063
  %v1128 = vunpack.c.l.bf16 %v1064
  %v1129 = vunpack.c.l.bf16 %v1065
  %v1130 = vunpack.c.l.bf16 %v1066
  %v1131 = vunpack.c.l.bf16 %v1067
  %v1132 = vunpack.c.l.bf16 %v1068
  %v1133 = vunpack.c.l.bf16 %v1069
  %v1134 = vunpack.c.l.bf16 %v1070
  %v1135 = vunpack.c.l.bf16 %v1071
  %v1136 = vunpack.c.l.bf16 %v1072
  %v1137 = vunpack.c.l.bf16 %v1073
  %v1138 = vunpack.c.l.bf16 %v1074
  %v1139 = vunpack.c.l.bf16 %v1075
  %v1140 = vunpack.c.l.bf16 %v1076
  %v1141 = vunpack.c.l.bf16 %v1077
  %v1142 = vunpack.c.l.bf16 %v1078
  %v1143 = vunpack.c.l.bf16 %v1079
  %v1144 = vunpack.c.l.bf16 %v1080
  %v1145 = vunpack.c.l.bf16 %v1081
  %v1146 = vunpack.c.l.bf16 %v1082
  %v1147 = vunpack.c.l.bf16 %v1083
  %v1148 = vunpack.c.l.bf16 %v1084
  %v1149 = vunpack.c.l.bf16 %v1085
  %v1150 = vunpack.c.l.bf16 %v1086
  %v1151 = vunpack.c.l.bf16 %v1087
  %v1152 = vunpack.c.l.bf16 %v1088
  %v1153 = vunpack.c.l.bf16 %v1089
  %v1154 = vunpack.c.l.bf16 %v1090
  %v1155 = vunpack.c.l.bf16 %v1091
  %v1156 = vunpack.c.l.bf16 %v1092
  %v1157 = vunpack.c.l.bf16 %v1093
  %v1158 = vunpack.c.l.bf16 %v1094
  %v1159 = vunpack.c.l.bf16 %v1095
  %v1160 = vunpack.c.l.bf16 %v1096
  %v1161 = vunpack.c.l.bf16 %v1097
  %v1162 = vunpack.c.l.bf16 %v1098
  %v1163 = vunpack.c.l.bf16 %v1099
  %v1164 = vunpack.c.l.bf16 %v1100
  %v1165 = vunpack.c.l.bf16 %v1101
  %v1166 = vunpack.c.l.bf16 %v1102
  %v1167 = vunpack.c.l.bf16 %v1103
  %v1168 = vunpack.c.l.bf16 %v1104
  %v1169 = vunpack.c.l.bf16 %v1105
  %v1170 = vunpack.c.l.bf16 %v1106
  %v1171 = vunpack.c.l.bf16 %v1107
  %v1172 = vunpack.c.l.bf16 %v1108
  %v1173 = vunpack.c.l.bf16 %v1109
  %v1174 = vunpack.c.l.bf16 %v1110
  %v1175 = vunpack.c.l.bf16 %v1111
  %v1176 = vunpack.c.l.bf16 %v1112
  %v1177 = vunpack.c.l.bf16 %v1113
  %v1178 = vunpack.c.l.bf16 %v1114
  %v1179 = vunpack.c.l.bf16 %v1115
  %v1180 = vunpack.c.l.bf16 %v1116
  %v1181 = vunpack.c.l.bf16 %v1117
  %v1182 = vunpack.c.l.bf16 %v1118
  %v1183 = vunpack.c.l.bf16 %v1119
  %v1184 = vunpack.c.l.bf16 %v1120
  %v1185 = vunpack.c.l.bf16 %v1121
  %v1186 = vunpack.c.l.bf16 %v1122
  %v1187 = vld [vmem:[%s9] sm:$0x1]
  %v1188 = vlaneseq
  %v1189 = vshrl.u32 %v1188, 7
  %v1190 = vsub.s32 0, %v1189
  %v1191 = vrot.slane %v1187, %v1190
  %v1192 = vmul.f32 %v1123, %v1191
  %v1193 = vmul.f32 %v1124, %v1191
  %v1194 = vmul.f32 %v1125, %v1191
  %v1195 = vmul.f32 %v1126, %v1191
  %v1196 = vmul.f32 %v1127, %v1191
  %v1197 = vmul.f32 %v1128, %v1191
  %v1198 = vmul.f32 %v1129, %v1191
  %v1199 = vmul.f32 %v1130, %v1191
  %v1200 = vmul.f32 %v1131, %v1191
  %v1201 = vmul.f32 %v1132, %v1191
  %v1202 = vmul.f32 %v1133, %v1191
  %v1203 = vmul.f32 %v1134, %v1191
  %v1204 = vmul.f32 %v1135, %v1191
  %v1205 = vmul.f32 %v1136, %v1191
  %v1206 = vmul.f32 %v1137, %v1191
  %v1207 = vmul.f32 %v1138, %v1191
  %v1208 = vmul.f32 %v1139, %v1191
  %v1209 = vmul.f32 %v1140, %v1191
  %v1210 = vmul.f32 %v1141, %v1191
  %v1211 = vmul.f32 %v1142, %v1191
  %v1212 = vmul.f32 %v1143, %v1191
  %v1213 = vmul.f32 %v1144, %v1191
  %v1214 = vmul.f32 %v1145, %v1191
  %v1215 = vmul.f32 %v1146, %v1191
  %v1216 = vmul.f32 %v1147, %v1191
  %v1217 = vmul.f32 %v1148, %v1191
  %v1218 = vmul.f32 %v1149, %v1191
  %v1219 = vmul.f32 %v1150, %v1191
  %v1220 = vmul.f32 %v1151, %v1191
  %v1221 = vmul.f32 %v1152, %v1191
  %v1222 = vmul.f32 %v1153, %v1191
  %v1223 = vmul.f32 %v1154, %v1191
  %v1224 = vmul.f32 %v1155, %v1191
  %v1225 = vmul.f32 %v1156, %v1191
  %v1226 = vmul.f32 %v1157, %v1191
  %v1227 = vmul.f32 %v1158, %v1191
  %v1228 = vmul.f32 %v1159, %v1191
  %v1229 = vmul.f32 %v1160, %v1191
  %v1230 = vmul.f32 %v1161, %v1191
  %v1231 = vmul.f32 %v1162, %v1191
  %v1232 = vmul.f32 %v1163, %v1191
  %v1233 = vmul.f32 %v1164, %v1191
  %v1234 = vmul.f32 %v1165, %v1191
  %v1235 = vmul.f32 %v1166, %v1191
  %v1236 = vmul.f32 %v1167, %v1191
  %v1237 = vmul.f32 %v1168, %v1191
  %v1238 = vmul.f32 %v1169, %v1191
  %v1239 = vmul.f32 %v1170, %v1191
  %v1240 = vmul.f32 %v1171, %v1191
  %v1241 = vmul.f32 %v1172, %v1191
  %v1242 = vmul.f32 %v1173, %v1191
  %v1243 = vmul.f32 %v1174, %v1191
  %v1244 = vmul.f32 %v1175, %v1191
  %v1245 = vmul.f32 %v1176, %v1191
  %v1246 = vmul.f32 %v1177, %v1191
  %v1247 = vmul.f32 %v1178, %v1191
  %v1248 = vmul.f32 %v1179, %v1191
  %v1249 = vmul.f32 %v1180, %v1191
  %v1250 = vmul.f32 %v1181, %v1191
  %v1251 = vmul.f32 %v1182, %v1191
  %v1252 = vmul.f32 %v1183, %v1191
  %v1253 = vmul.f32 %v1184, %v1191
  %v1254 = vmul.f32 %v1185, %v1191
  %v1255 = vmul.f32 %v1186, %v1191
  %v1256 = vld [vmem:[%s9 + $0x1] sm:$0x1]
  %v1257 = vlaneseq
  %v1258 = vshrl.u32 %v1257, 7
  %v1259 = vsub.s32 0, %v1258
  %v1260 = vrot.slane %v1256, %v1259
  %v1261 = vadd.f32 %v1192, %v1260
  %v1262 = vadd.f32 %v1193, %v1260
  %v1263 = vadd.f32 %v1194, %v1260
  %v1264 = vadd.f32 %v1195, %v1260
  %v1265 = vadd.f32 %v1196, %v1260
  %v1266 = vadd.f32 %v1197, %v1260
  %v1267 = vadd.f32 %v1198, %v1260
  %v1268 = vadd.f32 %v1199, %v1260
  %v1269 = vadd.f32 %v1200, %v1260
  %v1270 = vadd.f32 %v1201, %v1260
  %v1271 = vadd.f32 %v1202, %v1260
  %v1272 = vadd.f32 %v1203, %v1260
  %v1273 = vadd.f32 %v1204, %v1260
  %v1274 = vadd.f32 %v1205, %v1260
  %v1275 = vadd.f32 %v1206, %v1260
  %v1276 = vadd.f32 %v1207, %v1260
  %v1277 = vadd.f32 %v1208, %v1260
  %v1278 = vadd.f32 %v1209, %v1260
  %v1279 = vadd.f32 %v1210, %v1260
  %v1280 = vadd.f32 %v1211, %v1260
  %v1281 = vadd.f32 %v1212, %v1260
  %v1282 = vadd.f32 %v1213, %v1260
  %v1283 = vadd.f32 %v1214, %v1260
  %v1284 = vadd.f32 %v1215, %v1260
  %v1285 = vadd.f32 %v1216, %v1260
  %v1286 = vadd.f32 %v1217, %v1260
  %v1287 = vadd.f32 %v1218, %v1260
  %v1288 = vadd.f32 %v1219, %v1260
  %v1289 = vadd.f32 %v1220, %v1260
  %v1290 = vadd.f32 %v1221, %v1260
  %v1291 = vadd.f32 %v1222, %v1260
  %v1292 = vadd.f32 %v1223, %v1260
  %v1293 = vadd.f32 %v1224, %v1260
  %v1294 = vadd.f32 %v1225, %v1260
  %v1295 = vadd.f32 %v1226, %v1260
  %v1296 = vadd.f32 %v1227, %v1260
  %v1297 = vadd.f32 %v1228, %v1260
  %v1298 = vadd.f32 %v1229, %v1260
  %v1299 = vadd.f32 %v1230, %v1260
  %v1300 = vadd.f32 %v1231, %v1260
  %v1301 = vadd.f32 %v1232, %v1260
  %v1302 = vadd.f32 %v1233, %v1260
  %v1303 = vadd.f32 %v1234, %v1260
  %v1304 = vadd.f32 %v1235, %v1260
  %v1305 = vadd.f32 %v1236, %v1260
  %v1306 = vadd.f32 %v1237, %v1260
  %v1307 = vadd.f32 %v1238, %v1260
  %v1308 = vadd.f32 %v1239, %v1260
  %v1309 = vadd.f32 %v1240, %v1260
  %v1310 = vadd.f32 %v1241, %v1260
  %v1311 = vadd.f32 %v1242, %v1260
  %v1312 = vadd.f32 %v1243, %v1260
  %v1313 = vadd.f32 %v1244, %v1260
  %v1314 = vadd.f32 %v1245, %v1260
  %v1315 = vadd.f32 %v1246, %v1260
  %v1316 = vadd.f32 %v1247, %v1260
  %v1317 = vadd.f32 %v1248, %v1260
  %v1318 = vadd.f32 %v1249, %v1260
  %v1319 = vadd.f32 %v1250, %v1260
  %v1320 = vadd.f32 %v1251, %v1260
  %v1321 = vadd.f32 %v1252, %v1260
  %v1322 = vadd.f32 %v1253, %v1260
  %v1323 = vadd.f32 %v1254, %v1260
  %v1324 = vadd.f32 %v1255, %v1260
  %vm1325 = vcmp.ge.f32.partialorder %v1261, 0.0
  %vm1326 = vcmp.ge.f32.partialorder %v1262, 0.0
  %vm1327 = vcmp.ge.f32.partialorder %v1263, 0.0
  %vm1328 = vcmp.ge.f32.partialorder %v1264, 0.0
  %vm1329 = vcmp.ge.f32.partialorder %v1265, 0.0
  %vm1330 = vcmp.ge.f32.partialorder %v1266, 0.0
  %vm1331 = vcmp.ge.f32.partialorder %v1267, 0.0
  %vm1332 = vcmp.ge.f32.partialorder %v1268, 0.0
  %vm1333 = vcmp.ge.f32.partialorder %v1269, 0.0
  %vm1334 = vcmp.ge.f32.partialorder %v1270, 0.0
  %vm1335 = vcmp.ge.f32.partialorder %v1271, 0.0
  %vm1336 = vcmp.ge.f32.partialorder %v1272, 0.0
  %vm1337 = vcmp.ge.f32.partialorder %v1273, 0.0
  %vm1338 = vcmp.ge.f32.partialorder %v1274, 0.0
  %vm1339 = vcmp.ge.f32.partialorder %v1275, 0.0
  %vm1340 = vcmp.ge.f32.partialorder %v1276, 0.0
  %vm1341 = vcmp.ge.f32.partialorder %v1277, 0.0
  %vm1342 = vcmp.ge.f32.partialorder %v1278, 0.0
  %vm1343 = vcmp.ge.f32.partialorder %v1279, 0.0
  %vm1344 = vcmp.ge.f32.partialorder %v1280, 0.0
  %vm1345 = vcmp.ge.f32.partialorder %v1281, 0.0
  %vm1346 = vcmp.ge.f32.partialorder %v1282, 0.0
  %vm1347 = vcmp.ge.f32.partialorder %v1283, 0.0
  %vm1348 = vcmp.ge.f32.partialorder %v1284, 0.0
  %vm1349 = vcmp.ge.f32.partialorder %v1285, 0.0
  %vm1350 = vcmp.ge.f32.partialorder %v1286, 0.0
  %vm1351 = vcmp.ge.f32.partialorder %v1287, 0.0
  %vm1352 = vcmp.ge.f32.partialorder %v1288, 0.0
  %vm1353 = vcmp.ge.f32.partialorder %v1289, 0.0
  %vm1354 = vcmp.ge.f32.partialorder %v1290, 0.0
  %vm1355 = vcmp.ge.f32.partialorder %v1291, 0.0
  %vm1356 = vcmp.ge.f32.partialorder %v1292, 0.0
  %vm1357 = vcmp.ge.f32.partialorder %v1293, 0.0
  %vm1358 = vcmp.ge.f32.partialorder %v1294, 0.0
  %vm1359 = vcmp.ge.f32.partialorder %v1295, 0.0
  %vm1360 = vcmp.ge.f32.partialorder %v1296, 0.0
  %vm1361 = vcmp.ge.f32.partialorder %v1297, 0.0
  %vm1362 = vcmp.ge.f32.partialorder %v1298, 0.0
  %vm1363 = vcmp.ge.f32.partialorder %v1299, 0.0
  %vm1364 = vcmp.ge.f32.partialorder %v1300, 0.0
  %vm1365 = vcmp.ge.f32.partialorder %v1301, 0.0
  %vm1366 = vcmp.ge.f32.partialorder %v1302, 0.0
  %vm1367 = vcmp.ge.f32.partialorder %v1303, 0.0
  %vm1368 = vcmp.ge.f32.partialorder %v1304, 0.0
  %vm1369 = vcmp.ge.f32.partialorder %v1305, 0.0
  %vm1370 = vcmp.ge.f32.partialorder %v1306, 0.0
  %vm1371 = vcmp.ge.f32.partialorder %v1307, 0.0
  %vm1372 = vcmp.ge.f32.partialorder %v1308, 0.0
  %vm1373 = vcmp.ge.f32.partialorder %v1309, 0.0
  %vm1374 = vcmp.ge.f32.partialorder %v1310, 0.0
  %vm1375 = vcmp.ge.f32.partialorder %v1311, 0.0
  %vm1376 = vcmp.ge.f32.partialorder %v1312, 0.0
  %vm1377 = vcmp.ge.f32.partialorder %v1313, 0.0
  %vm1378 = vcmp.ge.f32.partialorder %v1314, 0.0
  %vm1379 = vcmp.ge.f32.partialorder %v1315, 0.0
  %vm1380 = vcmp.ge.f32.partialorder %v1316, 0.0
  %vm1381 = vcmp.ge.f32.partialorder %v1317, 0.0
  %vm1382 = vcmp.ge.f32.partialorder %v1318, 0.0
  %vm1383 = vcmp.ge.f32.partialorder %v1319, 0.0
  %vm1384 = vcmp.ge.f32.partialorder %v1320, 0.0
  %vm1385 = vcmp.ge.f32.partialorder %v1321, 0.0
  %vm1386 = vcmp.ge.f32.partialorder %v1322, 0.0
  %vm1387 = vcmp.ge.f32.partialorder %v1323, 0.0
  %vm1388 = vcmp.ge.f32.partialorder %v1324, 0.0
  %v1389 = vld [vmem:[%s9 + $0x2] sm:$0x1]
  %v1390 = vlaneseq
  %v1391 = vshrl.u32 %v1390, 7
  %v1392 = vsub.s32 0, %v1391
  %v1393 = vrot.slane %v1389, %v1392
  %v1394 = vmul.f32 %v1393, %v1261
  %v1395 = vmul.f32 %v1393, %v1262
  %v1396 = vmul.f32 %v1393, %v1263
  %v1397 = vmul.f32 %v1393, %v1264
  %v1398 = vmul.f32 %v1393, %v1265
  %v1399 = vmul.f32 %v1393, %v1266
  %v1400 = vmul.f32 %v1393, %v1267
  %v1401 = vmul.f32 %v1393, %v1268
  %v1402 = vmul.f32 %v1393, %v1269
  %v1403 = vmul.f32 %v1393, %v1270
  %v1404 = vmul.f32 %v1393, %v1271
  %v1405 = vmul.f32 %v1393, %v1272
  %v1406 = vmul.f32 %v1393, %v1273
  %v1407 = vmul.f32 %v1393, %v1274
  %v1408 = vmul.f32 %v1393, %v1275
  %v1409 = vmul.f32 %v1393, %v1276
  %v1410 = vmul.f32 %v1393, %v1277
  %v1411 = vmul.f32 %v1393, %v1278
  %v1412 = vmul.f32 %v1393, %v1279
  %v1413 = vmul.f32 %v1393, %v1280
  %v1414 = vmul.f32 %v1393, %v1281
  %v1415 = vmul.f32 %v1393, %v1282
  %v1416 = vmul.f32 %v1393, %v1283
  %v1417 = vmul.f32 %v1393, %v1284
  %v1418 = vmul.f32 %v1393, %v1285
  %v1419 = vmul.f32 %v1393, %v1286
  %v1420 = vmul.f32 %v1393, %v1287
  %v1421 = vmul.f32 %v1393, %v1288
  %v1422 = vmul.f32 %v1393, %v1289
  %v1423 = vmul.f32 %v1393, %v1290
  %v1424 = vmul.f32 %v1393, %v1291
  %v1425 = vmul.f32 %v1393, %v1292
  %v1426 = vmul.f32 %v1393, %v1293
  %v1427 = vmul.f32 %v1393, %v1294
  %v1428 = vmul.f32 %v1393, %v1295
  %v1429 = vmul.f32 %v1393, %v1296
  %v1430 = vmul.f32 %v1393, %v1297
  %v1431 = vmul.f32 %v1393, %v1298
  %v1432 = vmul.f32 %v1393, %v1299
  %v1433 = vmul.f32 %v1393, %v1300
  %v1434 = vmul.f32 %v1393, %v1301
  %v1435 = vmul.f32 %v1393, %v1302
  %v1436 = vmul.f32 %v1393, %v1303
  %v1437 = vmul.f32 %v1393, %v1304
  %v1438 = vmul.f32 %v1393, %v1305
  %v1439 = vmul.f32 %v1393, %v1306
  %v1440 = vmul.f32 %v1393, %v1307
  %v1441 = vmul.f32 %v1393, %v1308
  %v1442 = vmul.f32 %v1393, %v1309
  %v1443 = vmul.f32 %v1393, %v1310
  %v1444 = vmul.f32 %v1393, %v1311
  %v1445 = vmul.f32 %v1393, %v1312
  %v1446 = vmul.f32 %v1393, %v1313
  %v1447 = vmul.f32 %v1393, %v1314
  %v1448 = vmul.f32 %v1393, %v1315
  %v1449 = vmul.f32 %v1393, %v1316
  %v1450 = vmul.f32 %v1393, %v1317
  %v1451 = vmul.f32 %v1393, %v1318
  %v1452 = vmul.f32 %v1393, %v1319
  %v1453 = vmul.f32 %v1393, %v1320
  %v1454 = vmul.f32 %v1393, %v1321
  %v1455 = vmul.f32 %v1393, %v1322
  %v1456 = vmul.f32 %v1393, %v1323
  %v1457 = vmul.f32 %v1393, %v1324
  %v1458 = vsel %vm1325, %v1261, %v1394
  %v1459 = vsel %vm1326, %v1262, %v1395
  %v1460 = vsel %vm1327, %v1263, %v1396
  %v1461 = vsel %vm1328, %v1264, %v1397
  %v1462 = vsel %vm1329, %v1265, %v1398
  %v1463 = vsel %vm1330, %v1266, %v1399
  %v1464 = vsel %vm1331, %v1267, %v1400
  %v1465 = vsel %vm1332, %v1268, %v1401
  %v1466 = vsel %vm1333, %v1269, %v1402
  %v1467 = vsel %vm1334, %v1270, %v1403
  %v1468 = vsel %vm1335, %v1271, %v1404
  %v1469 = vsel %vm1336, %v1272, %v1405
  %v1470 = vsel %vm1337, %v1273, %v1406
  %v1471 = vsel %vm1338, %v1274, %v1407
  %v1472 = vsel %vm1339, %v1275, %v1408
  %v1473 = vsel %vm1340, %v1276, %v1409
  %v1474 = vsel %vm1341, %v1277, %v1410
  %v1475 = vsel %vm1342, %v1278, %v1411
  %v1476 = vsel %vm1343, %v1279, %v1412
  %v1477 = vsel %vm1344, %v1280, %v1413
  %v1478 = vsel %vm1345, %v1281, %v1414
  %v1479 = vsel %vm1346, %v1282, %v1415
  %v1480 = vsel %vm1347, %v1283, %v1416
  %v1481 = vsel %vm1348, %v1284, %v1417
  %v1482 = vsel %vm1349, %v1285, %v1418
  %v1483 = vsel %vm1350, %v1286, %v1419
  %v1484 = vsel %vm1351, %v1287, %v1420
  %v1485 = vsel %vm1352, %v1288, %v1421
  %v1486 = vsel %vm1353, %v1289, %v1422
  %v1487 = vsel %vm1354, %v1290, %v1423
  %v1488 = vsel %vm1355, %v1291, %v1424
  %v1489 = vsel %vm1356, %v1292, %v1425
  %v1490 = vsel %vm1357, %v1293, %v1426
  %v1491 = vsel %vm1358, %v1294, %v1427
  %v1492 = vsel %vm1359, %v1295, %v1428
  %v1493 = vsel %vm1360, %v1296, %v1429
  %v1494 = vsel %vm1361, %v1297, %v1430
  %v1495 = vsel %vm1362, %v1298, %v1431
  %v1496 = vsel %vm1363, %v1299, %v1432
  %v1497 = vsel %vm1364, %v1300, %v1433
  %v1498 = vsel %vm1365, %v1301, %v1434
  %v1499 = vsel %vm1366, %v1302, %v1435
  %v1500 = vsel %vm1367, %v1303, %v1436
  %v1501 = vsel %vm1368, %v1304, %v1437
  %v1502 = vsel %vm1369, %v1305, %v1438
  %v1503 = vsel %vm1370, %v1306, %v1439
  %v1504 = vsel %vm1371, %v1307, %v1440
  %v1505 = vsel %vm1372, %v1308, %v1441
  %v1506 = vsel %vm1373, %v1309, %v1442
  %v1507 = vsel %vm1374, %v1310, %v1443
  %v1508 = vsel %vm1375, %v1311, %v1444
  %v1509 = vsel %vm1376, %v1312, %v1445
  %v1510 = vsel %vm1377, %v1313, %v1446
  %v1511 = vsel %vm1378, %v1314, %v1447
  %v1512 = vsel %vm1379, %v1315, %v1448
  %v1513 = vsel %vm1380, %v1316, %v1449
  %v1514 = vsel %vm1381, %v1317, %v1450
  %v1515 = vsel %vm1382, %v1318, %v1451
  %v1516 = vsel %vm1383, %v1319, %v1452
  %v1517 = vsel %vm1384, %v1320, %v1453
  %v1518 = vsel %vm1385, %v1321, %v1454
  %v1519 = vsel %vm1386, %v1322, %v1455
  %v1520 = vsel %vm1387, %v1323, %v1456
  %v1521 = vsel %vm1388, %v1324, %v1457
  %v1522 = vpack.c.bf16 %v1459, %v1458
  %v1523 = vpack.c.bf16 %v1461, %v1460
  %v1524 = vpack.c.bf16 %v1463, %v1462
  %v1525 = vpack.c.bf16 %v1465, %v1464
  %v1526 = vpack.c.bf16 %v1467, %v1466
  %v1527 = vpack.c.bf16 %v1469, %v1468
  %v1528 = vpack.c.bf16 %v1471, %v1470
  %v1529 = vpack.c.bf16 %v1473, %v1472
  %v1530 = vpack.c.bf16 %v1475, %v1474
  %v1531 = vpack.c.bf16 %v1477, %v1476
  %v1532 = vpack.c.bf16 %v1479, %v1478
  %v1533 = vpack.c.bf16 %v1481, %v1480
  %v1534 = vpack.c.bf16 %v1483, %v1482
  %v1535 = vpack.c.bf16 %v1485, %v1484
  %v1536 = vpack.c.bf16 %v1487, %v1486
  %v1537 = vpack.c.bf16 %v1489, %v1488
  %v1538 = vpack.c.bf16 %v1491, %v1490
  %v1539 = vpack.c.bf16 %v1493, %v1492
  %v1540 = vpack.c.bf16 %v1495, %v1494
  %v1541 = vpack.c.bf16 %v1497, %v1496
  %v1542 = vpack.c.bf16 %v1499, %v1498
  %v1543 = vpack.c.bf16 %v1501, %v1500
  %v1544 = vpack.c.bf16 %v1503, %v1502
  %v1545 = vpack.c.bf16 %v1505, %v1504
  %v1546 = vpack.c.bf16 %v1507, %v1506
  %v1547 = vpack.c.bf16 %v1509, %v1508
  %v1548 = vpack.c.bf16 %v1511, %v1510
  %v1549 = vpack.c.bf16 %v1513, %v1512
  %v1550 = vpack.c.bf16 %v1515, %v1514
  %v1551 = vpack.c.bf16 %v1517, %v1516
  %v1552 = vpack.c.bf16 %v1519, %v1518
  %v1553 = vpack.c.bf16 %v1521, %v1520
  %v1586 = vunpack.c.l.b16 %v1522
  %v1587 = vunpack.c.h.b16 %v1522
  %v1588 = vunpack.c.l.b16 %v1523
  %v1589 = vunpack.c.h.b16 %v1523
  %v1590 = vunpack.c.l.b16 %v1524
  %v1591 = vunpack.c.h.b16 %v1524
  %v1592 = vunpack.c.l.b16 %v1525
  %v1593 = vunpack.c.h.b16 %v1525
  %v1594 = vunpack.c.l.b16 %v1526
  %v1595 = vunpack.c.h.b16 %v1526
  %v1596 = vunpack.c.l.b16 %v1527
  %v1597 = vunpack.c.h.b16 %v1527
  %v1598 = vunpack.c.l.b16 %v1528
  %v1599 = vunpack.c.h.b16 %v1528
  %v1600 = vunpack.c.l.b16 %v1529
  %v1601 = vunpack.c.h.b16 %v1529
  %v1602 = vunpack.c.l.b16 %v1530
  %v1603 = vunpack.c.h.b16 %v1530
  %v1604 = vunpack.c.l.b16 %v1531
  %v1605 = vunpack.c.h.b16 %v1531
  %v1606 = vunpack.c.l.b16 %v1532
  %v1607 = vunpack.c.h.b16 %v1532
  %v1608 = vunpack.c.l.b16 %v1533
  %v1609 = vunpack.c.h.b16 %v1533
  %v1610 = vunpack.c.l.b16 %v1534
  %v1611 = vunpack.c.h.b16 %v1534
  %v1612 = vunpack.c.l.b16 %v1535
  %v1613 = vunpack.c.h.b16 %v1535
  %v1614 = vunpack.c.l.b16 %v1536
  %v1615 = vunpack.c.h.b16 %v1536
  %v1616 = vunpack.c.l.b16 %v1537
  %v1617 = vunpack.c.h.b16 %v1537
  %v1618 = vunpack.c.l.b16 %v1538
  %v1619 = vunpack.c.h.b16 %v1538
  %v1620 = vunpack.c.l.b16 %v1539
  %v1621 = vunpack.c.h.b16 %v1539
  %v1622 = vunpack.c.l.b16 %v1540
  %v1623 = vunpack.c.h.b16 %v1540
  %v1624 = vunpack.c.l.b16 %v1541
  %v1625 = vunpack.c.h.b16 %v1541
  %v1626 = vunpack.c.l.b16 %v1542
  %v1627 = vunpack.c.h.b16 %v1542
  %v1628 = vunpack.c.l.b16 %v1543
  %v1629 = vunpack.c.h.b16 %v1543
  %v1630 = vunpack.c.l.b16 %v1544
  %v1631 = vunpack.c.h.b16 %v1544
  %v1632 = vunpack.c.l.b16 %v1545
  %v1633 = vunpack.c.h.b16 %v1545
  %v1634 = vunpack.c.l.b16 %v1546
  %v1635 = vunpack.c.h.b16 %v1546
  %v1636 = vunpack.c.l.b16 %v1547
  %v1637 = vunpack.c.h.b16 %v1547
  %v1638 = vunpack.c.l.b16 %v1548
  %v1639 = vunpack.c.h.b16 %v1548
  %v1640 = vunpack.c.l.b16 %v1549
  %v1641 = vunpack.c.h.b16 %v1549
  %v1642 = vunpack.c.l.b16 %v1550
  %v1643 = vunpack.c.h.b16 %v1550
  %v1644 = vunpack.c.l.b16 %v1551
  %v1645 = vunpack.c.h.b16 %v1551
  %v1646 = vunpack.c.l.b16 %v1552
  %v1647 = vunpack.c.h.b16 %v1552
  %v1648 = vunpack.c.l.b16 %v1553
  %v1649 = vunpack.c.h.b16 %v1553
  %v1650 = vpack.c.b16 %v1586, %v1586
  %v1651 = vpack.c.b16 %v1587, %v1587
  %v1652 = vpack.c.b16 %v1588, %v1588
  %v1653 = vpack.c.b16 %v1589, %v1589
  %v1654 = vpack.c.b16 %v1590, %v1590
  %v1655 = vpack.c.b16 %v1591, %v1591
  %v1656 = vpack.c.b16 %v1592, %v1592
  %v1657 = vpack.c.b16 %v1593, %v1593
  %v1658 = vpack.c.b16 %v1594, %v1594
  %v1659 = vpack.c.b16 %v1595, %v1595
  %v1660 = vpack.c.b16 %v1596, %v1596
  %v1661 = vpack.c.b16 %v1597, %v1597
  %v1662 = vpack.c.b16 %v1598, %v1598
  %v1663 = vpack.c.b16 %v1599, %v1599
  %v1664 = vpack.c.b16 %v1600, %v1600
  %v1665 = vpack.c.b16 %v1601, %v1601
  %v1666 = vpack.c.b16 %v1602, %v1602
  %v1667 = vpack.c.b16 %v1603, %v1603
  %v1668 = vpack.c.b16 %v1604, %v1604
  %v1669 = vpack.c.b16 %v1605, %v1605
  %v1670 = vpack.c.b16 %v1606, %v1606
  %v1671 = vpack.c.b16 %v1607, %v1607
  %v1672 = vpack.c.b16 %v1608, %v1608
  %v1673 = vpack.c.b16 %v1609, %v1609
  %v1674 = vpack.c.b16 %v1610, %v1610
  %v1675 = vpack.c.b16 %v1611, %v1611
  %v1676 = vpack.c.b16 %v1612, %v1612
  %v1677 = vpack.c.b16 %v1613, %v1613
  %v1678 = vpack.c.b16 %v1614, %v1614
  %v1679 = vpack.c.b16 %v1615, %v1615
  %v1680 = vpack.c.b16 %v1616, %v1616
  %v1681 = vpack.c.b16 %v1617, %v1617
  %v1682 = vpack.c.b16 %v1618, %v1618
  %v1683 = vpack.c.b16 %v1619, %v1619
  %v1684 = vpack.c.b16 %v1620, %v1620
  %v1685 = vpack.c.b16 %v1621, %v1621
  %v1686 = vpack.c.b16 %v1622, %v1622
  %v1687 = vpack.c.b16 %v1623, %v1623
  %v1688 = vpack.c.b16 %v1624, %v1624
  %v1689 = vpack.c.b16 %v1625, %v1625
  %v1690 = vpack.c.b16 %v1626, %v1626
  %v1691 = vpack.c.b16 %v1627, %v1627
  %v1692 = vpack.c.b16 %v1628, %v1628
  %v1693 = vpack.c.b16 %v1629, %v1629
  %v1694 = vpack.c.b16 %v1630, %v1630
  %v1695 = vpack.c.b16 %v1631, %v1631
  %v1696 = vpack.c.b16 %v1632, %v1632
  %v1697 = vpack.c.b16 %v1633, %v1633
  %v1698 = vpack.c.b16 %v1634, %v1634
  %v1699 = vpack.c.b16 %v1635, %v1635
  %v1700 = vpack.c.b16 %v1636, %v1636
  %v1701 = vpack.c.b16 %v1637, %v1637
  %v1702 = vpack.c.b16 %v1638, %v1638
  %v1703 = vpack.c.b16 %v1639, %v1639
  %v1704 = vpack.c.b16 %v1640, %v1640
  %v1705 = vpack.c.b16 %v1641, %v1641
  %v1706 = vpack.c.b16 %v1642, %v1642
  %v1707 = vpack.c.b16 %v1643, %v1643
  %v1708 = vpack.c.b16 %v1644, %v1644
  %v1709 = vpack.c.b16 %v1645, %v1645
  %v1710 = vpack.c.b16 %v1646, %v1646
  %v1711 = vpack.c.b16 %v1647, %v1647
  %v1712 = vpack.c.b16 %v1648, %v1648
  %v1713 = vpack.c.b16 %v1649, %v1649
  %vm1778 = vcmask 19456
  %1779 = vst.msk [vmem:[%s10] sm:$0xf] %vm1778, %v1650
  %1780 = vst.msk [vmem:[%s10 + $0x4] sm:$0xf] %vm1778, %v1651
  %1781 = vst.msk [vmem:[%s10 + $0x8] sm:$0xf] %vm1778, %v1652
  %1782 = vst.msk [vmem:[%s10 + $0xc] sm:$0xf] %vm1778, %v1653
  %1783 = vst.msk [vmem:[%s10 + $0x10] sm:$0xf] %vm1778, %v1654
  %1784 = vst.msk [vmem:[%s10 + $0x14] sm:$0xf] %vm1778, %v1655
  %1785 = vst.msk [vmem:[%s10 + $0x18] sm:$0xf] %vm1778, %v1656
  %1786 = vst.msk [vmem:[%s10 + $0x1c] sm:$0xf] %vm1778, %v1657
  %1787 = vst.msk [vmem:[%s10 + $0x20] sm:$0xf] %vm1778, %v1658
  %1788 = vst.msk [vmem:[%s10 + $0x24] sm:$0xf] %vm1778, %v1659
  %1789 = vst.msk [vmem:[%s10 + $0x28] sm:$0xf] %vm1778, %v1660
  %1790 = vst.msk [vmem:[%s10 + $0x2c] sm:$0xf] %vm1778, %v1661
  %1791 = vst.msk [vmem:[%s10 + $0x30] sm:$0xf] %vm1778, %v1662
  %1792 = vst.msk [vmem:[%s10 + $0x34] sm:$0xf] %vm1778, %v1663
  %1793 = vst.msk [vmem:[%s10 + $0x38] sm:$0xf] %vm1778, %v1664
  %1794 = vst.msk [vmem:[%s10 + $0x3c] sm:$0xf] %vm1778, %v1665
  %1795 = vst.msk [vmem:[%s10 + $0x40] sm:$0xf] %vm1778, %v1666
  %1796 = vst.msk [vmem:[%s10 + $0x44] sm:$0xf] %vm1778, %v1667
  %1797 = vst.msk [vmem:[%s10 + $0x48] sm:$0xf] %vm1778, %v1668
  %1798 = vst.msk [vmem:[%s10 + $0x4c] sm:$0xf] %vm1778, %v1669
  %1799 = vst.msk [vmem:[%s10 + $0x50] sm:$0xf] %vm1778, %v1670
  %1800 = vst.msk [vmem:[%s10 + $0x54] sm:$0xf] %vm1778, %v1671
  %1801 = vst.msk [vmem:[%s10 + $0x58] sm:$0xf] %vm1778, %v1672
  %1802 = vst.msk [vmem:[%s10 + $0x5c] sm:$0xf] %vm1778, %v1673
  %1803 = vst.msk [vmem:[%s10 + $0x60] sm:$0xf] %vm1778, %v1674
  %1804 = vst.msk [vmem:[%s10 + $0x64] sm:$0xf] %vm1778, %v1675
  %1805 = vst.msk [vmem:[%s10 + $0x68] sm:$0xf] %vm1778, %v1676
  %1806 = vst.msk [vmem:[%s10 + $0x6c] sm:$0xf] %vm1778, %v1677
  %1807 = vst.msk [vmem:[%s10 + $0x70] sm:$0xf] %vm1778, %v1678
  %1808 = vst.msk [vmem:[%s10 + $0x74] sm:$0xf] %vm1778, %v1679
  %1809 = vst.msk [vmem:[%s10 + $0x78] sm:$0xf] %vm1778, %v1680
  %1810 = vst.msk [vmem:[%s10 + $0x7c] sm:$0xf] %vm1778, %v1681
  %1811 = vst.msk [vmem:[%s10 + $0x80] sm:$0xf] %vm1778, %v1682
  %1812 = vst.msk [vmem:[%s10 + $0x84] sm:$0xf] %vm1778, %v1683
  %1813 = vst.msk [vmem:[%s10 + $0x88] sm:$0xf] %vm1778, %v1684
  %1814 = vst.msk [vmem:[%s10 + $0x8c] sm:$0xf] %vm1778, %v1685
  %1815 = vst.msk [vmem:[%s10 + $0x90] sm:$0xf] %vm1778, %v1686
  %1816 = vst.msk [vmem:[%s10 + $0x94] sm:$0xf] %vm1778, %v1687
  %1817 = vst.msk [vmem:[%s10 + $0x98] sm:$0xf] %vm1778, %v1688
  %1818 = vst.msk [vmem:[%s10 + $0x9c] sm:$0xf] %vm1778, %v1689
  %1819 = vst.msk [vmem:[%s10 + $0xa0] sm:$0xf] %vm1778, %v1690
  %1820 = vst.msk [vmem:[%s10 + $0xa4] sm:$0xf] %vm1778, %v1691
  %1821 = vst.msk [vmem:[%s10 + $0xa8] sm:$0xf] %vm1778, %v1692
  %1822 = vst.msk [vmem:[%s10 + $0xac] sm:$0xf] %vm1778, %v1693
  %1823 = vst.msk [vmem:[%s10 + $0xb0] sm:$0xf] %vm1778, %v1694
  %1824 = vst.msk [vmem:[%s10 + $0xb4] sm:$0xf] %vm1778, %v1695
  %1825 = vst.msk [vmem:[%s10 + $0xb8] sm:$0xf] %vm1778, %v1696
  %1826 = vst.msk [vmem:[%s10 + $0xbc] sm:$0xf] %vm1778, %v1697
  %1827 = vst.msk [vmem:[%s10 + $0xc0] sm:$0xf] %vm1778, %v1698
  %1828 = vst.msk [vmem:[%s10 + $0xc4] sm:$0xf] %vm1778, %v1699
  %1829 = vst.msk [vmem:[%s10 + $0xc8] sm:$0xf] %vm1778, %v1700
  %1830 = vst.msk [vmem:[%s10 + $0xcc] sm:$0xf] %vm1778, %v1701
  %1831 = vst.msk [vmem:[%s10 + $0xd0] sm:$0xf] %vm1778, %v1702
  %1832 = vst.msk [vmem:[%s10 + $0xd4] sm:$0xf] %vm1778, %v1703
  %1833 = vst.msk [vmem:[%s10 + $0xd8] sm:$0xf] %vm1778, %v1704
  %1834 = vst.msk [vmem:[%s10 + $0xdc] sm:$0xf] %vm1778, %v1705
  %1835 = vst.msk [vmem:[%s10 + $0xe0] sm:$0xf] %vm1778, %v1706
  %1836 = vst.msk [vmem:[%s10 + $0xe4] sm:$0xf] %vm1778, %v1707
  %1837 = vst.msk [vmem:[%s10 + $0xe8] sm:$0xf] %vm1778, %v1708
  %1838 = vst.msk [vmem:[%s10 + $0xec] sm:$0xf] %vm1778, %v1709
  %1839 = vst.msk [vmem:[%s10 + $0xf0] sm:$0xf] %vm1778, %v1710
  %1840 = vst.msk [vmem:[%s10 + $0xf4] sm:$0xf] %vm1778, %v1711
  %1841 = vst.msk [vmem:[%s10 + $0xf8] sm:$0xf] %vm1778, %v1712
  %1842 = vst.msk [vmem:[%s10 + $0xfc] sm:$0xf] %vm1778, %v1713
  // Predicated region
  $region42: #{enet_encoder_forward.75} parent=0 // pred_check
    _
  $region43: #{enet_encoder_forward.75} parent=0 // pred_check_branch
    %1844 = sbr.rel (0) target = $region45
  $region44: #{enet_encoder_forward.75} parent=0 // pred_region
    _
  $region45: #{enet_encoder_forward.75} parent=0 // pred_fallthru
    _
  // Predicated region
  $region46: #{enet_encoder_forward.75} parent=0 // pred_check
    _
  $region47: #{enet_encoder_forward.75} parent=0 // pred_check_branch
    %1846 = sbr.rel (0) target = $region49
  $region48: #{enet_encoder_forward.75} parent=0 // pred_region
    _
  $region49: #{enet_encoder_forward.75} parent=0 // pred_fallthru
    _

// kernel: enet_encoder_forward.77
$region0: #{enet_encoder_forward.77}
  #allocation0 [shape = 'u32[]', space=smem, size = 0x4, offset = 0x4, fixed_abs, tag = 'smem constant byte address 0x4 - core index']
  #allocation1 [shape = 'u32[144,128]{1,0:T(1,128)}', space=vmem, size = 0x12000, scoped, tag = 'internal scratch']
  %s0 = inlined_call_operand.vmem [shape: bf16[128,128], index: 0, kind: input, shape index: {}]
  %s1 = inlined_call_operand.vmem [shape: bf16[128,128], index: 1, kind: input, shape index: {}]
  %s2 = inlined_call_operand.vmem [shape: f32[8,128], index: 2, kind: input, shape index: {}]
  %s3 = inlined_call_operand.vmem [shape: bf16[128,128], index: 3, kind: output, shape index: {}]
  %s4 = sld [smem:[#allocation0]]
  $region22: #{enet_encoder_forward.77} parent=0
    _
  %s6 = ssub.s32 1, %s4
  %s7 = scalar_select 0, %s6, %s4
  // Predicated region
  $region2: #{enet_encoder_forward.77} parent=0 // pred_check
    _
  $region3: #{enet_encoder_forward.77} parent=0 // pred_check_branch
    %9 = sbr.rel (0) target = $region5
  $region4: #{enet_encoder_forward.77} parent=0 // pred_region
    _
  $region5: #{enet_encoder_forward.77} parent=0 // pred_fallthru
    _
  // Predicated region
  $region6: #{enet_encoder_forward.77} parent=0 // pred_check
    _
  $region7: #{enet_encoder_forward.77} parent=0 // pred_check_branch
    %11 = sbr.rel (0) target = $region9
  $region8: #{enet_encoder_forward.77} parent=0 // pred_region
    _
  $region9: #{enet_encoder_forward.77} parent=0 // pred_fallthru
    _
  // Predicated region
  $region10: #{enet_encoder_forward.77} parent=0 // pred_check
    _
  $region11: #{enet_encoder_forward.77} parent=0 // pred_check_branch
    %13 = sbr.rel (0) target = $region13
  $region12: #{enet_encoder_forward.77} parent=0 // pred_region
    _
  $region13: #{enet_encoder_forward.77} parent=0 // pred_fallthru
    _
  %v15 = vld [vmem:[%s0] sm:$0xf]
  %v16 = vld [vmem:[%s0 + $0x4] sm:$0xf]
  %v17 = vld [vmem:[%s0 + $0x8] sm:$0xf]
  %v18 = vld [vmem:[%s0 + $0xc] sm:$0xf]
  %v19 = vld [vmem:[%s0 + $0x10] sm:$0xf]
  %v20 = vld [vmem:[%s0 + $0x14] sm:$0xf]
  %v21 = vld [vmem:[%s0 + $0x18] sm:$0xf]
  %v22 = vld [vmem:[%s0 + $0x1c] sm:$0xf]
  %v23 = vld [vmem:[%s0 + $0x20] sm:$0xf]
  %v24 = vld [vmem:[%s0 + $0x24] sm:$0xf]
  %v25 = vld [vmem:[%s0 + $0x28] sm:$0xf]
  %v26 = vld [vmem:[%s0 + $0x2c] sm:$0xf]
  %v27 = vld [vmem:[%s0 + $0x30] sm:$0xf]
  %v28 = vld [vmem:[%s0 + $0x34] sm:$0xf]
  %v29 = vld [vmem:[%s0 + $0x38] sm:$0xf]
  %v30 = vld [vmem:[%s0 + $0x3c] sm:$0xf]
  %v31 = vld [vmem:[%s1] sm:$0xf]
  %v32 = vld [vmem:[%s1 + $0x4] sm:$0xf]
  %v33 = vld [vmem:[%s1 + $0x8] sm:$0xf]
  %v34 = vld [vmem:[%s1 + $0xc] sm:$0xf]
  %v35 = vld [vmem:[%s1 + $0x10] sm:$0xf]
  %v36 = vld [vmem:[%s1 + $0x14] sm:$0xf]
  %v37 = vld [vmem:[%s1 + $0x18] sm:$0xf]
  %v38 = vld [vmem:[%s1 + $0x1c] sm:$0xf]
  %v39 = vld [vmem:[%s1 + $0x20] sm:$0xf]
  %v40 = vld [vmem:[%s1 + $0x24] sm:$0xf]
  %v41 = vld [vmem:[%s1 + $0x28] sm:$0xf]
  %v42 = vld [vmem:[%s1 + $0x2c] sm:$0xf]
  %v43 = vld [vmem:[%s1 + $0x30] sm:$0xf]
  %v44 = vld [vmem:[%s1 + $0x34] sm:$0xf]
  %v45 = vld [vmem:[%s1 + $0x38] sm:$0xf]
  %v46 = vld [vmem:[%s1 + $0x3c] sm:$0xf]
  %v63 = vunpack.c.l.b16 %v15
  %v64 = vunpack.c.l.b16 %v16
  %v65 = vunpack.c.l.b16 %v17
  %v66 = vunpack.c.l.b16 %v18
  %v67 = vunpack.c.l.b16 %v19
  %v68 = vunpack.c.l.b16 %v20
  %v69 = vunpack.c.l.b16 %v21
  %v70 = vunpack.c.l.b16 %v22
  %v71 = vunpack.c.l.b16 %v23
  %v72 = vunpack.c.l.b16 %v24
  %v73 = vunpack.c.l.b16 %v25
  %v74 = vunpack.c.l.b16 %v26
  %v75 = vunpack.c.l.b16 %v27
  %v76 = vunpack.c.l.b16 %v28
  %v77 = vunpack.c.l.b16 %v29
  %v78 = vunpack.c.l.b16 %v30
  %v79 = vpack.c.b16 %v64, %v63
  %v80 = vpack.c.b16 %v66, %v65
  %v81 = vpack.c.b16 %v68, %v67
  %v82 = vpack.c.b16 %v70, %v69
  %v83 = vpack.c.b16 %v72, %v71
  %v84 = vpack.c.b16 %v74, %v73
  %v85 = vpack.c.b16 %v76, %v75
  %v86 = vpack.c.b16 %v78, %v77
  %v111 = vunpack.c.l.b16 %v31
  %v112 = vunpack.c.l.b16 %v32
  %v113 = vunpack.c.l.b16 %v33
  %v114 = vunpack.c.l.b16 %v34
  %v115 = vunpack.c.l.b16 %v35
  %v116 = vunpack.c.l.b16 %v36
  %v117 = vunpack.c.l.b16 %v37
  %v118 = vunpack.c.l.b16 %v38
  %v119 = vunpack.c.l.b16 %v39
  %v120 = vunpack.c.l.b16 %v40
  %v121 = vunpack.c.l.b16 %v41
  %v122 = vunpack.c.l.b16 %v42
  %v123 = vunpack.c.l.b16 %v43
  %v124 = vunpack.c.l.b16 %v44
  %v125 = vunpack.c.l.b16 %v45
  %v126 = vunpack.c.l.b16 %v46
  %v127 = vpack.c.b16 %v112, %v111
  %v128 = vpack.c.b16 %v114, %v113
  %v129 = vpack.c.b16 %v116, %v115
  %v130 = vpack.c.b16 %v118, %v117
  %v131 = vpack.c.b16 %v120, %v119
  %v132 = vpack.c.b16 %v122, %v121
  %v133 = vpack.c.b16 %v124, %v123
  %v134 = vpack.c.b16 %v126, %v125
  %143 = vmatprep.subr.bf16.mxu0 0
  %144 = vmatpush1.bf16.msra.mxu0 %v134
  %145 = vmatprep.subr.bf16.mxu0 0
  %146 = vmatpush1.bf16.msra.mxu0 %v133
  %147 = vmatprep.subr.bf16.mxu0 0
  %148 = vmatpush1.bf16.msra.mxu0 %v132
  %149 = vmatprep.subr.bf16.mxu0 0
  %150 = vmatpush1.bf16.msra.mxu0 %v131
  %151 = vmatprep.subr.bf16.mxu0 0
  %152 = vmatpush1.bf16.msra.mxu0 %v130
  %153 = vmatprep.subr.bf16.mxu0 0
  %154 = vmatpush1.bf16.msra.mxu0 %v129
  %155 = vmatprep.subr.bf16.mxu0 0
  %156 = vmatpush1.bf16.msra.mxu0 %v128
  %157 = vmatprep.subr.bf16.mxu0 0
  %158 = vmatpush1.bf16.msra.mxu0 %v127
  %159 = vmatprep.subr.bf16.mxu0 0
  %160 = vmatpush2.bf16.msra.mxu0 0
  %161 = vmatprep.subr.bf16.mxu0 0
  %162 = vmatpush2.bf16.msra.mxu0 0
  %163 = vmatprep.subr.bf16.mxu0 0
  %164 = vmatpush2.bf16.msra.mxu0 0
  %165 = vmatprep.subr.bf16.mxu0 0
  %166 = vmatpush2.bf16.msra.mxu0 0
  %167 = vmatprep.subr.bf16.mxu0 0
  %168 = vmatpush2.bf16.msra.mxu0 0
  %169 = vmatprep.subr.bf16.mxu0 0
  %170 = vmatpush2.bf16.msra.mxu0 0
  %171 = vmatprep.subr.bf16.mxu0 0
  %172 = vmatpush2.bf16.msra.mxu0 0
  %173 = vmatprep.subr.bf16.mxu0 0
  %174 = vmatpush2.bf16.msra.mxu0 0
  %175 = vmatprep.mubr.bf16.mxu0 0
  %176 = vmatmul.mubr.bf16.gmra.mxu0 %v79
  %v177 = vpop.f32.mrf.mxu0
  %v178 = vadd.f32 0.0, %v177
  %v179 = vpop.f32.mrf.mxu0
  %v180 = vpop.f32.mrf.mxu0
  %v181 = vadd.f32 0.0, %v180
  %v182 = vpop.f32.mrf.mxu0
  %183 = vmatprep.mubr.bf16.mxu0 0
  %184 = vmatmul.mubr.bf16.gmra.mxu0 %v80
  %v185 = vpop.f32.mrf.mxu0
  %v186 = vadd.f32 0.0, %v185
  %v187 = vpop.f32.mrf.mxu0
  %v188 = vpop.f32.mrf.mxu0
  %v189 = vadd.f32 0.0, %v188
  %v190 = vpop.f32.mrf.mxu0
  %191 = vmatprep.mubr.bf16.mxu0 0
  %192 = vmatmul.mubr.bf16.gmra.mxu0 %v81
  %v193 = vpop.f32.mrf.mxu0
  %v194 = vadd.f32 0.0, %v193
  %v195 = vpop.f32.mrf.mxu0
  %v196 = vpop.f32.mrf.mxu0
  %v197 = vadd.f32 0.0, %v196
  %v198 = vpop.f32.mrf.mxu0
  %199 = vmatprep.mubr.bf16.mxu0 0
  %200 = vmatmul.mubr.bf16.gmra.mxu0 %v82
  %v201 = vpop.f32.mrf.mxu0
  %v202 = vadd.f32 0.0, %v201
  %v203 = vpop.f32.mrf.mxu0
  %v204 = vpop.f32.mrf.mxu0
  %v205 = vadd.f32 0.0, %v204
  %v206 = vpop.f32.mrf.mxu0
  %207 = vmatprep.mubr.bf16.mxu0 0
  %208 = vmatmul.mubr.bf16.gmra.mxu0 %v83
  %v209 = vpop.f32.mrf.mxu0
  %v210 = vadd.f32 0.0, %v209
  %v211 = vpop.f32.mrf.mxu0
  %v212 = vpop.f32.mrf.mxu0
  %v213 = vadd.f32 0.0, %v212
  %v214 = vpop.f32.mrf.mxu0
  %215 = vmatprep.mubr.bf16.mxu0 0
  %216 = vmatmul.mubr.bf16.gmra.mxu0 %v84
  %v217 = vpop.f32.mrf.mxu0
  %v218 = vadd.f32 0.0, %v217
  %v219 = vpop.f32.mrf.mxu0
  %v220 = vpop.f32.mrf.mxu0
  %v221 = vadd.f32 0.0, %v220
  %v222 = vpop.f32.mrf.mxu0
  %223 = vmatprep.mubr.bf16.mxu0 0
  %224 = vmatmul.mubr.bf16.gmra.mxu0 %v85
  %v225 = vpop.f32.mrf.mxu0
  %v226 = vadd.f32 0.0, %v225
  %v227 = vpop.f32.mrf.mxu0
  %v228 = vpop.f32.mrf.mxu0
  %v229 = vadd.f32 0.0, %v228
  %v230 = vpop.f32.mrf.mxu0
  %231 = vmatprep.mubr.bf16.mxu0 0
  %232 = vmatmul.mubr.bf16.gmra.mxu0 %v86
  %v233 = vpop.f32.mrf.mxu0
  %v234 = vadd.f32 0.0, %v233
  %v235 = vpop.f32.mrf.mxu0
  %v236 = vpop.f32.mrf.mxu0
  %v237 = vadd.f32 0.0, %v236
  %v238 = vpop.f32.mrf.mxu0
  %239 = vdwg.mxu0
  %v240 = vld [vmem:[%s2] sm:$0x1]
  %v241 = vlaneseq
  %v242 = vshrl.u32 %v241, 7
  %v243 = vsub.s32 0, %v242
  %v244 = vrot.slane %v240, %v243
  %v245 = vmul.f32 %v178, %v244
  %v246 = vmul.f32 %v181, %v244
  %v247 = vmul.f32 %v186, %v244
  %v248 = vmul.f32 %v189, %v244
  %v249 = vmul.f32 %v194, %v244
  %v250 = vmul.f32 %v197, %v244
  %v251 = vmul.f32 %v202, %v244
  %v252 = vmul.f32 %v205, %v244
  %v253 = vmul.f32 %v210, %v244
  %v254 = vmul.f32 %v213, %v244
  %v255 = vmul.f32 %v218, %v244
  %v256 = vmul.f32 %v221, %v244
  %v257 = vmul.f32 %v226, %v244
  %v258 = vmul.f32 %v229, %v244
  %v259 = vmul.f32 %v234, %v244
  %v260 = vmul.f32 %v237, %v244
  %v261 = vld [vmem:[%s2 + $0x1] sm:$0x1]
  %v262 = vlaneseq
  %v263 = vshrl.u32 %v262, 7
  %v264 = vsub.s32 0, %v263
  %v265 = vrot.slane %v261, %v264
  %v266 = vadd.f32 %v245, %v265
  %v267 = vadd.f32 %v246, %v265
  %v268 = vadd.f32 %v247, %v265
  %v269 = vadd.f32 %v248, %v265
  %v270 = vadd.f32 %v249, %v265
  %v271 = vadd.f32 %v250, %v265
  %v272 = vadd.f32 %v251, %v265
  %v273 = vadd.f32 %v252, %v265
  %v274 = vadd.f32 %v253, %v265
  %v275 = vadd.f32 %v254, %v265
  %v276 = vadd.f32 %v255, %v265
  %v277 = vadd.f32 %v256, %v265
  %v278 = vadd.f32 %v257, %v265
  %v279 = vadd.f32 %v258, %v265
  %v280 = vadd.f32 %v259, %v265
  %v281 = vadd.f32 %v260, %v265
  %vm282 = vcmp.ge.f32.partialorder %v266, 0.0
  %vm283 = vcmp.ge.f32.partialorder %v267, 0.0
  %vm284 = vcmp.ge.f32.partialorder %v268, 0.0
  %vm285 = vcmp.ge.f32.partialorder %v269, 0.0
  %vm286 = vcmp.ge.f32.partialorder %v270, 0.0
  %vm287 = vcmp.ge.f32.partialorder %v271, 0.0
  %vm288 = vcmp.ge.f32.partialorder %v272, 0.0
  %vm289 = vcmp.ge.f32.partialorder %v273, 0.0
  %vm290 = vcmp.ge.f32.partialorder %v274, 0.0
  %vm291 = vcmp.ge.f32.partialorder %v275, 0.0
  %vm292 = vcmp.ge.f32.partialorder %v276, 0.0
  %vm293 = vcmp.ge.f32.partialorder %v277, 0.0
  %vm294 = vcmp.ge.f32.partialorder %v278, 0.0
  %vm295 = vcmp.ge.f32.partialorder %v279, 0.0
  %vm296 = vcmp.ge.f32.partialorder %v280, 0.0
  %vm297 = vcmp.ge.f32.partialorder %v281, 0.0
  %v298 = vld [vmem:[%s2 + $0x2] sm:$0x1]
  %v299 = vlaneseq
  %v300 = vshrl.u32 %v299, 7
  %v301 = vsub.s32 0, %v300
  %v302 = vrot.slane %v298, %v301
  %v303 = vmul.f32 %v302, %v266
  %v304 = vmul.f32 %v302, %v267
  %v305 = vmul.f32 %v302, %v268
  %v306 = vmul.f32 %v302, %v269
  %v307 = vmul.f32 %v302, %v270
  %v308 = vmul.f32 %v302, %v271
  %v309 = vmul.f32 %v302, %v272
  %v310 = vmul.f32 %v302, %v273
  %v311 = vmul.f32 %v302, %v274
  %v312 = vmul.f32 %v302, %v275
  %v313 = vmul.f32 %v302, %v276
  %v314 = vmul.f32 %v302, %v277
  %v315 = vmul.f32 %v302, %v278
  %v316 = vmul.f32 %v302, %v279
  %v317 = vmul.f32 %v302, %v280
  %v318 = vmul.f32 %v302, %v281
  %v319 = vsel %vm282, %v266, %v303
  %v320 = vsel %vm283, %v267, %v304
  %v321 = vsel %vm284, %v268, %v305
  %v322 = vsel %vm285, %v269, %v306
  %v323 = vsel %vm286, %v270, %v307
  %v324 = vsel %vm287, %v271, %v308
  %v325 = vsel %vm288, %v272, %v309
  %v326 = vsel %vm289, %v273, %v310
  %v327 = vsel %vm290, %v274, %v311
  %v328 = vsel %vm291, %v275, %v312
  %v329 = vsel %vm292, %v276, %v313
  %v330 = vsel %vm293, %v277, %v314
  %v331 = vsel %vm294, %v278, %v315
  %v332 = vsel %vm295, %v279, %v316
  %v333 = vsel %vm296, %v280, %v317
  %v334 = vsel %vm297, %v281, %v318
  %v335 = vpack.c.bf16 %v320, %v319
  %v336 = vpack.c.bf16 %v322, %v321
  %v337 = vpack.c.bf16 %v324, %v323
  %v338 = vpack.c.bf16 %v326, %v325
  %v339 = vpack.c.bf16 %v328, %v327
  %v340 = vpack.c.bf16 %v330, %v329
  %v341 = vpack.c.bf16 %v332, %v331
  %v342 = vpack.c.bf16 %v334, %v333
  %v351 = vunpack.c.l.b16 %v335
  %v352 = vunpack.c.h.b16 %v335
  %v353 = vunpack.c.l.b16 %v336
  %v354 = vunpack.c.h.b16 %v336
  %v355 = vunpack.c.l.b16 %v337
  %v356 = vunpack.c.h.b16 %v337
  %v357 = vunpack.c.l.b16 %v338
  %v358 = vunpack.c.h.b16 %v338
  %v359 = vunpack.c.l.b16 %v339
  %v360 = vunpack.c.h.b16 %v339
  %v361 = vunpack.c.l.b16 %v340
  %v362 = vunpack.c.h.b16 %v340
  %v363 = vunpack.c.l.b16 %v341
  %v364 = vunpack.c.h.b16 %v341
  %v365 = vunpack.c.l.b16 %v342
  %v366 = vunpack.c.h.b16 %v342
  %v367 = vpack.c.b16 %v351, %v351
  %v368 = vpack.c.b16 %v352, %v352
  %v369 = vpack.c.b16 %v353, %v353
  %v370 = vpack.c.b16 %v354, %v354
  %v371 = vpack.c.b16 %v355, %v355
  %v372 = vpack.c.b16 %v356, %v356
  %v373 = vpack.c.b16 %v357, %v357
  %v374 = vpack.c.b16 %v358, %v358
  %v375 = vpack.c.b16 %v359, %v359
  %v376 = vpack.c.b16 %v360, %v360
  %v377 = vpack.c.b16 %v361, %v361
  %v378 = vpack.c.b16 %v362, %v362
  %v379 = vpack.c.b16 %v363, %v363
  %v380 = vpack.c.b16 %v364, %v364
  %v381 = vpack.c.b16 %v365, %v365
  %v382 = vpack.c.b16 %v366, %v366
  %399 = vst [vmem:[%s3] sm:$0xf] %v367
  %400 = vst [vmem:[%s3 + $0x4] sm:$0xf] %v368
  %401 = vst [vmem:[%s3 + $0x8] sm:$0xf] %v369
  %402 = vst [vmem:[%s3 + $0xc] sm:$0xf] %v370
  %403 = vst [vmem:[%s3 + $0x10] sm:$0xf] %v371
  %404 = vst [vmem:[%s3 + $0x14] sm:$0xf] %v372
  %405 = vst [vmem:[%s3 + $0x18] sm:$0xf] %v373
  %406 = vst [vmem:[%s3 + $0x1c] sm:$0xf] %v374
  %407 = vst [vmem:[%s3 + $0x20] sm:$0xf] %v375
  %408 = vst [vmem:[%s3 + $0x24] sm:$0xf] %v376
  %409 = vst [vmem:[%s3 + $0x28] sm:$0xf] %v377
  %410 = vst [vmem:[%s3 + $0x2c] sm:$0xf] %v378
  %411 = vst [vmem:[%s3 + $0x30] sm:$0xf] %v379
  %412 = vst [vmem:[%s3 + $0x34] sm:$0xf] %v380
  %413 = vst [vmem:[%s3 + $0x38] sm:$0xf] %v381
  %414 = vst [vmem:[%s3 + $0x3c] sm:$0xf] %v382
  // Predicated region
  $region14: #{enet_encoder_forward.77} parent=0 // pred_check
    _
  $region15: #{enet_encoder_forward.77} parent=0 // pred_check_branch
    %416 = sbr.rel (0) target = $region17
  $region16: #{enet_encoder_forward.77} parent=0 // pred_region
    _
  $region17: #{enet_encoder_forward.77} parent=0 // pred_fallthru
    _
  // Predicated region
  $region18: #{enet_encoder_forward.77} parent=0 // pred_check
    _
  $region19: #{enet_encoder_forward.77} parent=0 // pred_check_branch
    %418 = sbr.rel (0) target = $region21
  $region20: #{enet_encoder_forward.77} parent=0 // pred_region
    _
  $region21: #{enet_encoder_forward.77} parent=0 // pred_fallthru
    _

// kernel: enet_encoder_forward.79
$region0: #{enet_encoder_forward.79}
  #allocation0 [shape = 'u32[]', space=smem, size = 0x4, offset = 0x4, fixed_abs, tag = 'smem constant byte address 0x4 - core index']
  #allocation1 [shape = 'u32[144,128]{1,0:T(1,128)}', space=vmem, size = 0x12000, scoped, tag = 'internal scratch']
  %s0 = inlined_call_operand.vmem [shape: bf16[128,128], index: 0, kind: input, shape index: {}]
  %s1 = inlined_call_operand.vmem [shape: bf16[128,128], index: 1, kind: input, shape index: {}]
  %s2 = inlined_call_operand.vmem [shape: f32[8,128], index: 2, kind: input, shape index: {}]
  %s3 = inlined_call_operand.vmem [shape: bf16[128,128], index: 3, kind: input, shape index: {}]
  %s4 = inlined_call_operand.vmem [shape: bf16[128,128], index: 4, kind: output, shape index: {}]
  %s5 = sld [smem:[#allocation0]]
  $region26: #{enet_encoder_forward.79} parent=0
    _
  %s7 = ssub.s32 1, %s5
  %s8 = scalar_select 0, %s7, %s5
  // Predicated region
  $region2: #{enet_encoder_forward.79} parent=0 // pred_check
    _
  $region3: #{enet_encoder_forward.79} parent=0 // pred_check_branch
    %10 = sbr.rel (0) target = $region5
  $region4: #{enet_encoder_forward.79} parent=0 // pred_region
    _
  $region5: #{enet_encoder_forward.79} parent=0 // pred_fallthru
    _
  // Predicated region
  $region6: #{enet_encoder_forward.79} parent=0 // pred_check
    _
  $region7: #{enet_encoder_forward.79} parent=0 // pred_check_branch
    %12 = sbr.rel (0) target = $region9
  $region8: #{enet_encoder_forward.79} parent=0 // pred_region
    _
  $region9: #{enet_encoder_forward.79} parent=0 // pred_fallthru
    _
  // Predicated region
  $region10: #{enet_encoder_forward.79} parent=0 // pred_check
    _
  $region11: #{enet_encoder_forward.79} parent=0 // pred_check_branch
    %14 = sbr.rel (0) target = $region13
  $region12: #{enet_encoder_forward.79} parent=0 // pred_region
    _
  $region13: #{enet_encoder_forward.79} parent=0 // pred_fallthru
    _
  // Predicated region
  $region14: #{enet_encoder_forward.79} parent=0 // pred_check
    _
  $region15: #{enet_encoder_forward.79} parent=0 // pred_check_branch
    %16 = sbr.rel (0) target = $region17
  $region16: #{enet_encoder_forward.79} parent=0 // pred_region
    _
  $region17: #{enet_encoder_forward.79} parent=0 // pred_fallthru
    _
  %v18 = vld [vmem:[%s0] sm:$0xf]
  %v19 = vld [vmem:[%s0 + $0x4] sm:$0xf]
  %v20 = vld [vmem:[%s0 + $0x8] sm:$0xf]
  %v21 = vld [vmem:[%s0 + $0xc] sm:$0xf]
  %v22 = vld [vmem:[%s0 + $0x10] sm:$0xf]
  %v23 = vld [vmem:[%s0 + $0x14] sm:$0xf]
  %v24 = vld [vmem:[%s0 + $0x18] sm:$0xf]
  %v25 = vld [vmem:[%s0 + $0x1c] sm:$0xf]
  %v26 = vld [vmem:[%s0 + $0x20] sm:$0xf]
  %v27 = vld [vmem:[%s0 + $0x24] sm:$0xf]
  %v28 = vld [vmem:[%s0 + $0x28] sm:$0xf]
  %v29 = vld [vmem:[%s0 + $0x2c] sm:$0xf]
  %v30 = vld [vmem:[%s0 + $0x30] sm:$0xf]
  %v31 = vld [vmem:[%s0 + $0x34] sm:$0xf]
  %v32 = vld [vmem:[%s0 + $0x38] sm:$0xf]
  %v33 = vld [vmem:[%s0 + $0x3c] sm:$0xf]
  %v34 = vld [vmem:[%s1] sm:$0xf]
  %v35 = vld [vmem:[%s1 + $0x4] sm:$0xf]
  %v36 = vld [vmem:[%s1 + $0x8] sm:$0xf]
  %v37 = vld [vmem:[%s1 + $0xc] sm:$0xf]
  %v38 = vld [vmem:[%s1 + $0x10] sm:$0xf]
  %v39 = vld [vmem:[%s1 + $0x14] sm:$0xf]
  %v40 = vld [vmem:[%s1 + $0x18] sm:$0xf]
  %v41 = vld [vmem:[%s1 + $0x1c] sm:$0xf]
  %v42 = vld [vmem:[%s1 + $0x20] sm:$0xf]
  %v43 = vld [vmem:[%s1 + $0x24] sm:$0xf]
  %v44 = vld [vmem:[%s1 + $0x28] sm:$0xf]
  %v45 = vld [vmem:[%s1 + $0x2c] sm:$0xf]
  %v46 = vld [vmem:[%s1 + $0x30] sm:$0xf]
  %v47 = vld [vmem:[%s1 + $0x34] sm:$0xf]
  %v48 = vld [vmem:[%s1 + $0x38] sm:$0xf]
  %v49 = vld [vmem:[%s1 + $0x3c] sm:$0xf]
  %v66 = vunpack.c.l.b16 %v18
  %v67 = vunpack.c.l.b16 %v19
  %v68 = vunpack.c.l.b16 %v20
  %v69 = vunpack.c.l.b16 %v21
  %v70 = vunpack.c.l.b16 %v22
  %v71 = vunpack.c.l.b16 %v23
  %v72 = vunpack.c.l.b16 %v24
  %v73 = vunpack.c.l.b16 %v25
  %v74 = vunpack.c.l.b16 %v26
  %v75 = vunpack.c.l.b16 %v27
  %v76 = vunpack.c.l.b16 %v28
  %v77 = vunpack.c.l.b16 %v29
  %v78 = vunpack.c.l.b16 %v30
  %v79 = vunpack.c.l.b16 %v31
  %v80 = vunpack.c.l.b16 %v32
  %v81 = vunpack.c.l.b16 %v33
  %v82 = vpack.c.b16 %v67, %v66
  %v83 = vpack.c.b16 %v69, %v68
  %v84 = vpack.c.b16 %v71, %v70
  %v85 = vpack.c.b16 %v73, %v72
  %v86 = vpack.c.b16 %v75, %v74
  %v87 = vpack.c.b16 %v77, %v76
  %v88 = vpack.c.b16 %v79, %v78
  %v89 = vpack.c.b16 %v81, %v80
  %v114 = vunpack.c.l.b16 %v34
  %v115 = vunpack.c.l.b16 %v35
  %v116 = vunpack.c.l.b16 %v36
  %v117 = vunpack.c.l.b16 %v37
  %v118 = vunpack.c.l.b16 %v38
  %v119 = vunpack.c.l.b16 %v39
  %v120 = vunpack.c.l.b16 %v40
  %v121 = vunpack.c.l.b16 %v41
  %v122 = vunpack.c.l.b16 %v42
  %v123 = vunpack.c.l.b16 %v43
  %v124 = vunpack.c.l.b16 %v44
  %v125 = vunpack.c.l.b16 %v45
  %v126 = vunpack.c.l.b16 %v46
  %v127 = vunpack.c.l.b16 %v47
  %v128 = vunpack.c.l.b16 %v48
  %v129 = vunpack.c.l.b16 %v49
  %v130 = vpack.c.b16 %v115, %v114
  %v131 = vpack.c.b16 %v117, %v116
  %v132 = vpack.c.b16 %v119, %v118
  %v133 = vpack.c.b16 %v121, %v120
  %v134 = vpack.c.b16 %v123, %v122
  %v135 = vpack.c.b16 %v125, %v124
  %v136 = vpack.c.b16 %v127, %v126
  %v137 = vpack.c.b16 %v129, %v128
  %146 = vmatprep.subr.bf16.mxu0 0
  %147 = vmatpush1.bf16.msra.mxu0 %v137
  %148 = vmatprep.subr.bf16.mxu0 0
  %149 = vmatpush1.bf16.msra.mxu0 %v136
  %150 = vmatprep.subr.bf16.mxu0 0
  %151 = vmatpush1.bf16.msra.mxu0 %v135
  %152 = vmatprep.subr.bf16.mxu0 0
  %153 = vmatpush1.bf16.msra.mxu0 %v134
  %154 = vmatprep.subr.bf16.mxu0 0
  %155 = vmatpush1.bf16.msra.mxu0 %v133
  %156 = vmatprep.subr.bf16.mxu0 0
  %157 = vmatpush1.bf16.msra.mxu0 %v132
  %158 = vmatprep.subr.bf16.mxu0 0
  %159 = vmatpush1.bf16.msra.mxu0 %v131
  %160 = vmatprep.subr.bf16.mxu0 0
  %161 = vmatpush1.bf16.msra.mxu0 %v130
  %162 = vmatprep.subr.bf16.mxu0 0
  %163 = vmatpush2.bf16.msra.mxu0 0
  %164 = vmatprep.subr.bf16.mxu0 0
  %165 = vmatpush2.bf16.msra.mxu0 0
  %166 = vmatprep.subr.bf16.mxu0 0
  %167 = vmatpush2.bf16.msra.mxu0 0
  %168 = vmatprep.subr.bf16.mxu0 0
  %169 = vmatpush2.bf16.msra.mxu0 0
  %170 = vmatprep.subr.bf16.mxu0 0
  %171 = vmatpush2.bf16.msra.mxu0 0
  %172 = vmatprep.subr.bf16.mxu0 0
  %173 = vmatpush2.bf16.msra.mxu0 0
  %174 = vmatprep.subr.bf16.mxu0 0
  %175 = vmatpush2.bf16.msra.mxu0 0
  %176 = vmatprep.subr.bf16.mxu0 0
  %177 = vmatpush2.bf16.msra.mxu0 0
  %178 = vmatprep.mubr.bf16.mxu0 0
  %179 = vmatmul.mubr.bf16.gmra.mxu0 %v82
  %v180 = vpop.f32.mrf.mxu0
  %v181 = vadd.f32 0.0, %v180
  %v182 = vpop.f32.mrf.mxu0
  %v183 = vpop.f32.mrf.mxu0
  %v184 = vadd.f32 0.0, %v183
  %v185 = vpop.f32.mrf.mxu0
  %186 = vmatprep.mubr.bf16.mxu0 0
  %187 = vmatmul.mubr.bf16.gmra.mxu0 %v83
  %v188 = vpop.f32.mrf.mxu0
  %v189 = vadd.f32 0.0, %v188
  %v190 = vpop.f32.mrf.mxu0
  %v191 = vpop.f32.mrf.mxu0
  %v192 = vadd.f32 0.0, %v191
  %v193 = vpop.f32.mrf.mxu0
  %194 = vmatprep.mubr.bf16.mxu0 0
  %195 = vmatmul.mubr.bf16.gmra.mxu0 %v84
  %v196 = vpop.f32.mrf.mxu0
  %v197 = vadd.f32 0.0, %v196
  %v198 = vpop.f32.mrf.mxu0
  %v199 = vpop.f32.mrf.mxu0
  %v200 = vadd.f32 0.0, %v199
  %v201 = vpop.f32.mrf.mxu0
  %202 = vmatprep.mubr.bf16.mxu0 0
  %203 = vmatmul.mubr.bf16.gmra.mxu0 %v85
  %v204 = vpop.f32.mrf.mxu0
  %v205 = vadd.f32 0.0, %v204
  %v206 = vpop.f32.mrf.mxu0
  %v207 = vpop.f32.mrf.mxu0
  %v208 = vadd.f32 0.0, %v207
  %v209 = vpop.f32.mrf.mxu0
  %210 = vmatprep.mubr.bf16.mxu0 0
  %211 = vmatmul.mubr.bf16.gmra.mxu0 %v86
  %v212 = vpop.f32.mrf.mxu0
  %v213 = vadd.f32 0.0, %v212
  %v214 = vpop.f32.mrf.mxu0
  %v215 = vpop.f32.mrf.mxu0
  %v216 = vadd.f32 0.0, %v215
  %v217 = vpop.f32.mrf.mxu0
  %218 = vmatprep.mubr.bf16.mxu0 0
  %219 = vmatmul.mubr.bf16.gmra.mxu0 %v87
  %v220 = vpop.f32.mrf.mxu0
  %v221 = vadd.f32 0.0, %v220
  %v222 = vpop.f32.mrf.mxu0
  %v223 = vpop.f32.mrf.mxu0
  %v224 = vadd.f32 0.0, %v223
  %v225 = vpop.f32.mrf.mxu0
  %226 = vmatprep.mubr.bf16.mxu0 0
  %227 = vmatmul.mubr.bf16.gmra.mxu0 %v88
  %v228 = vpop.f32.mrf.mxu0
  %v229 = vadd.f32 0.0, %v228
  %v230 = vpop.f32.mrf.mxu0
  %v231 = vpop.f32.mrf.mxu0
  %v232 = vadd.f32 0.0, %v231
  %v233 = vpop.f32.mrf.mxu0
  %234 = vmatprep.mubr.bf16.mxu0 0
  %235 = vmatmul.mubr.bf16.gmra.mxu0 %v89
  %v236 = vpop.f32.mrf.mxu0
  %v237 = vadd.f32 0.0, %v236
  %v238 = vpop.f32.mrf.mxu0
  %v239 = vpop.f32.mrf.mxu0
  %v240 = vadd.f32 0.0, %v239
  %v241 = vpop.f32.mrf.mxu0
  %242 = vdwg.mxu0
  %v243 = vld [vmem:[%s2] sm:$0x1]
  %v244 = vlaneseq
  %v245 = vshrl.u32 %v244, 7
  %v246 = vsub.s32 0, %v245
  %v247 = vrot.slane %v243, %v246
  %v248 = vmul.f32 %v181, %v247
  %v249 = vmul.f32 %v184, %v247
  %v250 = vmul.f32 %v189, %v247
  %v251 = vmul.f32 %v192, %v247
  %v252 = vmul.f32 %v197, %v247
  %v253 = vmul.f32 %v200, %v247
  %v254 = vmul.f32 %v205, %v247
  %v255 = vmul.f32 %v208, %v247
  %v256 = vmul.f32 %v213, %v247
  %v257 = vmul.f32 %v216, %v247
  %v258 = vmul.f32 %v221, %v247
  %v259 = vmul.f32 %v224, %v247
  %v260 = vmul.f32 %v229, %v247
  %v261 = vmul.f32 %v232, %v247
  %v262 = vmul.f32 %v237, %v247
  %v263 = vmul.f32 %v240, %v247
  %v264 = vld [vmem:[%s2 + $0x1] sm:$0x1]
  %v265 = vlaneseq
  %v266 = vshrl.u32 %v265, 7
  %v267 = vsub.s32 0, %v266
  %v268 = vrot.slane %v264, %v267
  %v269 = vadd.f32 %v248, %v268
  %v270 = vadd.f32 %v249, %v268
  %v271 = vadd.f32 %v250, %v268
  %v272 = vadd.f32 %v251, %v268
  %v273 = vadd.f32 %v252, %v268
  %v274 = vadd.f32 %v253, %v268
  %v275 = vadd.f32 %v254, %v268
  %v276 = vadd.f32 %v255, %v268
  %v277 = vadd.f32 %v256, %v268
  %v278 = vadd.f32 %v257, %v268
  %v279 = vadd.f32 %v258, %v268
  %v280 = vadd.f32 %v259, %v268
  %v281 = vadd.f32 %v260, %v268
  %v282 = vadd.f32 %v261, %v268
  %v283 = vadd.f32 %v262, %v268
  %v284 = vadd.f32 %v263, %v268
  %vm285 = vcmp.ge.f32.partialorder %v269, 0.0
  %vm286 = vcmp.ge.f32.partialorder %v270, 0.0
  %vm287 = vcmp.ge.f32.partialorder %v271, 0.0
  %vm288 = vcmp.ge.f32.partialorder %v272, 0.0
  %vm289 = vcmp.ge.f32.partialorder %v273, 0.0
  %vm290 = vcmp.ge.f32.partialorder %v274, 0.0
  %vm291 = vcmp.ge.f32.partialorder %v275, 0.0
  %vm292 = vcmp.ge.f32.partialorder %v276, 0.0
  %vm293 = vcmp.ge.f32.partialorder %v277, 0.0
  %vm294 = vcmp.ge.f32.partialorder %v278, 0.0
  %vm295 = vcmp.ge.f32.partialorder %v279, 0.0
  %vm296 = vcmp.ge.f32.partialorder %v280, 0.0
  %vm297 = vcmp.ge.f32.partialorder %v281, 0.0
  %vm298 = vcmp.ge.f32.partialorder %v282, 0.0
  %vm299 = vcmp.ge.f32.partialorder %v283, 0.0
  %vm300 = vcmp.ge.f32.partialorder %v284, 0.0
  %v301 = vld [vmem:[%s2 + $0x2] sm:$0x1]
  %v302 = vlaneseq
  %v303 = vshrl.u32 %v302, 7
  %v304 = vsub.s32 0, %v303
  %v305 = vrot.slane %v301, %v304
  %v306 = vmul.f32 %v305, %v269
  %v307 = vmul.f32 %v305, %v270
  %v308 = vmul.f32 %v305, %v271
  %v309 = vmul.f32 %v305, %v272
  %v310 = vmul.f32 %v305, %v273
  %v311 = vmul.f32 %v305, %v274
  %v312 = vmul.f32 %v305, %v275
  %v313 = vmul.f32 %v305, %v276
  %v314 = vmul.f32 %v305, %v277
  %v315 = vmul.f32 %v305, %v278
  %v316 = vmul.f32 %v305, %v279
  %v317 = vmul.f32 %v305, %v280
  %v318 = vmul.f32 %v305, %v281
  %v319 = vmul.f32 %v305, %v282
  %v320 = vmul.f32 %v305, %v283
  %v321 = vmul.f32 %v305, %v284
  %v322 = vsel %vm285, %v269, %v306
  %v323 = vsel %vm286, %v270, %v307
  %v324 = vsel %vm287, %v271, %v308
  %v325 = vsel %vm288, %v272, %v309
  %v326 = vsel %vm289, %v273, %v310
  %v327 = vsel %vm290, %v274, %v311
  %v328 = vsel %vm291, %v275, %v312
  %v329 = vsel %vm292, %v276, %v313
  %v330 = vsel %vm293, %v277, %v314
  %v331 = vsel %vm294, %v278, %v315
  %v332 = vsel %vm295, %v279, %v316
  %v333 = vsel %vm296, %v280, %v317
  %v334 = vsel %vm297, %v281, %v318
  %v335 = vsel %vm298, %v282, %v319
  %v336 = vsel %vm299, %v283, %v320
  %v337 = vsel %vm300, %v284, %v321
  %v338 = vld [vmem:[%s3] sm:$0xf]
  %v339 = vld [vmem:[%s3 + $0x4] sm:$0xf]
  %v340 = vld [vmem:[%s3 + $0x8] sm:$0xf]
  %v341 = vld [vmem:[%s3 + $0xc] sm:$0xf]
  %v342 = vld [vmem:[%s3 + $0x10] sm:$0xf]
  %v343 = vld [vmem:[%s3 + $0x14] sm:$0xf]
  %v344 = vld [vmem:[%s3 + $0x18] sm:$0xf]
  %v345 = vld [vmem:[%s3 + $0x1c] sm:$0xf]
  %v346 = vld [vmem:[%s3 + $0x20] sm:$0xf]
  %v347 = vld [vmem:[%s3 + $0x24] sm:$0xf]
  %v348 = vld [vmem:[%s3 + $0x28] sm:$0xf]
  %v349 = vld [vmem:[%s3 + $0x2c] sm:$0xf]
  %v350 = vld [vmem:[%s3 + $0x30] sm:$0xf]
  %v351 = vld [vmem:[%s3 + $0x34] sm:$0xf]
  %v352 = vld [vmem:[%s3 + $0x38] sm:$0xf]
  %v353 = vld [vmem:[%s3 + $0x3c] sm:$0xf]
  %v354 = vunpack.c.l.bf16 %v338
  %v355 = vunpack.c.l.bf16 %v339
  %v356 = vunpack.c.l.bf16 %v340
  %v357 = vunpack.c.l.bf16 %v341
  %v358 = vunpack.c.l.bf16 %v342
  %v359 = vunpack.c.l.bf16 %v343
  %v360 = vunpack.c.l.bf16 %v344
  %v361 = vunpack.c.l.bf16 %v345
  %v362 = vunpack.c.l.bf16 %v346
  %v363 = vunpack.c.l.bf16 %v347
  %v364 = vunpack.c.l.bf16 %v348
  %v365 = vunpack.c.l.bf16 %v349
  %v366 = vunpack.c.l.bf16 %v350
  %v367 = vunpack.c.l.bf16 %v351
  %v368 = vunpack.c.l.bf16 %v352
  %v369 = vunpack.c.l.bf16 %v353
  %v370 = vadd.f32 %v322, %v354
  %v371 = vadd.f32 %v323, %v355
  %v372 = vadd.f32 %v324, %v356
  %v373 = vadd.f32 %v325, %v357
  %v374 = vadd.f32 %v326, %v358
  %v375 = vadd.f32 %v327, %v359
  %v376 = vadd.f32 %v328, %v360
  %v377 = vadd.f32 %v329, %v361
  %v378 = vadd.f32 %v330, %v362
  %v379 = vadd.f32 %v331, %v363
  %v380 = vadd.f32 %v332, %v364
  %v381 = vadd.f32 %v333, %v365
  %v382 = vadd.f32 %v334, %v366
  %v383 = vadd.f32 %v335, %v367
  %v384 = vadd.f32 %v336, %v368
  %v385 = vadd.f32 %v337, %v369
  %vm386 = vcmp.ge.f32.partialorder %v370, 0.0
  %vm387 = vcmp.ge.f32.partialorder %v371, 0.0
  %vm388 = vcmp.ge.f32.partialorder %v372, 0.0
  %vm389 = vcmp.ge.f32.partialorder %v373, 0.0
  %vm390 = vcmp.ge.f32.partialorder %v374, 0.0
  %vm391 = vcmp.ge.f32.partialorder %v375, 0.0
  %vm392 = vcmp.ge.f32.partialorder %v376, 0.0
  %vm393 = vcmp.ge.f32.partialorder %v377, 0.0
  %vm394 = vcmp.ge.f32.partialorder %v378, 0.0
  %vm395 = vcmp.ge.f32.partialorder %v379, 0.0
  %vm396 = vcmp.ge.f32.partialorder %v380, 0.0
  %vm397 = vcmp.ge.f32.partialorder %v381, 0.0
  %vm398 = vcmp.ge.f32.partialorder %v382, 0.0
  %vm399 = vcmp.ge.f32.partialorder %v383, 0.0
  %vm400 = vcmp.ge.f32.partialorder %v384, 0.0
  %vm401 = vcmp.ge.f32.partialorder %v385, 0.0
  %v402 = vld [vmem:[%s2 + $0x3] sm:$0x1]
  %v403 = vlaneseq
  %v404 = vshrl.u32 %v403, 7
  %v405 = vsub.s32 0, %v404
  %v406 = vrot.slane %v402, %v405
  %v407 = vmul.f32 %v406, %v370
  %v408 = vmul.f32 %v406, %v371
  %v409 = vmul.f32 %v406, %v372
  %v410 = vmul.f32 %v406, %v373
  %v411 = vmul.f32 %v406, %v374
  %v412 = vmul.f32 %v406, %v375
  %v413 = vmul.f32 %v406, %v376
  %v414 = vmul.f32 %v406, %v377
  %v415 = vmul.f32 %v406, %v378
  %v416 = vmul.f32 %v406, %v379
  %v417 = vmul.f32 %v406, %v380
  %v418 = vmul.f32 %v406, %v381
  %v419 = vmul.f32 %v406, %v382
  %v420 = vmul.f32 %v406, %v383
  %v421 = vmul.f32 %v406, %v384
  %v422 = vmul.f32 %v406, %v385
  %v423 = vsel %vm386, %v370, %v407
  %v424 = vsel %vm387, %v371, %v408
  %v425 = vsel %vm388, %v372, %v409
  %v426 = vsel %vm389, %v373, %v410
  %v427 = vsel %vm390, %v374, %v411
  %v428 = vsel %vm391, %v375, %v412
  %v429 = vsel %vm392, %v376, %v413
  %v430 = vsel %vm393, %v377, %v414
  %v431 = vsel %vm394, %v378, %v415
  %v432 = vsel %vm395, %v379, %v416
  %v433 = vsel %vm396, %v380, %v417
  %v434 = vsel %vm397, %v381, %v418
  %v435 = vsel %vm398, %v382, %v419
  %v436 = vsel %vm399, %v383, %v420
  %v437 = vsel %vm400, %v384, %v421
  %v438 = vsel %vm401, %v385, %v422
  %v439 = vpack.c.bf16 %v424, %v423
  %v440 = vpack.c.bf16 %v426, %v425
  %v441 = vpack.c.bf16 %v428, %v427
  %v442 = vpack.c.bf16 %v430, %v429
  %v443 = vpack.c.bf16 %v432, %v431
  %v444 = vpack.c.bf16 %v434, %v433
  %v445 = vpack.c.bf16 %v436, %v435
  %v446 = vpack.c.bf16 %v438, %v437
  %v455 = vunpack.c.l.b16 %v439
  %v456 = vunpack.c.h.b16 %v439
  %v457 = vunpack.c.l.b16 %v440
  %v458 = vunpack.c.h.b16 %v440
  %v459 = vunpack.c.l.b16 %v441
  %v460 = vunpack.c.h.b16 %v441
  %v461 = vunpack.c.l.b16 %v442
  %v462 = vunpack.c.h.b16 %v442
  %v463 = vunpack.c.l.b16 %v443
  %v464 = vunpack.c.h.b16 %v443
  %v465 = vunpack.c.l.b16 %v444
  %v466 = vunpack.c.h.b16 %v444
  %v467 = vunpack.c.l.b16 %v445
  %v468 = vunpack.c.h.b16 %v445
  %v469 = vunpack.c.l.b16 %v446
  %v470 = vunpack.c.h.b16 %v446
  %v471 = vpack.c.b16 %v455, %v455
  %v472 = vpack.c.b16 %v456, %v456
  %v473 = vpack.c.b16 %v457, %v457
  %v474 = vpack.c.b16 %v458, %v458
  %v475 = vpack.c.b16 %v459, %v459
  %v476 = vpack.c.b16 %v460, %v460
  %v477 = vpack.c.b16 %v461, %v461
  %v478 = vpack.c.b16 %v462, %v462
  %v479 = vpack.c.b16 %v463, %v463
  %v480 = vpack.c.b16 %v464, %v464
  %v481 = vpack.c.b16 %v465, %v465
  %v482 = vpack.c.b16 %v466, %v466
  %v483 = vpack.c.b16 %v467, %v467
  %v484 = vpack.c.b16 %v468, %v468
  %v485 = vpack.c.b16 %v469, %v469
  %v486 = vpack.c.b16 %v470, %v470
  %503 = vst [vmem:[%s4] sm:$0xf] %v471
  %504 = vst [vmem:[%s4 + $0x4] sm:$0xf] %v472
  %505 = vst [vmem:[%s4 + $0x8] sm:$0xf] %v473
  %506 = vst [vmem:[%s4 + $0xc] sm:$0xf] %v474
  %507 = vst [vmem:[%s4 + $0x10] sm:$0xf] %v475
  %508 = vst [vmem:[%s4 + $0x14] sm:$0xf] %v476
  %509 = vst [vmem:[%s4 + $0x18] sm:$0xf] %v477
  %510 = vst [vmem:[%s4 + $0x1c] sm:$0xf] %v478
  %511 = vst [vmem:[%s4 + $0x20] sm:$0xf] %v479
  %512 = vst [vmem:[%s4 + $0x24] sm:$0xf] %v480
  %513 = vst [vmem:[%s4 + $0x28] sm:$0xf] %v481
  %514 = vst [vmem:[%s4 + $0x2c] sm:$0xf] %v482
  %515 = vst [vmem:[%s4 + $0x30] sm:$0xf] %v483
  %516 = vst [vmem:[%s4 + $0x34] sm:$0xf] %v484
  %517 = vst [vmem:[%s4 + $0x38] sm:$0xf] %v485
  %518 = vst [vmem:[%s4 + $0x3c] sm:$0xf] %v486
  // Predicated region
  $region18: #{enet_encoder_forward.79} parent=0 // pred_check
    _
  $region19: #{enet_encoder_forward.79} parent=0 // pred_check_branch
    %520 = sbr.rel (0) target = $region21
  $region20: #{enet_encoder_forward.79} parent=0 // pred_region
    _
  $region21: #{enet_encoder_forward.79} parent=0 // pred_fallthru
    _
  // Predicated region
  $region22: #{enet_encoder_forward.79} parent=0 // pred_check
    _
  $region23: #{enet_encoder_forward.79} parent=0 // pred_check_branch
    %522 = sbr.rel (0) target = $region25
  $region24: #{enet_encoder_forward.79} parent=0 // pred_region
    _
  $region25: #{enet_encoder_forward.79} parent=0 // pred_fallthru
    _

// kernel: enet_encoder_forward.76
$region0: #{enet_encoder_forward.76}
  #allocation0 [shape = 'u32[]', space=smem, size = 0x4, offset = 0x4, fixed_abs, tag = 'smem constant byte address 0x4 - core index']
  #allocation1 [shape = 'u32[144,128]{1,0:T(1,128)}', space=vmem, size = 0x12000, scoped, tag = 'internal scratch']
  %s0 = inlined_call_operand.vmem [shape: bf16[128,16], index: 0, kind: input, shape index: {}]
  %s1 = inlined_call_operand.vmem [shape: bf16[128,16], index: 1, kind: input, shape index: {}]
  %s2 = inlined_call_operand.vmem [shape: bf16[128,16], index: 2, kind: input, shape index: {}]
  %s3 = inlined_call_operand.vmem [shape: bf16[128,16], index: 3, kind: input, shape index: {}]
  %s4 = inlined_call_operand.vmem [shape: bf16[128,16], index: 4, kind: input, shape index: {}]
  %s5 = inlined_call_operand.vmem [shape: bf16[128,16], index: 5, kind: input, shape index: {}]
  %s6 = inlined_call_operand.vmem [shape: bf16[128,16], index: 6, kind: input, shape index: {}]
  %s7 = inlined_call_operand.vmem [shape: bf16[128,16], index: 7, kind: input, shape index: {}]
  %s8 = inlined_call_operand.vmem [shape: bf16[128,16], index: 8, kind: input, shape index: {}]
  %s9 = inlined_call_operand.vmem [shape: f32[8,16], index: 9, kind: input, shape index: {}]
  %s10 = inlined_call_operand.vmem [shape: bf16[128,64], index: 10, kind: output, shape index: {}]
  %s11 = sld [smem:[#allocation0]]
  $region50: #{enet_encoder_forward.76} parent=0
    _
  %s13 = ssub.s32 1, %s11
  %s14 = scalar_select 0, %s13, %s11
  // Predicated region
  $region2: #{enet_encoder_forward.76} parent=0 // pred_check
    _
  $region3: #{enet_encoder_forward.76} parent=0 // pred_check_branch
    %16 = sbr.rel (0) target = $region5
  $region4: #{enet_encoder_forward.76} parent=0 // pred_region
    _
  $region5: #{enet_encoder_forward.76} parent=0 // pred_fallthru
    _
  // Predicated region
  $region6: #{enet_encoder_forward.76} parent=0 // pred_check
    _
  $region7: #{enet_encoder_forward.76} parent=0 // pred_check_branch
    %18 = sbr.rel (0) target = $region9
  $region8: #{enet_encoder_forward.76} parent=0 // pred_region
    _
  $region9: #{enet_encoder_forward.76} parent=0 // pred_fallthru
    _
  // Predicated region
  $region10: #{enet_encoder_forward.76} parent=0 // pred_check
    _
  $region11: #{enet_encoder_forward.76} parent=0 // pred_check_branch
    %20 = sbr.rel (0) target = $region13
  $region12: #{enet_encoder_forward.76} parent=0 // pred_region
    _
  $region13: #{enet_encoder_forward.76} parent=0 // pred_fallthru
    _
  // Predicated region
  $region14: #{enet_encoder_forward.76} parent=0 // pred_check
    _
  $region15: #{enet_encoder_forward.76} parent=0 // pred_check_branch
    %22 = sbr.rel (0) target = $region17
  $region16: #{enet_encoder_forward.76} parent=0 // pred_region
    _
  $region17: #{enet_encoder_forward.76} parent=0 // pred_fallthru
    _
  // Predicated region
  $region18: #{enet_encoder_forward.76} parent=0 // pred_check
    _
  $region19: #{enet_encoder_forward.76} parent=0 // pred_check_branch
    %24 = sbr.rel (0) target = $region21
  $region20: #{enet_encoder_forward.76} parent=0 // pred_region
    _
  $region21: #{enet_encoder_forward.76} parent=0 // pred_fallthru
    _
  // Predicated region
  $region22: #{enet_encoder_forward.76} parent=0 // pred_check
    _
  $region23: #{enet_encoder_forward.76} parent=0 // pred_check_branch
    %26 = sbr.rel (0) target = $region25
  $region24: #{enet_encoder_forward.76} parent=0 // pred_region
    _
  $region25: #{enet_encoder_forward.76} parent=0 // pred_fallthru
    _
  // Predicated region
  $region26: #{enet_encoder_forward.76} parent=0 // pred_check
    _
  $region27: #{enet_encoder_forward.76} parent=0 // pred_check_branch
    %28 = sbr.rel (0) target = $region29
  $region28: #{enet_encoder_forward.76} parent=0 // pred_region
    _
  $region29: #{enet_encoder_forward.76} parent=0 // pred_fallthru
    _
  // Predicated region
  $region30: #{enet_encoder_forward.76} parent=0 // pred_check
    _
  $region31: #{enet_encoder_forward.76} parent=0 // pred_check_branch
    %30 = sbr.rel (0) target = $region33
  $region32: #{enet_encoder_forward.76} parent=0 // pred_region
    _
  $region33: #{enet_encoder_forward.76} parent=0 // pred_fallthru
    _
  // Predicated region
  $region34: #{enet_encoder_forward.76} parent=0 // pred_check
    _
  $region35: #{enet_encoder_forward.76} parent=0 // pred_check_branch
    %32 = sbr.rel (0) target = $region37
  $region36: #{enet_encoder_forward.76} parent=0 // pred_region
    _
  $region37: #{enet_encoder_forward.76} parent=0 // pred_fallthru
    _
  // Predicated region
  $region38: #{enet_encoder_forward.76} parent=0 // pred_check
    _
  $region39: #{enet_encoder_forward.76} parent=0 // pred_check_branch
    %34 = sbr.rel (0) target = $region41
  $region40: #{enet_encoder_forward.76} parent=0 // pred_region
    _
  $region41: #{enet_encoder_forward.76} parent=0 // pred_fallthru
    _
  %v36 = vld [vmem:[%s0] sm:$0xf]
  %v37 = vld [vmem:[%s0 + $0x4] sm:$0xf]
  %v38 = vld [vmem:[%s0 + $0x8] sm:$0xf]
  %v39 = vld [vmem:[%s0 + $0xc] sm:$0xf]
  %v40 = vld [vmem:[%s0 + $0x10] sm:$0xf]
  %v41 = vld [vmem:[%s0 + $0x14] sm:$0xf]
  %v42 = vld [vmem:[%s0 + $0x18] sm:$0xf]
  %v43 = vld [vmem:[%s0 + $0x1c] sm:$0xf]
  %v44 = vld [vmem:[%s0 + $0x20] sm:$0xf]
  %v45 = vld [vmem:[%s0 + $0x24] sm:$0xf]
  %v46 = vld [vmem:[%s0 + $0x28] sm:$0xf]
  %v47 = vld [vmem:[%s0 + $0x2c] sm:$0xf]
  %v48 = vld [vmem:[%s0 + $0x30] sm:$0xf]
  %v49 = vld [vmem:[%s0 + $0x34] sm:$0xf]
  %v50 = vld [vmem:[%s0 + $0x38] sm:$0xf]
  %v51 = vld [vmem:[%s0 + $0x3c] sm:$0xf]
  %v52 = vld [vmem:[%s1] sm:$0xf]
  %v53 = vld [vmem:[%s1 + $0x4] sm:$0xf]
  %v54 = vld [vmem:[%s1 + $0x8] sm:$0xf]
  %v55 = vld [vmem:[%s1 + $0xc] sm:$0xf]
  %v56 = vld [vmem:[%s1 + $0x10] sm:$0xf]
  %v57 = vld [vmem:[%s1 + $0x14] sm:$0xf]
  %v58 = vld [vmem:[%s1 + $0x18] sm:$0xf]
  %v59 = vld [vmem:[%s1 + $0x1c] sm:$0xf]
  %v60 = vld [vmem:[%s1 + $0x20] sm:$0xf]
  %v61 = vld [vmem:[%s1 + $0x24] sm:$0xf]
  %v62 = vld [vmem:[%s1 + $0x28] sm:$0xf]
  %v63 = vld [vmem:[%s1 + $0x2c] sm:$0xf]
  %v64 = vld [vmem:[%s1 + $0x30] sm:$0xf]
  %v65 = vld [vmem:[%s1 + $0x34] sm:$0xf]
  %v66 = vld [vmem:[%s1 + $0x38] sm:$0xf]
  %v67 = vld [vmem:[%s1 + $0x3c] sm:$0xf]
  %v68 = vmax.bf16 %v36, %v52
  %v69 = vmax.bf16 %v37, %v53
  %v70 = vmax.bf16 %v38, %v54
  %v71 = vmax.bf16 %v39, %v55
  %v72 = vmax.bf16 %v40, %v56
  %v73 = vmax.bf16 %v41, %v57
  %v74 = vmax.bf16 %v42, %v58
  %v75 = vmax.bf16 %v43, %v59
  %v76 = vmax.bf16 %v44, %v60
  %v77 = vmax.bf16 %v45, %v61
  %v78 = vmax.bf16 %v46, %v62
  %v79 = vmax.bf16 %v47, %v63
  %v80 = vmax.bf16 %v48, %v64
  %v81 = vmax.bf16 %v49, %v65
  %v82 = vmax.bf16 %v50, %v66
  %v83 = vmax.bf16 %v51, %v67
  %v84 = vld [vmem:[%s2] sm:$0xf]
  %v85 = vld [vmem:[%s2 + $0x4] sm:$0xf]
  %v86 = vld [vmem:[%s2 + $0x8] sm:$0xf]
  %v87 = vld [vmem:[%s2 + $0xc] sm:$0xf]
  %v88 = vld [vmem:[%s2 + $0x10] sm:$0xf]
  %v89 = vld [vmem:[%s2 + $0x14] sm:$0xf]
  %v90 = vld [vmem:[%s2 + $0x18] sm:$0xf]
  %v91 = vld [vmem:[%s2 + $0x1c] sm:$0xf]
  %v92 = vld [vmem:[%s2 + $0x20] sm:$0xf]
  %v93 = vld [vmem:[%s2 + $0x24] sm:$0xf]
  %v94 = vld [vmem:[%s2 + $0x28] sm:$0xf]
  %v95 = vld [vmem:[%s2 + $0x2c] sm:$0xf]
  %v96 = vld [vmem:[%s2 + $0x30] sm:$0xf]
  %v97 = vld [vmem:[%s2 + $0x34] sm:$0xf]
  %v98 = vld [vmem:[%s2 + $0x38] sm:$0xf]
  %v99 = vld [vmem:[%s2 + $0x3c] sm:$0xf]
  %v100 = vmax.bf16 %v68, %v84
  %v101 = vmax.bf16 %v69, %v85
  %v102 = vmax.bf16 %v70, %v86
  %v103 = vmax.bf16 %v71, %v87
  %v104 = vmax.bf16 %v72, %v88
  %v105 = vmax.bf16 %v73, %v89
  %v106 = vmax.bf16 %v74, %v90
  %v107 = vmax.bf16 %v75, %v91
  %v108 = vmax.bf16 %v76, %v92
  %v109 = vmax.bf16 %v77, %v93
  %v110 = vmax.bf16 %v78, %v94
  %v111 = vmax.bf16 %v79, %v95
  %v112 = vmax.bf16 %v80, %v96
  %v113 = vmax.bf16 %v81, %v97
  %v114 = vmax.bf16 %v82, %v98
  %v115 = vmax.bf16 %v83, %v99
  %v116 = vld [vmem:[%s3] sm:$0xf]
  %v117 = vld [vmem:[%s3 + $0x4] sm:$0xf]
  %v118 = vld [vmem:[%s3 + $0x8] sm:$0xf]
  %v119 = vld [vmem:[%s3 + $0xc] sm:$0xf]
  %v120 = vld [vmem:[%s3 + $0x10] sm:$0xf]
  %v121 = vld [vmem:[%s3 + $0x14] sm:$0xf]
  %v122 = vld [vmem:[%s3 + $0x18] sm:$0xf]
  %v123 = vld [vmem:[%s3 + $0x1c] sm:$0xf]
  %v124 = vld [vmem:[%s3 + $0x20] sm:$0xf]
  %v125 = vld [vmem:[%s3 + $0x24] sm:$0xf]
  %v126 = vld [vmem:[%s3 + $0x28] sm:$0xf]
  %v127 = vld [vmem:[%s3 + $0x2c] sm:$0xf]
  %v128 = vld [vmem:[%s3 + $0x30] sm:$0xf]
  %v129 = vld [vmem:[%s3 + $0x34] sm:$0xf]
  %v130 = vld [vmem:[%s3 + $0x38] sm:$0xf]
  %v131 = vld [vmem:[%s3 + $0x3c] sm:$0xf]
  %v132 = vmax.bf16 %v100, %v116
  %v133 = vmax.bf16 %v101, %v117
  %v134 = vmax.bf16 %v102, %v118
  %v135 = vmax.bf16 %v103, %v119
  %v136 = vmax.bf16 %v104, %v120
  %v137 = vmax.bf16 %v105, %v121
  %v138 = vmax.bf16 %v106, %v122
  %v139 = vmax.bf16 %v107, %v123
  %v140 = vmax.bf16 %v108, %v124
  %v141 = vmax.bf16 %v109, %v125
  %v142 = vmax.bf16 %v110, %v126
  %v143 = vmax.bf16 %v111, %v127
  %v144 = vmax.bf16 %v112, %v128
  %v145 = vmax.bf16 %v113, %v129
  %v146 = vmax.bf16 %v114, %v130
  %v147 = vmax.bf16 %v115, %v131
  %v148 = vld [vmem:[%s4] sm:$0xf]
  %v149 = vld [vmem:[%s4 + $0x4] sm:$0xf]
  %v150 = vld [vmem:[%s4 + $0x8] sm:$0xf]
  %v151 = vld [vmem:[%s4 + $0xc] sm:$0xf]
  %v152 = vld [vmem:[%s4 + $0x10] sm:$0xf]
  %v153 = vld [vmem:[%s4 + $0x14] sm:$0xf]
  %v154 = vld [vmem:[%s4 + $0x18] sm:$0xf]
  %v155 = vld [vmem:[%s4 + $0x1c] sm:$0xf]
  %v156 = vld [vmem:[%s4 + $0x20] sm:$0xf]
  %v157 = vld [vmem:[%s4 + $0x24] sm:$0xf]
  %v158 = vld [vmem:[%s4 + $0x28] sm:$0xf]
  %v159 = vld [vmem:[%s4 + $0x2c] sm:$0xf]
  %v160 = vld [vmem:[%s4 + $0x30] sm:$0xf]
  %v161 = vld [vmem:[%s4 + $0x34] sm:$0xf]
  %v162 = vld [vmem:[%s4 + $0x38] sm:$0xf]
  %v163 = vld [vmem:[%s4 + $0x3c] sm:$0xf]
  %v164 = vmax.bf16 %v132, %v148
  %v165 = vmax.bf16 %v133, %v149
  %v166 = vmax.bf16 %v134, %v150
  %v167 = vmax.bf16 %v135, %v151
  %v168 = vmax.bf16 %v136, %v152
  %v169 = vmax.bf16 %v137, %v153
  %v170 = vmax.bf16 %v138, %v154
  %v171 = vmax.bf16 %v139, %v155
  %v172 = vmax.bf16 %v140, %v156
  %v173 = vmax.bf16 %v141, %v157
  %v174 = vmax.bf16 %v142, %v158
  %v175 = vmax.bf16 %v143, %v159
  %v176 = vmax.bf16 %v144, %v160
  %v177 = vmax.bf16 %v145, %v161
  %v178 = vmax.bf16 %v146, %v162
  %v179 = vmax.bf16 %v147, %v163
  %v180 = vld [vmem:[%s5] sm:$0xf]
  %v181 = vld [vmem:[%s5 + $0x4] sm:$0xf]
  %v182 = vld [vmem:[%s5 + $0x8] sm:$0xf]
  %v183 = vld [vmem:[%s5 + $0xc] sm:$0xf]
  %v184 = vld [vmem:[%s5 + $0x10] sm:$0xf]
  %v185 = vld [vmem:[%s5 + $0x14] sm:$0xf]
  %v186 = vld [vmem:[%s5 + $0x18] sm:$0xf]
  %v187 = vld [vmem:[%s5 + $0x1c] sm:$0xf]
  %v188 = vld [vmem:[%s5 + $0x20] sm:$0xf]
  %v189 = vld [vmem:[%s5 + $0x24] sm:$0xf]
  %v190 = vld [vmem:[%s5 + $0x28] sm:$0xf]
  %v191 = vld [vmem:[%s5 + $0x2c] sm:$0xf]
  %v192 = vld [vmem:[%s5 + $0x30] sm:$0xf]
  %v193 = vld [vmem:[%s5 + $0x34] sm:$0xf]
  %v194 = vld [vmem:[%s5 + $0x38] sm:$0xf]
  %v195 = vld [vmem:[%s5 + $0x3c] sm:$0xf]
  %v196 = vmax.bf16 %v164, %v180
  %v197 = vmax.bf16 %v165, %v181
  %v198 = vmax.bf16 %v166, %v182
  %v199 = vmax.bf16 %v167, %v183
  %v200 = vmax.bf16 %v168, %v184
  %v201 = vmax.bf16 %v169, %v185
  %v202 = vmax.bf16 %v170, %v186
  %v203 = vmax.bf16 %v171, %v187
  %v204 = vmax.bf16 %v172, %v188
  %v205 = vmax.bf16 %v173, %v189
  %v206 = vmax.bf16 %v174, %v190
  %v207 = vmax.bf16 %v175, %v191
  %v208 = vmax.bf16 %v176, %v192
  %v209 = vmax.bf16 %v177, %v193
  %v210 = vmax.bf16 %v178, %v194
  %v211 = vmax.bf16 %v179, %v195
  %v212 = vld [vmem:[%s6] sm:$0xf]
  %v213 = vld [vmem:[%s6 + $0x4] sm:$0xf]
  %v214 = vld [vmem:[%s6 + $0x8] sm:$0xf]
  %v215 = vld [vmem:[%s6 + $0xc] sm:$0xf]
  %v216 = vld [vmem:[%s6 + $0x10] sm:$0xf]
  %v217 = vld [vmem:[%s6 + $0x14] sm:$0xf]
  %v218 = vld [vmem:[%s6 + $0x18] sm:$0xf]
  %v219 = vld [vmem:[%s6 + $0x1c] sm:$0xf]
  %v220 = vld [vmem:[%s6 + $0x20] sm:$0xf]
  %v221 = vld [vmem:[%s6 + $0x24] sm:$0xf]
  %v222 = vld [vmem:[%s6 + $0x28] sm:$0xf]
  %v223 = vld [vmem:[%s6 + $0x2c] sm:$0xf]
  %v224 = vld [vmem:[%s6 + $0x30] sm:$0xf]
  %v225 = vld [vmem:[%s6 + $0x34] sm:$0xf]
  %v226 = vld [vmem:[%s6 + $0x38] sm:$0xf]
  %v227 = vld [vmem:[%s6 + $0x3c] sm:$0xf]
  %v228 = vmax.bf16 %v196, %v212
  %v229 = vmax.bf16 %v197, %v213
  %v230 = vmax.bf16 %v198, %v214
  %v231 = vmax.bf16 %v199, %v215
  %v232 = vmax.bf16 %v200, %v216
  %v233 = vmax.bf16 %v201, %v217
  %v234 = vmax.bf16 %v202, %v218
  %v235 = vmax.bf16 %v203, %v219
  %v236 = vmax.bf16 %v204, %v220
  %v237 = vmax.bf16 %v205, %v221
  %v238 = vmax.bf16 %v206, %v222
  %v239 = vmax.bf16 %v207, %v223
  %v240 = vmax.bf16 %v208, %v224
  %v241 = vmax.bf16 %v209, %v225
  %v242 = vmax.bf16 %v210, %v226
  %v243 = vmax.bf16 %v211, %v227
  %v244 = vld [vmem:[%s7] sm:$0xf]
  %v245 = vld [vmem:[%s7 + $0x4] sm:$0xf]
  %v246 = vld [vmem:[%s7 + $0x8] sm:$0xf]
  %v247 = vld [vmem:[%s7 + $0xc] sm:$0xf]
  %v248 = vld [vmem:[%s7 + $0x10] sm:$0xf]
  %v249 = vld [vmem:[%s7 + $0x14] sm:$0xf]
  %v250 = vld [vmem:[%s7 + $0x18] sm:$0xf]
  %v251 = vld [vmem:[%s7 + $0x1c] sm:$0xf]
  %v252 = vld [vmem:[%s7 + $0x20] sm:$0xf]
  %v253 = vld [vmem:[%s7 + $0x24] sm:$0xf]
  %v254 = vld [vmem:[%s7 + $0x28] sm:$0xf]
  %v255 = vld [vmem:[%s7 + $0x2c] sm:$0xf]
  %v256 = vld [vmem:[%s7 + $0x30] sm:$0xf]
  %v257 = vld [vmem:[%s7 + $0x34] sm:$0xf]
  %v258 = vld [vmem:[%s7 + $0x38] sm:$0xf]
  %v259 = vld [vmem:[%s7 + $0x3c] sm:$0xf]
  %v260 = vmax.bf16 %v228, %v244
  %v261 = vmax.bf16 %v229, %v245
  %v262 = vmax.bf16 %v230, %v246
  %v263 = vmax.bf16 %v231, %v247
  %v264 = vmax.bf16 %v232, %v248
  %v265 = vmax.bf16 %v233, %v249
  %v266 = vmax.bf16 %v234, %v250
  %v267 = vmax.bf16 %v235, %v251
  %v268 = vmax.bf16 %v236, %v252
  %v269 = vmax.bf16 %v237, %v253
  %v270 = vmax.bf16 %v238, %v254
  %v271 = vmax.bf16 %v239, %v255
  %v272 = vmax.bf16 %v240, %v256
  %v273 = vmax.bf16 %v241, %v257
  %v274 = vmax.bf16 %v242, %v258
  %v275 = vmax.bf16 %v243, %v259
  %v276 = vld [vmem:[%s8] sm:$0xf]
  %v277 = vld [vmem:[%s8 + $0x4] sm:$0xf]
  %v278 = vld [vmem:[%s8 + $0x8] sm:$0xf]
  %v279 = vld [vmem:[%s8 + $0xc] sm:$0xf]
  %v280 = vld [vmem:[%s8 + $0x10] sm:$0xf]
  %v281 = vld [vmem:[%s8 + $0x14] sm:$0xf]
  %v282 = vld [vmem:[%s8 + $0x18] sm:$0xf]
  %v283 = vld [vmem:[%s8 + $0x1c] sm:$0xf]
  %v284 = vld [vmem:[%s8 + $0x20] sm:$0xf]
  %v285 = vld [vmem:[%s8 + $0x24] sm:$0xf]
  %v286 = vld [vmem:[%s8 + $0x28] sm:$0xf]
  %v287 = vld [vmem:[%s8 + $0x2c] sm:$0xf]
  %v288 = vld [vmem:[%s8 + $0x30] sm:$0xf]
  %v289 = vld [vmem:[%s8 + $0x34] sm:$0xf]
  %v290 = vld [vmem:[%s8 + $0x38] sm:$0xf]
  %v291 = vld [vmem:[%s8 + $0x3c] sm:$0xf]
  %v292 = vmax.bf16 %v260, %v276
  %v293 = vmax.bf16 %v261, %v277
  %v294 = vmax.bf16 %v262, %v278
  %v295 = vmax.bf16 %v263, %v279
  %v296 = vmax.bf16 %v264, %v280
  %v297 = vmax.bf16 %v265, %v281
  %v298 = vmax.bf16 %v266, %v282
  %v299 = vmax.bf16 %v267, %v283
  %v300 = vmax.bf16 %v268, %v284
  %v301 = vmax.bf16 %v269, %v285
  %v302 = vmax.bf16 %v270, %v286
  %v303 = vmax.bf16 %v271, %v287
  %v304 = vmax.bf16 %v272, %v288
  %v305 = vmax.bf16 %v273, %v289
  %v306 = vmax.bf16 %v274, %v290
  %v307 = vmax.bf16 %v275, %v291
  %v308 = vunpack.c.l.bf16 %v292
  %v309 = vunpack.c.l.bf16 %v293
  %v310 = vunpack.c.l.bf16 %v294
  %v311 = vunpack.c.l.bf16 %v295
  %v312 = vunpack.c.l.bf16 %v296
  %v313 = vunpack.c.l.bf16 %v297
  %v314 = vunpack.c.l.bf16 %v298
  %v315 = vunpack.c.l.bf16 %v299
  %v316 = vunpack.c.l.bf16 %v300
  %v317 = vunpack.c.l.bf16 %v301
  %v318 = vunpack.c.l.bf16 %v302
  %v319 = vunpack.c.l.bf16 %v303
  %v320 = vunpack.c.l.bf16 %v304
  %v321 = vunpack.c.l.bf16 %v305
  %v322 = vunpack.c.l.bf16 %v306
  %v323 = vunpack.c.l.bf16 %v307
  %v324 = vld [vmem:[%s9] sm:$0x1]
  %v325 = vlaneseq
  %v326 = vshrl.u32 %v325, 7
  %v327 = vsub.s32 0, %v326
  %v328 = vrot.slane %v324, %v327
  %v329 = vmul.f32 %v308, %v328
  %v330 = vmul.f32 %v309, %v328
  %v331 = vmul.f32 %v310, %v328
  %v332 = vmul.f32 %v311, %v328
  %v333 = vmul.f32 %v312, %v328
  %v334 = vmul.f32 %v313, %v328
  %v335 = vmul.f32 %v314, %v328
  %v336 = vmul.f32 %v315, %v328
  %v337 = vmul.f32 %v316, %v328
  %v338 = vmul.f32 %v317, %v328
  %v339 = vmul.f32 %v318, %v328
  %v340 = vmul.f32 %v319, %v328
  %v341 = vmul.f32 %v320, %v328
  %v342 = vmul.f32 %v321, %v328
  %v343 = vmul.f32 %v322, %v328
  %v344 = vmul.f32 %v323, %v328
  %v345 = vld [vmem:[%s9 + $0x1] sm:$0x1]
  %v346 = vlaneseq
  %v347 = vshrl.u32 %v346, 7
  %v348 = vsub.s32 0, %v347
  %v349 = vrot.slane %v345, %v348
  %v350 = vadd.f32 %v329, %v349
  %v351 = vadd.f32 %v330, %v349
  %v352 = vadd.f32 %v331, %v349
  %v353 = vadd.f32 %v332, %v349
  %v354 = vadd.f32 %v333, %v349
  %v355 = vadd.f32 %v334, %v349
  %v356 = vadd.f32 %v335, %v349
  %v357 = vadd.f32 %v336, %v349
  %v358 = vadd.f32 %v337, %v349
  %v359 = vadd.f32 %v338, %v349
  %v360 = vadd.f32 %v339, %v349
  %v361 = vadd.f32 %v340, %v349
  %v362 = vadd.f32 %v341, %v349
  %v363 = vadd.f32 %v342, %v349
  %v364 = vadd.f32 %v343, %v349
  %v365 = vadd.f32 %v344, %v349
  %vm366 = vcmp.ge.f32.partialorder %v350, 0.0
  %vm367 = vcmp.ge.f32.partialorder %v351, 0.0
  %vm368 = vcmp.ge.f32.partialorder %v352, 0.0
  %vm369 = vcmp.ge.f32.partialorder %v353, 0.0
  %vm370 = vcmp.ge.f32.partialorder %v354, 0.0
  %vm371 = vcmp.ge.f32.partialorder %v355, 0.0
  %vm372 = vcmp.ge.f32.partialorder %v356, 0.0
  %vm373 = vcmp.ge.f32.partialorder %v357, 0.0
  %vm374 = vcmp.ge.f32.partialorder %v358, 0.0
  %vm375 = vcmp.ge.f32.partialorder %v359, 0.0
  %vm376 = vcmp.ge.f32.partialorder %v360, 0.0
  %vm377 = vcmp.ge.f32.partialorder %v361, 0.0
  %vm378 = vcmp.ge.f32.partialorder %v362, 0.0
  %vm379 = vcmp.ge.f32.partialorder %v363, 0.0
  %vm380 = vcmp.ge.f32.partialorder %v364, 0.0
  %vm381 = vcmp.ge.f32.partialorder %v365, 0.0
  %v382 = vld [vmem:[%s9 + $0x2] sm:$0x1]
  %v383 = vlaneseq
  %v384 = vshrl.u32 %v383, 7
  %v385 = vsub.s32 0, %v384
  %v386 = vrot.slane %v382, %v385
  %v387 = vmul.f32 %v386, %v350
  %v388 = vmul.f32 %v386, %v351
  %v389 = vmul.f32 %v386, %v352
  %v390 = vmul.f32 %v386, %v353
  %v391 = vmul.f32 %v386, %v354
  %v392 = vmul.f32 %v386, %v355
  %v393 = vmul.f32 %v386, %v356
  %v394 = vmul.f32 %v386, %v357
  %v395 = vmul.f32 %v386, %v358
  %v396 = vmul.f32 %v386, %v359
  %v397 = vmul.f32 %v386, %v360
  %v398 = vmul.f32 %v386, %v361
  %v399 = vmul.f32 %v386, %v362
  %v400 = vmul.f32 %v386, %v363
  %v401 = vmul.f32 %v386, %v364
  %v402 = vmul.f32 %v386, %v365
  %v403 = vsel %vm366, %v350, %v387
  %v404 = vsel %vm367, %v351, %v388
  %v405 = vsel %vm368, %v352, %v389
  %v406 = vsel %vm369, %v353, %v390
  %v407 = vsel %vm370, %v354, %v391
  %v408 = vsel %vm371, %v355, %v392
  %v409 = vsel %vm372, %v356, %v393
  %v410 = vsel %vm373, %v357, %v394
  %v411 = vsel %vm374, %v358, %v395
  %v412 = vsel %vm375, %v359, %v396
  %v413 = vsel %vm376, %v360, %v397
  %v414 = vsel %vm377, %v361, %v398
  %v415 = vsel %vm378, %v362, %v399
  %v416 = vsel %vm379, %v363, %v400
  %v417 = vsel %vm380, %v364, %v401
  %v418 = vsel %vm381, %v365, %v402
  %v419 = vpack.c.bf16 %v404, %v403
  %v420 = vpack.c.bf16 %v406, %v405
  %v421 = vpack.c.bf16 %v408, %v407
  %v422 = vpack.c.bf16 %v410, %v409
  %v423 = vpack.c.bf16 %v412, %v411
  %v424 = vpack.c.bf16 %v414, %v413
  %v425 = vpack.c.bf16 %v416, %v415
  %v426 = vpack.c.bf16 %v418, %v417
  %vm427 = vcmask 519168
  %428 = vst.msk [vmem:[%s10] sm:$0xf] %vm427, 0
  %429 = vst.msk [vmem:[%s10 + $0x4] sm:$0xf] %vm427, 0
  %430 = vst.msk [vmem:[%s10 + $0x8] sm:$0xf] %vm427, 0
  %431 = vst.msk [vmem:[%s10 + $0xc] sm:$0xf] %vm427, 0
  %432 = vst.msk [vmem:[%s10 + $0x10] sm:$0xf] %vm427, 0
  %433 = vst.msk [vmem:[%s10 + $0x14] sm:$0xf] %vm427, 0
  %434 = vst.msk [vmem:[%s10 + $0x18] sm:$0xf] %vm427, 0
  %435 = vst.msk [vmem:[%s10 + $0x1c] sm:$0xf] %vm427, 0
  %436 = vst.msk [vmem:[%s10 + $0x20] sm:$0xf] %vm427, 0
  %437 = vst.msk [vmem:[%s10 + $0x24] sm:$0xf] %vm427, 0
  %438 = vst.msk [vmem:[%s10 + $0x28] sm:$0xf] %vm427, 0
  %439 = vst.msk [vmem:[%s10 + $0x2c] sm:$0xf] %vm427, 0
  %440 = vst.msk [vmem:[%s10 + $0x30] sm:$0xf] %vm427, 0
  %441 = vst.msk [vmem:[%s10 + $0x34] sm:$0xf] %vm427, 0
  %442 = vst.msk [vmem:[%s10 + $0x38] sm:$0xf] %vm427, 0
  %443 = vst.msk [vmem:[%s10 + $0x3c] sm:$0xf] %vm427, 0
  %v452 = vunpack.c.l.b16 %v419
  %v453 = vunpack.c.h.b16 %v419
  %v454 = vunpack.c.l.b16 %v420
  %v455 = vunpack.c.h.b16 %v420
  %v456 = vunpack.c.l.b16 %v421
  %v457 = vunpack.c.h.b16 %v421
  %v458 = vunpack.c.l.b16 %v422
  %v459 = vunpack.c.h.b16 %v422
  %v460 = vunpack.c.l.b16 %v423
  %v461 = vunpack.c.h.b16 %v423
  %v462 = vunpack.c.l.b16 %v424
  %v463 = vunpack.c.h.b16 %v424
  %v464 = vunpack.c.l.b16 %v425
  %v465 = vunpack.c.h.b16 %v425
  %v466 = vunpack.c.l.b16 %v426
  %v467 = vunpack.c.h.b16 %v426
  %v468 = vpack.c.b16 %v452, %v452
  %v469 = vpack.c.b16 %v453, %v453
  %v470 = vpack.c.b16 %v454, %v454
  %v471 = vpack.c.b16 %v455, %v455
  %v472 = vpack.c.b16 %v456, %v456
  %v473 = vpack.c.b16 %v457, %v457
  %v474 = vpack.c.b16 %v458, %v458
  %v475 = vpack.c.b16 %v459, %v459
  %v476 = vpack.c.b16 %v460, %v460
  %v477 = vpack.c.b16 %v461, %v461
  %v478 = vpack.c.b16 %v462, %v462
  %v479 = vpack.c.b16 %v463, %v463
  %v480 = vpack.c.b16 %v464, %v464
  %v481 = vpack.c.b16 %v465, %v465
  %v482 = vpack.c.b16 %v466, %v466
  %v483 = vpack.c.b16 %v467, %v467
  %vm500 = vcmask 125952
  %501 = vst.msk [vmem:[%s10] sm:$0xf] %vm500, %v468
  %502 = vst.msk [vmem:[%s10 + $0x4] sm:$0xf] %vm500, %v469
  %503 = vst.msk [vmem:[%s10 + $0x8] sm:$0xf] %vm500, %v470
  %504 = vst.msk [vmem:[%s10 + $0xc] sm:$0xf] %vm500, %v471
  %505 = vst.msk [vmem:[%s10 + $0x10] sm:$0xf] %vm500, %v472
  %506 = vst.msk [vmem:[%s10 + $0x14] sm:$0xf] %vm500, %v473
  %507 = vst.msk [vmem:[%s10 + $0x18] sm:$0xf] %vm500, %v474
  %508 = vst.msk [vmem:[%s10 + $0x1c] sm:$0xf] %vm500, %v475
  %509 = vst.msk [vmem:[%s10 + $0x20] sm:$0xf] %vm500, %v476
  %510 = vst.msk [vmem:[%s10 + $0x24] sm:$0xf] %vm500, %v477
  %511 = vst.msk [vmem:[%s10 + $0x28] sm:$0xf] %vm500, %v478
  %512 = vst.msk [vmem:[%s10 + $0x2c] sm:$0xf] %vm500, %v479
  %513 = vst.msk [vmem:[%s10 + $0x30] sm:$0xf] %vm500, %v480
  %514 = vst.msk [vmem:[%s10 + $0x34] sm:$0xf] %vm500, %v481
  %515 = vst.msk [vmem:[%s10 + $0x38] sm:$0xf] %vm500, %v482
  %516 = vst.msk [vmem:[%s10 + $0x3c] sm:$0xf] %vm500, %v483
  // Predicated region
  $region42: #{enet_encoder_forward.76} parent=0 // pred_check
    _
  $region43: #{enet_encoder_forward.76} parent=0 // pred_check_branch
    %518 = sbr.rel (0) target = $region45
  $region44: #{enet_encoder_forward.76} parent=0 // pred_region
    _
  $region45: #{enet_encoder_forward.76} parent=0 // pred_fallthru
    _
  // Predicated region
  $region46: #{enet_encoder_forward.76} parent=0 // pred_check
    _
  $region47: #{enet_encoder_forward.76} parent=0 // pred_check_branch
    %520 = sbr.rel (0) target = $region49
  $region48: #{enet_encoder_forward.76} parent=0 // pred_region
    _
  $region49: #{enet_encoder_forward.76} parent=0 // pred_fallthru
    _

// kernel: enet_encoder_forward.81
$region0: #{enet_encoder_forward.81}
  #allocation0 [shape = 'u32[]', space=smem, size = 0x4, offset = 0x4, fixed_abs, tag = 'smem constant byte address 0x4 - core index']
  #allocation1 [shape = 'u32[144,128]{1,0:T(1,128)}', space=vmem, size = 0x12000, scoped, tag = 'internal scratch']
  %s0 = inlined_call_operand.vmem [shape: bf16[128,256], index: 0, kind: input, shape index: {}]
  %s1 = inlined_call_operand.vmem [shape: bf16[256,128], index: 1, kind: input, shape index: {}]
  %s2 = inlined_call_operand.vmem [shape: f32[8,128], index: 2, kind: input, shape index: {}]
  %s3 = inlined_call_operand.vmem [shape: bf16[128,128], index: 3, kind: output, shape index: {}]
  %s4 = sld [smem:[#allocation0]]
  $region22: #{enet_encoder_forward.81} parent=0
    _
  %s6 = ssub.s32 1, %s4
  %s7 = scalar_select 0, %s6, %s4
  // Predicated region
  $region2: #{enet_encoder_forward.81} parent=0 // pred_check
    _
  $region3: #{enet_encoder_forward.81} parent=0 // pred_check_branch
    %9 = sbr.rel (0) target = $region5
  $region4: #{enet_encoder_forward.81} parent=0 // pred_region
    _
  $region5: #{enet_encoder_forward.81} parent=0 // pred_fallthru
    _
  // Predicated region
  $region6: #{enet_encoder_forward.81} parent=0 // pred_check
    _
  $region7: #{enet_encoder_forward.81} parent=0 // pred_check_branch
    %11 = sbr.rel (0) target = $region9
  $region8: #{enet_encoder_forward.81} parent=0 // pred_region
    _
  $region9: #{enet_encoder_forward.81} parent=0 // pred_fallthru
    _
  // Predicated region
  $region10: #{enet_encoder_forward.81} parent=0 // pred_check
    _
  $region11: #{enet_encoder_forward.81} parent=0 // pred_check_branch
    %13 = sbr.rel (0) target = $region13
  $region12: #{enet_encoder_forward.81} parent=0 // pred_region
    _
  $region13: #{enet_encoder_forward.81} parent=0 // pred_fallthru
    _
  %v15 = vld [vmem:[%s0] sm:$0xff]
  %v16 = vld [vmem:[%s0 + $0x8] sm:$0xff]
  %v17 = vld [vmem:[%s0 + $0x10] sm:$0xff]
  %v18 = vld [vmem:[%s0 + $0x18] sm:$0xff]
  %v19 = vld [vmem:[%s0 + $0x20] sm:$0xff]
  %v20 = vld [vmem:[%s0 + $0x28] sm:$0xff]
  %v21 = vld [vmem:[%s0 + $0x30] sm:$0xff]
  %v22 = vld [vmem:[%s0 + $0x38] sm:$0xff]
  %v23 = vld [vmem:[%s0 + $0x40] sm:$0xff]
  %v24 = vld [vmem:[%s0 + $0x48] sm:$0xff]
  %v25 = vld [vmem:[%s0 + $0x50] sm:$0xff]
  %v26 = vld [vmem:[%s0 + $0x58] sm:$0xff]
  %v27 = vld [vmem:[%s0 + $0x60] sm:$0xff]
  %v28 = vld [vmem:[%s0 + $0x68] sm:$0xff]
  %v29 = vld [vmem:[%s0 + $0x70] sm:$0xff]
  %v30 = vld [vmem:[%s0 + $0x78] sm:$0xff]
  %v31 = vld [vmem:[%s1] sm:$0xf]
  %v32 = vld [vmem:[%s1 + $0x4] sm:$0xf]
  %v33 = vld [vmem:[%s1 + $0x8] sm:$0xf]
  %v34 = vld [vmem:[%s1 + $0xc] sm:$0xf]
  %v35 = vld [vmem:[%s1 + $0x10] sm:$0xf]
  %v36 = vld [vmem:[%s1 + $0x14] sm:$0xf]
  %v37 = vld [vmem:[%s1 + $0x18] sm:$0xf]
  %v38 = vld [vmem:[%s1 + $0x1c] sm:$0xf]
  %v39 = vld [vmem:[%s1 + $0x20] sm:$0xf]
  %v40 = vld [vmem:[%s1 + $0x24] sm:$0xf]
  %v41 = vld [vmem:[%s1 + $0x28] sm:$0xf]
  %v42 = vld [vmem:[%s1 + $0x2c] sm:$0xf]
  %v43 = vld [vmem:[%s1 + $0x30] sm:$0xf]
  %v44 = vld [vmem:[%s1 + $0x34] sm:$0xf]
  %v45 = vld [vmem:[%s1 + $0x38] sm:$0xf]
  %v46 = vld [vmem:[%s1 + $0x3c] sm:$0xf]
  %v47 = vld [vmem:[%s1 + $0x40] sm:$0xf]
  %v48 = vld [vmem:[%s1 + $0x44] sm:$0xf]
  %v49 = vld [vmem:[%s1 + $0x48] sm:$0xf]
  %v50 = vld [vmem:[%s1 + $0x4c] sm:$0xf]
  %v51 = vld [vmem:[%s1 + $0x50] sm:$0xf]
  %v52 = vld [vmem:[%s1 + $0x54] sm:$0xf]
  %v53 = vld [vmem:[%s1 + $0x58] sm:$0xf]
  %v54 = vld [vmem:[%s1 + $0x5c] sm:$0xf]
  %v55 = vld [vmem:[%s1 + $0x60] sm:$0xf]
  %v56 = vld [vmem:[%s1 + $0x64] sm:$0xf]
  %v57 = vld [vmem:[%s1 + $0x68] sm:$0xf]
  %v58 = vld [vmem:[%s1 + $0x6c] sm:$0xf]
  %v59 = vld [vmem:[%s1 + $0x70] sm:$0xf]
  %v60 = vld [vmem:[%s1 + $0x74] sm:$0xf]
  %v61 = vld [vmem:[%s1 + $0x78] sm:$0xf]
  %v62 = vld [vmem:[%s1 + $0x7c] sm:$0xf]
  %v79 = vunpack.c.l.b16 %v15
  %v80 = vunpack.c.h.b16 %v15
  %v81 = vunpack.c.l.b16 %v16
  %v82 = vunpack.c.h.b16 %v16
  %v83 = vunpack.c.l.b16 %v17
  %v84 = vunpack.c.h.b16 %v17
  %v85 = vunpack.c.l.b16 %v18
  %v86 = vunpack.c.h.b16 %v18
  %v87 = vunpack.c.l.b16 %v19
  %v88 = vunpack.c.h.b16 %v19
  %v89 = vunpack.c.l.b16 %v20
  %v90 = vunpack.c.h.b16 %v20
  %v91 = vunpack.c.l.b16 %v21
  %v92 = vunpack.c.h.b16 %v21
  %v93 = vunpack.c.l.b16 %v22
  %v94 = vunpack.c.h.b16 %v22
  %v95 = vunpack.c.l.b16 %v23
  %v96 = vunpack.c.h.b16 %v23
  %v97 = vunpack.c.l.b16 %v24
  %v98 = vunpack.c.h.b16 %v24
  %v99 = vunpack.c.l.b16 %v25
  %v100 = vunpack.c.h.b16 %v25
  %v101 = vunpack.c.l.b16 %v26
  %v102 = vunpack.c.h.b16 %v26
  %v103 = vunpack.c.l.b16 %v27
  %v104 = vunpack.c.h.b16 %v27
  %v105 = vunpack.c.l.b16 %v28
  %v106 = vunpack.c.h.b16 %v28
  %v107 = vunpack.c.l.b16 %v29
  %v108 = vunpack.c.h.b16 %v29
  %v109 = vunpack.c.l.b16 %v30
  %v110 = vunpack.c.h.b16 %v30
  %v111 = vpack.c.b16 %v81, %v79
  %v112 = vpack.c.b16 %v82, %v80
  %v113 = vpack.c.b16 %v85, %v83
  %v114 = vpack.c.b16 %v86, %v84
  %v115 = vpack.c.b16 %v89, %v87
  %v116 = vpack.c.b16 %v90, %v88
  %v117 = vpack.c.b16 %v93, %v91
  %v118 = vpack.c.b16 %v94, %v92
  %v119 = vpack.c.b16 %v97, %v95
  %v120 = vpack.c.b16 %v98, %v96
  %v121 = vpack.c.b16 %v101, %v99
  %v122 = vpack.c.b16 %v102, %v100
  %v123 = vpack.c.b16 %v105, %v103
  %v124 = vpack.c.b16 %v106, %v104
  %v125 = vpack.c.b16 %v109, %v107
  %v126 = vpack.c.b16 %v110, %v108
  %v175 = vunpack.c.l.b16 %v31
  %v176 = vunpack.c.l.b16 %v32
  %v177 = vunpack.c.l.b16 %v33
  %v178 = vunpack.c.l.b16 %v34
  %v179 = vunpack.c.l.b16 %v35
  %v180 = vunpack.c.l.b16 %v36
  %v181 = vunpack.c.l.b16 %v37
  %v182 = vunpack.c.l.b16 %v38
  %v183 = vunpack.c.l.b16 %v39
  %v184 = vunpack.c.l.b16 %v40
  %v185 = vunpack.c.l.b16 %v41
  %v186 = vunpack.c.l.b16 %v42
  %v187 = vunpack.c.l.b16 %v43
  %v188 = vunpack.c.l.b16 %v44
  %v189 = vunpack.c.l.b16 %v45
  %v190 = vunpack.c.l.b16 %v46
  %v191 = vunpack.c.l.b16 %v47
  %v192 = vunpack.c.l.b16 %v48
  %v193 = vunpack.c.l.b16 %v49
  %v194 = vunpack.c.l.b16 %v50
  %v195 = vunpack.c.l.b16 %v51
  %v196 = vunpack.c.l.b16 %v52
  %v197 = vunpack.c.l.b16 %v53
  %v198 = vunpack.c.l.b16 %v54
  %v199 = vunpack.c.l.b16 %v55
  %v200 = vunpack.c.l.b16 %v56
  %v201 = vunpack.c.l.b16 %v57
  %v202 = vunpack.c.l.b16 %v58
  %v203 = vunpack.c.l.b16 %v59
  %v204 = vunpack.c.l.b16 %v60
  %v205 = vunpack.c.l.b16 %v61
  %v206 = vunpack.c.l.b16 %v62
  %v207 = vpack.c.b16 %v176, %v175
  %v208 = vpack.c.b16 %v178, %v177
  %v209 = vpack.c.b16 %v180, %v179
  %v210 = vpack.c.b16 %v182, %v181
  %v211 = vpack.c.b16 %v184, %v183
  %v212 = vpack.c.b16 %v186, %v185
  %v213 = vpack.c.b16 %v188, %v187
  %v214 = vpack.c.b16 %v190, %v189
  %v215 = vpack.c.b16 %v192, %v191
  %v216 = vpack.c.b16 %v194, %v193
  %v217 = vpack.c.b16 %v196, %v195
  %v218 = vpack.c.b16 %v198, %v197
  %v219 = vpack.c.b16 %v200, %v199
  %v220 = vpack.c.b16 %v202, %v201
  %v221 = vpack.c.b16 %v204, %v203
  %v222 = vpack.c.b16 %v206, %v205
  %239 = vmatprep.subr.bf16.mxu0 0
  %240 = vmatpush1.bf16.msra.mxu0 %v214
  %241 = vmatprep.subr.bf16.mxu0 0
  %242 = vmatpush1.bf16.msra.mxu0 %v213
  %243 = vmatprep.subr.bf16.mxu0 0
  %244 = vmatpush1.bf16.msra.mxu0 %v212
  %245 = vmatprep.subr.bf16.mxu0 0
  %246 = vmatpush1.bf16.msra.mxu0 %v211
  %247 = vmatprep.subr.bf16.mxu0 0
  %248 = vmatpush1.bf16.msra.mxu0 %v210
  %249 = vmatprep.subr.bf16.mxu0 0
  %250 = vmatpush1.bf16.msra.mxu0 %v209
  %251 = vmatprep.subr.bf16.mxu0 0
  %252 = vmatpush1.bf16.msra.mxu0 %v208
  %253 = vmatprep.subr.bf16.mxu0 0
  %254 = vmatpush1.bf16.msra.mxu0 %v207
  %255 = vmatprep.subr.bf16.mxu0 0
  %256 = vmatpush2.bf16.msra.mxu0 %v222
  %257 = vmatprep.subr.bf16.mxu0 0
  %258 = vmatpush2.bf16.msra.mxu0 %v221
  %259 = vmatprep.subr.bf16.mxu0 0
  %260 = vmatpush2.bf16.msra.mxu0 %v220
  %261 = vmatprep.subr.bf16.mxu0 0
  %262 = vmatpush2.bf16.msra.mxu0 %v219
  %263 = vmatprep.subr.bf16.mxu0 0
  %264 = vmatpush2.bf16.msra.mxu0 %v218
  %265 = vmatprep.subr.bf16.mxu0 0
  %266 = vmatpush2.bf16.msra.mxu0 %v217
  %267 = vmatprep.subr.bf16.mxu0 0
  %268 = vmatpush2.bf16.msra.mxu0 %v216
  %269 = vmatprep.subr.bf16.mxu0 0
  %270 = vmatpush2.bf16.msra.mxu0 %v215
  %271 = vmatprep.mubr.bf16.mxu0 %v112
  %272 = vmatmul.mubr.bf16.gmra.mxu0 %v111
  %v273 = vpop.f32.mrf.mxu0
  %v274 = vadd.f32 0.0, %v273
  %v275 = vpop.f32.mrf.mxu0
  %v276 = vpop.f32.mrf.mxu0
  %v277 = vadd.f32 0.0, %v276
  %v278 = vpop.f32.mrf.mxu0
  %279 = vmatprep.mubr.bf16.mxu0 %v114
  %280 = vmatmul.mubr.bf16.gmra.mxu0 %v113
  %v281 = vpop.f32.mrf.mxu0
  %v282 = vadd.f32 0.0, %v281
  %v283 = vpop.f32.mrf.mxu0
  %v284 = vpop.f32.mrf.mxu0
  %v285 = vadd.f32 0.0, %v284
  %v286 = vpop.f32.mrf.mxu0
  %287 = vmatprep.mubr.bf16.mxu0 %v116
  %288 = vmatmul.mubr.bf16.gmra.mxu0 %v115
  %v289 = vpop.f32.mrf.mxu0
  %v290 = vadd.f32 0.0, %v289
  %v291 = vpop.f32.mrf.mxu0
  %v292 = vpop.f32.mrf.mxu0
  %v293 = vadd.f32 0.0, %v292
  %v294 = vpop.f32.mrf.mxu0
  %295 = vmatprep.mubr.bf16.mxu0 %v118
  %296 = vmatmul.mubr.bf16.gmra.mxu0 %v117
  %v297 = vpop.f32.mrf.mxu0
  %v298 = vadd.f32 0.0, %v297
  %v299 = vpop.f32.mrf.mxu0
  %v300 = vpop.f32.mrf.mxu0
  %v301 = vadd.f32 0.0, %v300
  %v302 = vpop.f32.mrf.mxu0
  %303 = vmatprep.mubr.bf16.mxu0 %v120
  %304 = vmatmul.mubr.bf16.gmra.mxu0 %v119
  %v305 = vpop.f32.mrf.mxu0
  %v306 = vadd.f32 0.0, %v305
  %v307 = vpop.f32.mrf.mxu0
  %v308 = vpop.f32.mrf.mxu0
  %v309 = vadd.f32 0.0, %v308
  %v310 = vpop.f32.mrf.mxu0
  %311 = vmatprep.mubr.bf16.mxu0 %v122
  %312 = vmatmul.mubr.bf16.gmra.mxu0 %v121
  %v313 = vpop.f32.mrf.mxu0
  %v314 = vadd.f32 0.0, %v313
  %v315 = vpop.f32.mrf.mxu0
  %v316 = vpop.f32.mrf.mxu0
  %v317 = vadd.f32 0.0, %v316
  %v318 = vpop.f32.mrf.mxu0
  %319 = vmatprep.mubr.bf16.mxu0 %v124
  %320 = vmatmul.mubr.bf16.gmra.mxu0 %v123
  %v321 = vpop.f32.mrf.mxu0
  %v322 = vadd.f32 0.0, %v321
  %v323 = vpop.f32.mrf.mxu0
  %v324 = vpop.f32.mrf.mxu0
  %v325 = vadd.f32 0.0, %v324
  %v326 = vpop.f32.mrf.mxu0
  %327 = vmatprep.mubr.bf16.mxu0 %v126
  %328 = vmatmul.mubr.bf16.gmra.mxu0 %v125
  %v329 = vpop.f32.mrf.mxu0
  %v330 = vadd.f32 0.0, %v329
  %v331 = vpop.f32.mrf.mxu0
  %v332 = vpop.f32.mrf.mxu0
  %v333 = vadd.f32 0.0, %v332
  %v334 = vpop.f32.mrf.mxu0
  %335 = vdwg.mxu0
  %v336 = vld [vmem:[%s2] sm:$0x1]
  %v337 = vlaneseq
  %v338 = vshrl.u32 %v337, 7
  %v339 = vsub.s32 0, %v338
  %v340 = vrot.slane %v336, %v339
  %v341 = vmul.f32 %v274, %v340
  %v342 = vmul.f32 %v277, %v340
  %v343 = vmul.f32 %v282, %v340
  %v344 = vmul.f32 %v285, %v340
  %v345 = vmul.f32 %v290, %v340
  %v346 = vmul.f32 %v293, %v340
  %v347 = vmul.f32 %v298, %v340
  %v348 = vmul.f32 %v301, %v340
  %v349 = vmul.f32 %v306, %v340
  %v350 = vmul.f32 %v309, %v340
  %v351 = vmul.f32 %v314, %v340
  %v352 = vmul.f32 %v317, %v340
  %v353 = vmul.f32 %v322, %v340
  %v354 = vmul.f32 %v325, %v340
  %v355 = vmul.f32 %v330, %v340
  %v356 = vmul.f32 %v333, %v340
  %v357 = vld [vmem:[%s2 + $0x1] sm:$0x1]
  %v358 = vlaneseq
  %v359 = vshrl.u32 %v358, 7
  %v360 = vsub.s32 0, %v359
  %v361 = vrot.slane %v357, %v360
  %v362 = vadd.f32 %v341, %v361
  %v363 = vadd.f32 %v342, %v361
  %v364 = vadd.f32 %v343, %v361
  %v365 = vadd.f32 %v344, %v361
  %v366 = vadd.f32 %v345, %v361
  %v367 = vadd.f32 %v346, %v361
  %v368 = vadd.f32 %v347, %v361
  %v369 = vadd.f32 %v348, %v361
  %v370 = vadd.f32 %v349, %v361
  %v371 = vadd.f32 %v350, %v361
  %v372 = vadd.f32 %v351, %v361
  %v373 = vadd.f32 %v352, %v361
  %v374 = vadd.f32 %v353, %v361
  %v375 = vadd.f32 %v354, %v361
  %v376 = vadd.f32 %v355, %v361
  %v377 = vadd.f32 %v356, %v361
  %vm378 = vcmp.ge.f32.partialorder %v362, 0.0
  %vm379 = vcmp.ge.f32.partialorder %v363, 0.0
  %vm380 = vcmp.ge.f32.partialorder %v364, 0.0
  %vm381 = vcmp.ge.f32.partialorder %v365, 0.0
  %vm382 = vcmp.ge.f32.partialorder %v366, 0.0
  %vm383 = vcmp.ge.f32.partialorder %v367, 0.0
  %vm384 = vcmp.ge.f32.partialorder %v368, 0.0
  %vm385 = vcmp.ge.f32.partialorder %v369, 0.0
  %vm386 = vcmp.ge.f32.partialorder %v370, 0.0
  %vm387 = vcmp.ge.f32.partialorder %v371, 0.0
  %vm388 = vcmp.ge.f32.partialorder %v372, 0.0
  %vm389 = vcmp.ge.f32.partialorder %v373, 0.0
  %vm390 = vcmp.ge.f32.partialorder %v374, 0.0
  %vm391 = vcmp.ge.f32.partialorder %v375, 0.0
  %vm392 = vcmp.ge.f32.partialorder %v376, 0.0
  %vm393 = vcmp.ge.f32.partialorder %v377, 0.0
  %v394 = vld [vmem:[%s2 + $0x2] sm:$0x1]
  %v395 = vlaneseq
  %v396 = vshrl.u32 %v395, 7
  %v397 = vsub.s32 0, %v396
  %v398 = vrot.slane %v394, %v397
  %v399 = vmul.f32 %v398, %v362
  %v400 = vmul.f32 %v398, %v363
  %v401 = vmul.f32 %v398, %v364
  %v402 = vmul.f32 %v398, %v365
  %v403 = vmul.f32 %v398, %v366
  %v404 = vmul.f32 %v398, %v367
  %v405 = vmul.f32 %v398, %v368
  %v406 = vmul.f32 %v398, %v369
  %v407 = vmul.f32 %v398, %v370
  %v408 = vmul.f32 %v398, %v371
  %v409 = vmul.f32 %v398, %v372
  %v410 = vmul.f32 %v398, %v373
  %v411 = vmul.f32 %v398, %v374
  %v412 = vmul.f32 %v398, %v375
  %v413 = vmul.f32 %v398, %v376
  %v414 = vmul.f32 %v398, %v377
  %v415 = vsel %vm378, %v362, %v399
  %v416 = vsel %vm379, %v363, %v400
  %v417 = vsel %vm380, %v364, %v401
  %v418 = vsel %vm381, %v365, %v402
  %v419 = vsel %vm382, %v366, %v403
  %v420 = vsel %vm383, %v367, %v404
  %v421 = vsel %vm384, %v368, %v405
  %v422 = vsel %vm385, %v369, %v406
  %v423 = vsel %vm386, %v370, %v407
  %v424 = vsel %vm387, %v371, %v408
  %v425 = vsel %vm388, %v372, %v409
  %v426 = vsel %vm389, %v373, %v410
  %v427 = vsel %vm390, %v374, %v411
  %v428 = vsel %vm391, %v375, %v412
  %v429 = vsel %vm392, %v376, %v413
  %v430 = vsel %vm393, %v377, %v414
  %v431 = vpack.c.bf16 %v416, %v415
  %v432 = vpack.c.bf16 %v418, %v417
  %v433 = vpack.c.bf16 %v420, %v419
  %v434 = vpack.c.bf16 %v422, %v421
  %v435 = vpack.c.bf16 %v424, %v423
  %v436 = vpack.c.bf16 %v426, %v425
  %v437 = vpack.c.bf16 %v428, %v427
  %v438 = vpack.c.bf16 %v430, %v429
  %v447 = vunpack.c.l.b16 %v431
  %v448 = vunpack.c.h.b16 %v431
  %v449 = vunpack.c.l.b16 %v432
  %v450 = vunpack.c.h.b16 %v432
  %v451 = vunpack.c.l.b16 %v433
  %v452 = vunpack.c.h.b16 %v433
  %v453 = vunpack.c.l.b16 %v434
  %v454 = vunpack.c.h.b16 %v434
  %v455 = vunpack.c.l.b16 %v435
  %v456 = vunpack.c.h.b16 %v435
  %v457 = vunpack.c.l.b16 %v436
  %v458 = vunpack.c.h.b16 %v436
  %v459 = vunpack.c.l.b16 %v437
  %v460 = vunpack.c.h.b16 %v437
  %v461 = vunpack.c.l.b16 %v438
  %v462 = vunpack.c.h.b16 %v438
  %v463 = vpack.c.b16 %v447, %v447
  %v464 = vpack.c.b16 %v448, %v448
  %v465 = vpack.c.b16 %v449, %v449
  %v466 = vpack.c.b16 %v450, %v450
  %v467 = vpack.c.b16 %v451, %v451
  %v468 = vpack.c.b16 %v452, %v452
  %v469 = vpack.c.b16 %v453, %v453
  %v470 = vpack.c.b16 %v454, %v454
  %v471 = vpack.c.b16 %v455, %v455
  %v472 = vpack.c.b16 %v456, %v456
  %v473 = vpack.c.b16 %v457, %v457
  %v474 = vpack.c.b16 %v458, %v458
  %v475 = vpack.c.b16 %v459, %v459
  %v476 = vpack.c.b16 %v460, %v460
  %v477 = vpack.c.b16 %v461, %v461
  %v478 = vpack.c.b16 %v462, %v462
  %495 = vst [vmem:[%s3] sm:$0xf] %v463
  %496 = vst [vmem:[%s3 + $0x4] sm:$0xf] %v464
  %497 = vst [vmem:[%s3 + $0x8] sm:$0xf] %v465
  %498 = vst [vmem:[%s3 + $0xc] sm:$0xf] %v466
  %499 = vst [vmem:[%s3 + $0x10] sm:$0xf] %v467
  %500 = vst [vmem:[%s3 + $0x14] sm:$0xf] %v468
  %501 = vst [vmem:[%s3 + $0x18] sm:$0xf] %v469
  %502 = vst [vmem:[%s3 + $0x1c] sm:$0xf] %v470
  %503 = vst [vmem:[%s3 + $0x20] sm:$0xf] %v471
  %504 = vst [vmem:[%s3 + $0x24] sm:$0xf] %v472
  %505 = vst [vmem:[%s3 + $0x28] sm:$0xf] %v473
  %506 = vst [vmem:[%s3 + $0x2c] sm:$0xf] %v474
  %507 = vst [vmem:[%s3 + $0x30] sm:$0xf] %v475
  %508 = vst [vmem:[%s3 + $0x34] sm:$0xf] %v476
  %509 = vst [vmem:[%s3 + $0x38] sm:$0xf] %v477
  %510 = vst [vmem:[%s3 + $0x3c] sm:$0xf] %v478
  // Predicated region
  $region14: #{enet_encoder_forward.81} parent=0 // pred_check
    _
  $region15: #{enet_encoder_forward.81} parent=0 // pred_check_branch
    %512 = sbr.rel (0) target = $region17
  $region16: #{enet_encoder_forward.81} parent=0 // pred_region
    _
  $region17: #{enet_encoder_forward.81} parent=0 // pred_fallthru
    _
  // Predicated region
  $region18: #{enet_encoder_forward.81} parent=0 // pred_check
    _
  $region19: #{enet_encoder_forward.81} parent=0 // pred_check_branch
    %514 = sbr.rel (0) target = $region21
  $region20: #{enet_encoder_forward.81} parent=0 // pred_region
    _
  $region21: #{enet_encoder_forward.81} parent=0 // pred_fallthru
    _

// kernel: enet_encoder_forward.93
$region0: #{enet_encoder_forward.93}
  #allocation0 [shape = 'u32[]', space=smem, size = 0x4, offset = 0x4, fixed_abs, tag = 'smem constant byte address 0x4 - core index']
  #allocation1 [shape = 'u32[144,128]{1,0:T(1,128)}', space=vmem, size = 0x12000, scoped, tag = 'internal scratch']
  %s0 = inlined_call_operand.vmem [shape: bf16[32,256], index: 0, kind: input, shape index: {}]
  %s1 = inlined_call_operand.vmem [shape: bf16[256,128], index: 1, kind: input, shape index: {}]
  %s2 = inlined_call_operand.vmem [shape: f32[8,128], index: 2, kind: input, shape index: {}]
  %s3 = inlined_call_operand.vmem [shape: bf16[32,128], index: 3, kind: output, shape index: {}]
  %s4 = sld [smem:[#allocation0]]
  $region22: #{enet_encoder_forward.93} parent=0
    _
  %s6 = ssub.s32 1, %s4
  %s7 = scalar_select 0, %s6, %s4
  // Predicated region
  $region2: #{enet_encoder_forward.93} parent=0 // pred_check
    _
  $region3: #{enet_encoder_forward.93} parent=0 // pred_check_branch
    %9 = sbr.rel (0) target = $region5
  $region4: #{enet_encoder_forward.93} parent=0 // pred_region
    _
  $region5: #{enet_encoder_forward.93} parent=0 // pred_fallthru
    _
  // Predicated region
  $region6: #{enet_encoder_forward.93} parent=0 // pred_check
    _
  $region7: #{enet_encoder_forward.93} parent=0 // pred_check_branch
    %11 = sbr.rel (0) target = $region9
  $region8: #{enet_encoder_forward.93} parent=0 // pred_region
    _
  $region9: #{enet_encoder_forward.93} parent=0 // pred_fallthru
    _
  // Predicated region
  $region10: #{enet_encoder_forward.93} parent=0 // pred_check
    _
  $region11: #{enet_encoder_forward.93} parent=0 // pred_check_branch
    %13 = sbr.rel (0) target = $region13
  $region12: #{enet_encoder_forward.93} parent=0 // pred_region
    _
  $region13: #{enet_encoder_forward.93} parent=0 // pred_fallthru
    _
  %v15 = vld [vmem:[%s0] sm:$0xff]
  %v16 = vld [vmem:[%s0 + $0x8] sm:$0xff]
  %v17 = vld [vmem:[%s0 + $0x10] sm:$0xff]
  %v18 = vld [vmem:[%s0 + $0x18] sm:$0xff]
  %v19 = vld [vmem:[%s1] sm:$0xf]
  %v20 = vld [vmem:[%s1 + $0x4] sm:$0xf]
  %v21 = vld [vmem:[%s1 + $0x8] sm:$0xf]
  %v22 = vld [vmem:[%s1 + $0xc] sm:$0xf]
  %v23 = vld [vmem:[%s1 + $0x10] sm:$0xf]
  %v24 = vld [vmem:[%s1 + $0x14] sm:$0xf]
  %v25 = vld [vmem:[%s1 + $0x18] sm:$0xf]
  %v26 = vld [vmem:[%s1 + $0x1c] sm:$0xf]
  %v27 = vld [vmem:[%s1 + $0x20] sm:$0xf]
  %v28 = vld [vmem:[%s1 + $0x24] sm:$0xf]
  %v29 = vld [vmem:[%s1 + $0x28] sm:$0xf]
  %v30 = vld [vmem:[%s1 + $0x2c] sm:$0xf]
  %v31 = vld [vmem:[%s1 + $0x30] sm:$0xf]
  %v32 = vld [vmem:[%s1 + $0x34] sm:$0xf]
  %v33 = vld [vmem:[%s1 + $0x38] sm:$0xf]
  %v34 = vld [vmem:[%s1 + $0x3c] sm:$0xf]
  %v35 = vld [vmem:[%s1 + $0x40] sm:$0xf]
  %v36 = vld [vmem:[%s1 + $0x44] sm:$0xf]
  %v37 = vld [vmem:[%s1 + $0x48] sm:$0xf]
  %v38 = vld [vmem:[%s1 + $0x4c] sm:$0xf]
  %v39 = vld [vmem:[%s1 + $0x50] sm:$0xf]
  %v40 = vld [vmem:[%s1 + $0x54] sm:$0xf]
  %v41 = vld [vmem:[%s1 + $0x58] sm:$0xf]
  %v42 = vld [vmem:[%s1 + $0x5c] sm:$0xf]
  %v43 = vld [vmem:[%s1 + $0x60] sm:$0xf]
  %v44 = vld [vmem:[%s1 + $0x64] sm:$0xf]
  %v45 = vld [vmem:[%s1 + $0x68] sm:$0xf]
  %v46 = vld [vmem:[%s1 + $0x6c] sm:$0xf]
  %v47 = vld [vmem:[%s1 + $0x70] sm:$0xf]
  %v48 = vld [vmem:[%s1 + $0x74] sm:$0xf]
  %v49 = vld [vmem:[%s1 + $0x78] sm:$0xf]
  %v50 = vld [vmem:[%s1 + $0x7c] sm:$0xf]
  %v55 = vunpack.c.l.b16 %v15
  %v56 = vunpack.c.h.b16 %v15
  %v57 = vunpack.c.l.b16 %v16
  %v58 = vunpack.c.h.b16 %v16
  %v59 = vunpack.c.l.b16 %v17
  %v60 = vunpack.c.h.b16 %v17
  %v61 = vunpack.c.l.b16 %v18
  %v62 = vunpack.c.h.b16 %v18
  %v63 = vpack.c.b16 %v57, %v55
  %v64 = vpack.c.b16 %v58, %v56
  %v65 = vpack.c.b16 %v61, %v59
  %v66 = vpack.c.b16 %v62, %v60
  %v103 = vunpack.c.l.b16 %v19
  %v104 = vunpack.c.l.b16 %v20
  %v105 = vunpack.c.l.b16 %v21
  %v106 = vunpack.c.l.b16 %v22
  %v107 = vunpack.c.l.b16 %v23
  %v108 = vunpack.c.l.b16 %v24
  %v109 = vunpack.c.l.b16 %v25
  %v110 = vunpack.c.l.b16 %v26
  %v111 = vunpack.c.l.b16 %v27
  %v112 = vunpack.c.l.b16 %v28
  %v113 = vunpack.c.l.b16 %v29
  %v114 = vunpack.c.l.b16 %v30
  %v115 = vunpack.c.l.b16 %v31
  %v116 = vunpack.c.l.b16 %v32
  %v117 = vunpack.c.l.b16 %v33
  %v118 = vunpack.c.l.b16 %v34
  %v119 = vunpack.c.l.b16 %v35
  %v120 = vunpack.c.l.b16 %v36
  %v121 = vunpack.c.l.b16 %v37
  %v122 = vunpack.c.l.b16 %v38
  %v123 = vunpack.c.l.b16 %v39
  %v124 = vunpack.c.l.b16 %v40
  %v125 = vunpack.c.l.b16 %v41
  %v126 = vunpack.c.l.b16 %v42
  %v127 = vunpack.c.l.b16 %v43
  %v128 = vunpack.c.l.b16 %v44
  %v129 = vunpack.c.l.b16 %v45
  %v130 = vunpack.c.l.b16 %v46
  %v131 = vunpack.c.l.b16 %v47
  %v132 = vunpack.c.l.b16 %v48
  %v133 = vunpack.c.l.b16 %v49
  %v134 = vunpack.c.l.b16 %v50
  %v135 = vpack.c.b16 %v104, %v103
  %v136 = vpack.c.b16 %v106, %v105
  %v137 = vpack.c.b16 %v108, %v107
  %v138 = vpack.c.b16 %v110, %v109
  %v139 = vpack.c.b16 %v112, %v111
  %v140 = vpack.c.b16 %v114, %v113
  %v141 = vpack.c.b16 %v116, %v115
  %v142 = vpack.c.b16 %v118, %v117
  %v143 = vpack.c.b16 %v120, %v119
  %v144 = vpack.c.b16 %v122, %v121
  %v145 = vpack.c.b16 %v124, %v123
  %v146 = vpack.c.b16 %v126, %v125
  %v147 = vpack.c.b16 %v128, %v127
  %v148 = vpack.c.b16 %v130, %v129
  %v149 = vpack.c.b16 %v132, %v131
  %v150 = vpack.c.b16 %v134, %v133
  %167 = vmatprep.subr.bf16.mxu0 0
  %168 = vmatpush1.bf16.msra.mxu0 %v142
  %169 = vmatprep.subr.bf16.mxu0 0
  %170 = vmatpush1.bf16.msra.mxu0 %v141
  %171 = vmatprep.subr.bf16.mxu0 0
  %172 = vmatpush1.bf16.msra.mxu0 %v140
  %173 = vmatprep.subr.bf16.mxu0 0
  %174 = vmatpush1.bf16.msra.mxu0 %v139
  %175 = vmatprep.subr.bf16.mxu0 0
  %176 = vmatpush1.bf16.msra.mxu0 %v138
  %177 = vmatprep.subr.bf16.mxu0 0
  %178 = vmatpush1.bf16.msra.mxu0 %v137
  %179 = vmatprep.subr.bf16.mxu0 0
  %180 = vmatpush1.bf16.msra.mxu0 %v136
  %181 = vmatprep.subr.bf16.mxu0 0
  %182 = vmatpush1.bf16.msra.mxu0 %v135
  %183 = vmatprep.subr.bf16.mxu0 0
  %184 = vmatpush2.bf16.msra.mxu0 %v150
  %185 = vmatprep.subr.bf16.mxu0 0
  %186 = vmatpush2.bf16.msra.mxu0 %v149
  %187 = vmatprep.subr.bf16.mxu0 0
  %188 = vmatpush2.bf16.msra.mxu0 %v148
  %189 = vmatprep.subr.bf16.mxu0 0
  %190 = vmatpush2.bf16.msra.mxu0 %v147
  %191 = vmatprep.subr.bf16.mxu0 0
  %192 = vmatpush2.bf16.msra.mxu0 %v146
  %193 = vmatprep.subr.bf16.mxu0 0
  %194 = vmatpush2.bf16.msra.mxu0 %v145
  %195 = vmatprep.subr.bf16.mxu0 0
  %196 = vmatpush2.bf16.msra.mxu0 %v144
  %197 = vmatprep.subr.bf16.mxu0 0
  %198 = vmatpush2.bf16.msra.mxu0 %v143
  %199 = vmatprep.mubr.bf16.mxu0 %v64
  %200 = vmatmul.mubr.bf16.gmra.mxu0 %v63
  %v201 = vpop.f32.mrf.mxu0
  %v202 = vadd.f32 0.0, %v201
  %v203 = vpop.f32.mrf.mxu0
  %v204 = vpop.f32.mrf.mxu0
  %v205 = vadd.f32 0.0, %v204
  %v206 = vpop.f32.mrf.mxu0
  %207 = vmatprep.mubr.bf16.mxu0 %v66
  %208 = vmatmul.mubr.bf16.gmra.mxu0 %v65
  %v209 = vpop.f32.mrf.mxu0
  %v210 = vadd.f32 0.0, %v209
  %v211 = vpop.f32.mrf.mxu0
  %v212 = vpop.f32.mrf.mxu0
  %v213 = vadd.f32 0.0, %v212
  %v214 = vpop.f32.mrf.mxu0
  %215 = vdwg.mxu0
  %v216 = vld [vmem:[%s2] sm:$0x1]
  %v217 = vlaneseq
  %v218 = vshrl.u32 %v217, 7
  %v219 = vsub.s32 0, %v218
  %v220 = vrot.slane %v216, %v219
  %v221 = vmul.f32 %v202, %v220
  %v222 = vmul.f32 %v205, %v220
  %v223 = vmul.f32 %v210, %v220
  %v224 = vmul.f32 %v213, %v220
  %v225 = vld [vmem:[%s2 + $0x1] sm:$0x1]
  %v226 = vlaneseq
  %v227 = vshrl.u32 %v226, 7
  %v228 = vsub.s32 0, %v227
  %v229 = vrot.slane %v225, %v228
  %v230 = vadd.f32 %v221, %v229
  %v231 = vadd.f32 %v222, %v229
  %v232 = vadd.f32 %v223, %v229
  %v233 = vadd.f32 %v224, %v229
  %vm234 = vcmp.ge.f32.partialorder %v230, 0.0
  %vm235 = vcmp.ge.f32.partialorder %v231, 0.0
  %vm236 = vcmp.ge.f32.partialorder %v232, 0.0
  %vm237 = vcmp.ge.f32.partialorder %v233, 0.0
  %v238 = vld [vmem:[%s2 + $0x2] sm:$0x1]
  %v239 = vlaneseq
  %v240 = vshrl.u32 %v239, 7
  %v241 = vsub.s32 0, %v240
  %v242 = vrot.slane %v238, %v241
  %v243 = vmul.f32 %v242, %v230
  %v244 = vmul.f32 %v242, %v231
  %v245 = vmul.f32 %v242, %v232
  %v246 = vmul.f32 %v242, %v233
  %v247 = vsel %vm234, %v230, %v243
  %v248 = vsel %vm235, %v231, %v244
  %v249 = vsel %vm236, %v232, %v245
  %v250 = vsel %vm237, %v233, %v246
  %v251 = vpack.c.bf16 %v248, %v247
  %v252 = vpack.c.bf16 %v250, %v249
  %v255 = vunpack.c.l.b16 %v251
  %v256 = vunpack.c.h.b16 %v251
  %v257 = vunpack.c.l.b16 %v252
  %v258 = vunpack.c.h.b16 %v252
  %v259 = vpack.c.b16 %v255, %v255
  %v260 = vpack.c.b16 %v256, %v256
  %v261 = vpack.c.b16 %v257, %v257
  %v262 = vpack.c.b16 %v258, %v258
  %267 = vst [vmem:[%s3] sm:$0xf] %v259
  %268 = vst [vmem:[%s3 + $0x4] sm:$0xf] %v260
  %269 = vst [vmem:[%s3 + $0x8] sm:$0xf] %v261
  %270 = vst [vmem:[%s3 + $0xc] sm:$0xf] %v262
  // Predicated region
  $region14: #{enet_encoder_forward.93} parent=0 // pred_check
    _
  $region15: #{enet_encoder_forward.93} parent=0 // pred_check_branch
    %272 = sbr.rel (0) target = $region17
  $region16: #{enet_encoder_forward.93} parent=0 // pred_region
    _
  $region17: #{enet_encoder_forward.93} parent=0 // pred_fallthru
    _
  // Predicated region
  $region18: #{enet_encoder_forward.93} parent=0 // pred_check
    _
  $region19: #{enet_encoder_forward.93} parent=0 // pred_check_branch
    %274 = sbr.rel (0) target = $region21
  $region20: #{enet_encoder_forward.93} parent=0 // pred_region
    _
  $region21: #{enet_encoder_forward.93} parent=0 // pred_fallthru
    _

// kernel: enet_encoder_forward.92
$region0: #{enet_encoder_forward.92}
  #allocation0 [shape = 'u32[]', space=smem, size = 0x4, offset = 0x4, fixed_abs, tag = 'smem constant byte address 0x4 - core index']
  #allocation1 [shape = 'u32[144,128]{1,0:T(1,128)}', space=vmem, size = 0x12000, scoped, tag = 'internal scratch']
  %s0 = inlined_call_operand.vmem [shape: bf16[32,64], index: 0, kind: input, shape index: {}]
  %s1 = inlined_call_operand.vmem [shape: bf16[32,64], index: 1, kind: input, shape index: {}]
  %s2 = inlined_call_operand.vmem [shape: bf16[32,64], index: 2, kind: input, shape index: {}]
  %s3 = inlined_call_operand.vmem [shape: bf16[32,64], index: 3, kind: input, shape index: {}]
  %s4 = inlined_call_operand.vmem [shape: bf16[32,64], index: 4, kind: input, shape index: {}]
  %s5 = inlined_call_operand.vmem [shape: bf16[32,64], index: 5, kind: input, shape index: {}]
  %s6 = inlined_call_operand.vmem [shape: bf16[32,64], index: 6, kind: input, shape index: {}]
  %s7 = inlined_call_operand.vmem [shape: bf16[32,64], index: 7, kind: input, shape index: {}]
  %s8 = inlined_call_operand.vmem [shape: bf16[32,64], index: 8, kind: input, shape index: {}]
  %s9 = inlined_call_operand.vmem [shape: f32[8,64], index: 9, kind: input, shape index: {}]
  %s10 = inlined_call_operand.vmem [shape: bf16[32,128], index: 10, kind: output, shape index: {}]
  %s11 = sld [smem:[#allocation0]]
  $region50: #{enet_encoder_forward.92} parent=0
    _
  %s13 = ssub.s32 1, %s11
  %s14 = scalar_select 0, %s13, %s11
  // Predicated region
  $region2: #{enet_encoder_forward.92} parent=0 // pred_check
    _
  $region3: #{enet_encoder_forward.92} parent=0 // pred_check_branch
    %16 = sbr.rel (0) target = $region5
  $region4: #{enet_encoder_forward.92} parent=0 // pred_region
    _
  $region5: #{enet_encoder_forward.92} parent=0 // pred_fallthru
    _
  // Predicated region
  $region6: #{enet_encoder_forward.92} parent=0 // pred_check
    _
  $region7: #{enet_encoder_forward.92} parent=0 // pred_check_branch
    %18 = sbr.rel (0) target = $region9
  $region8: #{enet_encoder_forward.92} parent=0 // pred_region
    _
  $region9: #{enet_encoder_forward.92} parent=0 // pred_fallthru
    _
  // Predicated region
  $region10: #{enet_encoder_forward.92} parent=0 // pred_check
    _
  $region11: #{enet_encoder_forward.92} parent=0 // pred_check_branch
    %20 = sbr.rel (0) target = $region13
  $region12: #{enet_encoder_forward.92} parent=0 // pred_region
    _
  $region13: #{enet_encoder_forward.92} parent=0 // pred_fallthru
    _
  // Predicated region
  $region14: #{enet_encoder_forward.92} parent=0 // pred_check
    _
  $region15: #{enet_encoder_forward.92} parent=0 // pred_check_branch
    %22 = sbr.rel (0) target = $region17
  $region16: #{enet_encoder_forward.92} parent=0 // pred_region
    _
  $region17: #{enet_encoder_forward.92} parent=0 // pred_fallthru
    _
  // Predicated region
  $region18: #{enet_encoder_forward.92} parent=0 // pred_check
    _
  $region19: #{enet_encoder_forward.92} parent=0 // pred_check_branch
    %24 = sbr.rel (0) target = $region21
  $region20: #{enet_encoder_forward.92} parent=0 // pred_region
    _
  $region21: #{enet_encoder_forward.92} parent=0 // pred_fallthru
    _
  // Predicated region
  $region22: #{enet_encoder_forward.92} parent=0 // pred_check
    _
  $region23: #{enet_encoder_forward.92} parent=0 // pred_check_branch
    %26 = sbr.rel (0) target = $region25
  $region24: #{enet_encoder_forward.92} parent=0 // pred_region
    _
  $region25: #{enet_encoder_forward.92} parent=0 // pred_fallthru
    _
  // Predicated region
  $region26: #{enet_encoder_forward.92} parent=0 // pred_check
    _
  $region27: #{enet_encoder_forward.92} parent=0 // pred_check_branch
    %28 = sbr.rel (0) target = $region29
  $region28: #{enet_encoder_forward.92} parent=0 // pred_region
    _
  $region29: #{enet_encoder_forward.92} parent=0 // pred_fallthru
    _
  // Predicated region
  $region30: #{enet_encoder_forward.92} parent=0 // pred_check
    _
  $region31: #{enet_encoder_forward.92} parent=0 // pred_check_branch
    %30 = sbr.rel (0) target = $region33
  $region32: #{enet_encoder_forward.92} parent=0 // pred_region
    _
  $region33: #{enet_encoder_forward.92} parent=0 // pred_fallthru
    _
  // Predicated region
  $region34: #{enet_encoder_forward.92} parent=0 // pred_check
    _
  $region35: #{enet_encoder_forward.92} parent=0 // pred_check_branch
    %32 = sbr.rel (0) target = $region37
  $region36: #{enet_encoder_forward.92} parent=0 // pred_region
    _
  $region37: #{enet_encoder_forward.92} parent=0 // pred_fallthru
    _
  // Predicated region
  $region38: #{enet_encoder_forward.92} parent=0 // pred_check
    _
  $region39: #{enet_encoder_forward.92} parent=0 // pred_check_branch
    %34 = sbr.rel (0) target = $region41
  $region40: #{enet_encoder_forward.92} parent=0 // pred_region
    _
  $region41: #{enet_encoder_forward.92} parent=0 // pred_fallthru
    _
  %v36 = vld [vmem:[%s0] sm:$0xf]
  %v37 = vld [vmem:[%s0 + $0x4] sm:$0xf]
  %v38 = vld [vmem:[%s0 + $0x8] sm:$0xf]
  %v39 = vld [vmem:[%s0 + $0xc] sm:$0xf]
  %v40 = vld [vmem:[%s1] sm:$0xf]
  %v41 = vld [vmem:[%s1 + $0x4] sm:$0xf]
  %v42 = vld [vmem:[%s1 + $0x8] sm:$0xf]
  %v43 = vld [vmem:[%s1 + $0xc] sm:$0xf]
  %v44 = vmax.bf16 %v36, %v40
  %v45 = vmax.bf16 %v37, %v41
  %v46 = vmax.bf16 %v38, %v42
  %v47 = vmax.bf16 %v39, %v43
  %v48 = vld [vmem:[%s2] sm:$0xf]
  %v49 = vld [vmem:[%s2 + $0x4] sm:$0xf]
  %v50 = vld [vmem:[%s2 + $0x8] sm:$0xf]
  %v51 = vld [vmem:[%s2 + $0xc] sm:$0xf]
  %v52 = vmax.bf16 %v44, %v48
  %v53 = vmax.bf16 %v45, %v49
  %v54 = vmax.bf16 %v46, %v50
  %v55 = vmax.bf16 %v47, %v51
  %v56 = vld [vmem:[%s3] sm:$0xf]
  %v57 = vld [vmem:[%s3 + $0x4] sm:$0xf]
  %v58 = vld [vmem:[%s3 + $0x8] sm:$0xf]
  %v59 = vld [vmem:[%s3 + $0xc] sm:$0xf]
  %v60 = vmax.bf16 %v52, %v56
  %v61 = vmax.bf16 %v53, %v57
  %v62 = vmax.bf16 %v54, %v58
  %v63 = vmax.bf16 %v55, %v59
  %v64 = vld [vmem:[%s4] sm:$0xf]
  %v65 = vld [vmem:[%s4 + $0x4] sm:$0xf]
  %v66 = vld [vmem:[%s4 + $0x8] sm:$0xf]
  %v67 = vld [vmem:[%s4 + $0xc] sm:$0xf]
  %v68 = vmax.bf16 %v60, %v64
  %v69 = vmax.bf16 %v61, %v65
  %v70 = vmax.bf16 %v62, %v66
  %v71 = vmax.bf16 %v63, %v67
  %v72 = vld [vmem:[%s5] sm:$0xf]
  %v73 = vld [vmem:[%s5 + $0x4] sm:$0xf]
  %v74 = vld [vmem:[%s5 + $0x8] sm:$0xf]
  %v75 = vld [vmem:[%s5 + $0xc] sm:$0xf]
  %v76 = vmax.bf16 %v68, %v72
  %v77 = vmax.bf16 %v69, %v73
  %v78 = vmax.bf16 %v70, %v74
  %v79 = vmax.bf16 %v71, %v75
  %v80 = vld [vmem:[%s6] sm:$0xf]
  %v81 = vld [vmem:[%s6 + $0x4] sm:$0xf]
  %v82 = vld [vmem:[%s6 + $0x8] sm:$0xf]
  %v83 = vld [vmem:[%s6 + $0xc] sm:$0xf]
  %v84 = vmax.bf16 %v76, %v80
  %v85 = vmax.bf16 %v77, %v81
  %v86 = vmax.bf16 %v78, %v82
  %v87 = vmax.bf16 %v79, %v83
  %v88 = vld [vmem:[%s7] sm:$0xf]
  %v89 = vld [vmem:[%s7 + $0x4] sm:$0xf]
  %v90 = vld [vmem:[%s7 + $0x8] sm:$0xf]
  %v91 = vld [vmem:[%s7 + $0xc] sm:$0xf]
  %v92 = vmax.bf16 %v84, %v88
  %v93 = vmax.bf16 %v85, %v89
  %v94 = vmax.bf16 %v86, %v90
  %v95 = vmax.bf16 %v87, %v91
  %v96 = vld [vmem:[%s8] sm:$0xf]
  %v97 = vld [vmem:[%s8 + $0x4] sm:$0xf]
  %v98 = vld [vmem:[%s8 + $0x8] sm:$0xf]
  %v99 = vld [vmem:[%s8 + $0xc] sm:$0xf]
  %v100 = vmax.bf16 %v92, %v96
  %v101 = vmax.bf16 %v93, %v97
  %v102 = vmax.bf16 %v94, %v98
  %v103 = vmax.bf16 %v95, %v99
  %v104 = vunpack.c.l.bf16 %v100
  %v105 = vunpack.c.l.bf16 %v101
  %v106 = vunpack.c.l.bf16 %v102
  %v107 = vunpack.c.l.bf16 %v103
  %v108 = vld [vmem:[%s9] sm:$0x1]
  %v109 = vlaneseq
  %v110 = vshrl.u32 %v109, 7
  %v111 = vsub.s32 0, %v110
  %v112 = vrot.slane %v108, %v111
  %v113 = vmul.f32 %v104, %v112
  %v114 = vmul.f32 %v105, %v112
  %v115 = vmul.f32 %v106, %v112
  %v116 = vmul.f32 %v107, %v112
  %v117 = vld [vmem:[%s9 + $0x1] sm:$0x1]
  %v118 = vlaneseq
  %v119 = vshrl.u32 %v118, 7
  %v120 = vsub.s32 0, %v119
  %v121 = vrot.slane %v117, %v120
  %v122 = vadd.f32 %v113, %v121
  %v123 = vadd.f32 %v114, %v121
  %v124 = vadd.f32 %v115, %v121
  %v125 = vadd.f32 %v116, %v121
  %vm126 = vcmp.ge.f32.partialorder %v122, 0.0
  %vm127 = vcmp.ge.f32.partialorder %v123, 0.0
  %vm128 = vcmp.ge.f32.partialorder %v124, 0.0
  %vm129 = vcmp.ge.f32.partialorder %v125, 0.0
  %v130 = vld [vmem:[%s9 + $0x2] sm:$0x1]
  %v131 = vlaneseq
  %v132 = vshrl.u32 %v131, 7
  %v133 = vsub.s32 0, %v132
  %v134 = vrot.slane %v130, %v133
  %v135 = vmul.f32 %v134, %v122
  %v136 = vmul.f32 %v134, %v123
  %v137 = vmul.f32 %v134, %v124
  %v138 = vmul.f32 %v134, %v125
  %v139 = vsel %vm126, %v122, %v135
  %v140 = vsel %vm127, %v123, %v136
  %v141 = vsel %vm128, %v124, %v137
  %v142 = vsel %vm129, %v125, %v138
  %v143 = vpack.c.bf16 %v140, %v139
  %v144 = vpack.c.bf16 %v142, %v141
  %145 = vst [vmem:[%s10] sm:$0xf] 0
  %146 = vst [vmem:[%s10 + $0x4] sm:$0xf] 0
  %147 = vst [vmem:[%s10 + $0x8] sm:$0xf] 0
  %148 = vst [vmem:[%s10 + $0xc] sm:$0xf] 0
  %v151 = vunpack.c.l.b16 %v143
  %v152 = vunpack.c.h.b16 %v143
  %v153 = vunpack.c.l.b16 %v144
  %v154 = vunpack.c.h.b16 %v144
  %v155 = vpack.c.b16 %v151, %v151
  %v156 = vpack.c.b16 %v152, %v152
  %v157 = vpack.c.b16 %v153, %v153
  %v158 = vpack.c.b16 %v154, %v154
  %vm163 = vcmask 519168
  %164 = vst.msk [vmem:[%s10] sm:$0xf] %vm163, %v155
  %165 = vst.msk [vmem:[%s10 + $0x4] sm:$0xf] %vm163, %v156
  %166 = vst.msk [vmem:[%s10 + $0x8] sm:$0xf] %vm163, %v157
  %167 = vst.msk [vmem:[%s10 + $0xc] sm:$0xf] %vm163, %v158
  // Predicated region
  $region42: #{enet_encoder_forward.92} parent=0 // pred_check
    _
  $region43: #{enet_encoder_forward.92} parent=0 // pred_check_branch
    %169 = sbr.rel (0) target = $region45
  $region44: #{enet_encoder_forward.92} parent=0 // pred_region
    _
  $region45: #{enet_encoder_forward.92} parent=0 // pred_fallthru
    _
  // Predicated region
  $region46: #{enet_encoder_forward.92} parent=0 // pred_check
    _
  $region47: #{enet_encoder_forward.92} parent=0 // pred_check_branch
    %171 = sbr.rel (0) target = $region49
  $region48: #{enet_encoder_forward.92} parent=0 // pred_region
    _
  $region49: #{enet_encoder_forward.92} parent=0 // pred_fallthru
    _

// kernel: enet_encoder_forward.96
$region0: #{enet_encoder_forward.96}
  #allocation0 [shape = 'u32[]', space=smem, size = 0x4, offset = 0x4, fixed_abs, tag = 'smem constant byte address 0x4 - core index']
  #allocation1 [shape = 'u32[144,128]{1,0:T(1,128)}', space=vmem, size = 0x12000, scoped, tag = 'internal scratch']
  %s0 = inlined_call_operand.vmem [shape: bf16[32,128], index: 0, kind: input, shape index: {}]
  %s1 = inlined_call_operand.vmem [shape: bf16[128,128], index: 1, kind: input, shape index: {}]
  %s2 = inlined_call_operand.vmem [shape: f32[8,128], index: 2, kind: input, shape index: {}]
  %s3 = inlined_call_operand.vmem [shape: bf16[32,128], index: 3, kind: output, shape index: {}]
  %s4 = sld [smem:[#allocation0]]
  $region22: #{enet_encoder_forward.96} parent=0
    _
  %s6 = ssub.s32 1, %s4
  %s7 = scalar_select 0, %s6, %s4
  // Predicated region
  $region2: #{enet_encoder_forward.96} parent=0 // pred_check
    _
  $region3: #{enet_encoder_forward.96} parent=0 // pred_check_branch
    %9 = sbr.rel (0) target = $region5
  $region4: #{enet_encoder_forward.96} parent=0 // pred_region
    _
  $region5: #{enet_encoder_forward.96} parent=0 // pred_fallthru
    _
  // Predicated region
  $region6: #{enet_encoder_forward.96} parent=0 // pred_check
    _
  $region7: #{enet_encoder_forward.96} parent=0 // pred_check_branch
    %11 = sbr.rel (0) target = $region9
  $region8: #{enet_encoder_forward.96} parent=0 // pred_region
    _
  $region9: #{enet_encoder_forward.96} parent=0 // pred_fallthru
    _
  // Predicated region
  $region10: #{enet_encoder_forward.96} parent=0 // pred_check
    _
  $region11: #{enet_encoder_forward.96} parent=0 // pred_check_branch
    %13 = sbr.rel (0) target = $region13
  $region12: #{enet_encoder_forward.96} parent=0 // pred_region
    _
  $region13: #{enet_encoder_forward.96} parent=0 // pred_fallthru
    _
  %v15 = vld [vmem:[%s0] sm:$0xf]
  %v16 = vld [vmem:[%s0 + $0x4] sm:$0xf]
  %v17 = vld [vmem:[%s0 + $0x8] sm:$0xf]
  %v18 = vld [vmem:[%s0 + $0xc] sm:$0xf]
  %v19 = vld [vmem:[%s1] sm:$0xf]
  %v20 = vld [vmem:[%s1 + $0x4] sm:$0xf]
  %v21 = vld [vmem:[%s1 + $0x8] sm:$0xf]
  %v22 = vld [vmem:[%s1 + $0xc] sm:$0xf]
  %v23 = vld [vmem:[%s1 + $0x10] sm:$0xf]
  %v24 = vld [vmem:[%s1 + $0x14] sm:$0xf]
  %v25 = vld [vmem:[%s1 + $0x18] sm:$0xf]
  %v26 = vld [vmem:[%s1 + $0x1c] sm:$0xf]
  %v27 = vld [vmem:[%s1 + $0x20] sm:$0xf]
  %v28 = vld [vmem:[%s1 + $0x24] sm:$0xf]
  %v29 = vld [vmem:[%s1 + $0x28] sm:$0xf]
  %v30 = vld [vmem:[%s1 + $0x2c] sm:$0xf]
  %v31 = vld [vmem:[%s1 + $0x30] sm:$0xf]
  %v32 = vld [vmem:[%s1 + $0x34] sm:$0xf]
  %v33 = vld [vmem:[%s1 + $0x38] sm:$0xf]
  %v34 = vld [vmem:[%s1 + $0x3c] sm:$0xf]
  %v39 = vunpack.c.l.b16 %v15
  %v40 = vunpack.c.l.b16 %v16
  %v41 = vunpack.c.l.b16 %v17
  %v42 = vunpack.c.l.b16 %v18
  %v43 = vpack.c.b16 %v40, %v39
  %v44 = vpack.c.b16 %v42, %v41
  %v63 = vunpack.c.l.b16 %v19
  %v64 = vunpack.c.l.b16 %v20
  %v65 = vunpack.c.l.b16 %v21
  %v66 = vunpack.c.l.b16 %v22
  %v67 = vunpack.c.l.b16 %v23
  %v68 = vunpack.c.l.b16 %v24
  %v69 = vunpack.c.l.b16 %v25
  %v70 = vunpack.c.l.b16 %v26
  %v71 = vunpack.c.l.b16 %v27
  %v72 = vunpack.c.l.b16 %v28
  %v73 = vunpack.c.l.b16 %v29
  %v74 = vunpack.c.l.b16 %v30
  %v75 = vunpack.c.l.b16 %v31
  %v76 = vunpack.c.l.b16 %v32
  %v77 = vunpack.c.l.b16 %v33
  %v78 = vunpack.c.l.b16 %v34
  %v79 = vpack.c.b16 %v64, %v63
  %v80 = vpack.c.b16 %v66, %v65
  %v81 = vpack.c.b16 %v68, %v67
  %v82 = vpack.c.b16 %v70, %v69
  %v83 = vpack.c.b16 %v72, %v71
  %v84 = vpack.c.b16 %v74, %v73
  %v85 = vpack.c.b16 %v76, %v75
  %v86 = vpack.c.b16 %v78, %v77
  %95 = vmatprep.subr.bf16.mxu0 0
  %96 = vmatpush1.bf16.msra.mxu0 %v86
  %97 = vmatprep.subr.bf16.mxu0 0
  %98 = vmatpush1.bf16.msra.mxu0 %v85
  %99 = vmatprep.subr.bf16.mxu0 0
  %100 = vmatpush1.bf16.msra.mxu0 %v84
  %101 = vmatprep.subr.bf16.mxu0 0
  %102 = vmatpush1.bf16.msra.mxu0 %v83
  %103 = vmatprep.subr.bf16.mxu0 0
  %104 = vmatpush1.bf16.msra.mxu0 %v82
  %105 = vmatprep.subr.bf16.mxu0 0
  %106 = vmatpush1.bf16.msra.mxu0 %v81
  %107 = vmatprep.subr.bf16.mxu0 0
  %108 = vmatpush1.bf16.msra.mxu0 %v80
  %109 = vmatprep.subr.bf16.mxu0 0
  %110 = vmatpush1.bf16.msra.mxu0 %v79
  %111 = vmatprep.subr.bf16.mxu0 0
  %112 = vmatpush2.bf16.msra.mxu0 0
  %113 = vmatprep.subr.bf16.mxu0 0
  %114 = vmatpush2.bf16.msra.mxu0 0
  %115 = vmatprep.subr.bf16.mxu0 0
  %116 = vmatpush2.bf16.msra.mxu0 0
  %117 = vmatprep.subr.bf16.mxu0 0
  %118 = vmatpush2.bf16.msra.mxu0 0
  %119 = vmatprep.subr.bf16.mxu0 0
  %120 = vmatpush2.bf16.msra.mxu0 0
  %121 = vmatprep.subr.bf16.mxu0 0
  %122 = vmatpush2.bf16.msra.mxu0 0
  %123 = vmatprep.subr.bf16.mxu0 0
  %124 = vmatpush2.bf16.msra.mxu0 0
  %125 = vmatprep.subr.bf16.mxu0 0
  %126 = vmatpush2.bf16.msra.mxu0 0
  %127 = vmatprep.mubr.bf16.mxu0 0
  %128 = vmatmul.mubr.bf16.gmra.mxu0 %v43
  %v129 = vpop.f32.mrf.mxu0
  %v130 = vadd.f32 0.0, %v129
  %v131 = vpop.f32.mrf.mxu0
  %v132 = vpop.f32.mrf.mxu0
  %v133 = vadd.f32 0.0, %v132
  %v134 = vpop.f32.mrf.mxu0
  %135 = vmatprep.mubr.bf16.mxu0 0
  %136 = vmatmul.mubr.bf16.gmra.mxu0 %v44
  %v137 = vpop.f32.mrf.mxu0
  %v138 = vadd.f32 0.0, %v137
  %v139 = vpop.f32.mrf.mxu0
  %v140 = vpop.f32.mrf.mxu0
  %v141 = vadd.f32 0.0, %v140
  %v142 = vpop.f32.mrf.mxu0
  %143 = vdwg.mxu0
  %v144 = vld [vmem:[%s2] sm:$0x1]
  %v145 = vlaneseq
  %v146 = vshrl.u32 %v145, 7
  %v147 = vsub.s32 0, %v146
  %v148 = vrot.slane %v144, %v147
  %v149 = vmul.f32 %v130, %v148
  %v150 = vmul.f32 %v133, %v148
  %v151 = vmul.f32 %v138, %v148
  %v152 = vmul.f32 %v141, %v148
  %v153 = vld [vmem:[%s2 + $0x1] sm:$0x1]
  %v154 = vlaneseq
  %v155 = vshrl.u32 %v154, 7
  %v156 = vsub.s32 0, %v155
  %v157 = vrot.slane %v153, %v156
  %v158 = vadd.f32 %v149, %v157
  %v159 = vadd.f32 %v150, %v157
  %v160 = vadd.f32 %v151, %v157
  %v161 = vadd.f32 %v152, %v157
  %vm162 = vcmp.ge.f32.partialorder %v158, 0.0
  %vm163 = vcmp.ge.f32.partialorder %v159, 0.0
  %vm164 = vcmp.ge.f32.partialorder %v160, 0.0
  %vm165 = vcmp.ge.f32.partialorder %v161, 0.0
  %v166 = vld [vmem:[%s2 + $0x2] sm:$0x1]
  %v167 = vlaneseq
  %v168 = vshrl.u32 %v167, 7
  %v169 = vsub.s32 0, %v168
  %v170 = vrot.slane %v166, %v169
  %v171 = vmul.f32 %v170, %v158
  %v172 = vmul.f32 %v170, %v159
  %v173 = vmul.f32 %v170, %v160
  %v174 = vmul.f32 %v170, %v161
  %v175 = vsel %vm162, %v158, %v171
  %v176 = vsel %vm163, %v159, %v172
  %v177 = vsel %vm164, %v160, %v173
  %v178 = vsel %vm165, %v161, %v174
  %v179 = vpack.c.bf16 %v176, %v175
  %v180 = vpack.c.bf16 %v178, %v177
  %v183 = vunpack.c.l.b16 %v179
  %v184 = vunpack.c.h.b16 %v179
  %v185 = vunpack.c.l.b16 %v180
  %v186 = vunpack.c.h.b16 %v180
  %v187 = vpack.c.b16 %v183, %v183
  %v188 = vpack.c.b16 %v184, %v184
  %v189 = vpack.c.b16 %v185, %v185
  %v190 = vpack.c.b16 %v186, %v186
  %195 = vst [vmem:[%s3] sm:$0xf] %v187
  %196 = vst [vmem:[%s3 + $0x4] sm:$0xf] %v188
  %197 = vst [vmem:[%s3 + $0x8] sm:$0xf] %v189
  %198 = vst [vmem:[%s3 + $0xc] sm:$0xf] %v190
  // Predicated region
  $region14: #{enet_encoder_forward.96} parent=0 // pred_check
    _
  $region15: #{enet_encoder_forward.96} parent=0 // pred_check_branch
    %200 = sbr.rel (0) target = $region17
  $region16: #{enet_encoder_forward.96} parent=0 // pred_region
    _
  $region17: #{enet_encoder_forward.96} parent=0 // pred_fallthru
    _
  // Predicated region
  $region18: #{enet_encoder_forward.96} parent=0 // pred_check
    _
  $region19: #{enet_encoder_forward.96} parent=0 // pred_check_branch
    %202 = sbr.rel (0) target = $region21
  $region20: #{enet_encoder_forward.96} parent=0 // pred_region
    _
  $region21: #{enet_encoder_forward.96} parent=0 // pred_fallthru
    _

// kernel: enet_encoder_forward.95
$region0: #{enet_encoder_forward.95}
  #allocation0 [shape = 'u32[]', space=smem, size = 0x4, offset = 0x4, fixed_abs, tag = 'smem constant byte address 0x4 - core index']
  #allocation1 [shape = 'u32[144,128]{1,0:T(1,128)}', space=vmem, size = 0x12000, scoped, tag = 'internal scratch']
  %s0 = inlined_call_operand.vmem [shape: bf16[32,128], index: 0, kind: input, shape index: {}]
  %s1 = inlined_call_operand.vmem [shape: bf16[128,128], index: 1, kind: input, shape index: {}]
  %s2 = inlined_call_operand.vmem [shape: f32[8,128], index: 2, kind: input, shape index: {}]
  %s3 = inlined_call_operand.vmem [shape: bf16[32,128], index: 3, kind: input, shape index: {}]
  %s4 = inlined_call_operand.vmem [shape: bf16[32,128], index: 4, kind: output, shape index: {}]
  %s5 = sld [smem:[#allocation0]]
  $region26: #{enet_encoder_forward.95} parent=0
    _
  %s7 = ssub.s32 1, %s5
  %s8 = scalar_select 0, %s7, %s5
  // Predicated region
  $region2: #{enet_encoder_forward.95} parent=0 // pred_check
    _
  $region3: #{enet_encoder_forward.95} parent=0 // pred_check_branch
    %10 = sbr.rel (0) target = $region5
  $region4: #{enet_encoder_forward.95} parent=0 // pred_region
    _
  $region5: #{enet_encoder_forward.95} parent=0 // pred_fallthru
    _
  // Predicated region
  $region6: #{enet_encoder_forward.95} parent=0 // pred_check
    _
  $region7: #{enet_encoder_forward.95} parent=0 // pred_check_branch
    %12 = sbr.rel (0) target = $region9
  $region8: #{enet_encoder_forward.95} parent=0 // pred_region
    _
  $region9: #{enet_encoder_forward.95} parent=0 // pred_fallthru
    _
  // Predicated region
  $region10: #{enet_encoder_forward.95} parent=0 // pred_check
    _
  $region11: #{enet_encoder_forward.95} parent=0 // pred_check_branch
    %14 = sbr.rel (0) target = $region13
  $region12: #{enet_encoder_forward.95} parent=0 // pred_region
    _
  $region13: #{enet_encoder_forward.95} parent=0 // pred_fallthru
    _
  // Predicated region
  $region14: #{enet_encoder_forward.95} parent=0 // pred_check
    _
  $region15: #{enet_encoder_forward.95} parent=0 // pred_check_branch
    %16 = sbr.rel (0) target = $region17
  $region16: #{enet_encoder_forward.95} parent=0 // pred_region
    _
  $region17: #{enet_encoder_forward.95} parent=0 // pred_fallthru
    _
  %v18 = vld [vmem:[%s0] sm:$0xf]
  %v19 = vld [vmem:[%s0 + $0x4] sm:$0xf]
  %v20 = vld [vmem:[%s0 + $0x8] sm:$0xf]
  %v21 = vld [vmem:[%s0 + $0xc] sm:$0xf]
  %v22 = vld [vmem:[%s1] sm:$0xf]
  %v23 = vld [vmem:[%s1 + $0x4] sm:$0xf]
  %v24 = vld [vmem:[%s1 + $0x8] sm:$0xf]
  %v25 = vld [vmem:[%s1 + $0xc] sm:$0xf]
  %v26 = vld [vmem:[%s1 + $0x10] sm:$0xf]
  %v27 = vld [vmem:[%s1 + $0x14] sm:$0xf]
  %v28 = vld [vmem:[%s1 + $0x18] sm:$0xf]
  %v29 = vld [vmem:[%s1 + $0x1c] sm:$0xf]
  %v30 = vld [vmem:[%s1 + $0x20] sm:$0xf]
  %v31 = vld [vmem:[%s1 + $0x24] sm:$0xf]
  %v32 = vld [vmem:[%s1 + $0x28] sm:$0xf]
  %v33 = vld [vmem:[%s1 + $0x2c] sm:$0xf]
  %v34 = vld [vmem:[%s1 + $0x30] sm:$0xf]
  %v35 = vld [vmem:[%s1 + $0x34] sm:$0xf]
  %v36 = vld [vmem:[%s1 + $0x38] sm:$0xf]
  %v37 = vld [vmem:[%s1 + $0x3c] sm:$0xf]
  %v42 = vunpack.c.l.b16 %v18
  %v43 = vunpack.c.l.b16 %v19
  %v44 = vunpack.c.l.b16 %v20
  %v45 = vunpack.c.l.b16 %v21
  %v46 = vpack.c.b16 %v43, %v42
  %v47 = vpack.c.b16 %v45, %v44
  %v66 = vunpack.c.l.b16 %v22
  %v67 = vunpack.c.l.b16 %v23
  %v68 = vunpack.c.l.b16 %v24
  %v69 = vunpack.c.l.b16 %v25
  %v70 = vunpack.c.l.b16 %v26
  %v71 = vunpack.c.l.b16 %v27
  %v72 = vunpack.c.l.b16 %v28
  %v73 = vunpack.c.l.b16 %v29
  %v74 = vunpack.c.l.b16 %v30
  %v75 = vunpack.c.l.b16 %v31
  %v76 = vunpack.c.l.b16 %v32
  %v77 = vunpack.c.l.b16 %v33
  %v78 = vunpack.c.l.b16 %v34
  %v79 = vunpack.c.l.b16 %v35
  %v80 = vunpack.c.l.b16 %v36
  %v81 = vunpack.c.l.b16 %v37
  %v82 = vpack.c.b16 %v67, %v66
  %v83 = vpack.c.b16 %v69, %v68
  %v84 = vpack.c.b16 %v71, %v70
  %v85 = vpack.c.b16 %v73, %v72
  %v86 = vpack.c.b16 %v75, %v74
  %v87 = vpack.c.b16 %v77, %v76
  %v88 = vpack.c.b16 %v79, %v78
  %v89 = vpack.c.b16 %v81, %v80
  %98 = vmatprep.subr.bf16.mxu0 0
  %99 = vmatpush1.bf16.msra.mxu0 %v89
  %100 = vmatprep.subr.bf16.mxu0 0
  %101 = vmatpush1.bf16.msra.mxu0 %v88
  %102 = vmatprep.subr.bf16.mxu0 0
  %103 = vmatpush1.bf16.msra.mxu0 %v87
  %104 = vmatprep.subr.bf16.mxu0 0
  %105 = vmatpush1.bf16.msra.mxu0 %v86
  %106 = vmatprep.subr.bf16.mxu0 0
  %107 = vmatpush1.bf16.msra.mxu0 %v85
  %108 = vmatprep.subr.bf16.mxu0 0
  %109 = vmatpush1.bf16.msra.mxu0 %v84
  %110 = vmatprep.subr.bf16.mxu0 0
  %111 = vmatpush1.bf16.msra.mxu0 %v83
  %112 = vmatprep.subr.bf16.mxu0 0
  %113 = vmatpush1.bf16.msra.mxu0 %v82
  %114 = vmatprep.subr.bf16.mxu0 0
  %115 = vmatpush2.bf16.msra.mxu0 0
  %116 = vmatprep.subr.bf16.mxu0 0
  %117 = vmatpush2.bf16.msra.mxu0 0
  %118 = vmatprep.subr.bf16.mxu0 0
  %119 = vmatpush2.bf16.msra.mxu0 0
  %120 = vmatprep.subr.bf16.mxu0 0
  %121 = vmatpush2.bf16.msra.mxu0 0
  %122 = vmatprep.subr.bf16.mxu0 0
  %123 = vmatpush2.bf16.msra.mxu0 0
  %124 = vmatprep.subr.bf16.mxu0 0
  %125 = vmatpush2.bf16.msra.mxu0 0
  %126 = vmatprep.subr.bf16.mxu0 0
  %127 = vmatpush2.bf16.msra.mxu0 0
  %128 = vmatprep.subr.bf16.mxu0 0
  %129 = vmatpush2.bf16.msra.mxu0 0
  %130 = vmatprep.mubr.bf16.mxu0 0
  %131 = vmatmul.mubr.bf16.gmra.mxu0 %v46
  %v132 = vpop.f32.mrf.mxu0
  %v133 = vadd.f32 0.0, %v132
  %v134 = vpop.f32.mrf.mxu0
  %v135 = vpop.f32.mrf.mxu0
  %v136 = vadd.f32 0.0, %v135
  %v137 = vpop.f32.mrf.mxu0
  %138 = vmatprep.mubr.bf16.mxu0 0
  %139 = vmatmul.mubr.bf16.gmra.mxu0 %v47
  %v140 = vpop.f32.mrf.mxu0
  %v141 = vadd.f32 0.0, %v140
  %v142 = vpop.f32.mrf.mxu0
  %v143 = vpop.f32.mrf.mxu0
  %v144 = vadd.f32 0.0, %v143
  %v145 = vpop.f32.mrf.mxu0
  %146 = vdwg.mxu0
  %v147 = vld [vmem:[%s2] sm:$0x1]
  %v148 = vlaneseq
  %v149 = vshrl.u32 %v148, 7
  %v150 = vsub.s32 0, %v149
  %v151 = vrot.slane %v147, %v150
  %v152 = vmul.f32 %v133, %v151
  %v153 = vmul.f32 %v136, %v151
  %v154 = vmul.f32 %v141, %v151
  %v155 = vmul.f32 %v144, %v151
  %v156 = vld [vmem:[%s2 + $0x1] sm:$0x1]
  %v157 = vlaneseq
  %v158 = vshrl.u32 %v157, 7
  %v159 = vsub.s32 0, %v158
  %v160 = vrot.slane %v156, %v159
  %v161 = vadd.f32 %v152, %v160
  %v162 = vadd.f32 %v153, %v160
  %v163 = vadd.f32 %v154, %v160
  %v164 = vadd.f32 %v155, %v160
  %vm165 = vcmp.ge.f32.partialorder %v161, 0.0
  %vm166 = vcmp.ge.f32.partialorder %v162, 0.0
  %vm167 = vcmp.ge.f32.partialorder %v163, 0.0
  %vm168 = vcmp.ge.f32.partialorder %v164, 0.0
  %v169 = vld [vmem:[%s2 + $0x2] sm:$0x1]
  %v170 = vlaneseq
  %v171 = vshrl.u32 %v170, 7
  %v172 = vsub.s32 0, %v171
  %v173 = vrot.slane %v169, %v172
  %v174 = vmul.f32 %v173, %v161
  %v175 = vmul.f32 %v173, %v162
  %v176 = vmul.f32 %v173, %v163
  %v177 = vmul.f32 %v173, %v164
  %v178 = vsel %vm165, %v161, %v174
  %v179 = vsel %vm166, %v162, %v175
  %v180 = vsel %vm167, %v163, %v176
  %v181 = vsel %vm168, %v164, %v177
  %v182 = vld [vmem:[%s3] sm:$0xf]
  %v183 = vld [vmem:[%s3 + $0x4] sm:$0xf]
  %v184 = vld [vmem:[%s3 + $0x8] sm:$0xf]
  %v185 = vld [vmem:[%s3 + $0xc] sm:$0xf]
  %v186 = vunpack.c.l.bf16 %v182
  %v187 = vunpack.c.l.bf16 %v183
  %v188 = vunpack.c.l.bf16 %v184
  %v189 = vunpack.c.l.bf16 %v185
  %v190 = vadd.f32 %v178, %v186
  %v191 = vadd.f32 %v179, %v187
  %v192 = vadd.f32 %v180, %v188
  %v193 = vadd.f32 %v181, %v189
  %vm194 = vcmp.ge.f32.partialorder %v190, 0.0
  %vm195 = vcmp.ge.f32.partialorder %v191, 0.0
  %vm196 = vcmp.ge.f32.partialorder %v192, 0.0
  %vm197 = vcmp.ge.f32.partialorder %v193, 0.0
  %v198 = vld [vmem:[%s2 + $0x3] sm:$0x1]
  %v199 = vlaneseq
  %v200 = vshrl.u32 %v199, 7
  %v201 = vsub.s32 0, %v200
  %v202 = vrot.slane %v198, %v201
  %v203 = vmul.f32 %v202, %v190
  %v204 = vmul.f32 %v202, %v191
  %v205 = vmul.f32 %v202, %v192
  %v206 = vmul.f32 %v202, %v193
  %v207 = vsel %vm194, %v190, %v203
  %v208 = vsel %vm195, %v191, %v204
  %v209 = vsel %vm196, %v192, %v205
  %v210 = vsel %vm197, %v193, %v206
  %v211 = vpack.c.bf16 %v208, %v207
  %v212 = vpack.c.bf16 %v210, %v209
  %v215 = vunpack.c.l.b16 %v211
  %v216 = vunpack.c.h.b16 %v211
  %v217 = vunpack.c.l.b16 %v212
  %v218 = vunpack.c.h.b16 %v212
  %v219 = vpack.c.b16 %v215, %v215
  %v220 = vpack.c.b16 %v216, %v216
  %v221 = vpack.c.b16 %v217, %v217
  %v222 = vpack.c.b16 %v218, %v218
  %227 = vst [vmem:[%s4] sm:$0xf] %v219
  %228 = vst [vmem:[%s4 + $0x4] sm:$0xf] %v220
  %229 = vst [vmem:[%s4 + $0x8] sm:$0xf] %v221
  %230 = vst [vmem:[%s4 + $0xc] sm:$0xf] %v222
  // Predicated region
  $region18: #{enet_encoder_forward.95} parent=0 // pred_check
    _
  $region19: #{enet_encoder_forward.95} parent=0 // pred_check_branch
    %232 = sbr.rel (0) target = $region21
  $region20: #{enet_encoder_forward.95} parent=0 // pred_region
    _
  $region21: #{enet_encoder_forward.95} parent=0 // pred_fallthru
    _
  // Predicated region
  $region22: #{enet_encoder_forward.95} parent=0 // pred_check
    _
  $region23: #{enet_encoder_forward.95} parent=0 // pred_check_branch
    %234 = sbr.rel (0) target = $region25
  $region24: #{enet_encoder_forward.95} parent=0 // pred_region
    _
  $region25: #{enet_encoder_forward.95} parent=0 // pred_fallthru
    _

// kernel: enet_encoder_forward.97
$region0: #{enet_encoder_forward.97}
  #allocation0 [shape = 'u32[]', space=smem, size = 0x4, offset = 0x4, fixed_abs, tag = 'smem constant byte address 0x4 - core index']
  #allocation1 [shape = 'u32[144,128]{1,0:T(1,128)}', space=vmem, size = 0x12000, scoped, tag = 'internal scratch']
  %s0 = inlined_call_operand.vmem [shape: bf16[32,384], index: 0, kind: input, shape index: {}]
  %s1 = inlined_call_operand.vmem [shape: bf16[384,128], index: 1, kind: input, shape index: {}]
  %s2 = inlined_call_operand.vmem [shape: f32[8,128], index: 2, kind: input, shape index: {}]
  %s3 = inlined_call_operand.vmem [shape: bf16[32,128], index: 3, kind: output, shape index: {}]
  %s4 = sld [smem:[#allocation0]]
  $region22: #{enet_encoder_forward.97} parent=0
    _
  %s6 = ssub.s32 1, %s4
  %s7 = scalar_select 0, %s6, %s4
  // Predicated region
  $region2: #{enet_encoder_forward.97} parent=0 // pred_check
    _
  $region3: #{enet_encoder_forward.97} parent=0 // pred_check_branch
    %9 = sbr.rel (0) target = $region5
  $region4: #{enet_encoder_forward.97} parent=0 // pred_region
    _
  $region5: #{enet_encoder_forward.97} parent=0 // pred_fallthru
    _
  // Predicated region
  $region6: #{enet_encoder_forward.97} parent=0 // pred_check
    _
  $region7: #{enet_encoder_forward.97} parent=0 // pred_check_branch
    %11 = sbr.rel (0) target = $region9
  $region8: #{enet_encoder_forward.97} parent=0 // pred_region
    _
  $region9: #{enet_encoder_forward.97} parent=0 // pred_fallthru
    _
  // Predicated region
  $region10: #{enet_encoder_forward.97} parent=0 // pred_check
    _
  $region11: #{enet_encoder_forward.97} parent=0 // pred_check_branch
    %13 = sbr.rel (0) target = $region13
  $region12: #{enet_encoder_forward.97} parent=0 // pred_region
    _
  $region13: #{enet_encoder_forward.97} parent=0 // pred_fallthru
    _
  %v15 = vld [vmem:[%s0] sm:$0xff]
  %v16 = vld [vmem:[%s0 + $0x8] sm:$0xf]
  %v17 = vld [vmem:[%s0 + $0xc] sm:$0xff]
  %v18 = vld [vmem:[%s0 + $0x14] sm:$0xf]
  %v19 = vld [vmem:[%s0 + $0x18] sm:$0xff]
  %v20 = vld [vmem:[%s0 + $0x20] sm:$0xf]
  %v21 = vld [vmem:[%s0 + $0x24] sm:$0xff]
  %v22 = vld [vmem:[%s0 + $0x2c] sm:$0xf]
  %v23 = vld [vmem:[%s1] sm:$0xf]
  %v24 = vld [vmem:[%s1 + $0x4] sm:$0xf]
  %v25 = vld [vmem:[%s1 + $0x8] sm:$0xf]
  %v26 = vld [vmem:[%s1 + $0xc] sm:$0xf]
  %v27 = vld [vmem:[%s1 + $0x10] sm:$0xf]
  %v28 = vld [vmem:[%s1 + $0x14] sm:$0xf]
  %v29 = vld [vmem:[%s1 + $0x18] sm:$0xf]
  %v30 = vld [vmem:[%s1 + $0x1c] sm:$0xf]
  %v31 = vld [vmem:[%s1 + $0x20] sm:$0xf]
  %v32 = vld [vmem:[%s1 + $0x24] sm:$0xf]
  %v33 = vld [vmem:[%s1 + $0x28] sm:$0xf]
  %v34 = vld [vmem:[%s1 + $0x2c] sm:$0xf]
  %v35 = vld [vmem:[%s1 + $0x30] sm:$0xf]
  %v36 = vld [vmem:[%s1 + $0x34] sm:$0xf]
  %v37 = vld [vmem:[%s1 + $0x38] sm:$0xf]
  %v38 = vld [vmem:[%s1 + $0x3c] sm:$0xf]
  %v39 = vld [vmem:[%s1 + $0x40] sm:$0xf]
  %v40 = vld [vmem:[%s1 + $0x44] sm:$0xf]
  %v41 = vld [vmem:[%s1 + $0x48] sm:$0xf]
  %v42 = vld [vmem:[%s1 + $0x4c] sm:$0xf]
  %v43 = vld [vmem:[%s1 + $0x50] sm:$0xf]
  %v44 = vld [vmem:[%s1 + $0x54] sm:$0xf]
  %v45 = vld [vmem:[%s1 + $0x58] sm:$0xf]
  %v46 = vld [vmem:[%s1 + $0x5c] sm:$0xf]
  %v47 = vld [vmem:[%s1 + $0x60] sm:$0xf]
  %v48 = vld [vmem:[%s1 + $0x64] sm:$0xf]
  %v49 = vld [vmem:[%s1 + $0x68] sm:$0xf]
  %v50 = vld [vmem:[%s1 + $0x6c] sm:$0xf]
  %v51 = vld [vmem:[%s1 + $0x70] sm:$0xf]
  %v52 = vld [vmem:[%s1 + $0x74] sm:$0xf]
  %v53 = vld [vmem:[%s1 + $0x78] sm:$0xf]
  %v54 = vld [vmem:[%s1 + $0x7c] sm:$0xf]
  %v55 = vld [vmem:[%s1 + $0x80] sm:$0xf]
  %v56 = vld [vmem:[%s1 + $0x84] sm:$0xf]
  %v57 = vld [vmem:[%s1 + $0x88] sm:$0xf]
  %v58 = vld [vmem:[%s1 + $0x8c] sm:$0xf]
  %v59 = vld [vmem:[%s1 + $0x90] sm:$0xf]
  %v60 = vld [vmem:[%s1 + $0x94] sm:$0xf]
  %v61 = vld [vmem:[%s1 + $0x98] sm:$0xf]
  %v62 = vld [vmem:[%s1 + $0x9c] sm:$0xf]
  %v63 = vld [vmem:[%s1 + $0xa0] sm:$0xf]
  %v64 = vld [vmem:[%s1 + $0xa4] sm:$0xf]
  %v65 = vld [vmem:[%s1 + $0xa8] sm:$0xf]
  %v66 = vld [vmem:[%s1 + $0xac] sm:$0xf]
  %v67 = vld [vmem:[%s1 + $0xb0] sm:$0xf]
  %v68 = vld [vmem:[%s1 + $0xb4] sm:$0xf]
  %v69 = vld [vmem:[%s1 + $0xb8] sm:$0xf]
  %v70 = vld [vmem:[%s1 + $0xbc] sm:$0xf]
  %v79 = vunpack.c.l.b16 %v15
  %v80 = vunpack.c.h.b16 %v15
  %v81 = vunpack.c.l.b16 %v16
  %v82 = vunpack.c.l.b16 %v17
  %v83 = vunpack.c.h.b16 %v17
  %v84 = vunpack.c.l.b16 %v18
  %v85 = vunpack.c.l.b16 %v19
  %v86 = vunpack.c.h.b16 %v19
  %v87 = vunpack.c.l.b16 %v20
  %v88 = vunpack.c.l.b16 %v21
  %v89 = vunpack.c.h.b16 %v21
  %v90 = vunpack.c.l.b16 %v22
  %v91 = vpack.c.b16 %v82, %v79
  %v92 = vpack.c.b16 %v83, %v80
  %v93 = vpack.c.b16 %v84, %v81
  %v94 = vpack.c.b16 %v88, %v85
  %v95 = vpack.c.b16 %v89, %v86
  %v96 = vpack.c.b16 %v90, %v87
  %v151 = vunpack.c.l.b16 %v23
  %v152 = vunpack.c.l.b16 %v24
  %v153 = vunpack.c.l.b16 %v25
  %v154 = vunpack.c.l.b16 %v26
  %v155 = vunpack.c.l.b16 %v27
  %v156 = vunpack.c.l.b16 %v28
  %v157 = vunpack.c.l.b16 %v29
  %v158 = vunpack.c.l.b16 %v30
  %v159 = vunpack.c.l.b16 %v31
  %v160 = vunpack.c.l.b16 %v32
  %v161 = vunpack.c.l.b16 %v33
  %v162 = vunpack.c.l.b16 %v34
  %v163 = vunpack.c.l.b16 %v35
  %v164 = vunpack.c.l.b16 %v36
  %v165 = vunpack.c.l.b16 %v37
  %v166 = vunpack.c.l.b16 %v38
  %v167 = vunpack.c.l.b16 %v39
  %v168 = vunpack.c.l.b16 %v40
  %v169 = vunpack.c.l.b16 %v41
  %v170 = vunpack.c.l.b16 %v42
  %v171 = vunpack.c.l.b16 %v43
  %v172 = vunpack.c.l.b16 %v44
  %v173 = vunpack.c.l.b16 %v45
  %v174 = vunpack.c.l.b16 %v46
  %v175 = vunpack.c.l.b16 %v47
  %v176 = vunpack.c.l.b16 %v48
  %v177 = vunpack.c.l.b16 %v49
  %v178 = vunpack.c.l.b16 %v50
  %v179 = vunpack.c.l.b16 %v51
  %v180 = vunpack.c.l.b16 %v52
  %v181 = vunpack.c.l.b16 %v53
  %v182 = vunpack.c.l.b16 %v54
  %v183 = vunpack.c.l.b16 %v55
  %v184 = vunpack.c.l.b16 %v56
  %v185 = vunpack.c.l.b16 %v57
  %v186 = vunpack.c.l.b16 %v58
  %v187 = vunpack.c.l.b16 %v59
  %v188 = vunpack.c.l.b16 %v60
  %v189 = vunpack.c.l.b16 %v61
  %v190 = vunpack.c.l.b16 %v62
  %v191 = vunpack.c.l.b16 %v63
  %v192 = vunpack.c.l.b16 %v64
  %v193 = vunpack.c.l.b16 %v65
  %v194 = vunpack.c.l.b16 %v66
  %v195 = vunpack.c.l.b16 %v67
  %v196 = vunpack.c.l.b16 %v68
  %v197 = vunpack.c.l.b16 %v69
  %v198 = vunpack.c.l.b16 %v70
  %v199 = vpack.c.b16 %v152, %v151
  %v200 = vpack.c.b16 %v154, %v153
  %v201 = vpack.c.b16 %v156, %v155
  %v202 = vpack.c.b16 %v158, %v157
  %v203 = vpack.c.b16 %v160, %v159
  %v204 = vpack.c.b16 %v162, %v161
  %v205 = vpack.c.b16 %v164, %v163
  %v206 = vpack.c.b16 %v166, %v165
  %v207 = vpack.c.b16 %v168, %v167
  %v208 = vpack.c.b16 %v170, %v169
  %v209 = vpack.c.b16 %v172, %v171
  %v210 = vpack.c.b16 %v174, %v173
  %v211 = vpack.c.b16 %v176, %v175
  %v212 = vpack.c.b16 %v178, %v177
  %v213 = vpack.c.b16 %v180, %v179
  %v214 = vpack.c.b16 %v182, %v181
  %v215 = vpack.c.b16 %v184, %v183
  %v216 = vpack.c.b16 %v186, %v185
  %v217 = vpack.c.b16 %v188, %v187
  %v218 = vpack.c.b16 %v190, %v189
  %v219 = vpack.c.b16 %v192, %v191
  %v220 = vpack.c.b16 %v194, %v193
  %v221 = vpack.c.b16 %v196, %v195
  %v222 = vpack.c.b16 %v198, %v197
  %247 = vmatprep.subr.bf16.mxu0 0
  %248 = vmatpush1.bf16.msra.mxu0 %v206
  %249 = vmatprep.subr.bf16.mxu0 0
  %250 = vmatpush1.bf16.msra.mxu0 %v205
  %251 = vmatprep.subr.bf16.mxu0 0
  %252 = vmatpush1.bf16.msra.mxu0 %v204
  %253 = vmatprep.subr.bf16.mxu0 0
  %254 = vmatpush1.bf16.msra.mxu0 %v203
  %255 = vmatprep.subr.bf16.mxu0 0
  %256 = vmatpush1.bf16.msra.mxu0 %v202
  %257 = vmatprep.subr.bf16.mxu0 0
  %258 = vmatpush1.bf16.msra.mxu0 %v201
  %259 = vmatprep.subr.bf16.mxu0 0
  %260 = vmatpush1.bf16.msra.mxu0 %v200
  %261 = vmatprep.subr.bf16.mxu0 0
  %262 = vmatpush1.bf16.msra.mxu0 %v199
  %263 = vmatprep.subr.bf16.mxu0 0
  %264 = vmatpush2.bf16.msra.mxu0 %v214
  %265 = vmatprep.subr.bf16.mxu0 0
  %266 = vmatpush2.bf16.msra.mxu0 %v213
  %267 = vmatprep.subr.bf16.mxu0 0
  %268 = vmatpush2.bf16.msra.mxu0 %v212
  %269 = vmatprep.subr.bf16.mxu0 0
  %270 = vmatpush2.bf16.msra.mxu0 %v211
  %271 = vmatprep.subr.bf16.mxu0 0
  %272 = vmatpush2.bf16.msra.mxu0 %v210
  %273 = vmatprep.subr.bf16.mxu0 0
  %274 = vmatpush2.bf16.msra.mxu0 %v209
  %275 = vmatprep.subr.bf16.mxu0 0
  %276 = vmatpush2.bf16.msra.mxu0 %v208
  %277 = vmatprep.subr.bf16.mxu0 0
  %278 = vmatpush2.bf16.msra.mxu0 %v207
  %279 = vmatprep.mubr.bf16.mxu0 %v92
  %280 = vmatmul.mubr.bf16.gmra.mxu0 %v91
  %v281 = vpop.f32.mrf.mxu0
  %v282 = vadd.f32 0.0, %v281
  %v283 = vpop.f32.mrf.mxu0
  %v284 = vpop.f32.mrf.mxu0
  %v285 = vadd.f32 0.0, %v284
  %v286 = vpop.f32.mrf.mxu0
  %287 = vmatprep.mubr.bf16.mxu0 %v95
  %288 = vmatmul.mubr.bf16.gmra.mxu0 %v94
  %v289 = vpop.f32.mrf.mxu0
  %v290 = vadd.f32 0.0, %v289
  %v291 = vpop.f32.mrf.mxu0
  %v292 = vpop.f32.mrf.mxu0
  %v293 = vadd.f32 0.0, %v292
  %v294 = vpop.f32.mrf.mxu0
  %295 = vdwg.mxu0
  %296 = vmatprep.subr.bf16.mxu0 0
  %297 = vmatpush1.bf16.msra.mxu0 %v222
  %298 = vmatprep.subr.bf16.mxu0 0
  %299 = vmatpush1.bf16.msra.mxu0 %v221
  %300 = vmatprep.subr.bf16.mxu0 0
  %301 = vmatpush1.bf16.msra.mxu0 %v220
  %302 = vmatprep.subr.bf16.mxu0 0
  %303 = vmatpush1.bf16.msra.mxu0 %v219
  %304 = vmatprep.subr.bf16.mxu0 0
  %305 = vmatpush1.bf16.msra.mxu0 %v218
  %306 = vmatprep.subr.bf16.mxu0 0
  %307 = vmatpush1.bf16.msra.mxu0 %v217
  %308 = vmatprep.subr.bf16.mxu0 0
  %309 = vmatpush1.bf16.msra.mxu0 %v216
  %310 = vmatprep.subr.bf16.mxu0 0
  %311 = vmatpush1.bf16.msra.mxu0 %v215
  %312 = vmatprep.subr.bf16.mxu0 0
  %313 = vmatpush2.bf16.msra.mxu0 0
  %314 = vmatprep.subr.bf16.mxu0 0
  %315 = vmatpush2.bf16.msra.mxu0 0
  %316 = vmatprep.subr.bf16.mxu0 0
  %317 = vmatpush2.bf16.msra.mxu0 0
  %318 = vmatprep.subr.bf16.mxu0 0
  %319 = vmatpush2.bf16.msra.mxu0 0
  %320 = vmatprep.subr.bf16.mxu0 0
  %321 = vmatpush2.bf16.msra.mxu0 0
  %322 = vmatprep.subr.bf16.mxu0 0
  %323 = vmatpush2.bf16.msra.mxu0 0
  %324 = vmatprep.subr.bf16.mxu0 0
  %325 = vmatpush2.bf16.msra.mxu0 0
  %326 = vmatprep.subr.bf16.mxu0 0
  %327 = vmatpush2.bf16.msra.mxu0 0
  %328 = vmatprep.mubr.bf16.mxu0 0
  %329 = vmatmul.mubr.bf16.gmra.mxu0 %v93
  %v330 = vpop.f32.mrf.mxu0
  %v331 = vadd.f32 %v282, %v330
  %v332 = vpop.f32.mrf.mxu0
  %v333 = vpop.f32.mrf.mxu0
  %v334 = vadd.f32 %v285, %v333
  %v335 = vpop.f32.mrf.mxu0
  %336 = vmatprep.mubr.bf16.mxu0 0
  %337 = vmatmul.mubr.bf16.gmra.mxu0 %v96
  %v338 = vpop.f32.mrf.mxu0
  %v339 = vadd.f32 %v290, %v338
  %v340 = vpop.f32.mrf.mxu0
  %v341 = vpop.f32.mrf.mxu0
  %v342 = vadd.f32 %v293, %v341
  %v343 = vpop.f32.mrf.mxu0
  %344 = vdwg.mxu0
  %v345 = vld [vmem:[%s2] sm:$0x1]
  %v346 = vlaneseq
  %v347 = vshrl.u32 %v346, 7
  %v348 = vsub.s32 0, %v347
  %v349 = vrot.slane %v345, %v348
  %v350 = vmul.f32 %v331, %v349
  %v351 = vmul.f32 %v334, %v349
  %v352 = vmul.f32 %v339, %v349
  %v353 = vmul.f32 %v342, %v349
  %v354 = vld [vmem:[%s2 + $0x1] sm:$0x1]
  %v355 = vlaneseq
  %v356 = vshrl.u32 %v355, 7
  %v357 = vsub.s32 0, %v356
  %v358 = vrot.slane %v354, %v357
  %v359 = vadd.f32 %v350, %v358
  %v360 = vadd.f32 %v351, %v358
  %v361 = vadd.f32 %v352, %v358
  %v362 = vadd.f32 %v353, %v358
  %vm363 = vcmp.ge.f32.partialorder %v359, 0.0
  %vm364 = vcmp.ge.f32.partialorder %v360, 0.0
  %vm365 = vcmp.ge.f32.partialorder %v361, 0.0
  %vm366 = vcmp.ge.f32.partialorder %v362, 0.0
  %v367 = vld [vmem:[%s2 + $0x2] sm:$0x1]
  %v368 = vlaneseq
  %v369 = vshrl.u32 %v368, 7
  %v370 = vsub.s32 0, %v369
  %v371 = vrot.slane %v367, %v370
  %v372 = vmul.f32 %v371, %v359
  %v373 = vmul.f32 %v371, %v360
  %v374 = vmul.f32 %v371, %v361
  %v375 = vmul.f32 %v371, %v362
  %v376 = vsel %vm363, %v359, %v372
  %v377 = vsel %vm364, %v360, %v373
  %v378 = vsel %vm365, %v361, %v374
  %v379 = vsel %vm366, %v362, %v375
  %v380 = vpack.c.bf16 %v377, %v376
  %v381 = vpack.c.bf16 %v379, %v378
  %v384 = vunpack.c.l.b16 %v380
  %v385 = vunpack.c.h.b16 %v380
  %v386 = vunpack.c.l.b16 %v381
  %v387 = vunpack.c.h.b16 %v381
  %v388 = vpack.c.b16 %v384, %v384
  %v389 = vpack.c.b16 %v385, %v385
  %v390 = vpack.c.b16 %v386, %v386
  %v391 = vpack.c.b16 %v387, %v387
  %396 = vst [vmem:[%s3] sm:$0xf] %v388
  %397 = vst [vmem:[%s3 + $0x4] sm:$0xf] %v389
  %398 = vst [vmem:[%s3 + $0x8] sm:$0xf] %v390
  %399 = vst [vmem:[%s3 + $0xc] sm:$0xf] %v391
  // Predicated region
  $region14: #{enet_encoder_forward.97} parent=0 // pred_check
    _
  $region15: #{enet_encoder_forward.97} parent=0 // pred_check_branch
    %401 = sbr.rel (0) target = $region17
  $region16: #{enet_encoder_forward.97} parent=0 // pred_region
    _
  $region17: #{enet_encoder_forward.97} parent=0 // pred_fallthru
    _
  // Predicated region
  $region18: #{enet_encoder_forward.97} parent=0 // pred_check
    _
  $region19: #{enet_encoder_forward.97} parent=0 // pred_check_branch
    %403 = sbr.rel (0) target = $region21
  $region20: #{enet_encoder_forward.97} parent=0 // pred_region
    _
  $region21: #{enet_encoder_forward.97} parent=0 // pred_fallthru
    _

</llo_original>
